<compile_context>
chip_gen: v7x
topology: tpu7x:2x2x1
jax: 0.10.0
libtpu: 0.0.40
codegen_flags: <defaults>
</compile_context>

<pallas_src>
import jax
import jax.numpy as jnp
from jax import lax
from jax.experimental import pallas as pl
from jax.experimental.pallas import tpu as pltpu


LANE = 128                    # lane-dense padding target
W_DTYPE = jnp.bfloat16        # weight storage dtype (accumulation stays f32)

_VMEM = pl.BlockSpec(memory_space=pltpu.MemorySpace.VMEM)
_SMEM = pl.BlockSpec(memory_space=pltpu.MemorySpace.SMEM)


# ---------------------------------------------------------------------------
# Fused forward kernel
# ---------------------------------------------------------------------------

def _critic_fused_kernel(*refs):
    (obs1_ref, act_ref, obs2_ref, cw_ref, cp_ref,
     w11, b11, w12, b12, w13, b13, w14, b14,          # Linear_block_1 (obs1 MLP)
     w41, b41, w42, b42, w43, b43, w44, b44,          # Linear_block_4 (action MLP)
     w2a, w2b, w2c, b21, w22, b22, w23, b23, w24, b24,  # Linear_block_2
     wl, bl, o_ref) = refs

    f32 = jnp.float32
    bf16 = jnp.bfloat16

    def linear_relu(h, w_ref, b_ref):
        y = jnp.dot(h.astype(bf16), w_ref[...], preferred_element_type=f32) + b_ref[...]
        return jnp.maximum(y, 0.0)

    def mlp4(x, layers):
        h = x
        for w_ref, b_ref in layers:
            h = linear_relu(h, w_ref, b_ref)
        return h

    # --- obs1 / action MLP branches.  Outputs are (1, 128) with lanes >= 30 == 0
    #     (guaranteed by the zero-padded last-layer weights/biases).
    out1 = mlp4(obs1_ref[...], ((w11, b11), (w12, b12), (w13, b13), (w14, b14)))
    outa = mlp4(act_ref[...], ((w41, b41), (w42, b42), (w43, b43), (w44, b44)))

    # --- conv_blocks3: Conv2d(1, 1, 3, stride=2) + BatchNorm2d (batch stats) + ReLU.
    # Stride-2 tap selection is done on the MXU with iota-built 0/1 matrices:
    #   conv = sum_di  A_di @ x @ C_di,
    #   A_di[ho, r]  = (r == 2*ho + di)                      (row selection)
    #   C_di[c, wo]  = sum_dj w[di, dj] * (c == 2*wo + dj)   (column selection * taps)
    x = obs2_ref[...]                                   # (67, 69) f32
    H, W = x.shape
    HO, WO = (H - 3) // 2 + 1, (W - 3) // 2 + 1         # (33, 34)

    ho_ids = lax.broadcasted_iota(jnp.int32, (HO, H), 0)
    r_ids = lax.broadcasted_iota(jnp.int32, (HO, H), 1)
    c_ids = lax.broadcasted_iota(jnp.int32, (W, WO), 0)
    wo_ids = lax.broadcasted_iota(jnp.int32, (W, WO), 1)

    acc = jnp.zeros((HO, WO), f32)
    for di in range(3):
        a_sel = (r_ids == 2 * ho_ids + di).astype(f32)               # (33, 67)
        c_sel = (cw_ref[3 * di + 0] * (c_ids == 2 * wo_ids + 0).astype(f32)
                 + cw_ref[3 * di + 1] * (c_ids == 2 * wo_ids + 1).astype(f32)
                 + cw_ref[3 * di + 2] * (c_ids == 2 * wo_ids + 2).astype(f32))  # (69, 34)
        t = jnp.dot(a_sel, x, preferred_element_type=f32)            # (33, 69)
        acc = acc + jnp.dot(t, c_sel, preferred_element_type=f32)    # (33, 34)
    acc = acc + cp_ref[0]                                            # conv bias

    # BatchNorm2d (training mode) with single-pass sum / sum-of-squares statistics.
    n = float(HO * WO)
    s1 = jnp.sum(acc)
    s2 = jnp.sum(acc * acc)
    mean = s1 / n
    var = jnp.maximum(s2 / n - mean * mean, 0.0)                     # biased variance
    conv = jnp.maximum(
        cp_ref[1] * (acc - mean) * lax.rsqrt(var + 1e-5) + cp_ref[2], 0.0
    )                                                                # (33, 34)

    # --- Linear_block_2, layer 1, applied to the (virtual) concat
    #     [out_1 (30) | flatten(conv) (1122) | out_a (30)]:
    # the 1182-row weight was split on the host into w2a / w2c / w2b, so no
    # in-kernel concatenate or flatten is needed.
    h = (jnp.dot(out1.astype(bf16), w2a[...], preferred_element_type=f32)
         + jnp.dot(outa.astype(bf16), w2b[...], preferred_element_type=f32)
         + b21[...])
    for ho in range(HO):   # conv row `ho` contracts with W1[30 + ho*34 : 30 + (ho+1)*34]
        h = h + jnp.dot(conv[ho:ho + 1, :].astype(bf16), w2c[ho],
                        preferred_element_type=f32)
    h = jnp.maximum(h, 0.0)

    # Linear_block_2 layers 2-4 (last output padded 30 -> 128, pad lanes are 0).
    for w_ref, b_ref in ((w22, b22), (w23, b23), (w24, b24)):
        h = linear_relu(h, w_ref, b_ref)

    # --- Last_linear_block: Linear(30, 1) + ReLU, padded to (128, 128); the Q value
    #     lives in lane 0, all other lanes are exactly 0.
    o_ref[...] = linear_relu(h, wl, bl).astype(o_ref.dtype)


# ---------------------------------------------------------------------------
# Wrapper
# ---------------------------------------------------------------------------

def critic_forward(obs1, obs2_nchw, action, kp):
    """Reproduces CriticNetwork.forward(obs, action) with one fused pallas_call."""
    obs1_p = jnp.pad(obs1.reshape(1, -1).astype(jnp.float32),
                     ((0, 0), (0, LANE - obs1.size)))
    act_p = jnp.pad(action.reshape(1, -1).astype(jnp.float32),
                    ((0, 0), (0, LANE - action.size)))
    x_hw = obs2_nchw.reshape(obs2_nchw.shape[-2], obs2_nchw.shape[-1]).astype(jnp.float32)

    args = (obs1_p, act_p, x_hw, kp["conv_w"], kp["conv_p"],
            *kp["block1"], *kp["block4"],
            kp["w2a"], kp["w2b"], kp["w2c"], kp["b21"], *kp["block2_rest"],
            kp["wl"], kp["bl"])

    in_specs = [_VMEM] * len(args)
    in_specs[3] = _SMEM   # conv taps (9,)
    in_specs[4] = _SMEM   # [conv_bias, bn_gamma, bn_beta]

    out = pl.pallas_call(
        _critic_fused_kernel,
        out_shape=jax.ShapeDtypeStruct((1, LANE), jnp.float32),
        in_specs=in_specs,
        out_specs=_VMEM,
    )(*args)
    return out[0, :1]    # torch output shape: (1,)


# ---------------------------------------------------------------------------
# Parameter construction (PyTorch-style uniform fan-in init) and kernel packing
# ---------------------------------------------------------------------------

def _linear_init(key, din, dout):
    kw, kb = jax.random.split(key)
    bound = 1.0 / (din ** 0.5)
    w = jax.random.uniform(kw, (din, dout), jnp.float32, -bound, bound)
    b = jax.random.uniform(kb, (1, dout), jnp.float32, -bound, bound)
    return w, b


def _mlp_params(key, din, hidden, dout, num_layers=4):
    ks = jax.random.split(key, num_layers)
    dims = [din] + [hidden] * (num_layers - 1) + [dout]
    return [_linear_init(ks[i], dims[i], dims[i + 1]) for i in range(num_layers)]


def _pad2(a, rows, cols):
    return jnp.pad(a, ((0, rows - a.shape[0]), (0, cols - a.shape[1])))


def pack_params(raw):
    """Torch-layout f32 params -> zero-padded, bf16-weight kernel arguments."""
    def pack_mlp(layers, pad_in_first, pad_out_last):
        out = []
        n = len(layers)
        for idx, (w, b) in enumerate(layers):
            din, dout = w.shape
            rin = pad_in_first if idx == 0 else din
            rout = pad_out_last if idx == n - 1 else dout
            out.append(_pad2(w, rin, rout).astype(W_DTYPE))
            out.append(_pad2(b.reshape(1, -1), 1, rout).astype(jnp.float32))
        return tuple(out)

    kp = {}
    kp["block1"] = pack_mlp(raw["block1"], LANE, LANE)
    kp["block4"] = pack_mlp(raw["block4"], LANE, LANE)

    # Linear_block_2 layer 1: split the 1182-row weight along the concat layout
    # [out_1 (0:30) | flatten(conv) (30:1152) | out_a (1152:1182)].
    w1, b1 = raw["block2"][0]
    kp["w2a"] = _pad2(w1[0:30], LANE, w1.shape[1]).astype(W_DTYPE)
    kp["w2c"] = w1[30:1152].reshape(33, 34, w1.shape[1]).astype(W_DTYPE)
    kp["w2b"] = _pad2(w1[1152:1182], LANE, w1.shape[1]).astype(W_DTYPE)
    kp["b21"] = b1.reshape(1, -1).astype(jnp.float32)
    kp["block2_rest"] = pack_mlp(raw["block2"][1:], 256, LANE)

    kp["wl"] = _pad2(raw["last_w"], LANE, LANE).astype(W_DTYPE)
    kp["bl"] = _pad2(raw["last_b"].reshape(1, -1), 1, LANE).astype(jnp.float32)

    kp["conv_w"] = raw["conv_w"].reshape(9).astype(jnp.float32)
    kp["conv_p"] = jnp.stack(
        [raw["conv_b"], raw["bn_gamma"], raw["bn_beta"]]).astype(jnp.float32)
    return kp


if __name__ == "__main__":
    # env_params: obs1 dim = 8, obs2 grid = (67, 69) -> conv3x3/s2 -> (33, 34),
    # action dim = 4.  cat size = 30 + 33*34 + 30 = 1182, matching the module's
    # hard-coded self.input_dim_2 = 1182.
    OBS1_DIM, ACT_DIM = 8, 4
    OBS2_HW = (67, 69)
    HIDDEN, MLP_OUT = 256, 30

    root = jax.random.PRNGKey(0)
    k_p1, k_p4, k_p2, k_last, k_conv, k_o1, k_o2, k_ac = jax.random.split(root, 8)
    kcw, kcb = jax.random.split(k_conv)
    conv_bound = 1.0 / (1 * 3 * 3) ** 0.5

    raw = {
        "block1": _mlp_params(k_p1, OBS1_DIM, HIDDEN, MLP_OUT, 4),
        "block4": _mlp_params(k_p4, ACT_DIM, HIDDEN, MLP_OUT, 4),
        "block2": _mlp_params(k_p2, 1182, HIDDEN, MLP_OUT, 4),
        "last_w": _linear_init(k_last, MLP_OUT, 1)[0],
        "last_b": _linear_init(k_last, MLP_OUT, 1)[1],
        "conv_w": jax.random.uniform(kcw, (3, 3), jnp.float32, -conv_bound, conv_bound),
        "conv_b": jax.random.uniform(kcb, (), jnp.float32, -conv_bound, conv_bound),
        "bn_gamma": jnp.float32(1.0),
        "bn_beta": jnp.float32(0.0),
    }
    kparams = pack_params(raw)

    obs1 = jax.random.normal(k_o1, (OBS1_DIM,), jnp.float32)
    obs2 = jax.random.normal(k_o2, (1, 1) + OBS2_HW, jnp.float32)   # torch NCHW
    action = jax.random.normal(k_ac, (ACT_DIM,), jnp.float32)

    fwd = jax.jit(critic_forward)
    q = fwd(obs1, obs2, action, kparams)
    jax.block_until_ready(q)
    assert q.shape == (1,) and bool(jnp.all(jnp.isfinite(q)))
    print("KERNEL_OK")
</pallas_src>

<mosaic_0001>
module attributes {stable_mosaic.version = 11 : i64} {
  func.func @_critic_fused_kernel(%arg0: memref<1x128xf32, #tpu.memory_space<vmem>>, %arg1: memref<1x128xf32, #tpu.memory_space<vmem>>, %arg2: memref<67x69xf32, #tpu.memory_space<vmem>>, %arg3: memref<9xf32, #tpu.memory_space<smem>>, %arg4: memref<3xf32, #tpu.memory_space<smem>>, %arg5: memref<128x256xbf16, #tpu.memory_space<vmem>>, %arg6: memref<1x256xf32, #tpu.memory_space<vmem>>, %arg7: memref<256x256xbf16, #tpu.memory_space<vmem>>, %arg8: memref<1x256xf32, #tpu.memory_space<vmem>>, %arg9: memref<256x256xbf16, #tpu.memory_space<vmem>>, %arg10: memref<1x256xf32, #tpu.memory_space<vmem>>, %arg11: memref<256x128xbf16, #tpu.memory_space<vmem>>, %arg12: memref<1x128xf32, #tpu.memory_space<vmem>>, %arg13: memref<128x256xbf16, #tpu.memory_space<vmem>>, %arg14: memref<1x256xf32, #tpu.memory_space<vmem>>, %arg15: memref<256x256xbf16, #tpu.memory_space<vmem>>, %arg16: memref<1x256xf32, #tpu.memory_space<vmem>>, %arg17: memref<256x256xbf16, #tpu.memory_space<vmem>>, %arg18: memref<1x256xf32, #tpu.memory_space<vmem>>, %arg19: memref<256x128xbf16, #tpu.memory_space<vmem>>, %arg20: memref<1x128xf32, #tpu.memory_space<vmem>>, %arg21: memref<128x256xbf16, #tpu.memory_space<vmem>>, %arg22: memref<128x256xbf16, #tpu.memory_space<vmem>>, %arg23: memref<33x34x256xbf16, #tpu.memory_space<vmem>>, %arg24: memref<1x256xf32, #tpu.memory_space<vmem>>, %arg25: memref<256x256xbf16, #tpu.memory_space<vmem>>, %arg26: memref<1x256xf32, #tpu.memory_space<vmem>>, %arg27: memref<256x256xbf16, #tpu.memory_space<vmem>>, %arg28: memref<1x256xf32, #tpu.memory_space<vmem>>, %arg29: memref<256x128xbf16, #tpu.memory_space<vmem>>, %arg30: memref<1x128xf32, #tpu.memory_space<vmem>>, %arg31: memref<128x128xbf16, #tpu.memory_space<vmem>>, %arg32: memref<1x128xf32, #tpu.memory_space<vmem>>, %arg33: memref<1x128xf32, #tpu.memory_space<vmem>>) attributes {dimension_semantics = [], scalar_prefetch = 0 : i64, scratch_operands = 0 : i64, tpu.core_type = #tpu.core_type<tc>} {
    %c0 = arith.constant 0 : index
    %c0_0 = arith.constant 0 : index
    %0 = vector.load %arg0[%c0, %c0_0] : memref<1x128xf32, #tpu.memory_space<vmem>>, vector<1x128xf32>
    %1 = arith.truncf %0 : vector<1x128xf32> to vector<1x128xbf16>
    %c0_1 = arith.constant 0 : index
    %c0_2 = arith.constant 0 : index
    %2 = vector.load %arg5[%c0_1, %c0_2] : memref<128x256xbf16, #tpu.memory_space<vmem>>, vector<128x256xbf16>
    %cst = arith.constant dense<0.000000e+00> : vector<1x256xf32>
    %3 = tpu.matmul %1, %2, %cst {dimension_numbers = #tpu.dot_dimension_numbers<[1], [0], [0], [1], [0, 0, 1, 1], [], []>} : vector<1x128xbf16>, vector<128x256xbf16>, vector<1x256xf32> -> vector<1x256xf32>
    %c0_3 = arith.constant 0 : index
    %c0_4 = arith.constant 0 : index
    %4 = vector.load %arg6[%c0_3, %c0_4] : memref<1x256xf32, #tpu.memory_space<vmem>>, vector<1x256xf32>
    %5 = arith.addf %3, %4 : vector<1x256xf32>
    %cst_5 = arith.constant 0.000000e+00 : f32
    %6 = vector.broadcast %cst_5 : f32 to vector<1x256xf32>
    %7 = arith.maximumf %5, %6 : vector<1x256xf32>
    %8 = arith.truncf %7 : vector<1x256xf32> to vector<1x256xbf16>
    %c0_6 = arith.constant 0 : index
    %c0_7 = arith.constant 0 : index
    %9 = vector.load %arg7[%c0_6, %c0_7] : memref<256x256xbf16, #tpu.memory_space<vmem>>, vector<256x256xbf16>
    %cst_8 = arith.constant dense<0.000000e+00> : vector<1x256xf32>
    %10 = tpu.matmul %8, %9, %cst_8 {dimension_numbers = #tpu.dot_dimension_numbers<[1], [0], [0], [1], [0, 0, 1, 1], [], []>} : vector<1x256xbf16>, vector<256x256xbf16>, vector<1x256xf32> -> vector<1x256xf32>
    %c0_9 = arith.constant 0 : index
    %c0_10 = arith.constant 0 : index
    %11 = vector.load %arg8[%c0_9, %c0_10] : memref<1x256xf32, #tpu.memory_space<vmem>>, vector<1x256xf32>
    %12 = arith.addf %10, %11 : vector<1x256xf32>
    %cst_11 = arith.constant 0.000000e+00 : f32
    %13 = vector.broadcast %cst_11 : f32 to vector<1x256xf32>
    %14 = arith.maximumf %12, %13 : vector<1x256xf32>
    %15 = arith.truncf %14 : vector<1x256xf32> to vector<1x256xbf16>
    %c0_12 = arith.constant 0 : index
    %c0_13 = arith.constant 0 : index
    %16 = vector.load %arg9[%c0_12, %c0_13] : memref<256x256xbf16, #tpu.memory_space<vmem>>, vector<256x256xbf16>
    %cst_14 = arith.constant dense<0.000000e+00> : vector<1x256xf32>
    %17 = tpu.matmul %15, %16, %cst_14 {dimension_numbers = #tpu.dot_dimension_numbers<[1], [0], [0], [1], [0, 0, 1, 1], [], []>} : vector<1x256xbf16>, vector<256x256xbf16>, vector<1x256xf32> -> vector<1x256xf32>
    %c0_15 = arith.constant 0 : index
    %c0_16 = arith.constant 0 : index
    %18 = vector.load %arg10[%c0_15, %c0_16] : memref<1x256xf32, #tpu.memory_space<vmem>>, vector<1x256xf32>
    %19 = arith.addf %17, %18 : vector<1x256xf32>
    %cst_17 = arith.constant 0.000000e+00 : f32
    %20 = vector.broadcast %cst_17 : f32 to vector<1x256xf32>
    %21 = arith.maximumf %19, %20 : vector<1x256xf32>
    %22 = arith.truncf %21 : vector<1x256xf32> to vector<1x256xbf16>
    %c0_18 = arith.constant 0 : index
    %c0_19 = arith.constant 0 : index
    %23 = vector.load %arg11[%c0_18, %c0_19] : memref<256x128xbf16, #tpu.memory_space<vmem>>, vector<256x128xbf16>
    %cst_20 = arith.constant dense<0.000000e+00> : vector<1x128xf32>
    %24 = tpu.matmul %22, %23, %cst_20 {dimension_numbers = #tpu.dot_dimension_numbers<[1], [0], [0], [1], [0, 0, 1, 1], [], []>} : vector<1x256xbf16>, vector<256x128xbf16>, vector<1x128xf32> -> vector<1x128xf32>
    %c0_21 = arith.constant 0 : index
    %c0_22 = arith.constant 0 : index
    %25 = vector.load %arg12[%c0_21, %c0_22] : memref<1x128xf32, #tpu.memory_space<vmem>>, vector<1x128xf32>
    %26 = arith.addf %24, %25 : vector<1x128xf32>
    %cst_23 = arith.constant 0.000000e+00 : f32
    %27 = vector.broadcast %cst_23 : f32 to vector<1x128xf32>
    %28 = arith.maximumf %26, %27 : vector<1x128xf32>
    %c0_24 = arith.constant 0 : index
    %c0_25 = arith.constant 0 : index
    %29 = vector.load %arg1[%c0_24, %c0_25] : memref<1x128xf32, #tpu.memory_space<vmem>>, vector<1x128xf32>
    %30 = arith.truncf %29 : vector<1x128xf32> to vector<1x128xbf16>
    %c0_26 = arith.constant 0 : index
    %c0_27 = arith.constant 0 : index
    %31 = vector.load %arg13[%c0_26, %c0_27] : memref<128x256xbf16, #tpu.memory_space<vmem>>, vector<128x256xbf16>
    %cst_28 = arith.constant dense<0.000000e+00> : vector<1x256xf32>
    %32 = tpu.matmul %30, %31, %cst_28 {dimension_numbers = #tpu.dot_dimension_numbers<[1], [0], [0], [1], [0, 0, 1, 1], [], []>} : vector<1x128xbf16>, vector<128x256xbf16>, vector<1x256xf32> -> vector<1x256xf32>
    %c0_29 = arith.constant 0 : index
    %c0_30 = arith.constant 0 : index
    %33 = vector.load %arg14[%c0_29, %c0_30] : memref<1x256xf32, #tpu.memory_space<vmem>>, vector<1x256xf32>
    %34 = arith.addf %32, %33 : vector<1x256xf32>
    %cst_31 = arith.constant 0.000000e+00 : f32
    %35 = vector.broadcast %cst_31 : f32 to vector<1x256xf32>
    %36 = arith.maximumf %34, %35 : vector<1x256xf32>
    %37 = arith.truncf %36 : vector<1x256xf32> to vector<1x256xbf16>
    %c0_32 = arith.constant 0 : index
    %c0_33 = arith.constant 0 : index
    %38 = vector.load %arg15[%c0_32, %c0_33] : memref<256x256xbf16, #tpu.memory_space<vmem>>, vector<256x256xbf16>
    %cst_34 = arith.constant dense<0.000000e+00> : vector<1x256xf32>
    %39 = tpu.matmul %37, %38, %cst_34 {dimension_numbers = #tpu.dot_dimension_numbers<[1], [0], [0], [1], [0, 0, 1, 1], [], []>} : vector<1x256xbf16>, vector<256x256xbf16>, vector<1x256xf32> -> vector<1x256xf32>
    %c0_35 = arith.constant 0 : index
    %c0_36 = arith.constant 0 : index
    %40 = vector.load %arg16[%c0_35, %c0_36] : memref<1x256xf32, #tpu.memory_space<vmem>>, vector<1x256xf32>
    %41 = arith.addf %39, %40 : vector<1x256xf32>
    %cst_37 = arith.constant 0.000000e+00 : f32
    %42 = vector.broadcast %cst_37 : f32 to vector<1x256xf32>
    %43 = arith.maximumf %41, %42 : vector<1x256xf32>
    %44 = arith.truncf %43 : vector<1x256xf32> to vector<1x256xbf16>
    %c0_38 = arith.constant 0 : index
    %c0_39 = arith.constant 0 : index
    %45 = vector.load %arg17[%c0_38, %c0_39] : memref<256x256xbf16, #tpu.memory_space<vmem>>, vector<256x256xbf16>
    %cst_40 = arith.constant dense<0.000000e+00> : vector<1x256xf32>
    %46 = tpu.matmul %44, %45, %cst_40 {dimension_numbers = #tpu.dot_dimension_numbers<[1], [0], [0], [1], [0, 0, 1, 1], [], []>} : vector<1x256xbf16>, vector<256x256xbf16>, vector<1x256xf32> -> vector<1x256xf32>
    %c0_41 = arith.constant 0 : index
    %c0_42 = arith.constant 0 : index
    %47 = vector.load %arg18[%c0_41, %c0_42] : memref<1x256xf32, #tpu.memory_space<vmem>>, vector<1x256xf32>
    %48 = arith.addf %46, %47 : vector<1x256xf32>
    %cst_43 = arith.constant 0.000000e+00 : f32
    %49 = vector.broadcast %cst_43 : f32 to vector<1x256xf32>
    %50 = arith.maximumf %48, %49 : vector<1x256xf32>
    %51 = arith.truncf %50 : vector<1x256xf32> to vector<1x256xbf16>
    %c0_44 = arith.constant 0 : index
    %c0_45 = arith.constant 0 : index
    %52 = vector.load %arg19[%c0_44, %c0_45] : memref<256x128xbf16, #tpu.memory_space<vmem>>, vector<256x128xbf16>
    %cst_46 = arith.constant dense<0.000000e+00> : vector<1x128xf32>
    %53 = tpu.matmul %51, %52, %cst_46 {dimension_numbers = #tpu.dot_dimension_numbers<[1], [0], [0], [1], [0, 0, 1, 1], [], []>} : vector<1x256xbf16>, vector<256x128xbf16>, vector<1x128xf32> -> vector<1x128xf32>
    %c0_47 = arith.constant 0 : index
    %c0_48 = arith.constant 0 : index
    %54 = vector.load %arg20[%c0_47, %c0_48] : memref<1x128xf32, #tpu.memory_space<vmem>>, vector<1x128xf32>
    %55 = arith.addf %53, %54 : vector<1x128xf32>
    %cst_49 = arith.constant 0.000000e+00 : f32
    %56 = vector.broadcast %cst_49 : f32 to vector<1x128xf32>
    %57 = arith.maximumf %55, %56 : vector<1x128xf32>
    %c0_50 = arith.constant 0 : index
    %c0_51 = arith.constant 0 : index
    %58 = vector.load %arg2[%c0_50, %c0_51] : memref<67x69xf32, #tpu.memory_space<vmem>>, vector<67x69xf32>
    %59 = tpu.iota {dimensions = array<i32: 0>} : vector<33x67xi32>
    %60 = tpu.iota {dimensions = array<i32: 1>} : vector<33x67xi32>
    %61 = tpu.iota {dimensions = array<i32: 0>} : vector<69x34xi32>
    %62 = tpu.iota {dimensions = array<i32: 1>} : vector<69x34xi32>
    %cst_52 = arith.constant 0.000000e+00 : f32
    %63 = vector.broadcast %cst_52 : f32 to vector<33x34xf32>
    %c2_i32 = arith.constant 2 : i32
    %64 = vector.broadcast %c2_i32 : i32 to vector<33x67xi32>
    %65 = arith.muli %64, %59 : vector<33x67xi32>
    %c0_i32 = arith.constant 0 : i32
    %66 = vector.broadcast %c0_i32 : i32 to vector<33x67xi32>
    %67 = arith.addi %65, %66 : vector<33x67xi32>
    %68 = arith.cmpi eq, %60, %67 : vector<33x67xi32>
    %69 = arith.extui %68 : vector<33x67xi1> to vector<33x67xi32>
    %70 = arith.sitofp %69 : vector<33x67xi32> to vector<33x67xf32>
    %c0_53 = arith.constant 0 : index
    %71 = memref.load %arg3[%c0_53] : memref<9xf32, #tpu.memory_space<smem>>
    %c2_i32_54 = arith.constant 2 : i32
    %72 = vector.broadcast %c2_i32_54 : i32 to vector<69x34xi32>
    %73 = arith.muli %72, %62 : vector<69x34xi32>
    %c0_i32_55 = arith.constant 0 : i32
    %74 = vector.broadcast %c0_i32_55 : i32 to vector<69x34xi32>
    %75 = arith.addi %73, %74 : vector<69x34xi32>
    %76 = arith.cmpi eq, %61, %75 : vector<69x34xi32>
    %77 = arith.extui %76 : vector<69x34xi1> to vector<69x34xi32>
    %78 = arith.sitofp %77 : vector<69x34xi32> to vector<69x34xf32>
    %79 = vector.broadcast %71 : f32 to vector<69x34xf32>
    %80 = arith.mulf %79, %78 : vector<69x34xf32>
    %c1 = arith.constant 1 : index
    %81 = memref.load %arg3[%c1] : memref<9xf32, #tpu.memory_space<smem>>
    %c2_i32_56 = arith.constant 2 : i32
    %82 = vector.broadcast %c2_i32_56 : i32 to vector<69x34xi32>
    %83 = arith.muli %82, %62 : vector<69x34xi32>
    %c1_i32 = arith.constant 1 : i32
    %84 = vector.broadcast %c1_i32 : i32 to vector<69x34xi32>
    %85 = arith.addi %83, %84 : vector<69x34xi32>
    %86 = arith.cmpi eq, %61, %85 : vector<69x34xi32>
    %87 = arith.extui %86 : vector<69x34xi1> to vector<69x34xi32>
    %88 = arith.sitofp %87 : vector<69x34xi32> to vector<69x34xf32>
    %89 = vector.broadcast %81 : f32 to vector<69x34xf32>
    %90 = arith.mulf %89, %88 : vector<69x34xf32>
    %91 = arith.addf %80, %90 : vector<69x34xf32>
    %c2 = arith.constant 2 : index
    %92 = memref.load %arg3[%c2] : memref<9xf32, #tpu.memory_space<smem>>
    %c2_i32_57 = arith.constant 2 : i32
    %93 = vector.broadcast %c2_i32_57 : i32 to vector<69x34xi32>
    %94 = arith.muli %93, %62 : vector<69x34xi32>
    %c2_i32_58 = arith.constant 2 : i32
    %95 = vector.broadcast %c2_i32_58 : i32 to vector<69x34xi32>
    %96 = arith.addi %94, %95 : vector<69x34xi32>
    %97 = arith.cmpi eq, %61, %96 : vector<69x34xi32>
    %98 = arith.extui %97 : vector<69x34xi1> to vector<69x34xi32>
    %99 = arith.sitofp %98 : vector<69x34xi32> to vector<69x34xf32>
    %100 = vector.broadcast %92 : f32 to vector<69x34xf32>
    %101 = arith.mulf %100, %99 : vector<69x34xf32>
    %102 = arith.addf %91, %101 : vector<69x34xf32>
    %cst_59 = arith.constant dense<0.000000e+00> : vector<33x69xf32>
    %103 = tpu.matmul %70, %58, %cst_59 {dimension_numbers = #tpu.dot_dimension_numbers<[1], [0], [0], [1], [0, 0, 1, 1], [], []>} : vector<33x67xf32>, vector<67x69xf32>, vector<33x69xf32> -> vector<33x69xf32>
    %cst_60 = arith.constant dense<0.000000e+00> : vector<33x34xf32>
    %104 = tpu.matmul %103, %102, %cst_60 {dimension_numbers = #tpu.dot_dimension_numbers<[1], [0], [0], [1], [0, 0, 1, 1], [], []>} : vector<33x69xf32>, vector<69x34xf32>, vector<33x34xf32> -> vector<33x34xf32>
    %105 = arith.addf %63, %104 : vector<33x34xf32>
    %c2_i32_61 = arith.constant 2 : i32
    %106 = vector.broadcast %c2_i32_61 : i32 to vector<33x67xi32>
    %107 = arith.muli %106, %59 : vector<33x67xi32>
    %c1_i32_62 = arith.constant 1 : i32
    %108 = vector.broadcast %c1_i32_62 : i32 to vector<33x67xi32>
    %109 = arith.addi %107, %108 : vector<33x67xi32>
    %110 = arith.cmpi eq, %60, %109 : vector<33x67xi32>
    %111 = arith.extui %110 : vector<33x67xi1> to vector<33x67xi32>
    %112 = arith.sitofp %111 : vector<33x67xi32> to vector<33x67xf32>
    %c3 = arith.constant 3 : index
    %113 = memref.load %arg3[%c3] : memref<9xf32, #tpu.memory_space<smem>>
    %c2_i32_63 = arith.constant 2 : i32
    %114 = vector.broadcast %c2_i32_63 : i32 to vector<69x34xi32>
    %115 = arith.muli %114, %62 : vector<69x34xi32>
    %c0_i32_64 = arith.constant 0 : i32
    %116 = vector.broadcast %c0_i32_64 : i32 to vector<69x34xi32>
    %117 = arith.addi %115, %116 : vector<69x34xi32>
    %118 = arith.cmpi eq, %61, %117 : vector<69x34xi32>
    %119 = arith.extui %118 : vector<69x34xi1> to vector<69x34xi32>
    %120 = arith.sitofp %119 : vector<69x34xi32> to vector<69x34xf32>
    %121 = vector.broadcast %113 : f32 to vector<69x34xf32>
    %122 = arith.mulf %121, %120 : vector<69x34xf32>
    %c4 = arith.constant 4 : index
    %123 = memref.load %arg3[%c4] : memref<9xf32, #tpu.memory_space<smem>>
    %c2_i32_65 = arith.constant 2 : i32
    %124 = vector.broadcast %c2_i32_65 : i32 to vector<69x34xi32>
    %125 = arith.muli %124, %62 : vector<69x34xi32>
    %c1_i32_66 = arith.constant 1 : i32
    %126 = vector.broadcast %c1_i32_66 : i32 to vector<69x34xi32>
    %127 = arith.addi %125, %126 : vector<69x34xi32>
    %128 = arith.cmpi eq, %61, %127 : vector<69x34xi32>
    %129 = arith.extui %128 : vector<69x34xi1> to vector<69x34xi32>
    %130 = arith.sitofp %129 : vector<69x34xi32> to vector<69x34xf32>
    %131 = vector.broadcast %123 : f32 to vector<69x34xf32>
    %132 = arith.mulf %131, %130 : vector<69x34xf32>
    %133 = arith.addf %122, %132 : vector<69x34xf32>
    %c5 = arith.constant 5 : index
    %134 = memref.load %arg3[%c5] : memref<9xf32, #tpu.memory_space<smem>>
    %c2_i32_67 = arith.constant 2 : i32
    %135 = vector.broadcast %c2_i32_67 : i32 to vector<69x34xi32>
    %136 = arith.muli %135, %62 : vector<69x34xi32>
    %c2_i32_68 = arith.constant 2 : i32
    %137 = vector.broadcast %c2_i32_68 : i32 to vector<69x34xi32>
    %138 = arith.addi %136, %137 : vector<69x34xi32>
    %139 = arith.cmpi eq, %61, %138 : vector<69x34xi32>
    %140 = arith.extui %139 : vector<69x34xi1> to vector<69x34xi32>
    %141 = arith.sitofp %140 : vector<69x34xi32> to vector<69x34xf32>
    %142 = vector.broadcast %134 : f32 to vector<69x34xf32>
    %143 = arith.mulf %142, %141 : vector<69x34xf32>
    %144 = arith.addf %133, %143 : vector<69x34xf32>
    %cst_69 = arith.constant dense<0.000000e+00> : vector<33x69xf32>
    %145 = tpu.matmul %112, %58, %cst_69 {dimension_numbers = #tpu.dot_dimension_numbers<[1], [0], [0], [1], [0, 0, 1, 1], [], []>} : vector<33x67xf32>, vector<67x69xf32>, vector<33x69xf32> -> vector<33x69xf32>
    %cst_70 = arith.constant dense<0.000000e+00> : vector<33x34xf32>
    %146 = tpu.matmul %145, %144, %cst_70 {dimension_numbers = #tpu.dot_dimension_numbers<[1], [0], [0], [1], [0, 0, 1, 1], [], []>} : vector<33x69xf32>, vector<69x34xf32>, vector<33x34xf32> -> vector<33x34xf32>
    %147 = arith.addf %105, %146 : vector<33x34xf32>
    %c2_i32_71 = arith.constant 2 : i32
    %148 = vector.broadcast %c2_i32_71 : i32 to vector<33x67xi32>
    %149 = arith.muli %148, %59 : vector<33x67xi32>
    %c2_i32_72 = arith.constant 2 : i32
    %150 = vector.broadcast %c2_i32_72 : i32 to vector<33x67xi32>
    %151 = arith.addi %149, %150 : vector<33x67xi32>
    %152 = arith.cmpi eq, %60, %151 : vector<33x67xi32>
    %153 = arith.extui %152 : vector<33x67xi1> to vector<33x67xi32>
    %154 = arith.sitofp %153 : vector<33x67xi32> to vector<33x67xf32>
    %c6 = arith.constant 6 : index
    %155 = memref.load %arg3[%c6] : memref<9xf32, #tpu.memory_space<smem>>
    %c2_i32_73 = arith.constant 2 : i32
    %156 = vector.broadcast %c2_i32_73 : i32 to vector<69x34xi32>
    %157 = arith.muli %156, %62 : vector<69x34xi32>
    %c0_i32_74 = arith.constant 0 : i32
    %158 = vector.broadcast %c0_i32_74 : i32 to vector<69x34xi32>
    %159 = arith.addi %157, %158 : vector<69x34xi32>
    %160 = arith.cmpi eq, %61, %159 : vector<69x34xi32>
    %161 = arith.extui %160 : vector<69x34xi1> to vector<69x34xi32>
    %162 = arith.sitofp %161 : vector<69x34xi32> to vector<69x34xf32>
    %163 = vector.broadcast %155 : f32 to vector<69x34xf32>
    %164 = arith.mulf %163, %162 : vector<69x34xf32>
    %c7 = arith.constant 7 : index
    %165 = memref.load %arg3[%c7] : memref<9xf32, #tpu.memory_space<smem>>
    %c2_i32_75 = arith.constant 2 : i32
    %166 = vector.broadcast %c2_i32_75 : i32 to vector<69x34xi32>
    %167 = arith.muli %166, %62 : vector<69x34xi32>
    %c1_i32_76 = arith.constant 1 : i32
    %168 = vector.broadcast %c1_i32_76 : i32 to vector<69x34xi32>
    %169 = arith.addi %167, %168 : vector<69x34xi32>
    %170 = arith.cmpi eq, %61, %169 : vector<69x34xi32>
    %171 = arith.extui %170 : vector<69x34xi1> to vector<69x34xi32>
    %172 = arith.sitofp %171 : vector<69x34xi32> to vector<69x34xf32>
    %173 = vector.broadcast %165 : f32 to vector<69x34xf32>
    %174 = arith.mulf %173, %172 : vector<69x34xf32>
    %175 = arith.addf %164, %174 : vector<69x34xf32>
    %c8 = arith.constant 8 : index
    %176 = memref.load %arg3[%c8] : memref<9xf32, #tpu.memory_space<smem>>
    %c2_i32_77 = arith.constant 2 : i32
    %177 = vector.broadcast %c2_i32_77 : i32 to vector<69x34xi32>
    %178 = arith.muli %177, %62 : vector<69x34xi32>
    %c2_i32_78 = arith.constant 2 : i32
    %179 = vector.broadcast %c2_i32_78 : i32 to vector<69x34xi32>
    %180 = arith.addi %178, %179 : vector<69x34xi32>
    %181 = arith.cmpi eq, %61, %180 : vector<69x34xi32>
    %182 = arith.extui %181 : vector<69x34xi1> to vector<69x34xi32>
    %183 = arith.sitofp %182 : vector<69x34xi32> to vector<69x34xf32>
    %184 = vector.broadcast %176 : f32 to vector<69x34xf32>
    %185 = arith.mulf %184, %183 : vector<69x34xf32>
    %186 = arith.addf %175, %185 : vector<69x34xf32>
    %cst_79 = arith.constant dense<0.000000e+00> : vector<33x69xf32>
    %187 = tpu.matmul %154, %58, %cst_79 {dimension_numbers = #tpu.dot_dimension_numbers<[1], [0], [0], [1], [0, 0, 1, 1], [], []>} : vector<33x67xf32>, vector<67x69xf32>, vector<33x69xf32> -> vector<33x69xf32>
    %cst_80 = arith.constant dense<0.000000e+00> : vector<33x34xf32>
    %188 = tpu.matmul %187, %186, %cst_80 {dimension_numbers = #tpu.dot_dimension_numbers<[1], [0], [0], [1], [0, 0, 1, 1], [], []>} : vector<33x69xf32>, vector<69x34xf32>, vector<33x34xf32> -> vector<33x34xf32>
    %189 = arith.addf %147, %188 : vector<33x34xf32>
    %c0_81 = arith.constant 0 : index
    %190 = memref.load %arg4[%c0_81] : memref<3xf32, #tpu.memory_space<smem>>
    %191 = vector.broadcast %190 : f32 to vector<33x34xf32>
    %192 = arith.addf %189, %191 : vector<33x34xf32>
    %193 = vector.shape_cast %192 : vector<33x34xf32> to vector<1x33x34xf32>
    %cst_82 = arith.constant dense<0.000000e+00> : vector<1xf32>
    %194 = vector.multi_reduction <add>, %193, %cst_82 [1, 2] : vector<1x33x34xf32> to vector<1xf32>
    %195 = vector.shape_cast %194 : vector<1xf32> to vector<1x1x1xf32>
    %196 = vector.extract %195[0, 0, 0] : f32 from vector<1x1x1xf32>
    %197 = arith.mulf %192, %192 : vector<33x34xf32>
    %198 = vector.shape_cast %197 : vector<33x34xf32> to vector<1x33x34xf32>
    %cst_83 = arith.constant dense<0.000000e+00> : vector<1xf32>
    %199 = vector.multi_reduction <add>, %198, %cst_83 [1, 2] : vector<1x33x34xf32> to vector<1xf32>
    %200 = vector.shape_cast %199 : vector<1xf32> to vector<1x1x1xf32>
    %201 = vector.extract %200[0, 0, 0] : f32 from vector<1x1x1xf32>
    %cst_84 = arith.constant 1.122000e+03 : f32
    %202 = arith.divf %196, %cst_84 : f32
    %cst_85 = arith.constant 1.122000e+03 : f32
    %203 = arith.divf %201, %cst_85 : f32
    %204 = arith.mulf %202, %202 : f32
    %205 = arith.subf %203, %204 : f32
    %cst_86 = arith.constant 0.000000e+00 : f32
    %206 = arith.maximumf %205, %cst_86 : f32
    %c1_87 = arith.constant 1 : index
    %207 = memref.load %arg4[%c1_87] : memref<3xf32, #tpu.memory_space<smem>>
    %208 = vector.broadcast %202 : f32 to vector<33x34xf32>
    %209 = arith.subf %192, %208 : vector<33x34xf32>
    %210 = vector.broadcast %207 : f32 to vector<33x34xf32>
    %211 = arith.mulf %210, %209 : vector<33x34xf32>
    %cst_88 = arith.constant 9.99999974E-6 : f32
    %212 = arith.addf %206, %cst_88 : f32
    %213 = math.rsqrt %212 : f32
    %214 = vector.broadcast %213 : f32 to vector<33x34xf32>
    %215 = arith.mulf %211, %214 : vector<33x34xf32>
    %c2_89 = arith.constant 2 : index
    %216 = memref.load %arg4[%c2_89] : memref<3xf32, #tpu.memory_space<smem>>
    %217 = vector.broadcast %216 : f32 to vector<33x34xf32>
    %218 = arith.addf %215, %217 : vector<33x34xf32>
    %cst_90 = arith.constant 0.000000e+00 : f32
    %219 = vector.broadcast %cst_90 : f32 to vector<33x34xf32>
    %220 = arith.maximumf %218, %219 : vector<33x34xf32>
    %221 = arith.truncf %28 : vector<1x128xf32> to vector<1x128xbf16>
    %c0_91 = arith.constant 0 : index
    %c0_92 = arith.constant 0 : index
    %222 = vector.load %arg21[%c0_91, %c0_92] : memref<128x256xbf16, #tpu.memory_space<vmem>>, vector<128x256xbf16>
    %cst_93 = arith.constant dense<0.000000e+00> : vector<1x256xf32>
    %223 = tpu.matmul %221, %222, %cst_93 {dimension_numbers = #tpu.dot_dimension_numbers<[1], [0], [0], [1], [0, 0, 1, 1], [], []>} : vector<1x128xbf16>, vector<128x256xbf16>, vector<1x256xf32> -> vector<1x256xf32>
    %224 = arith.truncf %57 : vector<1x128xf32> to vector<1x128xbf16>
    %c0_94 = arith.constant 0 : index
    %c0_95 = arith.constant 0 : index
    %225 = vector.load %arg22[%c0_94, %c0_95] : memref<128x256xbf16, #tpu.memory_space<vmem>>, vector<128x256xbf16>
    %cst_96 = arith.constant dense<0.000000e+00> : vector<1x256xf32>
    %226 = tpu.matmul %224, %225, %cst_96 {dimension_numbers = #tpu.dot_dimension_numbers<[1], [0], [0], [1], [0, 0, 1, 1], [], []>} : vector<1x128xbf16>, vector<128x256xbf16>, vector<1x256xf32> -> vector<1x256xf32>
    %227 = arith.addf %223, %226 : vector<1x256xf32>
    %c0_97 = arith.constant 0 : index
    %c0_98 = arith.constant 0 : index
    %228 = vector.load %arg24[%c0_97, %c0_98] : memref<1x256xf32, #tpu.memory_space<vmem>>, vector<1x256xf32>
    %229 = arith.addf %227, %228 : vector<1x256xf32>
    %230 = vector.extract_strided_slice %220 {offsets = [0, 0], sizes = [1, 34], strides = [1, 1]} : vector<33x34xf32> to vector<1x34xf32>
    %231 = arith.truncf %230 : vector<1x34xf32> to vector<1x34xbf16>
    %c0_99 = arith.constant 0 : index
    %c0_100 = arith.constant 0 : index
    %c0_101 = arith.constant 0 : index
    %232 = vector.load %arg23[%c0_99, %c0_100, %c0_101] : memref<33x34x256xbf16, #tpu.memory_space<vmem>>, vector<1x34x256xbf16>
    %233 = vector.shape_cast %232 : vector<1x34x256xbf16> to vector<34x256xbf16>
    %cst_102 = arith.constant dense<0.000000e+00> : vector<1x256xf32>
    %234 = tpu.matmul %231, %233, %cst_102 {dimension_numbers = #tpu.dot_dimension_numbers<[1], [0], [0], [1], [0, 0, 1, 1], [], []>} : vector<1x34xbf16>, vector<34x256xbf16>, vector<1x256xf32> -> vector<1x256xf32>
    %235 = arith.addf %229, %234 : vector<1x256xf32>
    %236 = vector.extract_strided_slice %220 {offsets = [1, 0], sizes = [1, 34], strides = [1, 1]} : vector<33x34xf32> to vector<1x34xf32>
    %237 = arith.truncf %236 : vector<1x34xf32> to vector<1x34xbf16>
    %c1_103 = arith.constant 1 : index
    %c0_104 = arith.constant 0 : index
    %c0_105 = arith.constant 0 : index
    %238 = vector.load %arg23[%c1_103, %c0_104, %c0_105] : memref<33x34x256xbf16, #tpu.memory_space<vmem>>, vector<1x34x256xbf16>
    %239 = vector.shape_cast %238 : vector<1x34x256xbf16> to vector<34x256xbf16>
    %cst_106 = arith.constant dense<0.000000e+00> : vector<1x256xf32>
    %240 = tpu.matmul %237, %239, %cst_106 {dimension_numbers = #tpu.dot_dimension_numbers<[1], [0], [0], [1], [0, 0, 1, 1], [], []>} : vector<1x34xbf16>, vector<34x256xbf16>, vector<1x256xf32> -> vector<1x256xf32>
    %241 = arith.addf %235, %240 : vector<1x256xf32>
    %242 = vector.extract_strided_slice %220 {offsets = [2, 0], sizes = [1, 34], strides = [1, 1]} : vector<33x34xf32> to vector<1x34xf32>
    %243 = arith.truncf %242 : vector<1x34xf32> to vector<1x34xbf16>
    %c2_107 = arith.constant 2 : index
    %c0_108 = arith.constant 0 : index
    %c0_109 = arith.constant 0 : index
    %244 = vector.load %arg23[%c2_107, %c0_108, %c0_109] : memref<33x34x256xbf16, #tpu.memory_space<vmem>>, vector<1x34x256xbf16>
    %245 = vector.shape_cast %244 : vector<1x34x256xbf16> to vector<34x256xbf16>
    %cst_110 = arith.constant dense<0.000000e+00> : vector<1x256xf32>
    %246 = tpu.matmul %243, %245, %cst_110 {dimension_numbers = #tpu.dot_dimension_numbers<[1], [0], [0], [1], [0, 0, 1, 1], [], []>} : vector<1x34xbf16>, vector<34x256xbf16>, vector<1x256xf32> -> vector<1x256xf32>
    %247 = arith.addf %241, %246 : vector<1x256xf32>
    %248 = vector.extract_strided_slice %220 {offsets = [3, 0], sizes = [1, 34], strides = [1, 1]} : vector<33x34xf32> to vector<1x34xf32>
    %249 = arith.truncf %248 : vector<1x34xf32> to vector<1x34xbf16>
    %c3_111 = arith.constant 3 : index
    %c0_112 = arith.constant 0 : index
    %c0_113 = arith.constant 0 : index
    %250 = vector.load %arg23[%c3_111, %c0_112, %c0_113] : memref<33x34x256xbf16, #tpu.memory_space<vmem>>, vector<1x34x256xbf16>
    %251 = vector.shape_cast %250 : vector<1x34x256xbf16> to vector<34x256xbf16>
    %cst_114 = arith.constant dense<0.000000e+00> : vector<1x256xf32>
    %252 = tpu.matmul %249, %251, %cst_114 {dimension_numbers = #tpu.dot_dimension_numbers<[1], [0], [0], [1], [0, 0, 1, 1], [], []>} : vector<1x34xbf16>, vector<34x256xbf16>, vector<1x256xf32> -> vector<1x256xf32>
    %253 = arith.addf %247, %252 : vector<1x256xf32>
    %254 = vector.extract_strided_slice %220 {offsets = [4, 0], sizes = [1, 34], strides = [1, 1]} : vector<33x34xf32> to vector<1x34xf32>
    %255 = arith.truncf %254 : vector<1x34xf32> to vector<1x34xbf16>
    %c4_115 = arith.constant 4 : index
    %c0_116 = arith.constant 0 : index
    %c0_117 = arith.constant 0 : index
    %256 = vector.load %arg23[%c4_115, %c0_116, %c0_117] : memref<33x34x256xbf16, #tpu.memory_space<vmem>>, vector<1x34x256xbf16>
    %257 = vector.shape_cast %256 : vector<1x34x256xbf16> to vector<34x256xbf16>
    %cst_118 = arith.constant dense<0.000000e+00> : vector<1x256xf32>
    %258 = tpu.matmul %255, %257, %cst_118 {dimension_numbers = #tpu.dot_dimension_numbers<[1], [0], [0], [1], [0, 0, 1, 1], [], []>} : vector<1x34xbf16>, vector<34x256xbf16>, vector<1x256xf32> -> vector<1x256xf32>
    %259 = arith.addf %253, %258 : vector<1x256xf32>
    %260 = vector.extract_strided_slice %220 {offsets = [5, 0], sizes = [1, 34], strides = [1, 1]} : vector<33x34xf32> to vector<1x34xf32>
    %261 = arith.truncf %260 : vector<1x34xf32> to vector<1x34xbf16>
    %c5_119 = arith.constant 5 : index
    %c0_120 = arith.constant 0 : index
    %c0_121 = arith.constant 0 : index
    %262 = vector.load %arg23[%c5_119, %c0_120, %c0_121] : memref<33x34x256xbf16, #tpu.memory_space<vmem>>, vector<1x34x256xbf16>
    %263 = vector.shape_cast %262 : vector<1x34x256xbf16> to vector<34x256xbf16>
    %cst_122 = arith.constant dense<0.000000e+00> : vector<1x256xf32>
    %264 = tpu.matmul %261, %263, %cst_122 {dimension_numbers = #tpu.dot_dimension_numbers<[1], [0], [0], [1], [0, 0, 1, 1], [], []>} : vector<1x34xbf16>, vector<34x256xbf16>, vector<1x256xf32> -> vector<1x256xf32>
    %265 = arith.addf %259, %264 : vector<1x256xf32>
    %266 = vector.extract_strided_slice %220 {offsets = [6, 0], sizes = [1, 34], strides = [1, 1]} : vector<33x34xf32> to vector<1x34xf32>
    %267 = arith.truncf %266 : vector<1x34xf32> to vector<1x34xbf16>
    %c6_123 = arith.constant 6 : index
    %c0_124 = arith.constant 0 : index
    %c0_125 = arith.constant 0 : index
    %268 = vector.load %arg23[%c6_123, %c0_124, %c0_125] : memref<33x34x256xbf16, #tpu.memory_space<vmem>>, vector<1x34x256xbf16>
    %269 = vector.shape_cast %268 : vector<1x34x256xbf16> to vector<34x256xbf16>
    %cst_126 = arith.constant dense<0.000000e+00> : vector<1x256xf32>
    %270 = tpu.matmul %267, %269, %cst_126 {dimension_numbers = #tpu.dot_dimension_numbers<[1], [0], [0], [1], [0, 0, 1, 1], [], []>} : vector<1x34xbf16>, vector<34x256xbf16>, vector<1x256xf32> -> vector<1x256xf32>
    %271 = arith.addf %265, %270 : vector<1x256xf32>
    %272 = vector.extract_strided_slice %220 {offsets = [7, 0], sizes = [1, 34], strides = [1, 1]} : vector<33x34xf32> to vector<1x34xf32>
    %273 = arith.truncf %272 : vector<1x34xf32> to vector<1x34xbf16>
    %c7_127 = arith.constant 7 : index
    %c0_128 = arith.constant 0 : index
    %c0_129 = arith.constant 0 : index
    %274 = vector.load %arg23[%c7_127, %c0_128, %c0_129] : memref<33x34x256xbf16, #tpu.memory_space<vmem>>, vector<1x34x256xbf16>
    %275 = vector.shape_cast %274 : vector<1x34x256xbf16> to vector<34x256xbf16>
    %cst_130 = arith.constant dense<0.000000e+00> : vector<1x256xf32>
    %276 = tpu.matmul %273, %275, %cst_130 {dimension_numbers = #tpu.dot_dimension_numbers<[1], [0], [0], [1], [0, 0, 1, 1], [], []>} : vector<1x34xbf16>, vector<34x256xbf16>, vector<1x256xf32> -> vector<1x256xf32>
    %277 = arith.addf %271, %276 : vector<1x256xf32>
    %278 = vector.extract_strided_slice %220 {offsets = [8, 0], sizes = [1, 34], strides = [1, 1]} : vector<33x34xf32> to vector<1x34xf32>
    %279 = arith.truncf %278 : vector<1x34xf32> to vector<1x34xbf16>
    %c8_131 = arith.constant 8 : index
    %c0_132 = arith.constant 0 : index
    %c0_133 = arith.constant 0 : index
    %280 = vector.load %arg23[%c8_131, %c0_132, %c0_133] : memref<33x34x256xbf16, #tpu.memory_space<vmem>>, vector<1x34x256xbf16>
    %281 = vector.shape_cast %280 : vector<1x34x256xbf16> to vector<34x256xbf16>
    %cst_134 = arith.constant dense<0.000000e+00> : vector<1x256xf32>
    %282 = tpu.matmul %279, %281, %cst_134 {dimension_numbers = #tpu.dot_dimension_numbers<[1], [0], [0], [1], [0, 0, 1, 1], [], []>} : vector<1x34xbf16>, vector<34x256xbf16>, vector<1x256xf32> -> vector<1x256xf32>
    %283 = arith.addf %277, %282 : vector<1x256xf32>
    %284 = vector.extract_strided_slice %220 {offsets = [9, 0], sizes = [1, 34], strides = [1, 1]} : vector<33x34xf32> to vector<1x34xf32>
    %285 = arith.truncf %284 : vector<1x34xf32> to vector<1x34xbf16>
    %c9 = arith.constant 9 : index
    %c0_135 = arith.constant 0 : index
    %c0_136 = arith.constant 0 : index
    %286 = vector.load %arg23[%c9, %c0_135, %c0_136] : memref<33x34x256xbf16, #tpu.memory_space<vmem>>, vector<1x34x256xbf16>
    %287 = vector.shape_cast %286 : vector<1x34x256xbf16> to vector<34x256xbf16>
    %cst_137 = arith.constant dense<0.000000e+00> : vector<1x256xf32>
    %288 = tpu.matmul %285, %287, %cst_137 {dimension_numbers = #tpu.dot_dimension_numbers<[1], [0], [0], [1], [0, 0, 1, 1], [], []>} : vector<1x34xbf16>, vector<34x256xbf16>, vector<1x256xf32> -> vector<1x256xf32>
    %289 = arith.addf %283, %288 : vector<1x256xf32>
    %290 = vector.extract_strided_slice %220 {offsets = [10, 0], sizes = [1, 34], strides = [1, 1]} : vector<33x34xf32> to vector<1x34xf32>
    %291 = arith.truncf %290 : vector<1x34xf32> to vector<1x34xbf16>
    %c10 = arith.constant 10 : index
    %c0_138 = arith.constant 0 : index
    %c0_139 = arith.constant 0 : index
    %292 = vector.load %arg23[%c10, %c0_138, %c0_139] : memref<33x34x256xbf16, #tpu.memory_space<vmem>>, vector<1x34x256xbf16>
    %293 = vector.shape_cast %292 : vector<1x34x256xbf16> to vector<34x256xbf16>
    %cst_140 = arith.constant dense<0.000000e+00> : vector<1x256xf32>
    %294 = tpu.matmul %291, %293, %cst_140 {dimension_numbers = #tpu.dot_dimension_numbers<[1], [0], [0], [1], [0, 0, 1, 1], [], []>} : vector<1x34xbf16>, vector<34x256xbf16>, vector<1x256xf32> -> vector<1x256xf32>
    %295 = arith.addf %289, %294 : vector<1x256xf32>
    %296 = vector.extract_strided_slice %220 {offsets = [11, 0], sizes = [1, 34], strides = [1, 1]} : vector<33x34xf32> to vector<1x34xf32>
    %297 = arith.truncf %296 : vector<1x34xf32> to vector<1x34xbf16>
    %c11 = arith.constant 11 : index
    %c0_141 = arith.constant 0 : index
    %c0_142 = arith.constant 0 : index
    %298 = vector.load %arg23[%c11, %c0_141, %c0_142] : memref<33x34x256xbf16, #tpu.memory_space<vmem>>, vector<1x34x256xbf16>
    %299 = vector.shape_cast %298 : vector<1x34x256xbf16> to vector<34x256xbf16>
    %cst_143 = arith.constant dense<0.000000e+00> : vector<1x256xf32>
    %300 = tpu.matmul %297, %299, %cst_143 {dimension_numbers = #tpu.dot_dimension_numbers<[1], [0], [0], [1], [0, 0, 1, 1], [], []>} : vector<1x34xbf16>, vector<34x256xbf16>, vector<1x256xf32> -> vector<1x256xf32>
    %301 = arith.addf %295, %300 : vector<1x256xf32>
    %302 = vector.extract_strided_slice %220 {offsets = [12, 0], sizes = [1, 34], strides = [1, 1]} : vector<33x34xf32> to vector<1x34xf32>
    %303 = arith.truncf %302 : vector<1x34xf32> to vector<1x34xbf16>
    %c12 = arith.constant 12 : index
    %c0_144 = arith.constant 0 : index
    %c0_145 = arith.constant 0 : index
    %304 = vector.load %arg23[%c12, %c0_144, %c0_145] : memref<33x34x256xbf16, #tpu.memory_space<vmem>>, vector<1x34x256xbf16>
    %305 = vector.shape_cast %304 : vector<1x34x256xbf16> to vector<34x256xbf16>
    %cst_146 = arith.constant dense<0.000000e+00> : vector<1x256xf32>
    %306 = tpu.matmul %303, %305, %cst_146 {dimension_numbers = #tpu.dot_dimension_numbers<[1], [0], [0], [1], [0, 0, 1, 1], [], []>} : vector<1x34xbf16>, vector<34x256xbf16>, vector<1x256xf32> -> vector<1x256xf32>
    %307 = arith.addf %301, %306 : vector<1x256xf32>
    %308 = vector.extract_strided_slice %220 {offsets = [13, 0], sizes = [1, 34], strides = [1, 1]} : vector<33x34xf32> to vector<1x34xf32>
    %309 = arith.truncf %308 : vector<1x34xf32> to vector<1x34xbf16>
    %c13 = arith.constant 13 : index
    %c0_147 = arith.constant 0 : index
    %c0_148 = arith.constant 0 : index
    %310 = vector.load %arg23[%c13, %c0_147, %c0_148] : memref<33x34x256xbf16, #tpu.memory_space<vmem>>, vector<1x34x256xbf16>
    %311 = vector.shape_cast %310 : vector<1x34x256xbf16> to vector<34x256xbf16>
    %cst_149 = arith.constant dense<0.000000e+00> : vector<1x256xf32>
    %312 = tpu.matmul %309, %311, %cst_149 {dimension_numbers = #tpu.dot_dimension_numbers<[1], [0], [0], [1], [0, 0, 1, 1], [], []>} : vector<1x34xbf16>, vector<34x256xbf16>, vector<1x256xf32> -> vector<1x256xf32>
    %313 = arith.addf %307, %312 : vector<1x256xf32>
    %314 = vector.extract_strided_slice %220 {offsets = [14, 0], sizes = [1, 34], strides = [1, 1]} : vector<33x34xf32> to vector<1x34xf32>
    %315 = arith.truncf %314 : vector<1x34xf32> to vector<1x34xbf16>
    %c14 = arith.constant 14 : index
    %c0_150 = arith.constant 0 : index
    %c0_151 = arith.constant 0 : index
    %316 = vector.load %arg23[%c14, %c0_150, %c0_151] : memref<33x34x256xbf16, #tpu.memory_space<vmem>>, vector<1x34x256xbf16>
    %317 = vector.shape_cast %316 : vector<1x34x256xbf16> to vector<34x256xbf16>
    %cst_152 = arith.constant dense<0.000000e+00> : vector<1x256xf32>
    %318 = tpu.matmul %315, %317, %cst_152 {dimension_numbers = #tpu.dot_dimension_numbers<[1], [0], [0], [1], [0, 0, 1, 1], [], []>} : vector<1x34xbf16>, vector<34x256xbf16>, vector<1x256xf32> -> vector<1x256xf32>
    %319 = arith.addf %313, %318 : vector<1x256xf32>
    %320 = vector.extract_strided_slice %220 {offsets = [15, 0], sizes = [1, 34], strides = [1, 1]} : vector<33x34xf32> to vector<1x34xf32>
    %321 = arith.truncf %320 : vector<1x34xf32> to vector<1x34xbf16>
    %c15 = arith.constant 15 : index
    %c0_153 = arith.constant 0 : index
    %c0_154 = arith.constant 0 : index
    %322 = vector.load %arg23[%c15, %c0_153, %c0_154] : memref<33x34x256xbf16, #tpu.memory_space<vmem>>, vector<1x34x256xbf16>
    %323 = vector.shape_cast %322 : vector<1x34x256xbf16> to vector<34x256xbf16>
    %cst_155 = arith.constant dense<0.000000e+00> : vector<1x256xf32>
    %324 = tpu.matmul %321, %323, %cst_155 {dimension_numbers = #tpu.dot_dimension_numbers<[1], [0], [0], [1], [0, 0, 1, 1], [], []>} : vector<1x34xbf16>, vector<34x256xbf16>, vector<1x256xf32> -> vector<1x256xf32>
    %325 = arith.addf %319, %324 : vector<1x256xf32>
    %326 = vector.extract_strided_slice %220 {offsets = [16, 0], sizes = [1, 34], strides = [1, 1]} : vector<33x34xf32> to vector<1x34xf32>
    %327 = arith.truncf %326 : vector<1x34xf32> to vector<1x34xbf16>
    %c16 = arith.constant 16 : index
    %c0_156 = arith.constant 0 : index
    %c0_157 = arith.constant 0 : index
    %328 = vector.load %arg23[%c16, %c0_156, %c0_157] : memref<33x34x256xbf16, #tpu.memory_space<vmem>>, vector<1x34x256xbf16>
    %329 = vector.shape_cast %328 : vector<1x34x256xbf16> to vector<34x256xbf16>
    %cst_158 = arith.constant dense<0.000000e+00> : vector<1x256xf32>
    %330 = tpu.matmul %327, %329, %cst_158 {dimension_numbers = #tpu.dot_dimension_numbers<[1], [0], [0], [1], [0, 0, 1, 1], [], []>} : vector<1x34xbf16>, vector<34x256xbf16>, vector<1x256xf32> -> vector<1x256xf32>
    %331 = arith.addf %325, %330 : vector<1x256xf32>
    %332 = vector.extract_strided_slice %220 {offsets = [17, 0], sizes = [1, 34], strides = [1, 1]} : vector<33x34xf32> to vector<1x34xf32>
    %333 = arith.truncf %332 : vector<1x34xf32> to vector<1x34xbf16>
    %c17 = arith.constant 17 : index
    %c0_159 = arith.constant 0 : index
    %c0_160 = arith.constant 0 : index
    %334 = vector.load %arg23[%c17, %c0_159, %c0_160] : memref<33x34x256xbf16, #tpu.memory_space<vmem>>, vector<1x34x256xbf16>
    %335 = vector.shape_cast %334 : vector<1x34x256xbf16> to vector<34x256xbf16>
    %cst_161 = arith.constant dense<0.000000e+00> : vector<1x256xf32>
    %336 = tpu.matmul %333, %335, %cst_161 {dimension_numbers = #tpu.dot_dimension_numbers<[1], [0], [0], [1], [0, 0, 1, 1], [], []>} : vector<1x34xbf16>, vector<34x256xbf16>, vector<1x256xf32> -> vector<1x256xf32>
    %337 = arith.addf %331, %336 : vector<1x256xf32>
    %338 = vector.extract_strided_slice %220 {offsets = [18, 0], sizes = [1, 34], strides = [1, 1]} : vector<33x34xf32> to vector<1x34xf32>
    %339 = arith.truncf %338 : vector<1x34xf32> to vector<1x34xbf16>
    %c18 = arith.constant 18 : index
    %c0_162 = arith.constant 0 : index
    %c0_163 = arith.constant 0 : index
    %340 = vector.load %arg23[%c18, %c0_162, %c0_163] : memref<33x34x256xbf16, #tpu.memory_space<vmem>>, vector<1x34x256xbf16>
    %341 = vector.shape_cast %340 : vector<1x34x256xbf16> to vector<34x256xbf16>
    %cst_164 = arith.constant dense<0.000000e+00> : vector<1x256xf32>
    %342 = tpu.matmul %339, %341, %cst_164 {dimension_numbers = #tpu.dot_dimension_numbers<[1], [0], [0], [1], [0, 0, 1, 1], [], []>} : vector<1x34xbf16>, vector<34x256xbf16>, vector<1x256xf32> -> vector<1x256xf32>
    %343 = arith.addf %337, %342 : vector<1x256xf32>
    %344 = vector.extract_strided_slice %220 {offsets = [19, 0], sizes = [1, 34], strides = [1, 1]} : vector<33x34xf32> to vector<1x34xf32>
    %345 = arith.truncf %344 : vector<1x34xf32> to vector<1x34xbf16>
    %c19 = arith.constant 19 : index
    %c0_165 = arith.constant 0 : index
    %c0_166 = arith.constant 0 : index
    %346 = vector.load %arg23[%c19, %c0_165, %c0_166] : memref<33x34x256xbf16, #tpu.memory_space<vmem>>, vector<1x34x256xbf16>
    %347 = vector.shape_cast %346 : vector<1x34x256xbf16> to vector<34x256xbf16>
    %cst_167 = arith.constant dense<0.000000e+00> : vector<1x256xf32>
    %348 = tpu.matmul %345, %347, %cst_167 {dimension_numbers = #tpu.dot_dimension_numbers<[1], [0], [0], [1], [0, 0, 1, 1], [], []>} : vector<1x34xbf16>, vector<34x256xbf16>, vector<1x256xf32> -> vector<1x256xf32>
    %349 = arith.addf %343, %348 : vector<1x256xf32>
    %350 = vector.extract_strided_slice %220 {offsets = [20, 0], sizes = [1, 34], strides = [1, 1]} : vector<33x34xf32> to vector<1x34xf32>
    %351 = arith.truncf %350 : vector<1x34xf32> to vector<1x34xbf16>
    %c20 = arith.constant 20 : index
    %c0_168 = arith.constant 0 : index
    %c0_169 = arith.constant 0 : index
    %352 = vector.load %arg23[%c20, %c0_168, %c0_169] : memref<33x34x256xbf16, #tpu.memory_space<vmem>>, vector<1x34x256xbf16>
    %353 = vector.shape_cast %352 : vector<1x34x256xbf16> to vector<34x256xbf16>
    %cst_170 = arith.constant dense<0.000000e+00> : vector<1x256xf32>
    %354 = tpu.matmul %351, %353, %cst_170 {dimension_numbers = #tpu.dot_dimension_numbers<[1], [0], [0], [1], [0, 0, 1, 1], [], []>} : vector<1x34xbf16>, vector<34x256xbf16>, vector<1x256xf32> -> vector<1x256xf32>
    %355 = arith.addf %349, %354 : vector<1x256xf32>
    %356 = vector.extract_strided_slice %220 {offsets = [21, 0], sizes = [1, 34], strides = [1, 1]} : vector<33x34xf32> to vector<1x34xf32>
    %357 = arith.truncf %356 : vector<1x34xf32> to vector<1x34xbf16>
    %c21 = arith.constant 21 : index
    %c0_171 = arith.constant 0 : index
    %c0_172 = arith.constant 0 : index
    %358 = vector.load %arg23[%c21, %c0_171, %c0_172] : memref<33x34x256xbf16, #tpu.memory_space<vmem>>, vector<1x34x256xbf16>
    %359 = vector.shape_cast %358 : vector<1x34x256xbf16> to vector<34x256xbf16>
    %cst_173 = arith.constant dense<0.000000e+00> : vector<1x256xf32>
    %360 = tpu.matmul %357, %359, %cst_173 {dimension_numbers = #tpu.dot_dimension_numbers<[1], [0], [0], [1], [0, 0, 1, 1], [], []>} : vector<1x34xbf16>, vector<34x256xbf16>, vector<1x256xf32> -> vector<1x256xf32>
    %361 = arith.addf %355, %360 : vector<1x256xf32>
    %362 = vector.extract_strided_slice %220 {offsets = [22, 0], sizes = [1, 34], strides = [1, 1]} : vector<33x34xf32> to vector<1x34xf32>
    %363 = arith.truncf %362 : vector<1x34xf32> to vector<1x34xbf16>
    %c22 = arith.constant 22 : index
    %c0_174 = arith.constant 0 : index
    %c0_175 = arith.constant 0 : index
    %364 = vector.load %arg23[%c22, %c0_174, %c0_175] : memref<33x34x256xbf16, #tpu.memory_space<vmem>>, vector<1x34x256xbf16>
    %365 = vector.shape_cast %364 : vector<1x34x256xbf16> to vector<34x256xbf16>
    %cst_176 = arith.constant dense<0.000000e+00> : vector<1x256xf32>
    %366 = tpu.matmul %363, %365, %cst_176 {dimension_numbers = #tpu.dot_dimension_numbers<[1], [0], [0], [1], [0, 0, 1, 1], [], []>} : vector<1x34xbf16>, vector<34x256xbf16>, vector<1x256xf32> -> vector<1x256xf32>
    %367 = arith.addf %361, %366 : vector<1x256xf32>
    %368 = vector.extract_strided_slice %220 {offsets = [23, 0], sizes = [1, 34], strides = [1, 1]} : vector<33x34xf32> to vector<1x34xf32>
    %369 = arith.truncf %368 : vector<1x34xf32> to vector<1x34xbf16>
    %c23 = arith.constant 23 : index
    %c0_177 = arith.constant 0 : index
    %c0_178 = arith.constant 0 : index
    %370 = vector.load %arg23[%c23, %c0_177, %c0_178] : memref<33x34x256xbf16, #tpu.memory_space<vmem>>, vector<1x34x256xbf16>
    %371 = vector.shape_cast %370 : vector<1x34x256xbf16> to vector<34x256xbf16>
    %cst_179 = arith.constant dense<0.000000e+00> : vector<1x256xf32>
    %372 = tpu.matmul %369, %371, %cst_179 {dimension_numbers = #tpu.dot_dimension_numbers<[1], [0], [0], [1], [0, 0, 1, 1], [], []>} : vector<1x34xbf16>, vector<34x256xbf16>, vector<1x256xf32> -> vector<1x256xf32>
    %373 = arith.addf %367, %372 : vector<1x256xf32>
    %374 = vector.extract_strided_slice %220 {offsets = [24, 0], sizes = [1, 34], strides = [1, 1]} : vector<33x34xf32> to vector<1x34xf32>
    %375 = arith.truncf %374 : vector<1x34xf32> to vector<1x34xbf16>
    %c24 = arith.constant 24 : index
    %c0_180 = arith.constant 0 : index
    %c0_181 = arith.constant 0 : index
    %376 = vector.load %arg23[%c24, %c0_180, %c0_181] : memref<33x34x256xbf16, #tpu.memory_space<vmem>>, vector<1x34x256xbf16>
    %377 = vector.shape_cast %376 : vector<1x34x256xbf16> to vector<34x256xbf16>
    %cst_182 = arith.constant dense<0.000000e+00> : vector<1x256xf32>
    %378 = tpu.matmul %375, %377, %cst_182 {dimension_numbers = #tpu.dot_dimension_numbers<[1], [0], [0], [1], [0, 0, 1, 1], [], []>} : vector<1x34xbf16>, vector<34x256xbf16>, vector<1x256xf32> -> vector<1x256xf32>
    %379 = arith.addf %373, %378 : vector<1x256xf32>
    %380 = vector.extract_strided_slice %220 {offsets = [25, 0], sizes = [1, 34], strides = [1, 1]} : vector<33x34xf32> to vector<1x34xf32>
    %381 = arith.truncf %380 : vector<1x34xf32> to vector<1x34xbf16>
    %c25 = arith.constant 25 : index
    %c0_183 = arith.constant 0 : index
    %c0_184 = arith.constant 0 : index
    %382 = vector.load %arg23[%c25, %c0_183, %c0_184] : memref<33x34x256xbf16, #tpu.memory_space<vmem>>, vector<1x34x256xbf16>
    %383 = vector.shape_cast %382 : vector<1x34x256xbf16> to vector<34x256xbf16>
    %cst_185 = arith.constant dense<0.000000e+00> : vector<1x256xf32>
    %384 = tpu.matmul %381, %383, %cst_185 {dimension_numbers = #tpu.dot_dimension_numbers<[1], [0], [0], [1], [0, 0, 1, 1], [], []>} : vector<1x34xbf16>, vector<34x256xbf16>, vector<1x256xf32> -> vector<1x256xf32>
    %385 = arith.addf %379, %384 : vector<1x256xf32>
    %386 = vector.extract_strided_slice %220 {offsets = [26, 0], sizes = [1, 34], strides = [1, 1]} : vector<33x34xf32> to vector<1x34xf32>
    %387 = arith.truncf %386 : vector<1x34xf32> to vector<1x34xbf16>
    %c26 = arith.constant 26 : index
    %c0_186 = arith.constant 0 : index
    %c0_187 = arith.constant 0 : index
    %388 = vector.load %arg23[%c26, %c0_186, %c0_187] : memref<33x34x256xbf16, #tpu.memory_space<vmem>>, vector<1x34x256xbf16>
    %389 = vector.shape_cast %388 : vector<1x34x256xbf16> to vector<34x256xbf16>
    %cst_188 = arith.constant dense<0.000000e+00> : vector<1x256xf32>
    %390 = tpu.matmul %387, %389, %cst_188 {dimension_numbers = #tpu.dot_dimension_numbers<[1], [0], [0], [1], [0, 0, 1, 1], [], []>} : vector<1x34xbf16>, vector<34x256xbf16>, vector<1x256xf32> -> vector<1x256xf32>
    %391 = arith.addf %385, %390 : vector<1x256xf32>
    %392 = vector.extract_strided_slice %220 {offsets = [27, 0], sizes = [1, 34], strides = [1, 1]} : vector<33x34xf32> to vector<1x34xf32>
    %393 = arith.truncf %392 : vector<1x34xf32> to vector<1x34xbf16>
    %c27 = arith.constant 27 : index
    %c0_189 = arith.constant 0 : index
    %c0_190 = arith.constant 0 : index
    %394 = vector.load %arg23[%c27, %c0_189, %c0_190] : memref<33x34x256xbf16, #tpu.memory_space<vmem>>, vector<1x34x256xbf16>
    %395 = vector.shape_cast %394 : vector<1x34x256xbf16> to vector<34x256xbf16>
    %cst_191 = arith.constant dense<0.000000e+00> : vector<1x256xf32>
    %396 = tpu.matmul %393, %395, %cst_191 {dimension_numbers = #tpu.dot_dimension_numbers<[1], [0], [0], [1], [0, 0, 1, 1], [], []>} : vector<1x34xbf16>, vector<34x256xbf16>, vector<1x256xf32> -> vector<1x256xf32>
    %397 = arith.addf %391, %396 : vector<1x256xf32>
    %398 = vector.extract_strided_slice %220 {offsets = [28, 0], sizes = [1, 34], strides = [1, 1]} : vector<33x34xf32> to vector<1x34xf32>
    %399 = arith.truncf %398 : vector<1x34xf32> to vector<1x34xbf16>
    %c28 = arith.constant 28 : index
    %c0_192 = arith.constant 0 : index
    %c0_193 = arith.constant 0 : index
    %400 = vector.load %arg23[%c28, %c0_192, %c0_193] : memref<33x34x256xbf16, #tpu.memory_space<vmem>>, vector<1x34x256xbf16>
    %401 = vector.shape_cast %400 : vector<1x34x256xbf16> to vector<34x256xbf16>
    %cst_194 = arith.constant dense<0.000000e+00> : vector<1x256xf32>
    %402 = tpu.matmul %399, %401, %cst_194 {dimension_numbers = #tpu.dot_dimension_numbers<[1], [0], [0], [1], [0, 0, 1, 1], [], []>} : vector<1x34xbf16>, vector<34x256xbf16>, vector<1x256xf32> -> vector<1x256xf32>
    %403 = arith.addf %397, %402 : vector<1x256xf32>
    %404 = vector.extract_strided_slice %220 {offsets = [29, 0], sizes = [1, 34], strides = [1, 1]} : vector<33x34xf32> to vector<1x34xf32>
    %405 = arith.truncf %404 : vector<1x34xf32> to vector<1x34xbf16>
    %c29 = arith.constant 29 : index
    %c0_195 = arith.constant 0 : index
    %c0_196 = arith.constant 0 : index
    %406 = vector.load %arg23[%c29, %c0_195, %c0_196] : memref<33x34x256xbf16, #tpu.memory_space<vmem>>, vector<1x34x256xbf16>
    %407 = vector.shape_cast %406 : vector<1x34x256xbf16> to vector<34x256xbf16>
    %cst_197 = arith.constant dense<0.000000e+00> : vector<1x256xf32>
    %408 = tpu.matmul %405, %407, %cst_197 {dimension_numbers = #tpu.dot_dimension_numbers<[1], [0], [0], [1], [0, 0, 1, 1], [], []>} : vector<1x34xbf16>, vector<34x256xbf16>, vector<1x256xf32> -> vector<1x256xf32>
    %409 = arith.addf %403, %408 : vector<1x256xf32>
    %410 = vector.extract_strided_slice %220 {offsets = [30, 0], sizes = [1, 34], strides = [1, 1]} : vector<33x34xf32> to vector<1x34xf32>
    %411 = arith.truncf %410 : vector<1x34xf32> to vector<1x34xbf16>
    %c30 = arith.constant 30 : index
    %c0_198 = arith.constant 0 : index
    %c0_199 = arith.constant 0 : index
    %412 = vector.load %arg23[%c30, %c0_198, %c0_199] : memref<33x34x256xbf16, #tpu.memory_space<vmem>>, vector<1x34x256xbf16>
    %413 = vector.shape_cast %412 : vector<1x34x256xbf16> to vector<34x256xbf16>
    %cst_200 = arith.constant dense<0.000000e+00> : vector<1x256xf32>
    %414 = tpu.matmul %411, %413, %cst_200 {dimension_numbers = #tpu.dot_dimension_numbers<[1], [0], [0], [1], [0, 0, 1, 1], [], []>} : vector<1x34xbf16>, vector<34x256xbf16>, vector<1x256xf32> -> vector<1x256xf32>
    %415 = arith.addf %409, %414 : vector<1x256xf32>
    %416 = vector.extract_strided_slice %220 {offsets = [31, 0], sizes = [1, 34], strides = [1, 1]} : vector<33x34xf32> to vector<1x34xf32>
    %417 = arith.truncf %416 : vector<1x34xf32> to vector<1x34xbf16>
    %c31 = arith.constant 31 : index
    %c0_201 = arith.constant 0 : index
    %c0_202 = arith.constant 0 : index
    %418 = vector.load %arg23[%c31, %c0_201, %c0_202] : memref<33x34x256xbf16, #tpu.memory_space<vmem>>, vector<1x34x256xbf16>
    %419 = vector.shape_cast %418 : vector<1x34x256xbf16> to vector<34x256xbf16>
    %cst_203 = arith.constant dense<0.000000e+00> : vector<1x256xf32>
    %420 = tpu.matmul %417, %419, %cst_203 {dimension_numbers = #tpu.dot_dimension_numbers<[1], [0], [0], [1], [0, 0, 1, 1], [], []>} : vector<1x34xbf16>, vector<34x256xbf16>, vector<1x256xf32> -> vector<1x256xf32>
    %421 = arith.addf %415, %420 : vector<1x256xf32>
    %422 = vector.extract_strided_slice %220 {offsets = [32, 0], sizes = [1, 34], strides = [1, 1]} : vector<33x34xf32> to vector<1x34xf32>
    %423 = arith.truncf %422 : vector<1x34xf32> to vector<1x34xbf16>
    %c32 = arith.constant 32 : index
    %c0_204 = arith.constant 0 : index
    %c0_205 = arith.constant 0 : index
    %424 = vector.load %arg23[%c32, %c0_204, %c0_205] : memref<33x34x256xbf16, #tpu.memory_space<vmem>>, vector<1x34x256xbf16>
    %425 = vector.shape_cast %424 : vector<1x34x256xbf16> to vector<34x256xbf16>
    %cst_206 = arith.constant dense<0.000000e+00> : vector<1x256xf32>
    %426 = tpu.matmul %423, %425, %cst_206 {dimension_numbers = #tpu.dot_dimension_numbers<[1], [0], [0], [1], [0, 0, 1, 1], [], []>} : vector<1x34xbf16>, vector<34x256xbf16>, vector<1x256xf32> -> vector<1x256xf32>
    %427 = arith.addf %421, %426 : vector<1x256xf32>
    %cst_207 = arith.constant 0.000000e+00 : f32
    %428 = vector.broadcast %cst_207 : f32 to vector<1x256xf32>
    %429 = arith.maximumf %427, %428 : vector<1x256xf32>
    %430 = arith.truncf %429 : vector<1x256xf32> to vector<1x256xbf16>
    %c0_208 = arith.constant 0 : index
    %c0_209 = arith.constant 0 : index
    %431 = vector.load %arg25[%c0_208, %c0_209] : memref<256x256xbf16, #tpu.memory_space<vmem>>, vector<256x256xbf16>
    %cst_210 = arith.constant dense<0.000000e+00> : vector<1x256xf32>
    %432 = tpu.matmul %430, %431, %cst_210 {dimension_numbers = #tpu.dot_dimension_numbers<[1], [0], [0], [1], [0, 0, 1, 1], [], []>} : vector<1x256xbf16>, vector<256x256xbf16>, vector<1x256xf32> -> vector<1x256xf32>
    %c0_211 = arith.constant 0 : index
    %c0_212 = arith.constant 0 : index
    %433 = vector.load %arg26[%c0_211, %c0_212] : memref<1x256xf32, #tpu.memory_space<vmem>>, vector<1x256xf32>
    %434 = arith.addf %432, %433 : vector<1x256xf32>
    %cst_213 = arith.constant 0.000000e+00 : f32
    %435 = vector.broadcast %cst_213 : f32 to vector<1x256xf32>
    %436 = arith.maximumf %434, %435 : vector<1x256xf32>
    %437 = arith.truncf %436 : vector<1x256xf32> to vector<1x256xbf16>
    %c0_214 = arith.constant 0 : index
    %c0_215 = arith.constant 0 : index
    %438 = vector.load %arg27[%c0_214, %c0_215] : memref<256x256xbf16, #tpu.memory_space<vmem>>, vector<256x256xbf16>
    %cst_216 = arith.constant dense<0.000000e+00> : vector<1x256xf32>
    %439 = tpu.matmul %437, %438, %cst_216 {dimension_numbers = #tpu.dot_dimension_numbers<[1], [0], [0], [1], [0, 0, 1, 1], [], []>} : vector<1x256xbf16>, vector<256x256xbf16>, vector<1x256xf32> -> vector<1x256xf32>
    %c0_217 = arith.constant 0 : index
    %c0_218 = arith.constant 0 : index
    %440 = vector.load %arg28[%c0_217, %c0_218] : memref<1x256xf32, #tpu.memory_space<vmem>>, vector<1x256xf32>
    %441 = arith.addf %439, %440 : vector<1x256xf32>
    %cst_219 = arith.constant 0.000000e+00 : f32
    %442 = vector.broadcast %cst_219 : f32 to vector<1x256xf32>
    %443 = arith.maximumf %441, %442 : vector<1x256xf32>
    %444 = arith.truncf %443 : vector<1x256xf32> to vector<1x256xbf16>
    %c0_220 = arith.constant 0 : index
    %c0_221 = arith.constant 0 : index
    %445 = vector.load %arg29[%c0_220, %c0_221] : memref<256x128xbf16, #tpu.memory_space<vmem>>, vector<256x128xbf16>
    %cst_222 = arith.constant dense<0.000000e+00> : vector<1x128xf32>
    %446 = tpu.matmul %444, %445, %cst_222 {dimension_numbers = #tpu.dot_dimension_numbers<[1], [0], [0], [1], [0, 0, 1, 1], [], []>} : vector<1x256xbf16>, vector<256x128xbf16>, vector<1x128xf32> -> vector<1x128xf32>
    %c0_223 = arith.constant 0 : index
    %c0_224 = arith.constant 0 : index
    %447 = vector.load %arg30[%c0_223, %c0_224] : memref<1x128xf32, #tpu.memory_space<vmem>>, vector<1x128xf32>
    %448 = arith.addf %446, %447 : vector<1x128xf32>
    %cst_225 = arith.constant 0.000000e+00 : f32
    %449 = vector.broadcast %cst_225 : f32 to vector<1x128xf32>
    %450 = arith.maximumf %448, %449 : vector<1x128xf32>
    %451 = arith.truncf %450 : vector<1x128xf32> to vector<1x128xbf16>
    %c0_226 = arith.constant 0 : index
    %c0_227 = arith.constant 0 : index
    %452 = vector.load %arg31[%c0_226, %c0_227] : memref<128x128xbf16, #tpu.memory_space<vmem>>, vector<128x128xbf16>
    %cst_228 = arith.constant dense<0.000000e+00> : vector<1x128xf32>
    %453 = tpu.matmul %451, %452, %cst_228 {dimension_numbers = #tpu.dot_dimension_numbers<[1], [0], [0], [1], [0, 0, 1, 1], [], []>} : vector<1x128xbf16>, vector<128x128xbf16>, vector<1x128xf32> -> vector<1x128xf32>
    %c0_229 = arith.constant 0 : index
    %c0_230 = arith.constant 0 : index
    %454 = vector.load %arg32[%c0_229, %c0_230] : memref<1x128xf32, #tpu.memory_space<vmem>>, vector<1x128xf32>
    %455 = arith.addf %453, %454 : vector<1x128xf32>
    %cst_231 = arith.constant 0.000000e+00 : f32
    %456 = vector.broadcast %cst_231 : f32 to vector<1x128xf32>
    %457 = arith.maximumf %455, %456 : vector<1x128xf32>
    %c0_232 = arith.constant 0 : index
    %c0_233 = arith.constant 0 : index
    %458 = vector.load %arg33[%c0_232, %c0_233] : memref<1x128xf32, #tpu.memory_space<vmem>>, vector<1x128xf32>
    tpu.vector_store %arg33[%c0_232, %c0_233], %457 {strides = array<i32>} : memref<1x128xf32, #tpu.memory_space<vmem>>, vector<1x128xf32>,
    return
  }
}

</mosaic_0001>

<llo_original>
// kernel: critic_forward.1
$region0: #{critic_forward.1}
  #allocation0 [shape = 'u32[]', space=smem, size = 0x4, offset = 0x4, fixed_abs, tag = 'smem constant byte address 0x4 - core index']
  #allocation1 [shape = 'u32[144,128]{1,0:T(1,128)}', space=vmem, size = 0x12000, scoped, tag = 'internal scratch']
  %s0 = inlined_call_operand.smem [shape: u32[34], index: -1, kind: input, shape index: {}]
  %s1 = sld [smem:[%s0]]
  %s2 = scalar_lea.smem %s0, 1
  %s3 = sld [smem:[%s2]]
  %s4 = scalar_lea.smem %s0, 2
  %s5 = sld [smem:[%s4]]
  %s6 = scalar_lea.smem %s0, 3
  %s7 = sld [smem:[%s6]]
  %s8 = scalar_lea.smem %s0, 4
  %s9 = sld [smem:[%s8]]
  %s10 = scalar_lea.smem %s0, 5
  %s11 = sld [smem:[%s10]]
  %s12 = scalar_lea.smem %s0, 6
  %s13 = sld [smem:[%s12]]
  %s14 = scalar_lea.smem %s0, 7
  %s15 = sld [smem:[%s14]]
  %s16 = scalar_lea.smem %s0, 8
  %s17 = sld [smem:[%s16]]
  %s18 = scalar_lea.smem %s0, 9
  %s19 = sld [smem:[%s18]]
  %s20 = scalar_lea.smem %s0, 10
  %s21 = sld [smem:[%s20]]
  %s22 = scalar_lea.smem %s0, 11
  %s23 = sld [smem:[%s22]]
  %s24 = scalar_lea.smem %s0, 12
  %s25 = sld [smem:[%s24]]
  %s26 = scalar_lea.smem %s0, 13
  %s27 = sld [smem:[%s26]]
  %s28 = scalar_lea.smem %s0, 14
  %s29 = sld [smem:[%s28]]
  %s30 = scalar_lea.smem %s0, 15
  %s31 = sld [smem:[%s30]]
  %s32 = scalar_lea.smem %s0, 16
  %s33 = sld [smem:[%s32]]
  %s34 = scalar_lea.smem %s0, 17
  %s35 = sld [smem:[%s34]]
  %s36 = scalar_lea.smem %s0, 18
  %s37 = sld [smem:[%s36]]
  %s38 = scalar_lea.smem %s0, 19
  %s39 = sld [smem:[%s38]]
  %s40 = scalar_lea.smem %s0, 20
  %s41 = sld [smem:[%s40]]
  %s42 = scalar_lea.smem %s0, 21
  %s43 = sld [smem:[%s42]]
  %s44 = scalar_lea.smem %s0, 22
  %s45 = sld [smem:[%s44]]
  %s46 = scalar_lea.smem %s0, 23
  %s47 = sld [smem:[%s46]]
  %s48 = scalar_lea.smem %s0, 24
  %s49 = sld [smem:[%s48]]
  %s50 = scalar_lea.smem %s0, 25
  %s51 = sld [smem:[%s50]]
  %s52 = scalar_lea.smem %s0, 26
  %s53 = sld [smem:[%s52]]
  %s54 = scalar_lea.smem %s0, 27
  %s55 = sld [smem:[%s54]]
  %s56 = scalar_lea.smem %s0, 28
  %s57 = sld [smem:[%s56]]
  %s58 = scalar_lea.smem %s0, 29
  %s59 = sld [smem:[%s58]]
  %s60 = scalar_lea.smem %s0, 30
  %s61 = sld [smem:[%s60]]
  %s62 = scalar_lea.smem %s0, 31
  %s63 = sld [smem:[%s62]]
  %s64 = scalar_lea.smem %s0, 32
  %s65 = sld [smem:[%s64]]
  %s66 = scalar_lea.smem %s0, 33
  %s67 = sld [smem:[%s66]]
  %s68 = sld [smem:[#allocation0]]
  $region254: #{critic_forward.1} parent=0
    _
  %s70 = ssub.s32 1, %s68
  %s71 = scalar_select 0, %s70, %s68
  $region1: #{critic_forward.1} parent=0
    #allocation2 [shape = 'u8[512]{0}', space=smem, size = 0x200, scoped, tag = 'input window, operand 3, single buffered']
    #allocation3 [shape = 's32[1]{0}', space=sflag, size = 0x4, scoped, tag = 'scoped memory for critic_forward.1']
    #allocation4 [shape = 's32[1]{0}', space=sflag, size = 0x4, scoped, tag = 'scoped memory for critic_forward.1']
    #allocation5 [shape = 's32[1]{0}', space=sflag, size = 0x4, scoped, tag = 'scoped memory for critic_forward.1']
    #allocation6 [shape = 's32[1]{0}', space=sflag, size = 0x4, scoped, tag = 'scoped memory for critic_forward.1']
    #allocation7 [shape = 'u8[512]{0}', space=smem, size = 0x200, scoped, tag = 'input window, operand 4, single buffered']
    #allocation8 [shape = 'u8[1024]{0}', space=vmem, size = 0x400, scoped, tag = 'input window, operand 6, single buffered']
    #allocation9 [shape = 'u8[131072]{0}', space=vmem, size = 0x20000, scoped, tag = 'input window, operand 7, single buffered']
    #allocation10 [shape = 's32[1]{0}', space=sflag, size = 0x4, scoped, tag = 'scoped memory for critic_forward.1']
    #allocation11 [shape = 'u8[1024]{0}', space=vmem, size = 0x400, scoped, tag = 'input window, operand 8, single buffered']
    #allocation12 [shape = 'u8[131072]{0}', space=vmem, size = 0x20000, scoped, tag = 'input window, operand 9, single buffered']
    #allocation13 [shape = 's32[1]{0}', space=sflag, size = 0x4, scoped, tag = 'scoped memory for critic_forward.1']
    #allocation14 [shape = 'u8[1024]{0}', space=vmem, size = 0x400, scoped, tag = 'input window, operand 10, single buffered']
    #allocation15 [shape = 'u8[65536]{0}', space=vmem, size = 0x10000, scoped, tag = 'input window, operand 11, single buffered']
    #allocation16 [shape = 's32[1]{0}', space=sflag, size = 0x4, scoped, tag = 'scoped memory for critic_forward.1']
    #allocation17 [shape = 'u8[512]{0}', space=vmem, size = 0x400, scoped, tag = 'input window, operand 12, single buffered']
    #allocation18 [shape = 'u8[65536]{0}', space=vmem, size = 0x10000, scoped, tag = 'input window, operand 13, single buffered']
    #allocation19 [shape = 's32[1]{0}', space=sflag, size = 0x4, scoped, tag = 'scoped memory for critic_forward.1']
    #allocation20 [shape = 'u8[1024]{0}', space=vmem, size = 0x400, scoped, tag = 'input window, operand 14, single buffered']
    #allocation21 [shape = 'u8[131072]{0}', space=vmem, size = 0x20000, scoped, tag = 'input window, operand 15, single buffered']
    #allocation22 [shape = 's32[1]{0}', space=sflag, size = 0x4, scoped, tag = 'scoped memory for critic_forward.1']
    #allocation23 [shape = 'u8[1024]{0}', space=vmem, size = 0x400, scoped, tag = 'input window, operand 16, single buffered']
    #allocation24 [shape = 'u8[131072]{0}', space=vmem, size = 0x20000, scoped, tag = 'input window, operand 17, single buffered']
    #allocation25 [shape = 's32[1]{0}', space=sflag, size = 0x4, scoped, tag = 'scoped memory for critic_forward.1']
    #allocation26 [shape = 'u8[1024]{0}', space=vmem, size = 0x400, scoped, tag = 'input window, operand 18, single buffered']
    #allocation27 [shape = 'u8[65536]{0}', space=vmem, size = 0x10000, scoped, tag = 'input window, operand 19, single buffered']
    #allocation28 [shape = 's32[1]{0}', space=sflag, size = 0x4, scoped, tag = 'scoped memory for critic_forward.1']
    #allocation29 [shape = 'u8[512]{0}', space=vmem, size = 0x400, scoped, tag = 'input window, operand 20, single buffered']
    #allocation30 [shape = 'u8[65536]{0}', space=vmem, size = 0x10000, scoped, tag = 'input window, operand 22, single buffered']
    #allocation31 [shape = 's32[1]{0}', space=sflag, size = 0x4, scoped, tag = 'scoped memory for critic_forward.1']
    #allocation32 [shape = 'u8[675840]{0}', space=vmem, size = 0xa5000, scoped, tag = 'input window, operand 23, single buffered']
    #allocation33 [shape = 'u8[1024]{0}', space=vmem, size = 0x400, scoped, tag = 'input window, operand 24, single buffered']
    #allocation34 [shape = 's32[1]{0}', space=sflag, size = 0x4, scoped, tag = 'scoped memory for critic_forward.1']
    #allocation35 [shape = 'u8[131072]{0}', space=vmem, size = 0x20000, scoped, tag = 'input window, operand 25, single buffered']
    #allocation36 [shape = 'u8[1024]{0}', space=vmem, size = 0x400, scoped, tag = 'input window, operand 26, single buffered']
    #allocation37 [shape = 's32[1]{0}', space=sflag, size = 0x4, scoped, tag = 'scoped memory for critic_forward.1']
    #allocation38 [shape = 'u8[131072]{0}', space=vmem, size = 0x20000, scoped, tag = 'input window, operand 27, single buffered']
    #allocation39 [shape = 'u8[1024]{0}', space=vmem, size = 0x400, scoped, tag = 'input window, operand 28, single buffered']
    #allocation40 [shape = 's32[1]{0}', space=sflag, size = 0x4, scoped, tag = 'scoped memory for critic_forward.1']
    #allocation41 [shape = 'u8[65536]{0}', space=vmem, size = 0x10000, scoped, tag = 'input window, operand 29, single buffered']
    #allocation42 [shape = 'u8[512]{0}', space=vmem, size = 0x400, scoped, tag = 'input window, operand 30, single buffered']
    #allocation43 [shape = 's32[1]{0}', space=sflag, size = 0x4, scoped, tag = 'scoped memory for critic_forward.1']
    #allocation44 [shape = 'u8[32768]{0}', space=vmem, size = 0x8000, scoped, tag = 'input window, operand 31, single buffered']
    #allocation45 [shape = 'u8[512]{0}', space=vmem, size = 0x400, scoped, tag = 'input window, operand 32, single buffered']
    #allocation46 [shape = 's32[1]{0}', space=sflag, size = 0x4, scoped, tag = 'scoped memory for critic_forward.1']
    #allocation47 [shape = 'u8[512]{0}', space=vmem, size = 0x400, scoped, tag = 'output window, operand 0, single buffered']
    %72 = vsyncpa [#allocation6], 0
    %73 = vsyncpa [#allocation5], 0
    %74 = vsyncpa [#allocation3], 0
    %75 = vsyncpa [#allocation10], 0
    %76 = vsyncpa [#allocation13], 0
    %77 = vsyncpa [#allocation16], 0
    %78 = vsyncpa [#allocation19], 0
    %79 = vsyncpa [#allocation22], 0
    %80 = vsyncpa [#allocation25], 0
    %81 = vsyncpa [#allocation28], 0
    %82 = vsyncpa [#allocation31], 0
    %83 = vsyncpa [#allocation34], 0
    %84 = vsyncpa [#allocation37], 0
    %85 = vsyncpa [#allocation40], 0
    %86 = vsyncpa [#allocation43], 0
    %87 = vsyncpa [#allocation46], 0
    %88 = vsyncpa [#allocation4], 0
    // Predicated region
    $region2: #{critic_forward.1} parent=1 // pred_check
      _
    $region3: #{critic_forward.1} parent=1 // pred_check_branch
      %90 = sbr.rel (0) target = $region5
    $region4: #{critic_forward.1} parent=1 // pred_region
      _
    $region5: #{critic_forward.1} parent=1 // pred_fallthru
      _
    // Predicated region
    $region6: #{critic_forward.1} parent=1 // pred_check
      _
    $region7: #{critic_forward.1} parent=1 // pred_check_branch
      %92 = sbr.rel (0) target = $region9
    $region8: #{critic_forward.1} parent=1 // pred_region
      _
    $region9: #{critic_forward.1} parent=1 // pred_fallthru
      _
    // Predicated region
    $region10: #{critic_forward.1} parent=1 // pred_check
      _
    $region11: #{critic_forward.1} parent=1 // pred_check_branch
      %94 = sbr.rel (0) target = $region13
    $region12: #{critic_forward.1} parent=1 // pred_region
      _
    $region13: #{critic_forward.1} parent=1 // pred_fallthru
      _
    // Predicated region
    $region14: #{critic_forward.1} parent=1 // pred_check
      _
    $region15: #{critic_forward.1} parent=1 // pred_check_branch
      %96 = sbr.rel (0) target = $region17
    $region16: #{critic_forward.1} parent=1 // pred_region
      %s98 = ssub.s32 16, 16
      %99 = vsyncadd [#allocation6], %s98
      %s101 = sshll.u32 %s7, 4
      %s102 = int_to_ptr.vmem [resolvable:$true] %s101
      %104 = dma.vmem_to_smem %s102, 16, [#allocation2], [#allocation6]
    $region17: #{critic_forward.1} parent=1 // pred_fallthru
      _
    // Predicated region
    $region18: #{critic_forward.1} parent=1 // pred_check
      _
    $region19: #{critic_forward.1} parent=1 // pred_check_branch
      %106 = sbr.rel (0) target = $region21
    $region20: #{critic_forward.1} parent=1 // pred_region
      %s108 = ssub.s32 16, 16
      %109 = vsyncadd [#allocation5], %s108
      %112 = dma.hbm_to_smem %s9, 16, [#allocation7], [#allocation5]
    $region21: #{critic_forward.1} parent=1 // pred_fallthru
      _
    // Predicated region
    $region22: #{critic_forward.1} parent=1 // pred_check
      _
    $region23: #{critic_forward.1} parent=1 // pred_check_branch
      %114 = sbr.rel (0) target = $region25
    $region24: #{critic_forward.1} parent=1 // pred_region
      _
    $region25: #{critic_forward.1} parent=1 // pred_fallthru
      _
    // Predicated region
    $region26: #{critic_forward.1} parent=1 // pred_check
      _
    $region27: #{critic_forward.1} parent=1 // pred_check_branch
      %116 = sbr.rel (0) target = $region29
    $region28: #{critic_forward.1} parent=1 // pred_region
      %s118 = ssub.s32 32, 32
      %119 = vsyncadd [#allocation3], %s118
      %s121 = sshll.u32 [#allocation8], 4
      %s122 = int_to_ptr.vmem [resolvable:$true] %s121
      %124 = dma.hbm_to_vmem [thread:$0]  %s13, 32, %s122, [#allocation3]
    $region29: #{critic_forward.1} parent=1 // pred_fallthru
      _
    // Predicated region
    $region30: #{critic_forward.1} parent=1 // pred_check
      _
    $region31: #{critic_forward.1} parent=1 // pred_check_branch
      %126 = sbr.rel (0) target = $region33
    $region32: #{critic_forward.1} parent=1 // pred_region
      %s128 = ssub.s32 4096, 4096
      %129 = vsyncadd [#allocation10], %s128
      %s130 = sshll.u32 [#allocation9], 4
      %s131 = int_to_ptr.vmem [resolvable:$true] %s130
      %136 = dma.hbm_to_vmem [thread:$0]  %s15, 4096, %s131, [#allocation10], 128, 128, 8
    $region33: #{critic_forward.1} parent=1 // pred_fallthru
      _
    // Predicated region
    $region34: #{critic_forward.1} parent=1 // pred_check
      _
    $region35: #{critic_forward.1} parent=1 // pred_check_branch
      %138 = sbr.rel (0) target = $region37
    $region36: #{critic_forward.1} parent=1 // pred_region
      %s140 = ssub.s32 32, 32
      %141 = vsyncadd [#allocation10], %s140
      %s143 = sshll.u32 [#allocation11], 4
      %s144 = int_to_ptr.vmem [resolvable:$true] %s143
      %146 = dma.hbm_to_vmem [thread:$0]  %s17, 32, %s144, [#allocation10]
    $region37: #{critic_forward.1} parent=1 // pred_fallthru
      _
    // Predicated region
    $region38: #{critic_forward.1} parent=1 // pred_check
      _
    $region39: #{critic_forward.1} parent=1 // pred_check_branch
      %148 = sbr.rel (0) target = $region41
    $region40: #{critic_forward.1} parent=1 // pred_region
      %s150 = ssub.s32 4096, 4096
      %151 = vsyncadd [#allocation13], %s150
      %s152 = sshll.u32 [#allocation12], 4
      %s153 = int_to_ptr.vmem [resolvable:$true] %s152
      %158 = dma.hbm_to_vmem [thread:$0]  %s19, 4096, %s153, [#allocation13], 128, 128, 8
    $region41: #{critic_forward.1} parent=1 // pred_fallthru
      _
    // Predicated region
    $region42: #{critic_forward.1} parent=1 // pred_check
      _
    $region43: #{critic_forward.1} parent=1 // pred_check_branch
      %160 = sbr.rel (0) target = $region45
    $region44: #{critic_forward.1} parent=1 // pred_region
      %s162 = ssub.s32 32, 32
      %163 = vsyncadd [#allocation13], %s162
      %s165 = sshll.u32 [#allocation14], 4
      %s166 = int_to_ptr.vmem [resolvable:$true] %s165
      %168 = dma.hbm_to_vmem [thread:$0]  %s21, 32, %s166, [#allocation13]
    $region45: #{critic_forward.1} parent=1 // pred_fallthru
      _
    // Predicated region
    $region46: #{critic_forward.1} parent=1 // pred_check
      _
    $region47: #{critic_forward.1} parent=1 // pred_check_branch
      %170 = sbr.rel (0) target = $region49
    $region48: #{critic_forward.1} parent=1 // pred_region
      %s172 = ssub.s32 2048, 2048
      %173 = vsyncadd [#allocation16], %s172
      %s174 = sshll.u32 [#allocation15], 4
      %s175 = int_to_ptr.vmem [resolvable:$true] %s174
      %180 = dma.hbm_to_vmem [thread:$0]  %s23, 2048, %s175, [#allocation16], 64, 64, 4
    $region49: #{critic_forward.1} parent=1 // pred_fallthru
      _
    // Predicated region
    $region50: #{critic_forward.1} parent=1 // pred_check
      _
    $region51: #{critic_forward.1} parent=1 // pred_check_branch
      %182 = sbr.rel (0) target = $region53
    $region52: #{critic_forward.1} parent=1 // pred_region
      %s184 = ssub.s32 16, 16
      %185 = vsyncadd [#allocation16], %s184
      %s187 = sshll.u32 [#allocation17], 4
      %s188 = int_to_ptr.vmem [resolvable:$true] %s187
      %190 = dma.hbm_to_vmem [thread:$0]  %s25, 16, %s188, [#allocation16]
    $region53: #{critic_forward.1} parent=1 // pred_fallthru
      _
    // Predicated region
    $region54: #{critic_forward.1} parent=1 // pred_check
      _
    $region55: #{critic_forward.1} parent=1 // pred_check_branch
      %192 = sbr.rel (0) target = $region57
    $region56: #{critic_forward.1} parent=1 // pred_region
      %s194 = ssub.s32 2048, 2048
      %195 = vsyncadd [#allocation19], %s194
      %s196 = sshll.u32 [#allocation18], 4
      %s197 = int_to_ptr.vmem [resolvable:$true] %s196
      %202 = dma.hbm_to_vmem [thread:$0]  %s27, 2048, %s197, [#allocation19], 128, 128, 8
    $region57: #{critic_forward.1} parent=1 // pred_fallthru
      _
    // Predicated region
    $region58: #{critic_forward.1} parent=1 // pred_check
      _
    $region59: #{critic_forward.1} parent=1 // pred_check_branch
      %204 = sbr.rel (0) target = $region61
    $region60: #{critic_forward.1} parent=1 // pred_region
      %s206 = ssub.s32 32, 32
      %207 = vsyncadd [#allocation19], %s206
      %s209 = sshll.u32 [#allocation20], 4
      %s210 = int_to_ptr.vmem [resolvable:$true] %s209
      %212 = dma.hbm_to_vmem [thread:$0]  %s29, 32, %s210, [#allocation19]
    $region61: #{critic_forward.1} parent=1 // pred_fallthru
      _
    // Predicated region
    $region62: #{critic_forward.1} parent=1 // pred_check
      _
    $region63: #{critic_forward.1} parent=1 // pred_check_branch
      %214 = sbr.rel (0) target = $region65
    $region64: #{critic_forward.1} parent=1 // pred_region
      %s216 = ssub.s32 4096, 4096
      %217 = vsyncadd [#allocation22], %s216
      %s218 = sshll.u32 [#allocation21], 4
      %s219 = int_to_ptr.vmem [resolvable:$true] %s218
      %224 = dma.hbm_to_vmem [thread:$0]  %s31, 4096, %s219, [#allocation22], 128, 128, 8
    $region65: #{critic_forward.1} parent=1 // pred_fallthru
      _
    // Predicated region
    $region66: #{critic_forward.1} parent=1 // pred_check
      _
    $region67: #{critic_forward.1} parent=1 // pred_check_branch
      %226 = sbr.rel (0) target = $region69
    $region68: #{critic_forward.1} parent=1 // pred_region
      %s228 = ssub.s32 32, 32
      %229 = vsyncadd [#allocation22], %s228
      %s231 = sshll.u32 [#allocation23], 4
      %s232 = int_to_ptr.vmem [resolvable:$true] %s231
      %234 = dma.hbm_to_vmem [thread:$0]  %s33, 32, %s232, [#allocation22]
    $region69: #{critic_forward.1} parent=1 // pred_fallthru
      _
    // Predicated region
    $region70: #{critic_forward.1} parent=1 // pred_check
      _
    $region71: #{critic_forward.1} parent=1 // pred_check_branch
      %236 = sbr.rel (0) target = $region73
    $region72: #{critic_forward.1} parent=1 // pred_region
      %s238 = ssub.s32 4096, 4096
      %239 = vsyncadd [#allocation25], %s238
      %s240 = sshll.u32 [#allocation24], 4
      %s241 = int_to_ptr.vmem [resolvable:$true] %s240
      %246 = dma.hbm_to_vmem [thread:$0]  %s35, 4096, %s241, [#allocation25], 128, 128, 8
    $region73: #{critic_forward.1} parent=1 // pred_fallthru
      _
    // Predicated region
    $region74: #{critic_forward.1} parent=1 // pred_check
      _
    $region75: #{critic_forward.1} parent=1 // pred_check_branch
      %248 = sbr.rel (0) target = $region77
    $region76: #{critic_forward.1} parent=1 // pred_region
      %s250 = ssub.s32 32, 32
      %251 = vsyncadd [#allocation25], %s250
      %s253 = sshll.u32 [#allocation26], 4
      %s254 = int_to_ptr.vmem [resolvable:$true] %s253
      %256 = dma.hbm_to_vmem [thread:$0]  %s37, 32, %s254, [#allocation25]
    $region77: #{critic_forward.1} parent=1 // pred_fallthru
      _
    // Predicated region
    $region78: #{critic_forward.1} parent=1 // pred_check
      _
    $region79: #{critic_forward.1} parent=1 // pred_check_branch
      %258 = sbr.rel (0) target = $region81
    $region80: #{critic_forward.1} parent=1 // pred_region
      %s260 = ssub.s32 2048, 2048
      %261 = vsyncadd [#allocation28], %s260
      %s262 = sshll.u32 [#allocation27], 4
      %s263 = int_to_ptr.vmem [resolvable:$true] %s262
      %268 = dma.hbm_to_vmem [thread:$0]  %s39, 2048, %s263, [#allocation28], 64, 64, 4
    $region81: #{critic_forward.1} parent=1 // pred_fallthru
      _
    // Predicated region
    $region82: #{critic_forward.1} parent=1 // pred_check
      _
    $region83: #{critic_forward.1} parent=1 // pred_check_branch
      %270 = sbr.rel (0) target = $region85
    $region84: #{critic_forward.1} parent=1 // pred_region
      %s272 = ssub.s32 16, 16
      %273 = vsyncadd [#allocation28], %s272
      %s275 = sshll.u32 [#allocation29], 4
      %s276 = int_to_ptr.vmem [resolvable:$true] %s275
      %278 = dma.hbm_to_vmem [thread:$0]  %s41, 16, %s276, [#allocation28]
    $region85: #{critic_forward.1} parent=1 // pred_fallthru
      _
    // Predicated region
    $region86: #{critic_forward.1} parent=1 // pred_check
      _
    $region87: #{critic_forward.1} parent=1 // pred_check_branch
      %280 = sbr.rel (0) target = $region89
    $region88: #{critic_forward.1} parent=1 // pred_region
      _
    $region89: #{critic_forward.1} parent=1 // pred_fallthru
      _
    // Predicated region
    $region90: #{critic_forward.1} parent=1 // pred_check
      _
    $region91: #{critic_forward.1} parent=1 // pred_check_branch
      %282 = sbr.rel (0) target = $region93
    $region92: #{critic_forward.1} parent=1 // pred_region
      %s284 = ssub.s32 2048, 2048
      %285 = vsyncadd [#allocation31], %s284
      %s286 = sshll.u32 [#allocation30], 4
      %s287 = int_to_ptr.vmem [resolvable:$true] %s286
      %292 = dma.hbm_to_vmem [thread:$0]  %s45, 2048, %s287, [#allocation31], 128, 128, 8
    $region93: #{critic_forward.1} parent=1 // pred_fallthru
      _
    // Predicated region
    $region94: #{critic_forward.1} parent=1 // pred_check
      _
    $region95: #{critic_forward.1} parent=1 // pred_check_branch
      %294 = sbr.rel (0) target = $region97
    $region96: #{critic_forward.1} parent=1 // pred_region
      %s296 = ssub.s32 21120, 21120
      %297 = vsyncadd [#allocation31], %s296
      %s298 = sshll.u32 [#allocation32], 4
      %s299 = int_to_ptr.vmem [resolvable:$true] %s298
      %304 = dma.hbm_to_vmem [thread:$0]  %s47, 21120, %s299, [#allocation31], 128, 128, 8
    $region97: #{critic_forward.1} parent=1 // pred_fallthru
      _
    // Predicated region
    $region98: #{critic_forward.1} parent=1 // pred_check
      _
    $region99: #{critic_forward.1} parent=1 // pred_check_branch
      %306 = sbr.rel (0) target = $region101
    $region100: #{critic_forward.1} parent=1 // pred_region
      %s308 = ssub.s32 32, 32
      %309 = vsyncadd [#allocation34], %s308
      %s311 = sshll.u32 [#allocation33], 4
      %s312 = int_to_ptr.vmem [resolvable:$true] %s311
      %314 = dma.hbm_to_vmem [thread:$0]  %s49, 32, %s312, [#allocation34]
    $region101: #{critic_forward.1} parent=1 // pred_fallthru
      _
    // Predicated region
    $region102: #{critic_forward.1} parent=1 // pred_check
      _
    $region103: #{critic_forward.1} parent=1 // pred_check_branch
      %316 = sbr.rel (0) target = $region105
    $region104: #{critic_forward.1} parent=1 // pred_region
      %s318 = ssub.s32 4096, 4096
      %319 = vsyncadd [#allocation34], %s318
      %s320 = sshll.u32 [#allocation35], 4
      %s321 = int_to_ptr.vmem [resolvable:$true] %s320
      %326 = dma.hbm_to_vmem [thread:$0]  %s51, 4096, %s321, [#allocation34], 128, 128, 8
    $region105: #{critic_forward.1} parent=1 // pred_fallthru
      _
    // Predicated region
    $region106: #{critic_forward.1} parent=1 // pred_check
      _
    $region107: #{critic_forward.1} parent=1 // pred_check_branch
      %328 = sbr.rel (0) target = $region109
    $region108: #{critic_forward.1} parent=1 // pred_region
      %s330 = ssub.s32 32, 32
      %331 = vsyncadd [#allocation37], %s330
      %s333 = sshll.u32 [#allocation36], 4
      %s334 = int_to_ptr.vmem [resolvable:$true] %s333
      %336 = dma.hbm_to_vmem [thread:$0]  %s53, 32, %s334, [#allocation37]
    $region109: #{critic_forward.1} parent=1 // pred_fallthru
      _
    // Predicated region
    $region110: #{critic_forward.1} parent=1 // pred_check
      _
    $region111: #{critic_forward.1} parent=1 // pred_check_branch
      %338 = sbr.rel (0) target = $region113
    $region112: #{critic_forward.1} parent=1 // pred_region
      %s340 = ssub.s32 4096, 4096
      %341 = vsyncadd [#allocation37], %s340
      %s342 = sshll.u32 [#allocation38], 4
      %s343 = int_to_ptr.vmem [resolvable:$true] %s342
      %348 = dma.hbm_to_vmem [thread:$0]  %s55, 4096, %s343, [#allocation37], 128, 128, 8
    $region113: #{critic_forward.1} parent=1 // pred_fallthru
      _
    // Predicated region
    $region114: #{critic_forward.1} parent=1 // pred_check
      _
    $region115: #{critic_forward.1} parent=1 // pred_check_branch
      %350 = sbr.rel (0) target = $region117
    $region116: #{critic_forward.1} parent=1 // pred_region
      %s352 = ssub.s32 32, 32
      %353 = vsyncadd [#allocation40], %s352
      %s355 = sshll.u32 [#allocation39], 4
      %s356 = int_to_ptr.vmem [resolvable:$true] %s355
      %358 = dma.hbm_to_vmem [thread:$0]  %s57, 32, %s356, [#allocation40]
    $region117: #{critic_forward.1} parent=1 // pred_fallthru
      _
    // Predicated region
    $region118: #{critic_forward.1} parent=1 // pred_check
      _
    $region119: #{critic_forward.1} parent=1 // pred_check_branch
      %360 = sbr.rel (0) target = $region121
    $region120: #{critic_forward.1} parent=1 // pred_region
      %s362 = ssub.s32 2048, 2048
      %363 = vsyncadd [#allocation40], %s362
      %s364 = sshll.u32 [#allocation41], 4
      %s365 = int_to_ptr.vmem [resolvable:$true] %s364
      %370 = dma.hbm_to_vmem [thread:$0]  %s59, 2048, %s365, [#allocation40], 64, 64, 4
    $region121: #{critic_forward.1} parent=1 // pred_fallthru
      _
    // Predicated region
    $region122: #{critic_forward.1} parent=1 // pred_check
      _
    $region123: #{critic_forward.1} parent=1 // pred_check_branch
      %372 = sbr.rel (0) target = $region125
    $region124: #{critic_forward.1} parent=1 // pred_region
      %s374 = ssub.s32 16, 16
      %375 = vsyncadd [#allocation43], %s374
      %s377 = sshll.u32 [#allocation42], 4
      %s378 = int_to_ptr.vmem [resolvable:$true] %s377
      %380 = dma.hbm_to_vmem [thread:$0]  %s61, 16, %s378, [#allocation43]
    $region125: #{critic_forward.1} parent=1 // pred_fallthru
      _
    // Predicated region
    $region126: #{critic_forward.1} parent=1 // pred_check
      _
    $region127: #{critic_forward.1} parent=1 // pred_check_branch
      %382 = sbr.rel (0) target = $region129
    $region128: #{critic_forward.1} parent=1 // pred_region
      %s384 = ssub.s32 1024, 1024
      %385 = vsyncadd [#allocation43], %s384
      %s386 = sshll.u32 [#allocation44], 4
      %s387 = int_to_ptr.vmem [resolvable:$true] %s386
      %392 = dma.hbm_to_vmem [thread:$0]  %s63, 1024, %s387, [#allocation43], 64, 64, 4
    $region129: #{critic_forward.1} parent=1 // pred_fallthru
      _
    // Predicated region
    $region130: #{critic_forward.1} parent=1 // pred_check
      _
    $region131: #{critic_forward.1} parent=1 // pred_check_branch
      %394 = sbr.rel (0) target = $region133
    $region132: #{critic_forward.1} parent=1 // pred_region
      %s396 = ssub.s32 16, 16
      %397 = vsyncadd [#allocation46], %s396
      %s399 = sshll.u32 [#allocation45], 4
      %s400 = int_to_ptr.vmem [resolvable:$true] %s399
      %402 = dma.hbm_to_vmem [thread:$0]  %s65, 16, %s400, [#allocation46]
    $region133: #{critic_forward.1} parent=1 // pred_fallthru
      _
    // Predicated region
    $region134: #{critic_forward.1} parent=1 // pred_check
      _
    $region135: #{critic_forward.1} parent=1 // pred_check_branch
      %404 = sbr.rel (0) target = $region137
    $region136: #{critic_forward.1} parent=1 // pred_region
      %405 = dma.done [#allocation6], 16
    $region137: #{critic_forward.1} parent=1 // pred_fallthru
      _
    // Predicated region
    $region138: #{critic_forward.1} parent=1 // pred_check
      _
    $region139: #{critic_forward.1} parent=1 // pred_check_branch
      %407 = sbr.rel (0) target = $region141
    $region140: #{critic_forward.1} parent=1 // pred_region
      %408 = dma.done [#allocation5], 16
    $region141: #{critic_forward.1} parent=1 // pred_fallthru
      _
    // Predicated region
    $region142: #{critic_forward.1} parent=1 // pred_check
      _
    $region143: #{critic_forward.1} parent=1 // pred_check_branch
      %410 = sbr.rel (0) target = $region145
    $region144: #{critic_forward.1} parent=1 // pred_region
      %411 = dma.done [#allocation3], 32
    $region145: #{critic_forward.1} parent=1 // pred_fallthru
      _
    // Predicated region
    $region146: #{critic_forward.1} parent=1 // pred_check
      _
    $region147: #{critic_forward.1} parent=1 // pred_check_branch
      %413 = sbr.rel (0) target = $region149
    $region148: #{critic_forward.1} parent=1 // pred_region
      %414 = dma.done [#allocation10], 4096
    $region149: #{critic_forward.1} parent=1 // pred_fallthru
      _
    // Predicated region
    $region150: #{critic_forward.1} parent=1 // pred_check
      _
    $region151: #{critic_forward.1} parent=1 // pred_check_branch
      %416 = sbr.rel (0) target = $region153
    $region152: #{critic_forward.1} parent=1 // pred_region
      %417 = dma.done [#allocation10], 32
    $region153: #{critic_forward.1} parent=1 // pred_fallthru
      _
    // Predicated region
    $region154: #{critic_forward.1} parent=1 // pred_check
      _
    $region155: #{critic_forward.1} parent=1 // pred_check_branch
      %419 = sbr.rel (0) target = $region157
    $region156: #{critic_forward.1} parent=1 // pred_region
      %420 = dma.done [#allocation13], 4096
    $region157: #{critic_forward.1} parent=1 // pred_fallthru
      _
    // Predicated region
    $region158: #{critic_forward.1} parent=1 // pred_check
      _
    $region159: #{critic_forward.1} parent=1 // pred_check_branch
      %422 = sbr.rel (0) target = $region161
    $region160: #{critic_forward.1} parent=1 // pred_region
      %423 = dma.done [#allocation13], 32
    $region161: #{critic_forward.1} parent=1 // pred_fallthru
      _
    // Predicated region
    $region162: #{critic_forward.1} parent=1 // pred_check
      _
    $region163: #{critic_forward.1} parent=1 // pred_check_branch
      %425 = sbr.rel (0) target = $region165
    $region164: #{critic_forward.1} parent=1 // pred_region
      %426 = dma.done [#allocation16], 2048
    $region165: #{critic_forward.1} parent=1 // pred_fallthru
      _
    // Predicated region
    $region166: #{critic_forward.1} parent=1 // pred_check
      _
    $region167: #{critic_forward.1} parent=1 // pred_check_branch
      %428 = sbr.rel (0) target = $region169
    $region168: #{critic_forward.1} parent=1 // pred_region
      %429 = dma.done [#allocation16], 16
    $region169: #{critic_forward.1} parent=1 // pred_fallthru
      _
    // Predicated region
    $region170: #{critic_forward.1} parent=1 // pred_check
      _
    $region171: #{critic_forward.1} parent=1 // pred_check_branch
      %431 = sbr.rel (0) target = $region173
    $region172: #{critic_forward.1} parent=1 // pred_region
      %432 = dma.done [#allocation19], 2048
    $region173: #{critic_forward.1} parent=1 // pred_fallthru
      _
    // Predicated region
    $region174: #{critic_forward.1} parent=1 // pred_check
      _
    $region175: #{critic_forward.1} parent=1 // pred_check_branch
      %434 = sbr.rel (0) target = $region177
    $region176: #{critic_forward.1} parent=1 // pred_region
      %435 = dma.done [#allocation19], 32
    $region177: #{critic_forward.1} parent=1 // pred_fallthru
      _
    // Predicated region
    $region178: #{critic_forward.1} parent=1 // pred_check
      _
    $region179: #{critic_forward.1} parent=1 // pred_check_branch
      %437 = sbr.rel (0) target = $region181
    $region180: #{critic_forward.1} parent=1 // pred_region
      %438 = dma.done [#allocation22], 4096
    $region181: #{critic_forward.1} parent=1 // pred_fallthru
      _
    // Predicated region
    $region182: #{critic_forward.1} parent=1 // pred_check
      _
    $region183: #{critic_forward.1} parent=1 // pred_check_branch
      %440 = sbr.rel (0) target = $region185
    $region184: #{critic_forward.1} parent=1 // pred_region
      %441 = dma.done [#allocation22], 32
    $region185: #{critic_forward.1} parent=1 // pred_fallthru
      _
    // Predicated region
    $region186: #{critic_forward.1} parent=1 // pred_check
      _
    $region187: #{critic_forward.1} parent=1 // pred_check_branch
      %443 = sbr.rel (0) target = $region189
    $region188: #{critic_forward.1} parent=1 // pred_region
      %444 = dma.done [#allocation25], 4096
    $region189: #{critic_forward.1} parent=1 // pred_fallthru
      _
    // Predicated region
    $region190: #{critic_forward.1} parent=1 // pred_check
      _
    $region191: #{critic_forward.1} parent=1 // pred_check_branch
      %446 = sbr.rel (0) target = $region193
    $region192: #{critic_forward.1} parent=1 // pred_region
      %447 = dma.done [#allocation25], 32
    $region193: #{critic_forward.1} parent=1 // pred_fallthru
      _
    // Predicated region
    $region194: #{critic_forward.1} parent=1 // pred_check
      _
    $region195: #{critic_forward.1} parent=1 // pred_check_branch
      %449 = sbr.rel (0) target = $region197
    $region196: #{critic_forward.1} parent=1 // pred_region
      %450 = dma.done [#allocation28], 2048
    $region197: #{critic_forward.1} parent=1 // pred_fallthru
      _
    // Predicated region
    $region198: #{critic_forward.1} parent=1 // pred_check
      _
    $region199: #{critic_forward.1} parent=1 // pred_check_branch
      %452 = sbr.rel (0) target = $region201
    $region200: #{critic_forward.1} parent=1 // pred_region
      %453 = dma.done [#allocation28], 16
    $region201: #{critic_forward.1} parent=1 // pred_fallthru
      _
    // Predicated region
    $region202: #{critic_forward.1} parent=1 // pred_check
      _
    $region203: #{critic_forward.1} parent=1 // pred_check_branch
      %455 = sbr.rel (0) target = $region205
    $region204: #{critic_forward.1} parent=1 // pred_region
      %456 = dma.done [#allocation31], 2048
    $region205: #{critic_forward.1} parent=1 // pred_fallthru
      _
    // Predicated region
    $region206: #{critic_forward.1} parent=1 // pred_check
      _
    $region207: #{critic_forward.1} parent=1 // pred_check_branch
      %458 = sbr.rel (0) target = $region209
    $region208: #{critic_forward.1} parent=1 // pred_region
      %459 = dma.done [#allocation31], 21120
    $region209: #{critic_forward.1} parent=1 // pred_fallthru
      _
    // Predicated region
    $region210: #{critic_forward.1} parent=1 // pred_check
      _
    $region211: #{critic_forward.1} parent=1 // pred_check_branch
      %461 = sbr.rel (0) target = $region213
    $region212: #{critic_forward.1} parent=1 // pred_region
      %462 = dma.done [#allocation34], 32
    $region213: #{critic_forward.1} parent=1 // pred_fallthru
      _
    // Predicated region
    $region214: #{critic_forward.1} parent=1 // pred_check
      _
    $region215: #{critic_forward.1} parent=1 // pred_check_branch
      %464 = sbr.rel (0) target = $region217
    $region216: #{critic_forward.1} parent=1 // pred_region
      %465 = dma.done [#allocation34], 4096
    $region217: #{critic_forward.1} parent=1 // pred_fallthru
      _
    // Predicated region
    $region218: #{critic_forward.1} parent=1 // pred_check
      _
    $region219: #{critic_forward.1} parent=1 // pred_check_branch
      %467 = sbr.rel (0) target = $region221
    $region220: #{critic_forward.1} parent=1 // pred_region
      %468 = dma.done [#allocation37], 32
    $region221: #{critic_forward.1} parent=1 // pred_fallthru
      _
    // Predicated region
    $region222: #{critic_forward.1} parent=1 // pred_check
      _
    $region223: #{critic_forward.1} parent=1 // pred_check_branch
      %470 = sbr.rel (0) target = $region225
    $region224: #{critic_forward.1} parent=1 // pred_region
      %471 = dma.done [#allocation37], 4096
    $region225: #{critic_forward.1} parent=1 // pred_fallthru
      _
    // Predicated region
    $region226: #{critic_forward.1} parent=1 // pred_check
      _
    $region227: #{critic_forward.1} parent=1 // pred_check_branch
      %473 = sbr.rel (0) target = $region229
    $region228: #{critic_forward.1} parent=1 // pred_region
      %474 = dma.done [#allocation40], 32
    $region229: #{critic_forward.1} parent=1 // pred_fallthru
      _
    // Predicated region
    $region230: #{critic_forward.1} parent=1 // pred_check
      _
    $region231: #{critic_forward.1} parent=1 // pred_check_branch
      %476 = sbr.rel (0) target = $region233
    $region232: #{critic_forward.1} parent=1 // pred_region
      %477 = dma.done [#allocation40], 2048
    $region233: #{critic_forward.1} parent=1 // pred_fallthru
      _
    // Predicated region
    $region234: #{critic_forward.1} parent=1 // pred_check
      _
    $region235: #{critic_forward.1} parent=1 // pred_check_branch
      %479 = sbr.rel (0) target = $region237
    $region236: #{critic_forward.1} parent=1 // pred_region
      %480 = dma.done [#allocation43], 16
    $region237: #{critic_forward.1} parent=1 // pred_fallthru
      _
    // Predicated region
    $region238: #{critic_forward.1} parent=1 // pred_check
      _
    $region239: #{critic_forward.1} parent=1 // pred_check_branch
      %482 = sbr.rel (0) target = $region241
    $region240: #{critic_forward.1} parent=1 // pred_region
      %483 = dma.done [#allocation43], 1024
    $region241: #{critic_forward.1} parent=1 // pred_fallthru
      _
    // Predicated region
    $region242: #{critic_forward.1} parent=1 // pred_check
      _
    $region243: #{critic_forward.1} parent=1 // pred_check_branch
      %485 = sbr.rel (0) target = $region245
    $region244: #{critic_forward.1} parent=1 // pred_region
      %486 = dma.done [#allocation46], 16
    $region245: #{critic_forward.1} parent=1 // pred_fallthru
      _
    %487 = sfence
    %v489 = vld [vmem:[%s1] sm:$0x1]
    %v490 = vpack.c.bf16 %v489, %v489
    %v491 = vld [vmem:[%s11] sm:$0xff]
    %v492 = vld [vmem:[%s11 + $0x8] sm:$0xff]
    %v493 = vld [vmem:[%s11 + $0x10] sm:$0xff]
    %v494 = vld [vmem:[%s11 + $0x18] sm:$0xff]
    %v495 = vld [vmem:[%s11 + $0x20] sm:$0xff]
    %v496 = vld [vmem:[%s11 + $0x28] sm:$0xff]
    %v497 = vld [vmem:[%s11 + $0x30] sm:$0xff]
    %v498 = vld [vmem:[%s11 + $0x38] sm:$0xff]
    %v499 = vld [vmem:[%s11 + $0x40] sm:$0xff]
    %v500 = vld [vmem:[%s11 + $0x48] sm:$0xff]
    %v501 = vld [vmem:[%s11 + $0x50] sm:$0xff]
    %v502 = vld [vmem:[%s11 + $0x58] sm:$0xff]
    %v503 = vld [vmem:[%s11 + $0x60] sm:$0xff]
    %v504 = vld [vmem:[%s11 + $0x68] sm:$0xff]
    %v505 = vld [vmem:[%s11 + $0x70] sm:$0xff]
    %v506 = vld [vmem:[%s11 + $0x78] sm:$0xff]
    %v507 = vld [vmem:[#allocation8] sm:$0x3]
    %v524 = vunpack.c.l.b16 %v491
    %v525 = vunpack.c.h.b16 %v491
    %v526 = vunpack.c.l.b16 %v492
    %v527 = vunpack.c.h.b16 %v492
    %v528 = vunpack.c.l.b16 %v493
    %v529 = vunpack.c.h.b16 %v493
    %v530 = vunpack.c.l.b16 %v494
    %v531 = vunpack.c.h.b16 %v494
    %v532 = vunpack.c.l.b16 %v495
    %v533 = vunpack.c.h.b16 %v495
    %v534 = vunpack.c.l.b16 %v496
    %v535 = vunpack.c.h.b16 %v496
    %v536 = vunpack.c.l.b16 %v497
    %v537 = vunpack.c.h.b16 %v497
    %v538 = vunpack.c.l.b16 %v498
    %v539 = vunpack.c.h.b16 %v498
    %v540 = vunpack.c.l.b16 %v499
    %v541 = vunpack.c.h.b16 %v499
    %v542 = vunpack.c.l.b16 %v500
    %v543 = vunpack.c.h.b16 %v500
    %v544 = vunpack.c.l.b16 %v501
    %v545 = vunpack.c.h.b16 %v501
    %v546 = vunpack.c.l.b16 %v502
    %v547 = vunpack.c.h.b16 %v502
    %v548 = vunpack.c.l.b16 %v503
    %v549 = vunpack.c.h.b16 %v503
    %v550 = vunpack.c.l.b16 %v504
    %v551 = vunpack.c.h.b16 %v504
    %v552 = vunpack.c.l.b16 %v505
    %v553 = vunpack.c.h.b16 %v505
    %v554 = vunpack.c.l.b16 %v506
    %v555 = vunpack.c.h.b16 %v506
    %v556 = vpack.c.b16 %v526, %v524
    %v557 = vpack.c.b16 %v527, %v525
    %v558 = vpack.c.b16 %v530, %v528
    %v559 = vpack.c.b16 %v531, %v529
    %v560 = vpack.c.b16 %v534, %v532
    %v561 = vpack.c.b16 %v535, %v533
    %v562 = vpack.c.b16 %v538, %v536
    %v563 = vpack.c.b16 %v539, %v537
    %v564 = vpack.c.b16 %v542, %v540
    %v565 = vpack.c.b16 %v543, %v541
    %v566 = vpack.c.b16 %v546, %v544
    %v567 = vpack.c.b16 %v547, %v545
    %v568 = vpack.c.b16 %v550, %v548
    %v569 = vpack.c.b16 %v551, %v549
    %v570 = vpack.c.b16 %v554, %v552
    %v571 = vpack.c.b16 %v555, %v553
    %v589 = vlaneseq
    %v590 = vshrl.u32 %v589, 7
    %v591 = vsub.s32 0, %v590
    %v592 = vrot.slane %v507, %v591
    %v593 = vlaneseq
    %v594 = vshrl.u32 %v593, 7
    %v595 = vsub.s32 1, %v594
    %v596 = vrot.slane %v507, %v595
    %599 = vmatprep.subr.bf16.mxu0 %v557
    %600 = vmatpush1.bf16.msra.mxu0 %v556
    %601 = vmatprep.subr.bf16.mxu0 %v559
    %602 = vmatpush1.bf16.msra.mxu0 %v558
    %603 = vmatprep.subr.bf16.mxu0 %v561
    %604 = vmatpush1.bf16.msra.mxu0 %v560
    %605 = vmatprep.subr.bf16.mxu0 %v563
    %606 = vmatpush1.bf16.msra.mxu0 %v562
    %607 = vmatprep.subr.bf16.mxu0 %v565
    %608 = vmatpush1.bf16.msra.mxu0 %v564
    %609 = vmatprep.subr.bf16.mxu0 %v567
    %610 = vmatpush1.bf16.msra.mxu0 %v566
    %611 = vmatprep.subr.bf16.mxu0 %v569
    %612 = vmatpush1.bf16.msra.mxu0 %v568
    %613 = vmatprep.subr.bf16.mxu0 %v571
    %614 = vmatpush1.bf16.msra.mxu0 %v570
    %615 = vmatprep.subr.bf16.mxu0 0
    %616 = vmatpush1.bf16.msra.mxu0 0
    %617 = vmatprep.subr.bf16.mxu0 0
    %618 = vmatpush1.bf16.msra.mxu0 0
    %619 = vmatprep.subr.bf16.mxu0 0
    %620 = vmatpush1.bf16.msra.mxu0 0
    %621 = vmatprep.subr.bf16.mxu0 0
    %622 = vmatpush1.bf16.msra.mxu0 0
    %623 = vmatprep.subr.bf16.mxu0 0
    %624 = vmatpush1.bf16.msra.mxu0 0
    %625 = vmatprep.subr.bf16.mxu0 0
    %626 = vmatpush1.bf16.msra.mxu0 0
    %627 = vmatprep.subr.bf16.mxu0 0
    %628 = vmatpush1.bf16.msra.mxu0 0
    %629 = vmatprep.subr.bf16.mxu0 0
    %630 = vmatpush1.bf16.msra.mxu0 0
    %631 = vmatprep.mubr.bf16.mxu0 0
    %632 = vmatmul.mubr.bf16.gmra.mrb[0].mxu0 %v490
    %v633 = vpop.f32.mrb[0].mxu0
    %v634 = vadd.f32 %v592, %v633
    %v635 = vpop.f32.mrb[0].mxu0
    %v636 = vadd.f32 %v596, %v635
    %v637 = vpop.f32.mrb[0].mxu0
    %v638 = vpop.f32.mrb[0].mxu0
    %639 = vdwg.mxu0
    %v640 = vmax.f32 %v634, 0.0
    %v641 = vmax.f32 %v636, 0.0
    %v642 = vpack.c.bf16 %v640, %v640
    %v643 = vpack.c.bf16 %v641, %v641
    %v644 = vld [vmem:[#allocation9] sm:$0xff]
    %v645 = vld [vmem:[#allocation9 + $0x8] sm:$0xff]
    %v646 = vld [vmem:[#allocation9 + $0x10] sm:$0xff]
    %v647 = vld [vmem:[#allocation9 + $0x18] sm:$0xff]
    %v648 = vld [vmem:[#allocation9 + $0x20] sm:$0xff]
    %v649 = vld [vmem:[#allocation9 + $0x28] sm:$0xff]
    %v650 = vld [vmem:[#allocation9 + $0x30] sm:$0xff]
    %v651 = vld [vmem:[#allocation9 + $0x38] sm:$0xff]
    %v652 = vld [vmem:[#allocation9 + $0x40] sm:$0xff]
    %v653 = vld [vmem:[#allocation9 + $0x48] sm:$0xff]
    %v654 = vld [vmem:[#allocation9 + $0x50] sm:$0xff]
    %v655 = vld [vmem:[#allocation9 + $0x58] sm:$0xff]
    %v656 = vld [vmem:[#allocation9 + $0x60] sm:$0xff]
    %v657 = vld [vmem:[#allocation9 + $0x68] sm:$0xff]
    %v658 = vld [vmem:[#allocation9 + $0x70] sm:$0xff]
    %v659 = vld [vmem:[#allocation9 + $0x78] sm:$0xff]
    %v660 = vld [vmem:[#allocation9 + $0x80] sm:$0xff]
    %v661 = vld [vmem:[#allocation9 + $0x88] sm:$0xff]
    %v662 = vld [vmem:[#allocation9 + $0x90] sm:$0xff]
    %v663 = vld [vmem:[#allocation9 + $0x98] sm:$0xff]
    %v664 = vld [vmem:[#allocation9 + $0xa0] sm:$0xff]
    %v665 = vld [vmem:[#allocation9 + $0xa8] sm:$0xff]
    %v666 = vld [vmem:[#allocation9 + $0xb0] sm:$0xff]
    %v667 = vld [vmem:[#allocation9 + $0xb8] sm:$0xff]
    %v668 = vld [vmem:[#allocation9 + $0xc0] sm:$0xff]
    %v669 = vld [vmem:[#allocation9 + $0xc8] sm:$0xff]
    %v670 = vld [vmem:[#allocation9 + $0xd0] sm:$0xff]
    %v671 = vld [vmem:[#allocation9 + $0xd8] sm:$0xff]
    %v672 = vld [vmem:[#allocation9 + $0xe0] sm:$0xff]
    %v673 = vld [vmem:[#allocation9 + $0xe8] sm:$0xff]
    %v674 = vld [vmem:[#allocation9 + $0xf0] sm:$0xff]
    %v675 = vld [vmem:[#allocation9 + $0xf8] sm:$0xff]
    %v676 = vld [vmem:[#allocation11] sm:$0x3]
    %v709 = vunpack.c.l.b16 %v644
    %v710 = vunpack.c.h.b16 %v644
    %v711 = vunpack.c.l.b16 %v645
    %v712 = vunpack.c.h.b16 %v645
    %v713 = vunpack.c.l.b16 %v646
    %v714 = vunpack.c.h.b16 %v646
    %v715 = vunpack.c.l.b16 %v647
    %v716 = vunpack.c.h.b16 %v647
    %v717 = vunpack.c.l.b16 %v648
    %v718 = vunpack.c.h.b16 %v648
    %v719 = vunpack.c.l.b16 %v649
    %v720 = vunpack.c.h.b16 %v649
    %v721 = vunpack.c.l.b16 %v650
    %v722 = vunpack.c.h.b16 %v650
    %v723 = vunpack.c.l.b16 %v651
    %v724 = vunpack.c.h.b16 %v651
    %v725 = vunpack.c.l.b16 %v652
    %v726 = vunpack.c.h.b16 %v652
    %v727 = vunpack.c.l.b16 %v653
    %v728 = vunpack.c.h.b16 %v653
    %v729 = vunpack.c.l.b16 %v654
    %v730 = vunpack.c.h.b16 %v654
    %v731 = vunpack.c.l.b16 %v655
    %v732 = vunpack.c.h.b16 %v655
    %v733 = vunpack.c.l.b16 %v656
    %v734 = vunpack.c.h.b16 %v656
    %v735 = vunpack.c.l.b16 %v657
    %v736 = vunpack.c.h.b16 %v657
    %v737 = vunpack.c.l.b16 %v658
    %v738 = vunpack.c.h.b16 %v658
    %v739 = vunpack.c.l.b16 %v659
    %v740 = vunpack.c.h.b16 %v659
    %v741 = vunpack.c.l.b16 %v660
    %v742 = vunpack.c.h.b16 %v660
    %v743 = vunpack.c.l.b16 %v661
    %v744 = vunpack.c.h.b16 %v661
    %v745 = vunpack.c.l.b16 %v662
    %v746 = vunpack.c.h.b16 %v662
    %v747 = vunpack.c.l.b16 %v663
    %v748 = vunpack.c.h.b16 %v663
    %v749 = vunpack.c.l.b16 %v664
    %v750 = vunpack.c.h.b16 %v664
    %v751 = vunpack.c.l.b16 %v665
    %v752 = vunpack.c.h.b16 %v665
    %v753 = vunpack.c.l.b16 %v666
    %v754 = vunpack.c.h.b16 %v666
    %v755 = vunpack.c.l.b16 %v667
    %v756 = vunpack.c.h.b16 %v667
    %v757 = vunpack.c.l.b16 %v668
    %v758 = vunpack.c.h.b16 %v668
    %v759 = vunpack.c.l.b16 %v669
    %v760 = vunpack.c.h.b16 %v669
    %v761 = vunpack.c.l.b16 %v670
    %v762 = vunpack.c.h.b16 %v670
    %v763 = vunpack.c.l.b16 %v671
    %v764 = vunpack.c.h.b16 %v671
    %v765 = vunpack.c.l.b16 %v672
    %v766 = vunpack.c.h.b16 %v672
    %v767 = vunpack.c.l.b16 %v673
    %v768 = vunpack.c.h.b16 %v673
    %v769 = vunpack.c.l.b16 %v674
    %v770 = vunpack.c.h.b16 %v674
    %v771 = vunpack.c.l.b16 %v675
    %v772 = vunpack.c.h.b16 %v675
    %v773 = vpack.c.b16 %v711, %v709
    %v774 = vpack.c.b16 %v712, %v710
    %v775 = vpack.c.b16 %v715, %v713
    %v776 = vpack.c.b16 %v716, %v714
    %v777 = vpack.c.b16 %v719, %v717
    %v778 = vpack.c.b16 %v720, %v718
    %v779 = vpack.c.b16 %v723, %v721
    %v780 = vpack.c.b16 %v724, %v722
    %v781 = vpack.c.b16 %v727, %v725
    %v782 = vpack.c.b16 %v728, %v726
    %v783 = vpack.c.b16 %v731, %v729
    %v784 = vpack.c.b16 %v732, %v730
    %v785 = vpack.c.b16 %v735, %v733
    %v786 = vpack.c.b16 %v736, %v734
    %v787 = vpack.c.b16 %v739, %v737
    %v788 = vpack.c.b16 %v740, %v738
    %v789 = vpack.c.b16 %v743, %v741
    %v790 = vpack.c.b16 %v744, %v742
    %v791 = vpack.c.b16 %v747, %v745
    %v792 = vpack.c.b16 %v748, %v746
    %v793 = vpack.c.b16 %v751, %v749
    %v794 = vpack.c.b16 %v752, %v750
    %v795 = vpack.c.b16 %v755, %v753
    %v796 = vpack.c.b16 %v756, %v754
    %v797 = vpack.c.b16 %v759, %v757
    %v798 = vpack.c.b16 %v760, %v758
    %v799 = vpack.c.b16 %v763, %v761
    %v800 = vpack.c.b16 %v764, %v762
    %v801 = vpack.c.b16 %v767, %v765
    %v802 = vpack.c.b16 %v768, %v766
    %v803 = vpack.c.b16 %v771, %v769
    %v804 = vpack.c.b16 %v772, %v770
    %v838 = vlaneseq
    %v839 = vshrl.u32 %v838, 7
    %v840 = vsub.s32 0, %v839
    %v841 = vrot.slane %v676, %v840
    %v842 = vlaneseq
    %v843 = vshrl.u32 %v842, 7
    %v844 = vsub.s32 1, %v843
    %v845 = vrot.slane %v676, %v844
    %848 = vmatprep.subr.bf16.mxu0 %v774
    %849 = vmatpush1.bf16.msra.mxu0 %v773
    %850 = vmatprep.subr.bf16.mxu0 %v776
    %851 = vmatpush1.bf16.msra.mxu0 %v775
    %852 = vmatprep.subr.bf16.mxu0 %v778
    %853 = vmatpush1.bf16.msra.mxu0 %v777
    %854 = vmatprep.subr.bf16.mxu0 %v780
    %855 = vmatpush1.bf16.msra.mxu0 %v779
    %856 = vmatprep.subr.bf16.mxu0 %v782
    %857 = vmatpush1.bf16.msra.mxu0 %v781
    %858 = vmatprep.subr.bf16.mxu0 %v784
    %859 = vmatpush1.bf16.msra.mxu0 %v783
    %860 = vmatprep.subr.bf16.mxu0 %v786
    %861 = vmatpush1.bf16.msra.mxu0 %v785
    %862 = vmatprep.subr.bf16.mxu0 %v788
    %863 = vmatpush1.bf16.msra.mxu0 %v787
    %864 = vmatprep.subr.bf16.mxu0 %v790
    %865 = vmatpush1.bf16.msra.mxu0 %v789
    %866 = vmatprep.subr.bf16.mxu0 %v792
    %867 = vmatpush1.bf16.msra.mxu0 %v791
    %868 = vmatprep.subr.bf16.mxu0 %v794
    %869 = vmatpush1.bf16.msra.mxu0 %v793
    %870 = vmatprep.subr.bf16.mxu0 %v796
    %871 = vmatpush1.bf16.msra.mxu0 %v795
    %872 = vmatprep.subr.bf16.mxu0 %v798
    %873 = vmatpush1.bf16.msra.mxu0 %v797
    %874 = vmatprep.subr.bf16.mxu0 %v800
    %875 = vmatpush1.bf16.msra.mxu0 %v799
    %876 = vmatprep.subr.bf16.mxu0 %v802
    %877 = vmatpush1.bf16.msra.mxu0 %v801
    %878 = vmatprep.subr.bf16.mxu0 %v804
    %879 = vmatpush1.bf16.msra.mxu0 %v803
    %880 = vmatprep.mubr.bf16.mxu0 %v643
    %881 = vmatmul.mubr.bf16.gmra.mrb[0].mxu0 %v642
    %v882 = vpop.f32.mrb[0].mxu0
    %v883 = vadd.f32 %v841, %v882
    %v884 = vpop.f32.mrb[0].mxu0
    %v885 = vadd.f32 %v845, %v884
    %v886 = vpop.f32.mrb[0].mxu0
    %v887 = vpop.f32.mrb[0].mxu0
    %888 = vdwg.mxu0
    %v889 = vmax.f32 %v883, 0.0
    %v890 = vmax.f32 %v885, 0.0
    %v891 = vpack.c.bf16 %v889, %v889
    %v892 = vpack.c.bf16 %v890, %v890
    %v893 = vld [vmem:[#allocation12] sm:$0xff]
    %v894 = vld [vmem:[#allocation12 + $0x8] sm:$0xff]
    %v895 = vld [vmem:[#allocation12 + $0x10] sm:$0xff]
    %v896 = vld [vmem:[#allocation12 + $0x18] sm:$0xff]
    %v897 = vld [vmem:[#allocation12 + $0x20] sm:$0xff]
    %v898 = vld [vmem:[#allocation12 + $0x28] sm:$0xff]
    %v899 = vld [vmem:[#allocation12 + $0x30] sm:$0xff]
    %v900 = vld [vmem:[#allocation12 + $0x38] sm:$0xff]
    %v901 = vld [vmem:[#allocation12 + $0x40] sm:$0xff]
    %v902 = vld [vmem:[#allocation12 + $0x48] sm:$0xff]
    %v903 = vld [vmem:[#allocation12 + $0x50] sm:$0xff]
    %v904 = vld [vmem:[#allocation12 + $0x58] sm:$0xff]
    %v905 = vld [vmem:[#allocation12 + $0x60] sm:$0xff]
    %v906 = vld [vmem:[#allocation12 + $0x68] sm:$0xff]
    %v907 = vld [vmem:[#allocation12 + $0x70] sm:$0xff]
    %v908 = vld [vmem:[#allocation12 + $0x78] sm:$0xff]
    %v909 = vld [vmem:[#allocation12 + $0x80] sm:$0xff]
    %v910 = vld [vmem:[#allocation12 + $0x88] sm:$0xff]
    %v911 = vld [vmem:[#allocation12 + $0x90] sm:$0xff]
    %v912 = vld [vmem:[#allocation12 + $0x98] sm:$0xff]
    %v913 = vld [vmem:[#allocation12 + $0xa0] sm:$0xff]
    %v914 = vld [vmem:[#allocation12 + $0xa8] sm:$0xff]
    %v915 = vld [vmem:[#allocation12 + $0xb0] sm:$0xff]
    %v916 = vld [vmem:[#allocation12 + $0xb8] sm:$0xff]
    %v917 = vld [vmem:[#allocation12 + $0xc0] sm:$0xff]
    %v918 = vld [vmem:[#allocation12 + $0xc8] sm:$0xff]
    %v919 = vld [vmem:[#allocation12 + $0xd0] sm:$0xff]
    %v920 = vld [vmem:[#allocation12 + $0xd8] sm:$0xff]
    %v921 = vld [vmem:[#allocation12 + $0xe0] sm:$0xff]
    %v922 = vld [vmem:[#allocation12 + $0xe8] sm:$0xff]
    %v923 = vld [vmem:[#allocation12 + $0xf0] sm:$0xff]
    %v924 = vld [vmem:[#allocation12 + $0xf8] sm:$0xff]
    %v925 = vld [vmem:[#allocation14] sm:$0x3]
    %v958 = vunpack.c.l.b16 %v893
    %v959 = vunpack.c.h.b16 %v893
    %v960 = vunpack.c.l.b16 %v894
    %v961 = vunpack.c.h.b16 %v894
    %v962 = vunpack.c.l.b16 %v895
    %v963 = vunpack.c.h.b16 %v895
    %v964 = vunpack.c.l.b16 %v896
    %v965 = vunpack.c.h.b16 %v896
    %v966 = vunpack.c.l.b16 %v897
    %v967 = vunpack.c.h.b16 %v897
    %v968 = vunpack.c.l.b16 %v898
    %v969 = vunpack.c.h.b16 %v898
    %v970 = vunpack.c.l.b16 %v899
    %v971 = vunpack.c.h.b16 %v899
    %v972 = vunpack.c.l.b16 %v900
    %v973 = vunpack.c.h.b16 %v900
    %v974 = vunpack.c.l.b16 %v901
    %v975 = vunpack.c.h.b16 %v901
    %v976 = vunpack.c.l.b16 %v902
    %v977 = vunpack.c.h.b16 %v902
    %v978 = vunpack.c.l.b16 %v903
    %v979 = vunpack.c.h.b16 %v903
    %v980 = vunpack.c.l.b16 %v904
    %v981 = vunpack.c.h.b16 %v904
    %v982 = vunpack.c.l.b16 %v905
    %v983 = vunpack.c.h.b16 %v905
    %v984 = vunpack.c.l.b16 %v906
    %v985 = vunpack.c.h.b16 %v906
    %v986 = vunpack.c.l.b16 %v907
    %v987 = vunpack.c.h.b16 %v907
    %v988 = vunpack.c.l.b16 %v908
    %v989 = vunpack.c.h.b16 %v908
    %v990 = vunpack.c.l.b16 %v909
    %v991 = vunpack.c.h.b16 %v909
    %v992 = vunpack.c.l.b16 %v910
    %v993 = vunpack.c.h.b16 %v910
    %v994 = vunpack.c.l.b16 %v911
    %v995 = vunpack.c.h.b16 %v911
    %v996 = vunpack.c.l.b16 %v912
    %v997 = vunpack.c.h.b16 %v912
    %v998 = vunpack.c.l.b16 %v913
    %v999 = vunpack.c.h.b16 %v913
    %v1000 = vunpack.c.l.b16 %v914
    %v1001 = vunpack.c.h.b16 %v914
    %v1002 = vunpack.c.l.b16 %v915
    %v1003 = vunpack.c.h.b16 %v915
    %v1004 = vunpack.c.l.b16 %v916
    %v1005 = vunpack.c.h.b16 %v916
    %v1006 = vunpack.c.l.b16 %v917
    %v1007 = vunpack.c.h.b16 %v917
    %v1008 = vunpack.c.l.b16 %v918
    %v1009 = vunpack.c.h.b16 %v918
    %v1010 = vunpack.c.l.b16 %v919
    %v1011 = vunpack.c.h.b16 %v919
    %v1012 = vunpack.c.l.b16 %v920
    %v1013 = vunpack.c.h.b16 %v920
    %v1014 = vunpack.c.l.b16 %v921
    %v1015 = vunpack.c.h.b16 %v921
    %v1016 = vunpack.c.l.b16 %v922
    %v1017 = vunpack.c.h.b16 %v922
    %v1018 = vunpack.c.l.b16 %v923
    %v1019 = vunpack.c.h.b16 %v923
    %v1020 = vunpack.c.l.b16 %v924
    %v1021 = vunpack.c.h.b16 %v924
    %v1022 = vpack.c.b16 %v960, %v958
    %v1023 = vpack.c.b16 %v961, %v959
    %v1024 = vpack.c.b16 %v964, %v962
    %v1025 = vpack.c.b16 %v965, %v963
    %v1026 = vpack.c.b16 %v968, %v966
    %v1027 = vpack.c.b16 %v969, %v967
    %v1028 = vpack.c.b16 %v972, %v970
    %v1029 = vpack.c.b16 %v973, %v971
    %v1030 = vpack.c.b16 %v976, %v974
    %v1031 = vpack.c.b16 %v977, %v975
    %v1032 = vpack.c.b16 %v980, %v978
    %v1033 = vpack.c.b16 %v981, %v979
    %v1034 = vpack.c.b16 %v984, %v982
    %v1035 = vpack.c.b16 %v985, %v983
    %v1036 = vpack.c.b16 %v988, %v986
    %v1037 = vpack.c.b16 %v989, %v987
    %v1038 = vpack.c.b16 %v992, %v990
    %v1039 = vpack.c.b16 %v993, %v991
    %v1040 = vpack.c.b16 %v996, %v994
    %v1041 = vpack.c.b16 %v997, %v995
    %v1042 = vpack.c.b16 %v1000, %v998
    %v1043 = vpack.c.b16 %v1001, %v999
    %v1044 = vpack.c.b16 %v1004, %v1002
    %v1045 = vpack.c.b16 %v1005, %v1003
    %v1046 = vpack.c.b16 %v1008, %v1006
    %v1047 = vpack.c.b16 %v1009, %v1007
    %v1048 = vpack.c.b16 %v1012, %v1010
    %v1049 = vpack.c.b16 %v1013, %v1011
    %v1050 = vpack.c.b16 %v1016, %v1014
    %v1051 = vpack.c.b16 %v1017, %v1015
    %v1052 = vpack.c.b16 %v1020, %v1018
    %v1053 = vpack.c.b16 %v1021, %v1019
    %v1087 = vlaneseq
    %v1088 = vshrl.u32 %v1087, 7
    %v1089 = vsub.s32 0, %v1088
    %v1090 = vrot.slane %v925, %v1089
    %v1091 = vlaneseq
    %v1092 = vshrl.u32 %v1091, 7
    %v1093 = vsub.s32 1, %v1092
    %v1094 = vrot.slane %v925, %v1093
    %1097 = vmatprep.subr.bf16.mxu0 %v1023
    %1098 = vmatpush1.bf16.msra.mxu0 %v1022
    %1099 = vmatprep.subr.bf16.mxu0 %v1025
    %1100 = vmatpush1.bf16.msra.mxu0 %v1024
    %1101 = vmatprep.subr.bf16.mxu0 %v1027
    %1102 = vmatpush1.bf16.msra.mxu0 %v1026
    %1103 = vmatprep.subr.bf16.mxu0 %v1029
    %1104 = vmatpush1.bf16.msra.mxu0 %v1028
    %1105 = vmatprep.subr.bf16.mxu0 %v1031
    %1106 = vmatpush1.bf16.msra.mxu0 %v1030
    %1107 = vmatprep.subr.bf16.mxu0 %v1033
    %1108 = vmatpush1.bf16.msra.mxu0 %v1032
    %1109 = vmatprep.subr.bf16.mxu0 %v1035
    %1110 = vmatpush1.bf16.msra.mxu0 %v1034
    %1111 = vmatprep.subr.bf16.mxu0 %v1037
    %1112 = vmatpush1.bf16.msra.mxu0 %v1036
    %1113 = vmatprep.subr.bf16.mxu0 %v1039
    %1114 = vmatpush1.bf16.msra.mxu0 %v1038
    %1115 = vmatprep.subr.bf16.mxu0 %v1041
    %1116 = vmatpush1.bf16.msra.mxu0 %v1040
    %1117 = vmatprep.subr.bf16.mxu0 %v1043
    %1118 = vmatpush1.bf16.msra.mxu0 %v1042
    %1119 = vmatprep.subr.bf16.mxu0 %v1045
    %1120 = vmatpush1.bf16.msra.mxu0 %v1044
    %1121 = vmatprep.subr.bf16.mxu0 %v1047
    %1122 = vmatpush1.bf16.msra.mxu0 %v1046
    %1123 = vmatprep.subr.bf16.mxu0 %v1049
    %1124 = vmatpush1.bf16.msra.mxu0 %v1048
    %1125 = vmatprep.subr.bf16.mxu0 %v1051
    %1126 = vmatpush1.bf16.msra.mxu0 %v1050
    %1127 = vmatprep.subr.bf16.mxu0 %v1053
    %1128 = vmatpush1.bf16.msra.mxu0 %v1052
    %1129 = vmatprep.mubr.bf16.mxu0 %v892
    %1130 = vmatmul.mubr.bf16.gmra.mrb[0].mxu0 %v891
    %v1131 = vpop.f32.mrb[0].mxu0
    %v1132 = vadd.f32 %v1090, %v1131
    %v1133 = vpop.f32.mrb[0].mxu0
    %v1134 = vadd.f32 %v1094, %v1133
    %v1135 = vpop.f32.mrb[0].mxu0
    %v1136 = vpop.f32.mrb[0].mxu0
    %1137 = vdwg.mxu0
    %v1138 = vmax.f32 %v1132, 0.0
    %v1139 = vmax.f32 %v1134, 0.0
    %v1140 = vpack.c.bf16 %v1138, %v1138
    %v1141 = vpack.c.bf16 %v1139, %v1139
    %v1142 = vld [vmem:[#allocation15] sm:$0xf]
    %v1143 = vld [vmem:[#allocation15 + $0x4] sm:$0xf]
    %v1144 = vld [vmem:[#allocation15 + $0x8] sm:$0xf]
    %v1145 = vld [vmem:[#allocation15 + $0xc] sm:$0xf]
    %v1146 = vld [vmem:[#allocation15 + $0x10] sm:$0xf]
    %v1147 = vld [vmem:[#allocation15 + $0x14] sm:$0xf]
    %v1148 = vld [vmem:[#allocation15 + $0x18] sm:$0xf]
    %v1149 = vld [vmem:[#allocation15 + $0x1c] sm:$0xf]
    %v1150 = vld [vmem:[#allocation15 + $0x20] sm:$0xf]
    %v1151 = vld [vmem:[#allocation15 + $0x24] sm:$0xf]
    %v1152 = vld [vmem:[#allocation15 + $0x28] sm:$0xf]
    %v1153 = vld [vmem:[#allocation15 + $0x2c] sm:$0xf]
    %v1154 = vld [vmem:[#allocation15 + $0x30] sm:$0xf]
    %v1155 = vld [vmem:[#allocation15 + $0x34] sm:$0xf]
    %v1156 = vld [vmem:[#allocation15 + $0x38] sm:$0xf]
    %v1157 = vld [vmem:[#allocation15 + $0x3c] sm:$0xf]
    %v1158 = vld [vmem:[#allocation15 + $0x40] sm:$0xf]
    %v1159 = vld [vmem:[#allocation15 + $0x44] sm:$0xf]
    %v1160 = vld [vmem:[#allocation15 + $0x48] sm:$0xf]
    %v1161 = vld [vmem:[#allocation15 + $0x4c] sm:$0xf]
    %v1162 = vld [vmem:[#allocation15 + $0x50] sm:$0xf]
    %v1163 = vld [vmem:[#allocation15 + $0x54] sm:$0xf]
    %v1164 = vld [vmem:[#allocation15 + $0x58] sm:$0xf]
    %v1165 = vld [vmem:[#allocation15 + $0x5c] sm:$0xf]
    %v1166 = vld [vmem:[#allocation15 + $0x60] sm:$0xf]
    %v1167 = vld [vmem:[#allocation15 + $0x64] sm:$0xf]
    %v1168 = vld [vmem:[#allocation15 + $0x68] sm:$0xf]
    %v1169 = vld [vmem:[#allocation15 + $0x6c] sm:$0xf]
    %v1170 = vld [vmem:[#allocation15 + $0x70] sm:$0xf]
    %v1171 = vld [vmem:[#allocation15 + $0x74] sm:$0xf]
    %v1172 = vld [vmem:[#allocation15 + $0x78] sm:$0xf]
    %v1173 = vld [vmem:[#allocation15 + $0x7c] sm:$0xf]
    %v1174 = vld [vmem:[#allocation17] sm:$0x1]
    %v1207 = vunpack.c.l.b16 %v1142
    %v1208 = vunpack.c.l.b16 %v1143
    %v1209 = vunpack.c.l.b16 %v1144
    %v1210 = vunpack.c.l.b16 %v1145
    %v1211 = vunpack.c.l.b16 %v1146
    %v1212 = vunpack.c.l.b16 %v1147
    %v1213 = vunpack.c.l.b16 %v1148
    %v1214 = vunpack.c.l.b16 %v1149
    %v1215 = vunpack.c.l.b16 %v1150
    %v1216 = vunpack.c.l.b16 %v1151
    %v1217 = vunpack.c.l.b16 %v1152
    %v1218 = vunpack.c.l.b16 %v1153
    %v1219 = vunpack.c.l.b16 %v1154
    %v1220 = vunpack.c.l.b16 %v1155
    %v1221 = vunpack.c.l.b16 %v1156
    %v1222 = vunpack.c.l.b16 %v1157
    %v1223 = vunpack.c.l.b16 %v1158
    %v1224 = vunpack.c.l.b16 %v1159
    %v1225 = vunpack.c.l.b16 %v1160
    %v1226 = vunpack.c.l.b16 %v1161
    %v1227 = vunpack.c.l.b16 %v1162
    %v1228 = vunpack.c.l.b16 %v1163
    %v1229 = vunpack.c.l.b16 %v1164
    %v1230 = vunpack.c.l.b16 %v1165
    %v1231 = vunpack.c.l.b16 %v1166
    %v1232 = vunpack.c.l.b16 %v1167
    %v1233 = vunpack.c.l.b16 %v1168
    %v1234 = vunpack.c.l.b16 %v1169
    %v1235 = vunpack.c.l.b16 %v1170
    %v1236 = vunpack.c.l.b16 %v1171
    %v1237 = vunpack.c.l.b16 %v1172
    %v1238 = vunpack.c.l.b16 %v1173
    %v1239 = vpack.c.b16 %v1208, %v1207
    %v1240 = vpack.c.b16 %v1210, %v1209
    %v1241 = vpack.c.b16 %v1212, %v1211
    %v1242 = vpack.c.b16 %v1214, %v1213
    %v1243 = vpack.c.b16 %v1216, %v1215
    %v1244 = vpack.c.b16 %v1218, %v1217
    %v1245 = vpack.c.b16 %v1220, %v1219
    %v1246 = vpack.c.b16 %v1222, %v1221
    %v1247 = vpack.c.b16 %v1224, %v1223
    %v1248 = vpack.c.b16 %v1226, %v1225
    %v1249 = vpack.c.b16 %v1228, %v1227
    %v1250 = vpack.c.b16 %v1230, %v1229
    %v1251 = vpack.c.b16 %v1232, %v1231
    %v1252 = vpack.c.b16 %v1234, %v1233
    %v1253 = vpack.c.b16 %v1236, %v1235
    %v1254 = vpack.c.b16 %v1238, %v1237
    %1271 = vmatprep.subr.bf16.mxu0 0
    %1272 = vmatpush1.bf16.msra.mxu0 %v1239
    %1273 = vmatprep.subr.bf16.mxu0 0
    %1274 = vmatpush1.bf16.msra.mxu0 %v1240
    %1275 = vmatprep.subr.bf16.mxu0 0
    %1276 = vmatpush1.bf16.msra.mxu0 %v1241
    %1277 = vmatprep.subr.bf16.mxu0 0
    %1278 = vmatpush1.bf16.msra.mxu0 %v1242
    %1279 = vmatprep.subr.bf16.mxu0 0
    %1280 = vmatpush1.bf16.msra.mxu0 %v1243
    %1281 = vmatprep.subr.bf16.mxu0 0
    %1282 = vmatpush1.bf16.msra.mxu0 %v1244
    %1283 = vmatprep.subr.bf16.mxu0 0
    %1284 = vmatpush1.bf16.msra.mxu0 %v1245
    %1285 = vmatprep.subr.bf16.mxu0 0
    %1286 = vmatpush1.bf16.msra.mxu0 %v1246
    %1287 = vmatprep.subr.bf16.mxu0 0
    %1288 = vmatpush1.bf16.msra.mxu0 %v1247
    %1289 = vmatprep.subr.bf16.mxu0 0
    %1290 = vmatpush1.bf16.msra.mxu0 %v1248
    %1291 = vmatprep.subr.bf16.mxu0 0
    %1292 = vmatpush1.bf16.msra.mxu0 %v1249
    %1293 = vmatprep.subr.bf16.mxu0 0
    %1294 = vmatpush1.bf16.msra.mxu0 %v1250
    %1295 = vmatprep.subr.bf16.mxu0 0
    %1296 = vmatpush1.bf16.msra.mxu0 %v1251
    %1297 = vmatprep.subr.bf16.mxu0 0
    %1298 = vmatpush1.bf16.msra.mxu0 %v1252
    %1299 = vmatprep.subr.bf16.mxu0 0
    %1300 = vmatpush1.bf16.msra.mxu0 %v1253
    %1301 = vmatprep.subr.bf16.mxu0 0
    %1302 = vmatpush1.bf16.msra.mxu0 %v1254
    %1303 = vmatprep.mubr.bf16.mxu0 %v1141
    %1304 = vmatmul.mubr.bf16.gmra.mrb[0].mxu0 %v1140
    %v1305 = vpop.f32.mrb[0].mxu0
    %v1306 = vadd.f32 %v1174, %v1305
    %v1307 = vpop.f32.mrb[0].mxu0
    %v1308 = vpop.f32.mrb[0].mxu0
    %v1309 = vpop.f32.mrb[0].mxu0
    %1310 = vdwg.mxu0
    %v1311 = vmax.f32 %v1306, 0.0
    %v1312 = vld [vmem:[%s3] sm:$0x1]
    %v1313 = vpack.c.bf16 %v1312, %v1312
    %v1314 = vld [vmem:[#allocation18] sm:$0xff]
    %v1315 = vld [vmem:[#allocation18 + $0x8] sm:$0xff]
    %v1316 = vld [vmem:[#allocation18 + $0x10] sm:$0xff]
    %v1317 = vld [vmem:[#allocation18 + $0x18] sm:$0xff]
    %v1318 = vld [vmem:[#allocation18 + $0x20] sm:$0xff]
    %v1319 = vld [vmem:[#allocation18 + $0x28] sm:$0xff]
    %v1320 = vld [vmem:[#allocation18 + $0x30] sm:$0xff]
    %v1321 = vld [vmem:[#allocation18 + $0x38] sm:$0xff]
    %v1322 = vld [vmem:[#allocation18 + $0x40] sm:$0xff]
    %v1323 = vld [vmem:[#allocation18 + $0x48] sm:$0xff]
    %v1324 = vld [vmem:[#allocation18 + $0x50] sm:$0xff]
    %v1325 = vld [vmem:[#allocation18 + $0x58] sm:$0xff]
    %v1326 = vld [vmem:[#allocation18 + $0x60] sm:$0xff]
    %v1327 = vld [vmem:[#allocation18 + $0x68] sm:$0xff]
    %v1328 = vld [vmem:[#allocation18 + $0x70] sm:$0xff]
    %v1329 = vld [vmem:[#allocation18 + $0x78] sm:$0xff]
    %v1330 = vld [vmem:[#allocation20] sm:$0x3]
    %v1347 = vunpack.c.l.b16 %v1314
    %v1348 = vunpack.c.h.b16 %v1314
    %v1349 = vunpack.c.l.b16 %v1315
    %v1350 = vunpack.c.h.b16 %v1315
    %v1351 = vunpack.c.l.b16 %v1316
    %v1352 = vunpack.c.h.b16 %v1316
    %v1353 = vunpack.c.l.b16 %v1317
    %v1354 = vunpack.c.h.b16 %v1317
    %v1355 = vunpack.c.l.b16 %v1318
    %v1356 = vunpack.c.h.b16 %v1318
    %v1357 = vunpack.c.l.b16 %v1319
    %v1358 = vunpack.c.h.b16 %v1319
    %v1359 = vunpack.c.l.b16 %v1320
    %v1360 = vunpack.c.h.b16 %v1320
    %v1361 = vunpack.c.l.b16 %v1321
    %v1362 = vunpack.c.h.b16 %v1321
    %v1363 = vunpack.c.l.b16 %v1322
    %v1364 = vunpack.c.h.b16 %v1322
    %v1365 = vunpack.c.l.b16 %v1323
    %v1366 = vunpack.c.h.b16 %v1323
    %v1367 = vunpack.c.l.b16 %v1324
    %v1368 = vunpack.c.h.b16 %v1324
    %v1369 = vunpack.c.l.b16 %v1325
    %v1370 = vunpack.c.h.b16 %v1325
    %v1371 = vunpack.c.l.b16 %v1326
    %v1372 = vunpack.c.h.b16 %v1326
    %v1373 = vunpack.c.l.b16 %v1327
    %v1374 = vunpack.c.h.b16 %v1327
    %v1375 = vunpack.c.l.b16 %v1328
    %v1376 = vunpack.c.h.b16 %v1328
    %v1377 = vunpack.c.l.b16 %v1329
    %v1378 = vunpack.c.h.b16 %v1329
    %v1379 = vpack.c.b16 %v1349, %v1347
    %v1380 = vpack.c.b16 %v1350, %v1348
    %v1381 = vpack.c.b16 %v1353, %v1351
    %v1382 = vpack.c.b16 %v1354, %v1352
    %v1383 = vpack.c.b16 %v1357, %v1355
    %v1384 = vpack.c.b16 %v1358, %v1356
    %v1385 = vpack.c.b16 %v1361, %v1359
    %v1386 = vpack.c.b16 %v1362, %v1360
    %v1387 = vpack.c.b16 %v1365, %v1363
    %v1388 = vpack.c.b16 %v1366, %v1364
    %v1389 = vpack.c.b16 %v1369, %v1367
    %v1390 = vpack.c.b16 %v1370, %v1368
    %v1391 = vpack.c.b16 %v1373, %v1371
    %v1392 = vpack.c.b16 %v1374, %v1372
    %v1393 = vpack.c.b16 %v1377, %v1375
    %v1394 = vpack.c.b16 %v1378, %v1376
    %v1412 = vlaneseq
    %v1413 = vshrl.u32 %v1412, 7
    %v1414 = vsub.s32 0, %v1413
    %v1415 = vrot.slane %v1330, %v1414
    %v1416 = vlaneseq
    %v1417 = vshrl.u32 %v1416, 7
    %v1418 = vsub.s32 1, %v1417
    %v1419 = vrot.slane %v1330, %v1418
    %1422 = vmatprep.subr.bf16.mxu0 %v1380
    %1423 = vmatpush1.bf16.msra.mxu0 %v1379
    %1424 = vmatprep.subr.bf16.mxu0 %v1382
    %1425 = vmatpush1.bf16.msra.mxu0 %v1381
    %1426 = vmatprep.subr.bf16.mxu0 %v1384
    %1427 = vmatpush1.bf16.msra.mxu0 %v1383
    %1428 = vmatprep.subr.bf16.mxu0 %v1386
    %1429 = vmatpush1.bf16.msra.mxu0 %v1385
    %1430 = vmatprep.subr.bf16.mxu0 %v1388
    %1431 = vmatpush1.bf16.msra.mxu0 %v1387
    %1432 = vmatprep.subr.bf16.mxu0 %v1390
    %1433 = vmatpush1.bf16.msra.mxu0 %v1389
    %1434 = vmatprep.subr.bf16.mxu0 %v1392
    %1435 = vmatpush1.bf16.msra.mxu0 %v1391
    %1436 = vmatprep.subr.bf16.mxu0 %v1394
    %1437 = vmatpush1.bf16.msra.mxu0 %v1393
    %1438 = vmatprep.subr.bf16.mxu0 0
    %1439 = vmatpush1.bf16.msra.mxu0 0
    %1440 = vmatprep.subr.bf16.mxu0 0
    %1441 = vmatpush1.bf16.msra.mxu0 0
    %1442 = vmatprep.subr.bf16.mxu0 0
    %1443 = vmatpush1.bf16.msra.mxu0 0
    %1444 = vmatprep.subr.bf16.mxu0 0
    %1445 = vmatpush1.bf16.msra.mxu0 0
    %1446 = vmatprep.subr.bf16.mxu0 0
    %1447 = vmatpush1.bf16.msra.mxu0 0
    %1448 = vmatprep.subr.bf16.mxu0 0
    %1449 = vmatpush1.bf16.msra.mxu0 0
    %1450 = vmatprep.subr.bf16.mxu0 0
    %1451 = vmatpush1.bf16.msra.mxu0 0
    %1452 = vmatprep.subr.bf16.mxu0 0
    %1453 = vmatpush1.bf16.msra.mxu0 0
    %1454 = vmatprep.mubr.bf16.mxu0 0
    %1455 = vmatmul.mubr.bf16.gmra.mrb[0].mxu0 %v1313
    %v1456 = vpop.f32.mrb[0].mxu0
    %v1457 = vadd.f32 %v1415, %v1456
    %v1458 = vpop.f32.mrb[0].mxu0
    %v1459 = vadd.f32 %v1419, %v1458
    %v1460 = vpop.f32.mrb[0].mxu0
    %v1461 = vpop.f32.mrb[0].mxu0
    %1462 = vdwg.mxu0
    %v1463 = vmax.f32 %v1457, 0.0
    %v1464 = vmax.f32 %v1459, 0.0
    %v1465 = vpack.c.bf16 %v1463, %v1463
    %v1466 = vpack.c.bf16 %v1464, %v1464
    %v1467 = vld [vmem:[#allocation21] sm:$0xff]
    %v1468 = vld [vmem:[#allocation21 + $0x8] sm:$0xff]
    %v1469 = vld [vmem:[#allocation21 + $0x10] sm:$0xff]
    %v1470 = vld [vmem:[#allocation21 + $0x18] sm:$0xff]
    %v1471 = vld [vmem:[#allocation21 + $0x20] sm:$0xff]
    %v1472 = vld [vmem:[#allocation21 + $0x28] sm:$0xff]
    %v1473 = vld [vmem:[#allocation21 + $0x30] sm:$0xff]
    %v1474 = vld [vmem:[#allocation21 + $0x38] sm:$0xff]
    %v1475 = vld [vmem:[#allocation21 + $0x40] sm:$0xff]
    %v1476 = vld [vmem:[#allocation21 + $0x48] sm:$0xff]
    %v1477 = vld [vmem:[#allocation21 + $0x50] sm:$0xff]
    %v1478 = vld [vmem:[#allocation21 + $0x58] sm:$0xff]
    %v1479 = vld [vmem:[#allocation21 + $0x60] sm:$0xff]
    %v1480 = vld [vmem:[#allocation21 + $0x68] sm:$0xff]
    %v1481 = vld [vmem:[#allocation21 + $0x70] sm:$0xff]
    %v1482 = vld [vmem:[#allocation21 + $0x78] sm:$0xff]
    %v1483 = vld [vmem:[#allocation21 + $0x80] sm:$0xff]
    %v1484 = vld [vmem:[#allocation21 + $0x88] sm:$0xff]
    %v1485 = vld [vmem:[#allocation21 + $0x90] sm:$0xff]
    %v1486 = vld [vmem:[#allocation21 + $0x98] sm:$0xff]
    %v1487 = vld [vmem:[#allocation21 + $0xa0] sm:$0xff]
    %v1488 = vld [vmem:[#allocation21 + $0xa8] sm:$0xff]
    %v1489 = vld [vmem:[#allocation21 + $0xb0] sm:$0xff]
    %v1490 = vld [vmem:[#allocation21 + $0xb8] sm:$0xff]
    %v1491 = vld [vmem:[#allocation21 + $0xc0] sm:$0xff]
    %v1492 = vld [vmem:[#allocation21 + $0xc8] sm:$0xff]
    %v1493 = vld [vmem:[#allocation21 + $0xd0] sm:$0xff]
    %v1494 = vld [vmem:[#allocation21 + $0xd8] sm:$0xff]
    %v1495 = vld [vmem:[#allocation21 + $0xe0] sm:$0xff]
    %v1496 = vld [vmem:[#allocation21 + $0xe8] sm:$0xff]
    %v1497 = vld [vmem:[#allocation21 + $0xf0] sm:$0xff]
    %v1498 = vld [vmem:[#allocation21 + $0xf8] sm:$0xff]
    %v1499 = vld [vmem:[#allocation23] sm:$0x3]
    %v1532 = vunpack.c.l.b16 %v1467
    %v1533 = vunpack.c.h.b16 %v1467
    %v1534 = vunpack.c.l.b16 %v1468
    %v1535 = vunpack.c.h.b16 %v1468
    %v1536 = vunpack.c.l.b16 %v1469
    %v1537 = vunpack.c.h.b16 %v1469
    %v1538 = vunpack.c.l.b16 %v1470
    %v1539 = vunpack.c.h.b16 %v1470
    %v1540 = vunpack.c.l.b16 %v1471
    %v1541 = vunpack.c.h.b16 %v1471
    %v1542 = vunpack.c.l.b16 %v1472
    %v1543 = vunpack.c.h.b16 %v1472
    %v1544 = vunpack.c.l.b16 %v1473
    %v1545 = vunpack.c.h.b16 %v1473
    %v1546 = vunpack.c.l.b16 %v1474
    %v1547 = vunpack.c.h.b16 %v1474
    %v1548 = vunpack.c.l.b16 %v1475
    %v1549 = vunpack.c.h.b16 %v1475
    %v1550 = vunpack.c.l.b16 %v1476
    %v1551 = vunpack.c.h.b16 %v1476
    %v1552 = vunpack.c.l.b16 %v1477
    %v1553 = vunpack.c.h.b16 %v1477
    %v1554 = vunpack.c.l.b16 %v1478
    %v1555 = vunpack.c.h.b16 %v1478
    %v1556 = vunpack.c.l.b16 %v1479
    %v1557 = vunpack.c.h.b16 %v1479
    %v1558 = vunpack.c.l.b16 %v1480
    %v1559 = vunpack.c.h.b16 %v1480
    %v1560 = vunpack.c.l.b16 %v1481
    %v1561 = vunpack.c.h.b16 %v1481
    %v1562 = vunpack.c.l.b16 %v1482
    %v1563 = vunpack.c.h.b16 %v1482
    %v1564 = vunpack.c.l.b16 %v1483
    %v1565 = vunpack.c.h.b16 %v1483
    %v1566 = vunpack.c.l.b16 %v1484
    %v1567 = vunpack.c.h.b16 %v1484
    %v1568 = vunpack.c.l.b16 %v1485
    %v1569 = vunpack.c.h.b16 %v1485
    %v1570 = vunpack.c.l.b16 %v1486
    %v1571 = vunpack.c.h.b16 %v1486
    %v1572 = vunpack.c.l.b16 %v1487
    %v1573 = vunpack.c.h.b16 %v1487
    %v1574 = vunpack.c.l.b16 %v1488
    %v1575 = vunpack.c.h.b16 %v1488
    %v1576 = vunpack.c.l.b16 %v1489
    %v1577 = vunpack.c.h.b16 %v1489
    %v1578 = vunpack.c.l.b16 %v1490
    %v1579 = vunpack.c.h.b16 %v1490
    %v1580 = vunpack.c.l.b16 %v1491
    %v1581 = vunpack.c.h.b16 %v1491
    %v1582 = vunpack.c.l.b16 %v1492
    %v1583 = vunpack.c.h.b16 %v1492
    %v1584 = vunpack.c.l.b16 %v1493
    %v1585 = vunpack.c.h.b16 %v1493
    %v1586 = vunpack.c.l.b16 %v1494
    %v1587 = vunpack.c.h.b16 %v1494
    %v1588 = vunpack.c.l.b16 %v1495
    %v1589 = vunpack.c.h.b16 %v1495
    %v1590 = vunpack.c.l.b16 %v1496
    %v1591 = vunpack.c.h.b16 %v1496
    %v1592 = vunpack.c.l.b16 %v1497
    %v1593 = vunpack.c.h.b16 %v1497
    %v1594 = vunpack.c.l.b16 %v1498
    %v1595 = vunpack.c.h.b16 %v1498
    %v1596 = vpack.c.b16 %v1534, %v1532
    %v1597 = vpack.c.b16 %v1535, %v1533
    %v1598 = vpack.c.b16 %v1538, %v1536
    %v1599 = vpack.c.b16 %v1539, %v1537
    %v1600 = vpack.c.b16 %v1542, %v1540
    %v1601 = vpack.c.b16 %v1543, %v1541
    %v1602 = vpack.c.b16 %v1546, %v1544
    %v1603 = vpack.c.b16 %v1547, %v1545
    %v1604 = vpack.c.b16 %v1550, %v1548
    %v1605 = vpack.c.b16 %v1551, %v1549
    %v1606 = vpack.c.b16 %v1554, %v1552
    %v1607 = vpack.c.b16 %v1555, %v1553
    %v1608 = vpack.c.b16 %v1558, %v1556
    %v1609 = vpack.c.b16 %v1559, %v1557
    %v1610 = vpack.c.b16 %v1562, %v1560
    %v1611 = vpack.c.b16 %v1563, %v1561
    %v1612 = vpack.c.b16 %v1566, %v1564
    %v1613 = vpack.c.b16 %v1567, %v1565
    %v1614 = vpack.c.b16 %v1570, %v1568
    %v1615 = vpack.c.b16 %v1571, %v1569
    %v1616 = vpack.c.b16 %v1574, %v1572
    %v1617 = vpack.c.b16 %v1575, %v1573
    %v1618 = vpack.c.b16 %v1578, %v1576
    %v1619 = vpack.c.b16 %v1579, %v1577
    %v1620 = vpack.c.b16 %v1582, %v1580
    %v1621 = vpack.c.b16 %v1583, %v1581
    %v1622 = vpack.c.b16 %v1586, %v1584
    %v1623 = vpack.c.b16 %v1587, %v1585
    %v1624 = vpack.c.b16 %v1590, %v1588
    %v1625 = vpack.c.b16 %v1591, %v1589
    %v1626 = vpack.c.b16 %v1594, %v1592
    %v1627 = vpack.c.b16 %v1595, %v1593
    %v1661 = vlaneseq
    %v1662 = vshrl.u32 %v1661, 7
    %v1663 = vsub.s32 0, %v1662
    %v1664 = vrot.slane %v1499, %v1663
    %v1665 = vlaneseq
    %v1666 = vshrl.u32 %v1665, 7
    %v1667 = vsub.s32 1, %v1666
    %v1668 = vrot.slane %v1499, %v1667
    %1671 = vmatprep.subr.bf16.mxu0 %v1597
    %1672 = vmatpush1.bf16.msra.mxu0 %v1596
    %1673 = vmatprep.subr.bf16.mxu0 %v1599
    %1674 = vmatpush1.bf16.msra.mxu0 %v1598
    %1675 = vmatprep.subr.bf16.mxu0 %v1601
    %1676 = vmatpush1.bf16.msra.mxu0 %v1600
    %1677 = vmatprep.subr.bf16.mxu0 %v1603
    %1678 = vmatpush1.bf16.msra.mxu0 %v1602
    %1679 = vmatprep.subr.bf16.mxu0 %v1605
    %1680 = vmatpush1.bf16.msra.mxu0 %v1604
    %1681 = vmatprep.subr.bf16.mxu0 %v1607
    %1682 = vmatpush1.bf16.msra.mxu0 %v1606
    %1683 = vmatprep.subr.bf16.mxu0 %v1609
    %1684 = vmatpush1.bf16.msra.mxu0 %v1608
    %1685 = vmatprep.subr.bf16.mxu0 %v1611
    %1686 = vmatpush1.bf16.msra.mxu0 %v1610
    %1687 = vmatprep.subr.bf16.mxu0 %v1613
    %1688 = vmatpush1.bf16.msra.mxu0 %v1612
    %1689 = vmatprep.subr.bf16.mxu0 %v1615
    %1690 = vmatpush1.bf16.msra.mxu0 %v1614
    %1691 = vmatprep.subr.bf16.mxu0 %v1617
    %1692 = vmatpush1.bf16.msra.mxu0 %v1616
    %1693 = vmatprep.subr.bf16.mxu0 %v1619
    %1694 = vmatpush1.bf16.msra.mxu0 %v1618
    %1695 = vmatprep.subr.bf16.mxu0 %v1621
    %1696 = vmatpush1.bf16.msra.mxu0 %v1620
    %1697 = vmatprep.subr.bf16.mxu0 %v1623
    %1698 = vmatpush1.bf16.msra.mxu0 %v1622
    %1699 = vmatprep.subr.bf16.mxu0 %v1625
    %1700 = vmatpush1.bf16.msra.mxu0 %v1624
    %1701 = vmatprep.subr.bf16.mxu0 %v1627
    %1702 = vmatpush1.bf16.msra.mxu0 %v1626
    %1703 = vmatprep.mubr.bf16.mxu0 %v1466
    %1704 = vmatmul.mubr.bf16.gmra.mrb[0].mxu0 %v1465
    %v1705 = vpop.f32.mrb[0].mxu0
    %v1706 = vadd.f32 %v1664, %v1705
    %v1707 = vpop.f32.mrb[0].mxu0
    %v1708 = vadd.f32 %v1668, %v1707
    %v1709 = vpop.f32.mrb[0].mxu0
    %v1710 = vpop.f32.mrb[0].mxu0
    %1711 = vdwg.mxu0
    %v1712 = vmax.f32 %v1706, 0.0
    %v1713 = vmax.f32 %v1708, 0.0
    %v1714 = vpack.c.bf16 %v1712, %v1712
    %v1715 = vpack.c.bf16 %v1713, %v1713
    %v1716 = vld [vmem:[#allocation24] sm:$0xff]
    %v1717 = vld [vmem:[#allocation24 + $0x8] sm:$0xff]
    %v1718 = vld [vmem:[#allocation24 + $0x10] sm:$0xff]
    %v1719 = vld [vmem:[#allocation24 + $0x18] sm:$0xff]
    %v1720 = vld [vmem:[#allocation24 + $0x20] sm:$0xff]
    %v1721 = vld [vmem:[#allocation24 + $0x28] sm:$0xff]
    %v1722 = vld [vmem:[#allocation24 + $0x30] sm:$0xff]
    %v1723 = vld [vmem:[#allocation24 + $0x38] sm:$0xff]
    %v1724 = vld [vmem:[#allocation24 + $0x40] sm:$0xff]
    %v1725 = vld [vmem:[#allocation24 + $0x48] sm:$0xff]
    %v1726 = vld [vmem:[#allocation24 + $0x50] sm:$0xff]
    %v1727 = vld [vmem:[#allocation24 + $0x58] sm:$0xff]
    %v1728 = vld [vmem:[#allocation24 + $0x60] sm:$0xff]
    %v1729 = vld [vmem:[#allocation24 + $0x68] sm:$0xff]
    %v1730 = vld [vmem:[#allocation24 + $0x70] sm:$0xff]
    %v1731 = vld [vmem:[#allocation24 + $0x78] sm:$0xff]
    %v1732 = vld [vmem:[#allocation24 + $0x80] sm:$0xff]
    %v1733 = vld [vmem:[#allocation24 + $0x88] sm:$0xff]
    %v1734 = vld [vmem:[#allocation24 + $0x90] sm:$0xff]
    %v1735 = vld [vmem:[#allocation24 + $0x98] sm:$0xff]
    %v1736 = vld [vmem:[#allocation24 + $0xa0] sm:$0xff]
    %v1737 = vld [vmem:[#allocation24 + $0xa8] sm:$0xff]
    %v1738 = vld [vmem:[#allocation24 + $0xb0] sm:$0xff]
    %v1739 = vld [vmem:[#allocation24 + $0xb8] sm:$0xff]
    %v1740 = vld [vmem:[#allocation24 + $0xc0] sm:$0xff]
    %v1741 = vld [vmem:[#allocation24 + $0xc8] sm:$0xff]
    %v1742 = vld [vmem:[#allocation24 + $0xd0] sm:$0xff]
    %v1743 = vld [vmem:[#allocation24 + $0xd8] sm:$0xff]
    %v1744 = vld [vmem:[#allocation24 + $0xe0] sm:$0xff]
    %v1745 = vld [vmem:[#allocation24 + $0xe8] sm:$0xff]
    %v1746 = vld [vmem:[#allocation24 + $0xf0] sm:$0xff]
    %v1747 = vld [vmem:[#allocation24 + $0xf8] sm:$0xff]
    %v1748 = vld [vmem:[#allocation26] sm:$0x3]
    %v1781 = vunpack.c.l.b16 %v1716
    %v1782 = vunpack.c.h.b16 %v1716
    %v1783 = vunpack.c.l.b16 %v1717
    %v1784 = vunpack.c.h.b16 %v1717
    %v1785 = vunpack.c.l.b16 %v1718
    %v1786 = vunpack.c.h.b16 %v1718
    %v1787 = vunpack.c.l.b16 %v1719
    %v1788 = vunpack.c.h.b16 %v1719
    %v1789 = vunpack.c.l.b16 %v1720
    %v1790 = vunpack.c.h.b16 %v1720
    %v1791 = vunpack.c.l.b16 %v1721
    %v1792 = vunpack.c.h.b16 %v1721
    %v1793 = vunpack.c.l.b16 %v1722
    %v1794 = vunpack.c.h.b16 %v1722
    %v1795 = vunpack.c.l.b16 %v1723
    %v1796 = vunpack.c.h.b16 %v1723
    %v1797 = vunpack.c.l.b16 %v1724
    %v1798 = vunpack.c.h.b16 %v1724
    %v1799 = vunpack.c.l.b16 %v1725
    %v1800 = vunpack.c.h.b16 %v1725
    %v1801 = vunpack.c.l.b16 %v1726
    %v1802 = vunpack.c.h.b16 %v1726
    %v1803 = vunpack.c.l.b16 %v1727
    %v1804 = vunpack.c.h.b16 %v1727
    %v1805 = vunpack.c.l.b16 %v1728
    %v1806 = vunpack.c.h.b16 %v1728
    %v1807 = vunpack.c.l.b16 %v1729
    %v1808 = vunpack.c.h.b16 %v1729
    %v1809 = vunpack.c.l.b16 %v1730
    %v1810 = vunpack.c.h.b16 %v1730
    %v1811 = vunpack.c.l.b16 %v1731
    %v1812 = vunpack.c.h.b16 %v1731
    %v1813 = vunpack.c.l.b16 %v1732
    %v1814 = vunpack.c.h.b16 %v1732
    %v1815 = vunpack.c.l.b16 %v1733
    %v1816 = vunpack.c.h.b16 %v1733
    %v1817 = vunpack.c.l.b16 %v1734
    %v1818 = vunpack.c.h.b16 %v1734
    %v1819 = vunpack.c.l.b16 %v1735
    %v1820 = vunpack.c.h.b16 %v1735
    %v1821 = vunpack.c.l.b16 %v1736
    %v1822 = vunpack.c.h.b16 %v1736
    %v1823 = vunpack.c.l.b16 %v1737
    %v1824 = vunpack.c.h.b16 %v1737
    %v1825 = vunpack.c.l.b16 %v1738
    %v1826 = vunpack.c.h.b16 %v1738
    %v1827 = vunpack.c.l.b16 %v1739
    %v1828 = vunpack.c.h.b16 %v1739
    %v1829 = vunpack.c.l.b16 %v1740
    %v1830 = vunpack.c.h.b16 %v1740
    %v1831 = vunpack.c.l.b16 %v1741
    %v1832 = vunpack.c.h.b16 %v1741
    %v1833 = vunpack.c.l.b16 %v1742
    %v1834 = vunpack.c.h.b16 %v1742
    %v1835 = vunpack.c.l.b16 %v1743
    %v1836 = vunpack.c.h.b16 %v1743
    %v1837 = vunpack.c.l.b16 %v1744
    %v1838 = vunpack.c.h.b16 %v1744
    %v1839 = vunpack.c.l.b16 %v1745
    %v1840 = vunpack.c.h.b16 %v1745
    %v1841 = vunpack.c.l.b16 %v1746
    %v1842 = vunpack.c.h.b16 %v1746
    %v1843 = vunpack.c.l.b16 %v1747
    %v1844 = vunpack.c.h.b16 %v1747
    %v1845 = vpack.c.b16 %v1783, %v1781
    %v1846 = vpack.c.b16 %v1784, %v1782
    %v1847 = vpack.c.b16 %v1787, %v1785
    %v1848 = vpack.c.b16 %v1788, %v1786
    %v1849 = vpack.c.b16 %v1791, %v1789
    %v1850 = vpack.c.b16 %v1792, %v1790
    %v1851 = vpack.c.b16 %v1795, %v1793
    %v1852 = vpack.c.b16 %v1796, %v1794
    %v1853 = vpack.c.b16 %v1799, %v1797
    %v1854 = vpack.c.b16 %v1800, %v1798
    %v1855 = vpack.c.b16 %v1803, %v1801
    %v1856 = vpack.c.b16 %v1804, %v1802
    %v1857 = vpack.c.b16 %v1807, %v1805
    %v1858 = vpack.c.b16 %v1808, %v1806
    %v1859 = vpack.c.b16 %v1811, %v1809
    %v1860 = vpack.c.b16 %v1812, %v1810
    %v1861 = vpack.c.b16 %v1815, %v1813
    %v1862 = vpack.c.b16 %v1816, %v1814
    %v1863 = vpack.c.b16 %v1819, %v1817
    %v1864 = vpack.c.b16 %v1820, %v1818
    %v1865 = vpack.c.b16 %v1823, %v1821
    %v1866 = vpack.c.b16 %v1824, %v1822
    %v1867 = vpack.c.b16 %v1827, %v1825
    %v1868 = vpack.c.b16 %v1828, %v1826
    %v1869 = vpack.c.b16 %v1831, %v1829
    %v1870 = vpack.c.b16 %v1832, %v1830
    %v1871 = vpack.c.b16 %v1835, %v1833
    %v1872 = vpack.c.b16 %v1836, %v1834
    %v1873 = vpack.c.b16 %v1839, %v1837
    %v1874 = vpack.c.b16 %v1840, %v1838
    %v1875 = vpack.c.b16 %v1843, %v1841
    %v1876 = vpack.c.b16 %v1844, %v1842
    %v1910 = vlaneseq
    %v1911 = vshrl.u32 %v1910, 7
    %v1912 = vsub.s32 0, %v1911
    %v1913 = vrot.slane %v1748, %v1912
    %v1914 = vlaneseq
    %v1915 = vshrl.u32 %v1914, 7
    %v1916 = vsub.s32 1, %v1915
    %v1917 = vrot.slane %v1748, %v1916
    %1920 = vmatprep.subr.bf16.mxu0 %v1846
    %1921 = vmatpush1.bf16.msra.mxu0 %v1845
    %1922 = vmatprep.subr.bf16.mxu0 %v1848
    %1923 = vmatpush1.bf16.msra.mxu0 %v1847
    %1924 = vmatprep.subr.bf16.mxu0 %v1850
    %1925 = vmatpush1.bf16.msra.mxu0 %v1849
    %1926 = vmatprep.subr.bf16.mxu0 %v1852
    %1927 = vmatpush1.bf16.msra.mxu0 %v1851
    %1928 = vmatprep.subr.bf16.mxu0 %v1854
    %1929 = vmatpush1.bf16.msra.mxu0 %v1853
    %1930 = vmatprep.subr.bf16.mxu0 %v1856
    %1931 = vmatpush1.bf16.msra.mxu0 %v1855
    %1932 = vmatprep.subr.bf16.mxu0 %v1858
    %1933 = vmatpush1.bf16.msra.mxu0 %v1857
    %1934 = vmatprep.subr.bf16.mxu0 %v1860
    %1935 = vmatpush1.bf16.msra.mxu0 %v1859
    %1936 = vmatprep.subr.bf16.mxu0 %v1862
    %1937 = vmatpush1.bf16.msra.mxu0 %v1861
    %1938 = vmatprep.subr.bf16.mxu0 %v1864
    %1939 = vmatpush1.bf16.msra.mxu0 %v1863
    %1940 = vmatprep.subr.bf16.mxu0 %v1866
    %1941 = vmatpush1.bf16.msra.mxu0 %v1865
    %1942 = vmatprep.subr.bf16.mxu0 %v1868
    %1943 = vmatpush1.bf16.msra.mxu0 %v1867
    %1944 = vmatprep.subr.bf16.mxu0 %v1870
    %1945 = vmatpush1.bf16.msra.mxu0 %v1869
    %1946 = vmatprep.subr.bf16.mxu0 %v1872
    %1947 = vmatpush1.bf16.msra.mxu0 %v1871
    %1948 = vmatprep.subr.bf16.mxu0 %v1874
    %1949 = vmatpush1.bf16.msra.mxu0 %v1873
    %1950 = vmatprep.subr.bf16.mxu0 %v1876
    %1951 = vmatpush1.bf16.msra.mxu0 %v1875
    %1952 = vmatprep.mubr.bf16.mxu0 %v1715
    %1953 = vmatmul.mubr.bf16.gmra.mrb[0].mxu0 %v1714
    %v1954 = vpop.f32.mrb[0].mxu0
    %v1955 = vadd.f32 %v1913, %v1954
    %v1956 = vpop.f32.mrb[0].mxu0
    %v1957 = vadd.f32 %v1917, %v1956
    %v1958 = vpop.f32.mrb[0].mxu0
    %v1959 = vpop.f32.mrb[0].mxu0
    %1960 = vdwg.mxu0
    %v1961 = vmax.f32 %v1955, 0.0
    %v1962 = vmax.f32 %v1957, 0.0
    %v1963 = vpack.c.bf16 %v1961, %v1961
    %v1964 = vpack.c.bf16 %v1962, %v1962
    %v1965 = vld [vmem:[#allocation27] sm:$0xf]
    %v1966 = vld [vmem:[#allocation27 + $0x4] sm:$0xf]
    %v1967 = vld [vmem:[#allocation27 + $0x8] sm:$0xf]
    %v1968 = vld [vmem:[#allocation27 + $0xc] sm:$0xf]
    %v1969 = vld [vmem:[#allocation27 + $0x10] sm:$0xf]
    %v1970 = vld [vmem:[#allocation27 + $0x14] sm:$0xf]
    %v1971 = vld [vmem:[#allocation27 + $0x18] sm:$0xf]
    %v1972 = vld [vmem:[#allocation27 + $0x1c] sm:$0xf]
    %v1973 = vld [vmem:[#allocation27 + $0x20] sm:$0xf]
    %v1974 = vld [vmem:[#allocation27 + $0x24] sm:$0xf]
    %v1975 = vld [vmem:[#allocation27 + $0x28] sm:$0xf]
    %v1976 = vld [vmem:[#allocation27 + $0x2c] sm:$0xf]
    %v1977 = vld [vmem:[#allocation27 + $0x30] sm:$0xf]
    %v1978 = vld [vmem:[#allocation27 + $0x34] sm:$0xf]
    %v1979 = vld [vmem:[#allocation27 + $0x38] sm:$0xf]
    %v1980 = vld [vmem:[#allocation27 + $0x3c] sm:$0xf]
    %v1981 = vld [vmem:[#allocation27 + $0x40] sm:$0xf]
    %v1982 = vld [vmem:[#allocation27 + $0x44] sm:$0xf]
    %v1983 = vld [vmem:[#allocation27 + $0x48] sm:$0xf]
    %v1984 = vld [vmem:[#allocation27 + $0x4c] sm:$0xf]
    %v1985 = vld [vmem:[#allocation27 + $0x50] sm:$0xf]
    %v1986 = vld [vmem:[#allocation27 + $0x54] sm:$0xf]
    %v1987 = vld [vmem:[#allocation27 + $0x58] sm:$0xf]
    %v1988 = vld [vmem:[#allocation27 + $0x5c] sm:$0xf]
    %v1989 = vld [vmem:[#allocation27 + $0x60] sm:$0xf]
    %v1990 = vld [vmem:[#allocation27 + $0x64] sm:$0xf]
    %v1991 = vld [vmem:[#allocation27 + $0x68] sm:$0xf]
    %v1992 = vld [vmem:[#allocation27 + $0x6c] sm:$0xf]
    %v1993 = vld [vmem:[#allocation27 + $0x70] sm:$0xf]
    %v1994 = vld [vmem:[#allocation27 + $0x74] sm:$0xf]
    %v1995 = vld [vmem:[#allocation27 + $0x78] sm:$0xf]
    %v1996 = vld [vmem:[#allocation27 + $0x7c] sm:$0xf]
    %v1997 = vld [vmem:[#allocation29] sm:$0x1]
    %v2030 = vunpack.c.l.b16 %v1965
    %v2031 = vunpack.c.l.b16 %v1966
    %v2032 = vunpack.c.l.b16 %v1967
    %v2033 = vunpack.c.l.b16 %v1968
    %v2034 = vunpack.c.l.b16 %v1969
    %v2035 = vunpack.c.l.b16 %v1970
    %v2036 = vunpack.c.l.b16 %v1971
    %v2037 = vunpack.c.l.b16 %v1972
    %v2038 = vunpack.c.l.b16 %v1973
    %v2039 = vunpack.c.l.b16 %v1974
    %v2040 = vunpack.c.l.b16 %v1975
    %v2041 = vunpack.c.l.b16 %v1976
    %v2042 = vunpack.c.l.b16 %v1977
    %v2043 = vunpack.c.l.b16 %v1978
    %v2044 = vunpack.c.l.b16 %v1979
    %v2045 = vunpack.c.l.b16 %v1980
    %v2046 = vunpack.c.l.b16 %v1981
    %v2047 = vunpack.c.l.b16 %v1982
    %v2048 = vunpack.c.l.b16 %v1983
    %v2049 = vunpack.c.l.b16 %v1984
    %v2050 = vunpack.c.l.b16 %v1985
    %v2051 = vunpack.c.l.b16 %v1986
    %v2052 = vunpack.c.l.b16 %v1987
    %v2053 = vunpack.c.l.b16 %v1988
    %v2054 = vunpack.c.l.b16 %v1989
    %v2055 = vunpack.c.l.b16 %v1990
    %v2056 = vunpack.c.l.b16 %v1991
    %v2057 = vunpack.c.l.b16 %v1992
    %v2058 = vunpack.c.l.b16 %v1993
    %v2059 = vunpack.c.l.b16 %v1994
    %v2060 = vunpack.c.l.b16 %v1995
    %v2061 = vunpack.c.l.b16 %v1996
    %v2062 = vpack.c.b16 %v2031, %v2030
    %v2063 = vpack.c.b16 %v2033, %v2032
    %v2064 = vpack.c.b16 %v2035, %v2034
    %v2065 = vpack.c.b16 %v2037, %v2036
    %v2066 = vpack.c.b16 %v2039, %v2038
    %v2067 = vpack.c.b16 %v2041, %v2040
    %v2068 = vpack.c.b16 %v2043, %v2042
    %v2069 = vpack.c.b16 %v2045, %v2044
    %v2070 = vpack.c.b16 %v2047, %v2046
    %v2071 = vpack.c.b16 %v2049, %v2048
    %v2072 = vpack.c.b16 %v2051, %v2050
    %v2073 = vpack.c.b16 %v2053, %v2052
    %v2074 = vpack.c.b16 %v2055, %v2054
    %v2075 = vpack.c.b16 %v2057, %v2056
    %v2076 = vpack.c.b16 %v2059, %v2058
    %v2077 = vpack.c.b16 %v2061, %v2060
    %2094 = vmatprep.subr.bf16.mxu0 0
    %2095 = vmatpush1.bf16.msra.mxu0 %v2062
    %2096 = vmatprep.subr.bf16.mxu0 0
    %2097 = vmatpush1.bf16.msra.mxu0 %v2063
    %2098 = vmatprep.subr.bf16.mxu0 0
    %2099 = vmatpush1.bf16.msra.mxu0 %v2064
    %2100 = vmatprep.subr.bf16.mxu0 0
    %2101 = vmatpush1.bf16.msra.mxu0 %v2065
    %2102 = vmatprep.subr.bf16.mxu0 0
    %2103 = vmatpush1.bf16.msra.mxu0 %v2066
    %2104 = vmatprep.subr.bf16.mxu0 0
    %2105 = vmatpush1.bf16.msra.mxu0 %v2067
    %2106 = vmatprep.subr.bf16.mxu0 0
    %2107 = vmatpush1.bf16.msra.mxu0 %v2068
    %2108 = vmatprep.subr.bf16.mxu0 0
    %2109 = vmatpush1.bf16.msra.mxu0 %v2069
    %2110 = vmatprep.subr.bf16.mxu0 0
    %2111 = vmatpush1.bf16.msra.mxu0 %v2070
    %2112 = vmatprep.subr.bf16.mxu0 0
    %2113 = vmatpush1.bf16.msra.mxu0 %v2071
    %2114 = vmatprep.subr.bf16.mxu0 0
    %2115 = vmatpush1.bf16.msra.mxu0 %v2072
    %2116 = vmatprep.subr.bf16.mxu0 0
    %2117 = vmatpush1.bf16.msra.mxu0 %v2073
    %2118 = vmatprep.subr.bf16.mxu0 0
    %2119 = vmatpush1.bf16.msra.mxu0 %v2074
    %2120 = vmatprep.subr.bf16.mxu0 0
    %2121 = vmatpush1.bf16.msra.mxu0 %v2075
    %2122 = vmatprep.subr.bf16.mxu0 0
    %2123 = vmatpush1.bf16.msra.mxu0 %v2076
    %2124 = vmatprep.subr.bf16.mxu0 0
    %2125 = vmatpush1.bf16.msra.mxu0 %v2077
    %2126 = vmatprep.mubr.bf16.mxu0 %v1964
    %2127 = vmatmul.mubr.bf16.gmra.mrb[0].mxu0 %v1963
    %v2128 = vpop.f32.mrb[0].mxu0
    %v2129 = vadd.f32 %v1997, %v2128
    %v2130 = vpop.f32.mrb[0].mxu0
    %v2131 = vpop.f32.mrb[0].mxu0
    %v2132 = vpop.f32.mrb[0].mxu0
    %2133 = vdwg.mxu0
    %v2134 = vmax.f32 %v2129, 0.0
    %v2135 = vld [vmem:[%s5] sm:$0xff]
    %v2136 = vld [vmem:[%s5 + $0x8] sm:$0xff]
    %v2137 = vld [vmem:[%s5 + $0x10] sm:$0xff]
    %v2138 = vld [vmem:[%s5 + $0x18] sm:$0xff]
    %v2139 = vld [vmem:[%s5 + $0x20] sm:$0xff]
    %v2140 = vld [vmem:[%s5 + $0x28] sm:$0xff]
    %v2141 = vld [vmem:[%s5 + $0x30] sm:$0xff]
    %v2142 = vld [vmem:[%s5 + $0x38] sm:$0xff]
    %v2143 = vld [vmem:[%s5 + $0x40] sm:$0x7]
    %v2144 = vlaneseq
    %v2145 = vshrl.u32 %v2144, 7
    %v2146 = vadd.s32 %v2145, 8
    %v2147 = vadd.s32 %v2145, 16
    %v2148 = vadd.s32 %v2145, 24
    %v2149 = vadd.s32 %v2145, 32
    %v2150 = vlaneseq
    %v2151 = vand.u32 %v2150, 127
    %v2152 = vadd.s32 %v2145, 40
    %v2153 = vadd.s32 %v2145, 48
    %v2154 = vadd.s32 %v2145, 56
    %v2155 = vadd.s32 %v2145, 64
    %v2156 = vmul.u32 %v2145, 2
    %v2157 = vmul.u32 %v2146, 2
    %v2158 = vmul.u32 %v2147, 2
    %v2159 = vmul.u32 %v2148, 2
    %v2160 = vmul.u32 %v2149, 2
    %vm2161 = vcmp.eq.s32.totalorder %v2151, %v2156
    %vm2162 = vcmp.eq.s32.totalorder %v2151, %v2157
    %vm2163 = vcmp.eq.s32.totalorder %v2151, %v2158
    %vm2164 = vcmp.eq.s32.totalorder %v2151, %v2159
    %vm2165 = vcmp.eq.s32.totalorder %v2151, %v2160
    %v2166 = vsel %vm2161, 1, 0
    %v2167 = vsel %vm2162, 1, 0
    %v2168 = vsel %vm2163, 1, 0
    %v2169 = vsel %vm2164, 1, 0
    %v2170 = vsel %vm2165, 1, 0
    %v2171 = vcvt.s32.f32 %v2166
    %v2172 = vcvt.s32.f32 %v2167
    %v2173 = vcvt.s32.f32 %v2168
    %v2174 = vcvt.s32.f32 %v2169
    %v2175 = vcvt.s32.f32 %v2170
    %s2176 = sld [smem:[#allocation2]]
    %v2177 = vmul.u32 %v2151, 2
    %vm2178 = vcmp.eq.s32.totalorder %v2145, %v2177
    %vm2179 = vcmp.eq.s32.totalorder %v2146, %v2177
    %vm2180 = vcmp.eq.s32.totalorder %v2147, %v2177
    %vm2181 = vcmp.eq.s32.totalorder %v2148, %v2177
    %vm2182 = vcmp.eq.s32.totalorder %v2149, %v2177
    %vm2183 = vcmp.eq.s32.totalorder %v2152, %v2177
    %vm2184 = vcmp.eq.s32.totalorder %v2153, %v2177
    %vm2185 = vcmp.eq.s32.totalorder %v2154, %v2177
    %vm2186 = vcmp.eq.s32.totalorder %v2155, %v2177
    %v2187 = vsel %vm2178, 1, 0
    %v2188 = vsel %vm2179, 1, 0
    %v2189 = vsel %vm2180, 1, 0
    %v2190 = vsel %vm2181, 1, 0
    %v2191 = vsel %vm2182, 1, 0
    %v2192 = vsel %vm2183, 1, 0
    %v2193 = vsel %vm2184, 1, 0
    %v2194 = vsel %vm2185, 1, 0
    %v2195 = vsel %vm2186, 1, 0
    %v2196 = vcvt.s32.f32 %v2187
    %v2197 = vcvt.s32.f32 %v2188
    %v2198 = vcvt.s32.f32 %v2189
    %v2199 = vcvt.s32.f32 %v2190
    %v2200 = vcvt.s32.f32 %v2191
    %v2201 = vcvt.s32.f32 %v2192
    %v2202 = vcvt.s32.f32 %v2193
    %v2203 = vcvt.s32.f32 %v2194
    %v2204 = vcvt.s32.f32 %v2195
    %v2205 = vstv %s2176
    %v2206 = vmul.f32 %v2205, %v2196
    %v2207 = vmul.f32 %v2205, %v2197
    %v2208 = vmul.f32 %v2205, %v2198
    %v2209 = vmul.f32 %v2205, %v2199
    %v2210 = vmul.f32 %v2205, %v2200
    %v2211 = vmul.f32 %v2205, %v2201
    %v2212 = vmul.f32 %v2205, %v2202
    %v2213 = vmul.f32 %v2205, %v2203
    %v2214 = vmul.f32 %v2205, %v2204
    %s2215 = sld [smem:[#allocation2 + $0x1]]
    %v2216 = vadd.s32 %v2177, 1
    %vm2217 = vcmp.eq.s32.totalorder %v2145, %v2216
    %vm2218 = vcmp.eq.s32.totalorder %v2146, %v2216
    %vm2219 = vcmp.eq.s32.totalorder %v2147, %v2216
    %vm2220 = vcmp.eq.s32.totalorder %v2148, %v2216
    %vm2221 = vcmp.eq.s32.totalorder %v2149, %v2216
    %vm2222 = vcmp.eq.s32.totalorder %v2152, %v2216
    %vm2223 = vcmp.eq.s32.totalorder %v2153, %v2216
    %vm2224 = vcmp.eq.s32.totalorder %v2154, %v2216
    %vm2225 = vcmp.eq.s32.totalorder %v2155, %v2216
    %v2226 = vsel %vm2217, 1, 0
    %v2227 = vsel %vm2218, 1, 0
    %v2228 = vsel %vm2219, 1, 0
    %v2229 = vsel %vm2220, 1, 0
    %v2230 = vsel %vm2221, 1, 0
    %v2231 = vsel %vm2222, 1, 0
    %v2232 = vsel %vm2223, 1, 0
    %v2233 = vsel %vm2224, 1, 0
    %v2234 = vsel %vm2225, 1, 0
    %v2235 = vcvt.s32.f32 %v2226
    %v2236 = vcvt.s32.f32 %v2227
    %v2237 = vcvt.s32.f32 %v2228
    %v2238 = vcvt.s32.f32 %v2229
    %v2239 = vcvt.s32.f32 %v2230
    %v2240 = vcvt.s32.f32 %v2231
    %v2241 = vcvt.s32.f32 %v2232
    %v2242 = vcvt.s32.f32 %v2233
    %v2243 = vcvt.s32.f32 %v2234
    %v2244 = vstv %s2215
    %v2245 = vmul.f32 %v2244, %v2235
    %v2246 = vmul.f32 %v2244, %v2236
    %v2247 = vmul.f32 %v2244, %v2237
    %v2248 = vmul.f32 %v2244, %v2238
    %v2249 = vmul.f32 %v2244, %v2239
    %v2250 = vmul.f32 %v2244, %v2240
    %v2251 = vmul.f32 %v2244, %v2241
    %v2252 = vmul.f32 %v2244, %v2242
    %v2253 = vmul.f32 %v2244, %v2243
    %v2254 = vadd.f32 %v2206, %v2245
    %v2255 = vadd.f32 %v2207, %v2246
    %v2256 = vadd.f32 %v2208, %v2247
    %v2257 = vadd.f32 %v2209, %v2248
    %v2258 = vadd.f32 %v2210, %v2249
    %v2259 = vadd.f32 %v2211, %v2250
    %v2260 = vadd.f32 %v2212, %v2251
    %v2261 = vadd.f32 %v2213, %v2252
    %v2262 = vadd.f32 %v2214, %v2253
    %s2263 = sld [smem:[#allocation2 + $0x2]]
    %v2264 = vadd.s32 %v2177, 2
    %vm2265 = vcmp.eq.s32.totalorder %v2145, %v2264
    %vm2266 = vcmp.eq.s32.totalorder %v2146, %v2264
    %vm2267 = vcmp.eq.s32.totalorder %v2147, %v2264
    %vm2268 = vcmp.eq.s32.totalorder %v2148, %v2264
    %vm2269 = vcmp.eq.s32.totalorder %v2149, %v2264
    %vm2270 = vcmp.eq.s32.totalorder %v2152, %v2264
    %vm2271 = vcmp.eq.s32.totalorder %v2153, %v2264
    %vm2272 = vcmp.eq.s32.totalorder %v2154, %v2264
    %vm2273 = vcmp.eq.s32.totalorder %v2155, %v2264
    %v2274 = vsel %vm2265, 1, 0
    %v2275 = vsel %vm2266, 1, 0
    %v2276 = vsel %vm2267, 1, 0
    %v2277 = vsel %vm2268, 1, 0
    %v2278 = vsel %vm2269, 1, 0
    %v2279 = vsel %vm2270, 1, 0
    %v2280 = vsel %vm2271, 1, 0
    %v2281 = vsel %vm2272, 1, 0
    %v2282 = vsel %vm2273, 1, 0
    %v2283 = vcvt.s32.f32 %v2274
    %v2284 = vcvt.s32.f32 %v2275
    %v2285 = vcvt.s32.f32 %v2276
    %v2286 = vcvt.s32.f32 %v2277
    %v2287 = vcvt.s32.f32 %v2278
    %v2288 = vcvt.s32.f32 %v2279
    %v2289 = vcvt.s32.f32 %v2280
    %v2290 = vcvt.s32.f32 %v2281
    %v2291 = vcvt.s32.f32 %v2282
    %v2292 = vstv %s2263
    %v2293 = vmul.f32 %v2292, %v2283
    %v2294 = vmul.f32 %v2292, %v2284
    %v2295 = vmul.f32 %v2292, %v2285
    %v2296 = vmul.f32 %v2292, %v2286
    %v2297 = vmul.f32 %v2292, %v2287
    %v2298 = vmul.f32 %v2292, %v2288
    %v2299 = vmul.f32 %v2292, %v2289
    %v2300 = vmul.f32 %v2292, %v2290
    %v2301 = vmul.f32 %v2292, %v2291
    %v2302 = vadd.f32 %v2254, %v2293
    %v2303 = vadd.f32 %v2255, %v2294
    %v2304 = vadd.f32 %v2256, %v2295
    %v2305 = vadd.f32 %v2257, %v2296
    %v2306 = vadd.f32 %v2258, %v2297
    %v2307 = vadd.f32 %v2259, %v2298
    %v2308 = vadd.f32 %v2260, %v2299
    %v2309 = vadd.f32 %v2261, %v2300
    %v2310 = vadd.f32 %v2262, %v2301
    %vm2311 = vcmask 547840
    %v2313 = vsel %vm2311, %v2171, 0
    %v2316 = vsel %vm2311, %v2172, 0
    %v2319 = vsel %vm2311, %v2173, 0
    %v2322 = vsel %vm2311, %v2174, 0
    %v2325 = vsel %vm2311, %v2175, 0
    %vm2327 = vcmask 1042432
    %v2329 = vsel %vm2327, %v2143, 0
    %2331 = vmatprep.subr.mxu0 0.0
    %2332 = vmatpush1.msra.mxu0 %v2135
    %2333 = vmatprep.subr.mxu0 0.0
    %2334 = vmatpush1.msra.mxu0 %v2136
    %2335 = vmatprep.subr.mxu0 0.0
    %2336 = vmatpush1.msra.mxu0 %v2137
    %2337 = vmatprep.subr.mxu0 0.0
    %2338 = vmatpush1.msra.mxu0 %v2138
    %2339 = vmatprep.subr.mxu0 0.0
    %2340 = vmatpush1.msra.mxu0 %v2139
    %2341 = vmatprep.subr.mxu0 0.0
    %2342 = vmatpush1.msra.mxu0 %v2140
    %2343 = vmatprep.subr.mxu0 0.0
    %2344 = vmatpush1.msra.mxu0 %v2141
    %2345 = vmatprep.subr.mxu0 0.0
    %2346 = vmatpush1.msra.mxu0 %v2142
    %2347 = vmatprep.subr.mxu0 0.0
    %2348 = vmatpush1.msra.mxu0 %v2329
    %2349 = vmatprep.subr.mxu0 0.0
    %2350 = vmatpush1.msra.mxu0 0.0
    %2351 = vmatprep.subr.mxu0 0.0
    %2352 = vmatpush1.msra.mxu0 0.0
    %2353 = vmatprep.subr.mxu0 0.0
    %2354 = vmatpush1.msra.mxu0 0.0
    %2355 = vmatprep.subr.mxu0 0.0
    %2356 = vmatpush1.msra.mxu0 0.0
    %2357 = vmatprep.subr.mxu0 0.0
    %2358 = vmatpush1.msra.mxu0 0.0
    %2359 = vmatprep.subr.mxu0 0.0
    %2360 = vmatpush1.msra.mxu0 0.0
    %2361 = vmatprep.subr.mxu0 0.0
    %2362 = vmatpush1.msra.mxu0 0.0
    %2363 = vmatprep.subr.mxu0 0.0
    %2364 = vmatpush1.msra.mxu0 0.0
    %2365 = vmatprep.subr.mxu0 0.0
    %2366 = vmatpush1.msra.mxu0 0.0
    %2367 = vmatprep.subr.mxu0 0.0
    %2368 = vmatpush1.msra.mxu0 0.0
    %2369 = vmatprep.subr.mxu0 0.0
    %2370 = vmatpush1.msra.mxu0 0.0
    %2371 = vmatprep.subr.mxu0 0.0
    %2372 = vmatpush1.msra.mxu0 0.0
    %2373 = vmatprep.subr.mxu0 0.0
    %2374 = vmatpush1.msra.mxu0 0.0
    %2375 = vmatprep.subr.mxu0 0.0
    %2376 = vmatpush1.msra.mxu0 0.0
    %2377 = vmatprep.subr.mxu0 0.0
    %2378 = vmatpush1.msra.mxu0 0.0
    %2379 = vmatprep.subr.mxu0 0.0
    %2380 = vmatpush1.msra.mxu0 0.0
    %2381 = vmatprep.subr.mxu0 0.0
    %2382 = vmatpush1.msra.mxu0 0.0
    %2383 = vmatprep.subr.mxu0 0.0
    %2384 = vmatpush1.msra.mxu0 0.0
    %2385 = vmatprep.subr.mxu0 0.0
    %2386 = vmatpush1.msra.mxu0 0.0
    %2387 = vmatprep.subr.mxu0 0.0
    %2388 = vmatpush1.msra.mxu0 0.0
    %2389 = vmatprep.subr.mxu0 0.0
    %2390 = vmatpush1.msra.mxu0 0.0
    %2391 = vmatprep.subr.mxu0 0.0
    %2392 = vmatpush1.msra.mxu0 0.0
    %2393 = vmatprep.subr.mxu0 0.0
    %2394 = vmatpush1.msra.mxu0 0.0
    %2395 = vmatprep.mubr.f32.mxu0 0.0
    %2396 = vmatmul.mubr.f32.gmra.mrb[0].mxu0 %v2313
    %v2397 = vpop.f32.mrb[0].mxu0
    %v2398 = vadd.f32 0.0, %v2397
    %v2399 = vpop.f32.mrb[0].mxu0
    %2400 = vmatprep.mubr.f32.mxu0 0.0
    %2401 = vmatmul.mubr.f32.gmra.mrb[0].mxu0 %v2316
    %v2402 = vpop.f32.mrb[0].mxu0
    %v2403 = vadd.f32 0.0, %v2402
    %v2404 = vpop.f32.mrb[0].mxu0
    %2405 = vmatprep.mubr.f32.mxu0 0.0
    %2406 = vmatmul.mubr.f32.gmra.mrb[0].mxu0 %v2319
    %v2407 = vpop.f32.mrb[0].mxu0
    %v2408 = vadd.f32 0.0, %v2407
    %v2409 = vpop.f32.mrb[0].mxu0
    %2410 = vmatprep.mubr.f32.mxu0 0.0
    %2411 = vmatmul.mubr.f32.gmra.mrb[0].mxu0 %v2322
    %v2412 = vpop.f32.mrb[0].mxu0
    %v2413 = vadd.f32 0.0, %v2412
    %v2414 = vpop.f32.mrb[0].mxu0
    %2415 = vmatprep.mubr.f32.mxu0 0.0
    %2416 = vmatmul.mubr.f32.gmra.mrb[0].mxu0 %v2325
    %v2417 = vpop.f32.mrb[0].mxu0
    %v2418 = vadd.f32 0.0, %v2417
    %v2419 = vpop.f32.mrb[0].mxu0
    %2420 = vdwg.mxu0
    %v2421 = vadd.s32 %v2156, 1
    %v2422 = vadd.s32 %v2157, 1
    %v2423 = vadd.s32 %v2158, 1
    %v2424 = vadd.s32 %v2159, 1
    %v2425 = vadd.s32 %v2160, 1
    %vm2426 = vcmp.eq.s32.totalorder %v2151, %v2421
    %vm2427 = vcmp.eq.s32.totalorder %v2151, %v2422
    %vm2428 = vcmp.eq.s32.totalorder %v2151, %v2423
    %vm2429 = vcmp.eq.s32.totalorder %v2151, %v2424
    %vm2430 = vcmp.eq.s32.totalorder %v2151, %v2425
    %v2431 = vsel %vm2426, 1, 0
    %v2432 = vsel %vm2427, 1, 0
    %v2433 = vsel %vm2428, 1, 0
    %v2434 = vsel %vm2429, 1, 0
    %v2435 = vsel %vm2430, 1, 0
    %v2436 = vcvt.s32.f32 %v2431
    %v2437 = vcvt.s32.f32 %v2432
    %v2438 = vcvt.s32.f32 %v2433
    %v2439 = vcvt.s32.f32 %v2434
    %v2440 = vcvt.s32.f32 %v2435
    %s2441 = sld [smem:[#allocation2 + $0x3]]
    %v2442 = vstv %s2441
    %v2443 = vmul.f32 %v2442, %v2196
    %v2444 = vmul.f32 %v2442, %v2197
    %v2445 = vmul.f32 %v2442, %v2198
    %v2446 = vmul.f32 %v2442, %v2199
    %v2447 = vmul.f32 %v2442, %v2200
    %v2448 = vmul.f32 %v2442, %v2201
    %v2449 = vmul.f32 %v2442, %v2202
    %v2450 = vmul.f32 %v2442, %v2203
    %v2451 = vmul.f32 %v2442, %v2204
    %s2452 = sld [smem:[#allocation2 + $0x4]]
    %v2453 = vstv %s2452
    %v2454 = vmul.f32 %v2453, %v2235
    %v2455 = vmul.f32 %v2453, %v2236
    %v2456 = vmul.f32 %v2453, %v2237
    %v2457 = vmul.f32 %v2453, %v2238
    %v2458 = vmul.f32 %v2453, %v2239
    %v2459 = vmul.f32 %v2453, %v2240
    %v2460 = vmul.f32 %v2453, %v2241
    %v2461 = vmul.f32 %v2453, %v2242
    %v2462 = vmul.f32 %v2453, %v2243
    %v2463 = vadd.f32 %v2443, %v2454
    %v2464 = vadd.f32 %v2444, %v2455
    %v2465 = vadd.f32 %v2445, %v2456
    %v2466 = vadd.f32 %v2446, %v2457
    %v2467 = vadd.f32 %v2447, %v2458
    %v2468 = vadd.f32 %v2448, %v2459
    %v2469 = vadd.f32 %v2449, %v2460
    %v2470 = vadd.f32 %v2450, %v2461
    %v2471 = vadd.f32 %v2451, %v2462
    %s2472 = sld [smem:[#allocation2 + $0x5]]
    %v2473 = vstv %s2472
    %v2474 = vmul.f32 %v2473, %v2283
    %v2475 = vmul.f32 %v2473, %v2284
    %v2476 = vmul.f32 %v2473, %v2285
    %v2477 = vmul.f32 %v2473, %v2286
    %v2478 = vmul.f32 %v2473, %v2287
    %v2479 = vmul.f32 %v2473, %v2288
    %v2480 = vmul.f32 %v2473, %v2289
    %v2481 = vmul.f32 %v2473, %v2290
    %v2482 = vmul.f32 %v2473, %v2291
    %v2483 = vadd.f32 %v2463, %v2474
    %v2484 = vadd.f32 %v2464, %v2475
    %v2485 = vadd.f32 %v2465, %v2476
    %v2486 = vadd.f32 %v2466, %v2477
    %v2487 = vadd.f32 %v2467, %v2478
    %v2488 = vadd.f32 %v2468, %v2479
    %v2489 = vadd.f32 %v2469, %v2480
    %v2490 = vadd.f32 %v2470, %v2481
    %v2491 = vadd.f32 %v2471, %v2482
    %v2493 = vsel %vm2311, %v2436, 0
    %v2496 = vsel %vm2311, %v2437, 0
    %v2499 = vsel %vm2311, %v2438, 0
    %v2502 = vsel %vm2311, %v2439, 0
    %v2505 = vsel %vm2311, %v2440, 0
    %2507 = vmatprep.subr.mxu0 0.0
    %2508 = vmatpush1.msra.mxu0 %v2135
    %2509 = vmatprep.subr.mxu0 0.0
    %2510 = vmatpush1.msra.mxu0 %v2136
    %2511 = vmatprep.subr.mxu0 0.0
    %2512 = vmatpush1.msra.mxu0 %v2137
    %2513 = vmatprep.subr.mxu0 0.0
    %2514 = vmatpush1.msra.mxu0 %v2138
    %2515 = vmatprep.subr.mxu0 0.0
    %2516 = vmatpush1.msra.mxu0 %v2139
    %2517 = vmatprep.subr.mxu0 0.0
    %2518 = vmatpush1.msra.mxu0 %v2140
    %2519 = vmatprep.subr.mxu0 0.0
    %2520 = vmatpush1.msra.mxu0 %v2141
    %2521 = vmatprep.subr.mxu0 0.0
    %2522 = vmatpush1.msra.mxu0 %v2142
    %2523 = vmatprep.subr.mxu0 0.0
    %2524 = vmatpush1.msra.mxu0 %v2329
    %2525 = vmatprep.subr.mxu0 0.0
    %2526 = vmatpush1.msra.mxu0 0.0
    %2527 = vmatprep.subr.mxu0 0.0
    %2528 = vmatpush1.msra.mxu0 0.0
    %2529 = vmatprep.subr.mxu0 0.0
    %2530 = vmatpush1.msra.mxu0 0.0
    %2531 = vmatprep.subr.mxu0 0.0
    %2532 = vmatpush1.msra.mxu0 0.0
    %2533 = vmatprep.subr.mxu0 0.0
    %2534 = vmatpush1.msra.mxu0 0.0
    %2535 = vmatprep.subr.mxu0 0.0
    %2536 = vmatpush1.msra.mxu0 0.0
    %2537 = vmatprep.subr.mxu0 0.0
    %2538 = vmatpush1.msra.mxu0 0.0
    %2539 = vmatprep.subr.mxu0 0.0
    %2540 = vmatpush1.msra.mxu0 0.0
    %2541 = vmatprep.subr.mxu0 0.0
    %2542 = vmatpush1.msra.mxu0 0.0
    %2543 = vmatprep.subr.mxu0 0.0
    %2544 = vmatpush1.msra.mxu0 0.0
    %2545 = vmatprep.subr.mxu0 0.0
    %2546 = vmatpush1.msra.mxu0 0.0
    %2547 = vmatprep.subr.mxu0 0.0
    %2548 = vmatpush1.msra.mxu0 0.0
    %2549 = vmatprep.subr.mxu0 0.0
    %2550 = vmatpush1.msra.mxu0 0.0
    %2551 = vmatprep.subr.mxu0 0.0
    %2552 = vmatpush1.msra.mxu0 0.0
    %2553 = vmatprep.subr.mxu0 0.0
    %2554 = vmatpush1.msra.mxu0 0.0
    %2555 = vmatprep.subr.mxu0 0.0
    %2556 = vmatpush1.msra.mxu0 0.0
    %2557 = vmatprep.subr.mxu0 0.0
    %2558 = vmatpush1.msra.mxu0 0.0
    %2559 = vmatprep.subr.mxu0 0.0
    %2560 = vmatpush1.msra.mxu0 0.0
    %2561 = vmatprep.subr.mxu0 0.0
    %2562 = vmatpush1.msra.mxu0 0.0
    %2563 = vmatprep.subr.mxu0 0.0
    %2564 = vmatpush1.msra.mxu0 0.0
    %2565 = vmatprep.subr.mxu0 0.0
    %2566 = vmatpush1.msra.mxu0 0.0
    %2567 = vmatprep.subr.mxu0 0.0
    %2568 = vmatpush1.msra.mxu0 0.0
    %2569 = vmatprep.subr.mxu0 0.0
    %2570 = vmatpush1.msra.mxu0 0.0
    %2571 = vmatprep.mubr.f32.mxu0 0.0
    %2572 = vmatmul.mubr.f32.gmra.mrb[0].mxu0 %v2493
    %v2573 = vpop.f32.mrb[0].mxu0
    %v2574 = vadd.f32 0.0, %v2573
    %v2575 = vpop.f32.mrb[0].mxu0
    %2576 = vmatprep.mubr.f32.mxu0 0.0
    %2577 = vmatmul.mubr.f32.gmra.mrb[0].mxu0 %v2496
    %v2578 = vpop.f32.mrb[0].mxu0
    %v2579 = vadd.f32 0.0, %v2578
    %v2580 = vpop.f32.mrb[0].mxu0
    %2581 = vmatprep.mubr.f32.mxu0 0.0
    %2582 = vmatmul.mubr.f32.gmra.mrb[0].mxu0 %v2499
    %v2583 = vpop.f32.mrb[0].mxu0
    %v2584 = vadd.f32 0.0, %v2583
    %v2585 = vpop.f32.mrb[0].mxu0
    %2586 = vmatprep.mubr.f32.mxu0 0.0
    %2587 = vmatmul.mubr.f32.gmra.mrb[0].mxu0 %v2502
    %v2588 = vpop.f32.mrb[0].mxu0
    %v2589 = vadd.f32 0.0, %v2588
    %v2590 = vpop.f32.mrb[0].mxu0
    %2591 = vmatprep.mubr.f32.mxu0 0.0
    %2592 = vmatmul.mubr.f32.gmra.mrb[0].mxu0 %v2505
    %v2593 = vpop.f32.mrb[0].mxu0
    %v2594 = vadd.f32 0.0, %v2593
    %v2595 = vpop.f32.mrb[0].mxu0
    %2596 = vdwg.mxu0
    %vm2597 = vcmask 564224
    %v2599 = vsel %vm2597, %v2574, 0
    %v2602 = vsel %vm2597, %v2579, 0
    %v2605 = vsel %vm2597, %v2584, 0
    %v2608 = vsel %vm2597, %v2589, 0
    %v2611 = vsel %vm2597, %v2594, 0
    %vm2613 = vcmask 1044480
    %v2615 = vsel %vm2613, %v2491, 0
    %2617 = vmatprep.subr.mxu0 0.0
    %2618 = vmatpush1.msra.mxu0 %v2483
    %2619 = vmatprep.subr.mxu0 0.0
    %2620 = vmatpush1.msra.mxu0 %v2484
    %2621 = vmatprep.subr.mxu0 0.0
    %2622 = vmatpush1.msra.mxu0 %v2485
    %2623 = vmatprep.subr.mxu0 0.0
    %2624 = vmatpush1.msra.mxu0 %v2486
    %2625 = vmatprep.subr.mxu0 0.0
    %2626 = vmatpush1.msra.mxu0 %v2487
    %2627 = vmatprep.subr.mxu0 0.0
    %2628 = vmatpush1.msra.mxu0 %v2488
    %2629 = vmatprep.subr.mxu0 0.0
    %2630 = vmatpush1.msra.mxu0 %v2489
    %2631 = vmatprep.subr.mxu0 0.0
    %2632 = vmatpush1.msra.mxu0 %v2490
    %2633 = vmatprep.subr.mxu0 0.0
    %2634 = vmatpush1.msra.mxu0 %v2615
    %2635 = vmatprep.subr.mxu0 0.0
    %2636 = vmatpush1.msra.mxu0 0.0
    %2637 = vmatprep.subr.mxu0 0.0
    %2638 = vmatpush1.msra.mxu0 0.0
    %2639 = vmatprep.subr.mxu0 0.0
    %2640 = vmatpush1.msra.mxu0 0.0
    %2641 = vmatprep.subr.mxu0 0.0
    %2642 = vmatpush1.msra.mxu0 0.0
    %2643 = vmatprep.subr.mxu0 0.0
    %2644 = vmatpush1.msra.mxu0 0.0
    %2645 = vmatprep.subr.mxu0 0.0
    %2646 = vmatpush1.msra.mxu0 0.0
    %2647 = vmatprep.subr.mxu0 0.0
    %2648 = vmatpush1.msra.mxu0 0.0
    %2649 = vmatprep.subr.mxu0 0.0
    %2650 = vmatpush1.msra.mxu0 0.0
    %2651 = vmatprep.subr.mxu0 0.0
    %2652 = vmatpush1.msra.mxu0 0.0
    %2653 = vmatprep.subr.mxu0 0.0
    %2654 = vmatpush1.msra.mxu0 0.0
    %2655 = vmatprep.subr.mxu0 0.0
    %2656 = vmatpush1.msra.mxu0 0.0
    %2657 = vmatprep.subr.mxu0 0.0
    %2658 = vmatpush1.msra.mxu0 0.0
    %2659 = vmatprep.subr.mxu0 0.0
    %2660 = vmatpush1.msra.mxu0 0.0
    %2661 = vmatprep.subr.mxu0 0.0
    %2662 = vmatpush1.msra.mxu0 0.0
    %2663 = vmatprep.subr.mxu0 0.0
    %2664 = vmatpush1.msra.mxu0 0.0
    %2665 = vmatprep.subr.mxu0 0.0
    %2666 = vmatpush1.msra.mxu0 0.0
    %2667 = vmatprep.subr.mxu0 0.0
    %2668 = vmatpush1.msra.mxu0 0.0
    %2669 = vmatprep.subr.mxu0 0.0
    %2670 = vmatpush1.msra.mxu0 0.0
    %2671 = vmatprep.subr.mxu0 0.0
    %2672 = vmatpush1.msra.mxu0 0.0
    %2673 = vmatprep.subr.mxu0 0.0
    %2674 = vmatpush1.msra.mxu0 0.0
    %2675 = vmatprep.subr.mxu0 0.0
    %2676 = vmatpush1.msra.mxu0 0.0
    %2677 = vmatprep.subr.mxu0 0.0
    %2678 = vmatpush1.msra.mxu0 0.0
    %2679 = vmatprep.subr.mxu0 0.0
    %2680 = vmatpush1.msra.mxu0 0.0
    %2681 = vmatprep.mubr.f32.mxu0 0.0
    %2682 = vmatmul.mubr.f32.gmra.mrb[0].mxu0 %v2599
    %v2683 = vpop.f32.mrb[0].mxu0
    %v2684 = vadd.f32 0.0, %v2683
    %v2685 = vpop.f32.mrb[0].mxu0
    %2686 = vmatprep.mubr.f32.mxu0 0.0
    %2687 = vmatmul.mubr.f32.gmra.mrb[0].mxu0 %v2602
    %v2688 = vpop.f32.mrb[0].mxu0
    %v2689 = vadd.f32 0.0, %v2688
    %v2690 = vpop.f32.mrb[0].mxu0
    %2691 = vmatprep.mubr.f32.mxu0 0.0
    %2692 = vmatmul.mubr.f32.gmra.mrb[0].mxu0 %v2605
    %v2693 = vpop.f32.mrb[0].mxu0
    %v2694 = vadd.f32 0.0, %v2693
    %v2695 = vpop.f32.mrb[0].mxu0
    %2696 = vmatprep.mubr.f32.mxu0 0.0
    %2697 = vmatmul.mubr.f32.gmra.mrb[0].mxu0 %v2608
    %v2698 = vpop.f32.mrb[0].mxu0
    %v2699 = vadd.f32 0.0, %v2698
    %v2700 = vpop.f32.mrb[0].mxu0
    %2701 = vmatprep.mubr.f32.mxu0 0.0
    %2702 = vmatmul.mubr.f32.gmra.mrb[0].mxu0 %v2611
    %v2703 = vpop.f32.mrb[0].mxu0
    %v2704 = vadd.f32 0.0, %v2703
    %v2705 = vpop.f32.mrb[0].mxu0
    %2706 = vdwg.mxu0
    %v2708 = vsel %vm2597, %v2398, 0
    %v2711 = vsel %vm2597, %v2403, 0
    %v2714 = vsel %vm2597, %v2408, 0
    %v2717 = vsel %vm2597, %v2413, 0
    %v2720 = vsel %vm2597, %v2418, 0
    %v2723 = vsel %vm2613, %v2310, 0
    %2725 = vmatprep.subr.mxu0 0.0
    %2726 = vmatpush1.msra.mxu0 %v2302
    %2727 = vmatprep.subr.mxu0 0.0
    %2728 = vmatpush1.msra.mxu0 %v2303
    %2729 = vmatprep.subr.mxu0 0.0
    %2730 = vmatpush1.msra.mxu0 %v2304
    %2731 = vmatprep.subr.mxu0 0.0
    %2732 = vmatpush1.msra.mxu0 %v2305
    %2733 = vmatprep.subr.mxu0 0.0
    %2734 = vmatpush1.msra.mxu0 %v2306
    %2735 = vmatprep.subr.mxu0 0.0
    %2736 = vmatpush1.msra.mxu0 %v2307
    %2737 = vmatprep.subr.mxu0 0.0
    %2738 = vmatpush1.msra.mxu0 %v2308
    %2739 = vmatprep.subr.mxu0 0.0
    %2740 = vmatpush1.msra.mxu0 %v2309
    %2741 = vmatprep.subr.mxu0 0.0
    %2742 = vmatpush1.msra.mxu0 %v2723
    %2743 = vmatprep.subr.mxu0 0.0
    %2744 = vmatpush1.msra.mxu0 0.0
    %2745 = vmatprep.subr.mxu0 0.0
    %2746 = vmatpush1.msra.mxu0 0.0
    %2747 = vmatprep.subr.mxu0 0.0
    %2748 = vmatpush1.msra.mxu0 0.0
    %2749 = vmatprep.subr.mxu0 0.0
    %2750 = vmatpush1.msra.mxu0 0.0
    %2751 = vmatprep.subr.mxu0 0.0
    %2752 = vmatpush1.msra.mxu0 0.0
    %2753 = vmatprep.subr.mxu0 0.0
    %2754 = vmatpush1.msra.mxu0 0.0
    %2755 = vmatprep.subr.mxu0 0.0
    %2756 = vmatpush1.msra.mxu0 0.0
    %2757 = vmatprep.subr.mxu0 0.0
    %2758 = vmatpush1.msra.mxu0 0.0
    %2759 = vmatprep.subr.mxu0 0.0
    %2760 = vmatpush1.msra.mxu0 0.0
    %2761 = vmatprep.subr.mxu0 0.0
    %2762 = vmatpush1.msra.mxu0 0.0
    %2763 = vmatprep.subr.mxu0 0.0
    %2764 = vmatpush1.msra.mxu0 0.0
    %2765 = vmatprep.subr.mxu0 0.0
    %2766 = vmatpush1.msra.mxu0 0.0
    %2767 = vmatprep.subr.mxu0 0.0
    %2768 = vmatpush1.msra.mxu0 0.0
    %2769 = vmatprep.subr.mxu0 0.0
    %2770 = vmatpush1.msra.mxu0 0.0
    %2771 = vmatprep.subr.mxu0 0.0
    %2772 = vmatpush1.msra.mxu0 0.0
    %2773 = vmatprep.subr.mxu0 0.0
    %2774 = vmatpush1.msra.mxu0 0.0
    %2775 = vmatprep.subr.mxu0 0.0
    %2776 = vmatpush1.msra.mxu0 0.0
    %2777 = vmatprep.subr.mxu0 0.0
    %2778 = vmatpush1.msra.mxu0 0.0
    %2779 = vmatprep.subr.mxu0 0.0
    %2780 = vmatpush1.msra.mxu0 0.0
    %2781 = vmatprep.subr.mxu0 0.0
    %2782 = vmatpush1.msra.mxu0 0.0
    %2783 = vmatprep.subr.mxu0 0.0
    %2784 = vmatpush1.msra.mxu0 0.0
    %2785 = vmatprep.subr.mxu0 0.0
    %2786 = vmatpush1.msra.mxu0 0.0
    %2787 = vmatprep.subr.mxu0 0.0
    %2788 = vmatpush1.msra.mxu0 0.0
    %2789 = vmatprep.mubr.f32.mxu0 0.0
    %2790 = vmatmul.mubr.f32.gmra.mrb[0].mxu0 %v2708
    %v2791 = vpop.f32.mrb[0].mxu0
    %v2792 = vadd.f32 %v2684, %v2791
    %v2793 = vpop.f32.mrb[0].mxu0
    %2794 = vmatprep.mubr.f32.mxu0 0.0
    %2795 = vmatmul.mubr.f32.gmra.mrb[0].mxu0 %v2711
    %v2796 = vpop.f32.mrb[0].mxu0
    %v2797 = vadd.f32 %v2689, %v2796
    %v2798 = vpop.f32.mrb[0].mxu0
    %2799 = vmatprep.mubr.f32.mxu0 0.0
    %2800 = vmatmul.mubr.f32.gmra.mrb[0].mxu0 %v2714
    %v2801 = vpop.f32.mrb[0].mxu0
    %v2802 = vadd.f32 %v2694, %v2801
    %v2803 = vpop.f32.mrb[0].mxu0
    %2804 = vmatprep.mubr.f32.mxu0 0.0
    %2805 = vmatmul.mubr.f32.gmra.mrb[0].mxu0 %v2717
    %v2806 = vpop.f32.mrb[0].mxu0
    %v2807 = vadd.f32 %v2699, %v2806
    %v2808 = vpop.f32.mrb[0].mxu0
    %2809 = vmatprep.mubr.f32.mxu0 0.0
    %2810 = vmatmul.mubr.f32.gmra.mrb[0].mxu0 %v2720
    %v2811 = vpop.f32.mrb[0].mxu0
    %v2812 = vadd.f32 %v2704, %v2811
    %v2813 = vpop.f32.mrb[0].mxu0
    %2814 = vdwg.mxu0
    %v2815 = vadd.s32 %v2156, 2
    %v2816 = vadd.s32 %v2157, 2
    %v2817 = vadd.s32 %v2158, 2
    %v2818 = vadd.s32 %v2159, 2
    %v2819 = vadd.s32 %v2160, 2
    %vm2820 = vcmp.eq.s32.totalorder %v2151, %v2815
    %vm2821 = vcmp.eq.s32.totalorder %v2151, %v2816
    %vm2822 = vcmp.eq.s32.totalorder %v2151, %v2817
    %vm2823 = vcmp.eq.s32.totalorder %v2151, %v2818
    %vm2824 = vcmp.eq.s32.totalorder %v2151, %v2819
    %v2825 = vsel %vm2820, 1, 0
    %v2826 = vsel %vm2821, 1, 0
    %v2827 = vsel %vm2822, 1, 0
    %v2828 = vsel %vm2823, 1, 0
    %v2829 = vsel %vm2824, 1, 0
    %v2830 = vcvt.s32.f32 %v2825
    %v2831 = vcvt.s32.f32 %v2826
    %v2832 = vcvt.s32.f32 %v2827
    %v2833 = vcvt.s32.f32 %v2828
    %v2834 = vcvt.s32.f32 %v2829
    %s2835 = sld [smem:[#allocation2 + $0x6]]
    %v2836 = vstv %s2835
    %v2837 = vmul.f32 %v2836, %v2196
    %v2838 = vmul.f32 %v2836, %v2197
    %v2839 = vmul.f32 %v2836, %v2198
    %v2840 = vmul.f32 %v2836, %v2199
    %v2841 = vmul.f32 %v2836, %v2200
    %v2842 = vmul.f32 %v2836, %v2201
    %v2843 = vmul.f32 %v2836, %v2202
    %v2844 = vmul.f32 %v2836, %v2203
    %v2845 = vmul.f32 %v2836, %v2204
    %s2846 = sld [smem:[#allocation2 + $0x7]]
    %v2847 = vstv %s2846
    %v2848 = vmul.f32 %v2847, %v2235
    %v2849 = vmul.f32 %v2847, %v2236
    %v2850 = vmul.f32 %v2847, %v2237
    %v2851 = vmul.f32 %v2847, %v2238
    %v2852 = vmul.f32 %v2847, %v2239
    %v2853 = vmul.f32 %v2847, %v2240
    %v2854 = vmul.f32 %v2847, %v2241
    %v2855 = vmul.f32 %v2847, %v2242
    %v2856 = vmul.f32 %v2847, %v2243
    %v2857 = vadd.f32 %v2837, %v2848
    %v2858 = vadd.f32 %v2838, %v2849
    %v2859 = vadd.f32 %v2839, %v2850
    %v2860 = vadd.f32 %v2840, %v2851
    %v2861 = vadd.f32 %v2841, %v2852
    %v2862 = vadd.f32 %v2842, %v2853
    %v2863 = vadd.f32 %v2843, %v2854
    %v2864 = vadd.f32 %v2844, %v2855
    %v2865 = vadd.f32 %v2845, %v2856
    %s2866 = sld [smem:[#allocation2 + $0x8]]
    %v2867 = vstv %s2866
    %v2868 = vmul.f32 %v2867, %v2283
    %v2869 = vmul.f32 %v2867, %v2284
    %v2870 = vmul.f32 %v2867, %v2285
    %v2871 = vmul.f32 %v2867, %v2286
    %v2872 = vmul.f32 %v2867, %v2287
    %v2873 = vmul.f32 %v2867, %v2288
    %v2874 = vmul.f32 %v2867, %v2289
    %v2875 = vmul.f32 %v2867, %v2290
    %v2876 = vmul.f32 %v2867, %v2291
    %v2877 = vadd.f32 %v2857, %v2868
    %v2878 = vadd.f32 %v2858, %v2869
    %v2879 = vadd.f32 %v2859, %v2870
    %v2880 = vadd.f32 %v2860, %v2871
    %v2881 = vadd.f32 %v2861, %v2872
    %v2882 = vadd.f32 %v2862, %v2873
    %v2883 = vadd.f32 %v2863, %v2874
    %v2884 = vadd.f32 %v2864, %v2875
    %v2885 = vadd.f32 %v2865, %v2876
    %v2887 = vsel %vm2311, %v2830, 0
    %v2890 = vsel %vm2311, %v2831, 0
    %v2893 = vsel %vm2311, %v2832, 0
    %v2896 = vsel %vm2311, %v2833, 0
    %v2899 = vsel %vm2311, %v2834, 0
    %2901 = vmatprep.subr.mxu0 0.0
    %2902 = vmatpush1.msra.mxu0 %v2135
    %2903 = vmatprep.subr.mxu0 0.0
    %2904 = vmatpush1.msra.mxu0 %v2136
    %2905 = vmatprep.subr.mxu0 0.0
    %2906 = vmatpush1.msra.mxu0 %v2137
    %2907 = vmatprep.subr.mxu0 0.0
    %2908 = vmatpush1.msra.mxu0 %v2138
    %2909 = vmatprep.subr.mxu0 0.0
    %2910 = vmatpush1.msra.mxu0 %v2139
    %2911 = vmatprep.subr.mxu0 0.0
    %2912 = vmatpush1.msra.mxu0 %v2140
    %2913 = vmatprep.subr.mxu0 0.0
    %2914 = vmatpush1.msra.mxu0 %v2141
    %2915 = vmatprep.subr.mxu0 0.0
    %2916 = vmatpush1.msra.mxu0 %v2142
    %2917 = vmatprep.subr.mxu0 0.0
    %2918 = vmatpush1.msra.mxu0 %v2329
    %2919 = vmatprep.subr.mxu0 0.0
    %2920 = vmatpush1.msra.mxu0 0.0
    %2921 = vmatprep.subr.mxu0 0.0
    %2922 = vmatpush1.msra.mxu0 0.0
    %2923 = vmatprep.subr.mxu0 0.0
    %2924 = vmatpush1.msra.mxu0 0.0
    %2925 = vmatprep.subr.mxu0 0.0
    %2926 = vmatpush1.msra.mxu0 0.0
    %2927 = vmatprep.subr.mxu0 0.0
    %2928 = vmatpush1.msra.mxu0 0.0
    %2929 = vmatprep.subr.mxu0 0.0
    %2930 = vmatpush1.msra.mxu0 0.0
    %2931 = vmatprep.subr.mxu0 0.0
    %2932 = vmatpush1.msra.mxu0 0.0
    %2933 = vmatprep.subr.mxu0 0.0
    %2934 = vmatpush1.msra.mxu0 0.0
    %2935 = vmatprep.subr.mxu0 0.0
    %2936 = vmatpush1.msra.mxu0 0.0
    %2937 = vmatprep.subr.mxu0 0.0
    %2938 = vmatpush1.msra.mxu0 0.0
    %2939 = vmatprep.subr.mxu0 0.0
    %2940 = vmatpush1.msra.mxu0 0.0
    %2941 = vmatprep.subr.mxu0 0.0
    %2942 = vmatpush1.msra.mxu0 0.0
    %2943 = vmatprep.subr.mxu0 0.0
    %2944 = vmatpush1.msra.mxu0 0.0
    %2945 = vmatprep.subr.mxu0 0.0
    %2946 = vmatpush1.msra.mxu0 0.0
    %2947 = vmatprep.subr.mxu0 0.0
    %2948 = vmatpush1.msra.mxu0 0.0
    %2949 = vmatprep.subr.mxu0 0.0
    %2950 = vmatpush1.msra.mxu0 0.0
    %2951 = vmatprep.subr.mxu0 0.0
    %2952 = vmatpush1.msra.mxu0 0.0
    %2953 = vmatprep.subr.mxu0 0.0
    %2954 = vmatpush1.msra.mxu0 0.0
    %2955 = vmatprep.subr.mxu0 0.0
    %2956 = vmatpush1.msra.mxu0 0.0
    %2957 = vmatprep.subr.mxu0 0.0
    %2958 = vmatpush1.msra.mxu0 0.0
    %2959 = vmatprep.subr.mxu0 0.0
    %2960 = vmatpush1.msra.mxu0 0.0
    %2961 = vmatprep.subr.mxu0 0.0
    %2962 = vmatpush1.msra.mxu0 0.0
    %2963 = vmatprep.subr.mxu0 0.0
    %2964 = vmatpush1.msra.mxu0 0.0
    %2965 = vmatprep.mubr.f32.mxu0 0.0
    %2966 = vmatmul.mubr.f32.gmra.mrb[0].mxu0 %v2887
    %v2967 = vpop.f32.mrb[0].mxu0
    %v2968 = vadd.f32 0.0, %v2967
    %v2969 = vpop.f32.mrb[0].mxu0
    %2970 = vmatprep.mubr.f32.mxu0 0.0
    %2971 = vmatmul.mubr.f32.gmra.mrb[0].mxu0 %v2890
    %v2972 = vpop.f32.mrb[0].mxu0
    %v2973 = vadd.f32 0.0, %v2972
    %v2974 = vpop.f32.mrb[0].mxu0
    %2975 = vmatprep.mubr.f32.mxu0 0.0
    %2976 = vmatmul.mubr.f32.gmra.mrb[0].mxu0 %v2893
    %v2977 = vpop.f32.mrb[0].mxu0
    %v2978 = vadd.f32 0.0, %v2977
    %v2979 = vpop.f32.mrb[0].mxu0
    %2980 = vmatprep.mubr.f32.mxu0 0.0
    %2981 = vmatmul.mubr.f32.gmra.mrb[0].mxu0 %v2896
    %v2982 = vpop.f32.mrb[0].mxu0
    %v2983 = vadd.f32 0.0, %v2982
    %v2984 = vpop.f32.mrb[0].mxu0
    %2985 = vmatprep.mubr.f32.mxu0 0.0
    %2986 = vmatmul.mubr.f32.gmra.mrb[0].mxu0 %v2899
    %v2987 = vpop.f32.mrb[0].mxu0
    %v2988 = vadd.f32 0.0, %v2987
    %v2989 = vpop.f32.mrb[0].mxu0
    %2990 = vdwg.mxu0
    %v2992 = vsel %vm2597, %v2968, 0
    %v2995 = vsel %vm2597, %v2973, 0
    %v2998 = vsel %vm2597, %v2978, 0
    %v3001 = vsel %vm2597, %v2983, 0
    %v3004 = vsel %vm2597, %v2988, 0
    %v3007 = vsel %vm2613, %v2885, 0
    %3009 = vmatprep.subr.mxu0 0.0
    %3010 = vmatpush1.msra.mxu0 %v2877
    %3011 = vmatprep.subr.mxu0 0.0
    %3012 = vmatpush1.msra.mxu0 %v2878
    %3013 = vmatprep.subr.mxu0 0.0
    %3014 = vmatpush1.msra.mxu0 %v2879
    %3015 = vmatprep.subr.mxu0 0.0
    %3016 = vmatpush1.msra.mxu0 %v2880
    %3017 = vmatprep.subr.mxu0 0.0
    %3018 = vmatpush1.msra.mxu0 %v2881
    %3019 = vmatprep.subr.mxu0 0.0
    %3020 = vmatpush1.msra.mxu0 %v2882
    %3021 = vmatprep.subr.mxu0 0.0
    %3022 = vmatpush1.msra.mxu0 %v2883
    %3023 = vmatprep.subr.mxu0 0.0
    %3024 = vmatpush1.msra.mxu0 %v2884
    %3025 = vmatprep.subr.mxu0 0.0
    %3026 = vmatpush1.msra.mxu0 %v3007
    %3027 = vmatprep.subr.mxu0 0.0
    %3028 = vmatpush1.msra.mxu0 0.0
    %3029 = vmatprep.subr.mxu0 0.0
    %3030 = vmatpush1.msra.mxu0 0.0
    %3031 = vmatprep.subr.mxu0 0.0
    %3032 = vmatpush1.msra.mxu0 0.0
    %3033 = vmatprep.subr.mxu0 0.0
    %3034 = vmatpush1.msra.mxu0 0.0
    %3035 = vmatprep.subr.mxu0 0.0
    %3036 = vmatpush1.msra.mxu0 0.0
    %3037 = vmatprep.subr.mxu0 0.0
    %3038 = vmatpush1.msra.mxu0 0.0
    %3039 = vmatprep.subr.mxu0 0.0
    %3040 = vmatpush1.msra.mxu0 0.0
    %3041 = vmatprep.subr.mxu0 0.0
    %3042 = vmatpush1.msra.mxu0 0.0
    %3043 = vmatprep.subr.mxu0 0.0
    %3044 = vmatpush1.msra.mxu0 0.0
    %3045 = vmatprep.subr.mxu0 0.0
    %3046 = vmatpush1.msra.mxu0 0.0
    %3047 = vmatprep.subr.mxu0 0.0
    %3048 = vmatpush1.msra.mxu0 0.0
    %3049 = vmatprep.subr.mxu0 0.0
    %3050 = vmatpush1.msra.mxu0 0.0
    %3051 = vmatprep.subr.mxu0 0.0
    %3052 = vmatpush1.msra.mxu0 0.0
    %3053 = vmatprep.subr.mxu0 0.0
    %3054 = vmatpush1.msra.mxu0 0.0
    %3055 = vmatprep.subr.mxu0 0.0
    %3056 = vmatpush1.msra.mxu0 0.0
    %3057 = vmatprep.subr.mxu0 0.0
    %3058 = vmatpush1.msra.mxu0 0.0
    %3059 = vmatprep.subr.mxu0 0.0
    %3060 = vmatpush1.msra.mxu0 0.0
    %3061 = vmatprep.subr.mxu0 0.0
    %3062 = vmatpush1.msra.mxu0 0.0
    %3063 = vmatprep.subr.mxu0 0.0
    %3064 = vmatpush1.msra.mxu0 0.0
    %3065 = vmatprep.subr.mxu0 0.0
    %3066 = vmatpush1.msra.mxu0 0.0
    %3067 = vmatprep.subr.mxu0 0.0
    %3068 = vmatpush1.msra.mxu0 0.0
    %3069 = vmatprep.subr.mxu0 0.0
    %3070 = vmatpush1.msra.mxu0 0.0
    %3071 = vmatprep.subr.mxu0 0.0
    %3072 = vmatpush1.msra.mxu0 0.0
    %3073 = vmatprep.mubr.f32.mxu0 0.0
    %3074 = vmatmul.mubr.f32.gmra.mrb[0].mxu0 %v2992
    %v3075 = vpop.f32.mrb[0].mxu0
    %v3076 = vadd.f32 0.0, %v3075
    %v3077 = vpop.f32.mrb[0].mxu0
    %3078 = vmatprep.mubr.f32.mxu0 0.0
    %3079 = vmatmul.mubr.f32.gmra.mrb[0].mxu0 %v2995
    %v3080 = vpop.f32.mrb[0].mxu0
    %v3081 = vadd.f32 0.0, %v3080
    %v3082 = vpop.f32.mrb[0].mxu0
    %3083 = vmatprep.mubr.f32.mxu0 0.0
    %3084 = vmatmul.mubr.f32.gmra.mrb[0].mxu0 %v2998
    %v3085 = vpop.f32.mrb[0].mxu0
    %v3086 = vadd.f32 0.0, %v3085
    %v3087 = vpop.f32.mrb[0].mxu0
    %3088 = vmatprep.mubr.f32.mxu0 0.0
    %3089 = vmatmul.mubr.f32.gmra.mrb[0].mxu0 %v3001
    %v3090 = vpop.f32.mrb[0].mxu0
    %v3091 = vadd.f32 0.0, %v3090
    %v3092 = vpop.f32.mrb[0].mxu0
    %3093 = vmatprep.mubr.f32.mxu0 0.0
    %3094 = vmatmul.mubr.f32.gmra.mrb[0].mxu0 %v3004
    %v3095 = vpop.f32.mrb[0].mxu0
    %v3096 = vadd.f32 0.0, %v3095
    %v3097 = vpop.f32.mrb[0].mxu0
    %3098 = vdwg.mxu0
    %v3099 = vadd.f32 %v2792, %v3076
    %v3100 = vadd.f32 %v2797, %v3081
    %v3101 = vadd.f32 %v2802, %v3086
    %v3102 = vadd.f32 %v2807, %v3091
    %v3103 = vadd.f32 %v2812, %v3096
    %s3104 = sld [smem:[#allocation7]]
    %v3105 = vstv %s3104
    %v3106 = vadd.f32 %v3099, %v3105
    %v3107 = vadd.f32 %v3100, %v3105
    %v3108 = vadd.f32 %v3101, %v3105
    %v3109 = vadd.f32 %v3102, %v3105
    %v3110 = vadd.f32 %v3103, %v3105
    %vm3111 = vcmask 277504
    %v3112 = vsel %vm3111, %v3106, 0.0
    %v3113 = vsel %vm3111, %v3107, 0.0
    %v3114 = vadd.f32 %v3112, %v3113
    %v3115 = vsel %vm3111, %v3108, 0.0
    %v3116 = vadd.f32 %v3114, %v3115
    %v3117 = vsel %vm3111, %v3109, 0.0
    %v3118 = vadd.f32 %v3116, %v3117
    %vm3119 = vcmask 270336
    %v3120 = vsel %vm3119, %v3110, 0.0
    %v3121 = vadd.f32 %v3118, %v3120
    %3122 = vadd.xlane.f32.xlu0 %v3121
    %v3123 = vpop.xlane.xlu0 %3122
    %v3124 = vrot.slane %v3123, 4
    %v3125 = vadd.f32 %v3123, %v3124
    %v3126 = vrot.slane %v3125, 2
    %v3127 = vadd.f32 %v3125, %v3126
    %v3128 = vrot.slane %v3127, 1
    %v3129 = vadd.f32 %v3127, %v3128
    %s3130 = vtos %v3129
    %v3131 = vmul.f32 %v3106, %v3106
    %v3132 = vmul.f32 %v3107, %v3107
    %v3133 = vmul.f32 %v3108, %v3108
    %v3134 = vmul.f32 %v3109, %v3109
    %v3135 = vmul.f32 %v3110, %v3110
    %v3136 = vsel %vm3111, %v3131, 0.0
    %v3137 = vsel %vm3111, %v3132, 0.0
    %v3138 = vadd.f32 %v3136, %v3137
    %v3139 = vsel %vm3111, %v3133, 0.0
    %v3140 = vadd.f32 %v3138, %v3139
    %v3141 = vsel %vm3111, %v3134, 0.0
    %v3142 = vadd.f32 %v3140, %v3141
    %v3143 = vsel %vm3119, %v3135, 0.0
    %v3144 = vadd.f32 %v3142, %v3143
    %3145 = vadd.xlane.f32.xlu0 %v3144
    %v3146 = vpop.xlane.xlu0 %3145
    %v3147 = vrot.slane %v3146, 4
    %v3148 = vadd.f32 %v3146, %v3147
    %v3149 = vrot.slane %v3148, 2
    %v3150 = vadd.f32 %v3148, %v3149
    %v3151 = vrot.slane %v3150, 1
    %v3152 = vadd.f32 %v3150, %v3151
    %s3153 = vtos %v3152
    %v3154 = vrcp.pop 1122.0
    %s3155 = vtos %v3154
    %s3156 = smul.f32 %s3130, %s3155
    %v3157 = vrcp.pop 1122.0
    %s3158 = vtos %v3157
    %s3159 = smul.f32 %s3153, %s3158
    %s3160 = smul.f32 %s3156, %s3156
    %s3161 = ssub.f32 %s3159, %s3160
    %s3162 = smax.f32 %s3161, 0.0
    %s3163 = sld [smem:[#allocation7 + $0x1]]
    %v3164 = vstv %s3156
    %v3165 = vsub.f32 %v3106, %v3164
    %v3166 = vsub.f32 %v3107, %v3164
    %v3167 = vsub.f32 %v3108, %v3164
    %v3168 = vsub.f32 %v3109, %v3164
    %v3169 = vsub.f32 %v3110, %v3164
    %v3170 = vstv %s3163
    %v3171 = vmul.f32 %v3170, %v3165
    %v3172 = vmul.f32 %v3170, %v3166
    %v3173 = vmul.f32 %v3170, %v3167
    %v3174 = vmul.f32 %v3170, %v3168
    %v3175 = vmul.f32 %v3170, %v3169
    %s3176 = sadd.f32 %s3162, 1e-05
    %v3177 = vstv %s3176
    %v3178 = vrsqrt.pop %v3177
    %s3179 = vtos %v3178
    %v3180 = vstv %s3179
    %v3181 = vmul.f32 %v3171, %v3180
    %v3182 = vmul.f32 %v3172, %v3180
    %v3183 = vmul.f32 %v3173, %v3180
    %v3184 = vmul.f32 %v3174, %v3180
    %v3185 = vmul.f32 %v3175, %v3180
    %s3186 = sld [smem:[#allocation7 + $0x2]]
    %v3187 = vstv %s3186
    %v3188 = vadd.f32 %v3181, %v3187
    %v3189 = vadd.f32 %v3182, %v3187
    %v3190 = vadd.f32 %v3183, %v3187
    %v3191 = vadd.f32 %v3184, %v3187
    %v3192 = vadd.f32 %v3185, %v3187
    %v3193 = vmax.f32 %v3188, 0.0
    %v3194 = vmax.f32 %v3189, 0.0
    %v3195 = vmax.f32 %v3190, 0.0
    %v3196 = vmax.f32 %v3191, 0.0
    %v3197 = vmax.f32 %v3192, 0.0
    %v3198 = vpack.c.bf16 %v1311, %v1311
    %v3199 = vld [vmem:[%s43] sm:$0xff]
    %v3200 = vld [vmem:[%s43 + $0x8] sm:$0xff]
    %v3201 = vld [vmem:[%s43 + $0x10] sm:$0xff]
    %v3202 = vld [vmem:[%s43 + $0x18] sm:$0xff]
    %v3203 = vld [vmem:[%s43 + $0x20] sm:$0xff]
    %v3204 = vld [vmem:[%s43 + $0x28] sm:$0xff]
    %v3205 = vld [vmem:[%s43 + $0x30] sm:$0xff]
    %v3206 = vld [vmem:[%s43 + $0x38] sm:$0xff]
    %v3207 = vld [vmem:[%s43 + $0x40] sm:$0xff]
    %v3208 = vld [vmem:[%s43 + $0x48] sm:$0xff]
    %v3209 = vld [vmem:[%s43 + $0x50] sm:$0xff]
    %v3210 = vld [vmem:[%s43 + $0x58] sm:$0xff]
    %v3211 = vld [vmem:[%s43 + $0x60] sm:$0xff]
    %v3212 = vld [vmem:[%s43 + $0x68] sm:$0xff]
    %v3213 = vld [vmem:[%s43 + $0x70] sm:$0xff]
    %v3214 = vld [vmem:[%s43 + $0x78] sm:$0xff]
    %v3215 = vpack.c.bf16 %v2134, %v2134
    %v3216 = vld [vmem:[#allocation30] sm:$0xff]
    %v3217 = vld [vmem:[#allocation30 + $0x8] sm:$0xff]
    %v3218 = vld [vmem:[#allocation30 + $0x10] sm:$0xff]
    %v3219 = vld [vmem:[#allocation30 + $0x18] sm:$0xff]
    %v3220 = vld [vmem:[#allocation30 + $0x20] sm:$0xff]
    %v3221 = vld [vmem:[#allocation30 + $0x28] sm:$0xff]
    %v3222 = vld [vmem:[#allocation30 + $0x30] sm:$0xff]
    %v3223 = vld [vmem:[#allocation30 + $0x38] sm:$0xff]
    %v3224 = vld [vmem:[#allocation30 + $0x40] sm:$0xff]
    %v3225 = vld [vmem:[#allocation30 + $0x48] sm:$0xff]
    %v3226 = vld [vmem:[#allocation30 + $0x50] sm:$0xff]
    %v3227 = vld [vmem:[#allocation30 + $0x58] sm:$0xff]
    %v3228 = vld [vmem:[#allocation30 + $0x60] sm:$0xff]
    %v3229 = vld [vmem:[#allocation30 + $0x68] sm:$0xff]
    %v3230 = vld [vmem:[#allocation30 + $0x70] sm:$0xff]
    %v3231 = vld [vmem:[#allocation30 + $0x78] sm:$0xff]
    %v3248 = vunpack.c.l.b16 %v3216
    %v3249 = vunpack.c.h.b16 %v3216
    %v3250 = vunpack.c.l.b16 %v3217
    %v3251 = vunpack.c.h.b16 %v3217
    %v3252 = vunpack.c.l.b16 %v3218
    %v3253 = vunpack.c.h.b16 %v3218
    %v3254 = vunpack.c.l.b16 %v3219
    %v3255 = vunpack.c.h.b16 %v3219
    %v3256 = vunpack.c.l.b16 %v3220
    %v3257 = vunpack.c.h.b16 %v3220
    %v3258 = vunpack.c.l.b16 %v3221
    %v3259 = vunpack.c.h.b16 %v3221
    %v3260 = vunpack.c.l.b16 %v3222
    %v3261 = vunpack.c.h.b16 %v3222
    %v3262 = vunpack.c.l.b16 %v3223
    %v3263 = vunpack.c.h.b16 %v3223
    %v3264 = vunpack.c.l.b16 %v3224
    %v3265 = vunpack.c.h.b16 %v3224
    %v3266 = vunpack.c.l.b16 %v3225
    %v3267 = vunpack.c.h.b16 %v3225
    %v3268 = vunpack.c.l.b16 %v3226
    %v3269 = vunpack.c.h.b16 %v3226
    %v3270 = vunpack.c.l.b16 %v3227
    %v3271 = vunpack.c.h.b16 %v3227
    %v3272 = vunpack.c.l.b16 %v3228
    %v3273 = vunpack.c.h.b16 %v3228
    %v3274 = vunpack.c.l.b16 %v3229
    %v3275 = vunpack.c.h.b16 %v3229
    %v3276 = vunpack.c.l.b16 %v3230
    %v3277 = vunpack.c.h.b16 %v3230
    %v3278 = vunpack.c.l.b16 %v3231
    %v3279 = vunpack.c.h.b16 %v3231
    %v3280 = vpack.c.b16 %v3250, %v3248
    %v3281 = vpack.c.b16 %v3251, %v3249
    %v3282 = vpack.c.b16 %v3254, %v3252
    %v3283 = vpack.c.b16 %v3255, %v3253
    %v3284 = vpack.c.b16 %v3258, %v3256
    %v3285 = vpack.c.b16 %v3259, %v3257
    %v3286 = vpack.c.b16 %v3262, %v3260
    %v3287 = vpack.c.b16 %v3263, %v3261
    %v3288 = vpack.c.b16 %v3266, %v3264
    %v3289 = vpack.c.b16 %v3267, %v3265
    %v3290 = vpack.c.b16 %v3270, %v3268
    %v3291 = vpack.c.b16 %v3271, %v3269
    %v3292 = vpack.c.b16 %v3274, %v3272
    %v3293 = vpack.c.b16 %v3275, %v3273
    %v3294 = vpack.c.b16 %v3278, %v3276
    %v3295 = vpack.c.b16 %v3279, %v3277
    %3312 = vmatprep.subr.bf16.mxu0 %v3281
    %3313 = vmatpush1.bf16.msra.mxu0 %v3280
    %3314 = vmatprep.subr.bf16.mxu0 %v3283
    %3315 = vmatpush1.bf16.msra.mxu0 %v3282
    %3316 = vmatprep.subr.bf16.mxu0 %v3285
    %3317 = vmatpush1.bf16.msra.mxu0 %v3284
    %3318 = vmatprep.subr.bf16.mxu0 %v3287
    %3319 = vmatpush1.bf16.msra.mxu0 %v3286
    %3320 = vmatprep.subr.bf16.mxu0 %v3289
    %3321 = vmatpush1.bf16.msra.mxu0 %v3288
    %3322 = vmatprep.subr.bf16.mxu0 %v3291
    %3323 = vmatpush1.bf16.msra.mxu0 %v3290
    %3324 = vmatprep.subr.bf16.mxu0 %v3293
    %3325 = vmatpush1.bf16.msra.mxu0 %v3292
    %3326 = vmatprep.subr.bf16.mxu0 %v3295
    %3327 = vmatpush1.bf16.msra.mxu0 %v3294
    %3328 = vmatprep.subr.bf16.mxu0 0
    %3329 = vmatpush1.bf16.msra.mxu0 0
    %3330 = vmatprep.subr.bf16.mxu0 0
    %3331 = vmatpush1.bf16.msra.mxu0 0
    %3332 = vmatprep.subr.bf16.mxu0 0
    %3333 = vmatpush1.bf16.msra.mxu0 0
    %3334 = vmatprep.subr.bf16.mxu0 0
    %3335 = vmatpush1.bf16.msra.mxu0 0
    %3336 = vmatprep.subr.bf16.mxu0 0
    %3337 = vmatpush1.bf16.msra.mxu0 0
    %3338 = vmatprep.subr.bf16.mxu0 0
    %3339 = vmatpush1.bf16.msra.mxu0 0
    %3340 = vmatprep.subr.bf16.mxu0 0
    %3341 = vmatpush1.bf16.msra.mxu0 0
    %3342 = vmatprep.subr.bf16.mxu0 0
    %3343 = vmatpush1.bf16.msra.mxu0 0
    %3344 = vmatprep.mubr.bf16.mxu0 0
    %3345 = vmatmul.mubr.bf16.gmra.mrb[0].mxu0 %v3215
    %v3346 = vpop.f32.mrb[0].mxu0
    %v3347 = vadd.f32 0.0, %v3346
    %v3348 = vpop.f32.mrb[0].mxu0
    %v3349 = vadd.f32 0.0, %v3348
    %v3350 = vpop.f32.mrb[0].mxu0
    %v3351 = vpop.f32.mrb[0].mxu0
    %3352 = vdwg.mxu0
    %v3369 = vunpack.c.l.b16 %v3199
    %v3370 = vunpack.c.h.b16 %v3199
    %v3371 = vunpack.c.l.b16 %v3200
    %v3372 = vunpack.c.h.b16 %v3200
    %v3373 = vunpack.c.l.b16 %v3201
    %v3374 = vunpack.c.h.b16 %v3201
    %v3375 = vunpack.c.l.b16 %v3202
    %v3376 = vunpack.c.h.b16 %v3202
    %v3377 = vunpack.c.l.b16 %v3203
    %v3378 = vunpack.c.h.b16 %v3203
    %v3379 = vunpack.c.l.b16 %v3204
    %v3380 = vunpack.c.h.b16 %v3204
    %v3381 = vunpack.c.l.b16 %v3205
    %v3382 = vunpack.c.h.b16 %v3205
    %v3383 = vunpack.c.l.b16 %v3206
    %v3384 = vunpack.c.h.b16 %v3206
    %v3385 = vunpack.c.l.b16 %v3207
    %v3386 = vunpack.c.h.b16 %v3207
    %v3387 = vunpack.c.l.b16 %v3208
    %v3388 = vunpack.c.h.b16 %v3208
    %v3389 = vunpack.c.l.b16 %v3209
    %v3390 = vunpack.c.h.b16 %v3209
    %v3391 = vunpack.c.l.b16 %v3210
    %v3392 = vunpack.c.h.b16 %v3210
    %v3393 = vunpack.c.l.b16 %v3211
    %v3394 = vunpack.c.h.b16 %v3211
    %v3395 = vunpack.c.l.b16 %v3212
    %v3396 = vunpack.c.h.b16 %v3212
    %v3397 = vunpack.c.l.b16 %v3213
    %v3398 = vunpack.c.h.b16 %v3213
    %v3399 = vunpack.c.l.b16 %v3214
    %v3400 = vunpack.c.h.b16 %v3214
    %v3401 = vpack.c.b16 %v3371, %v3369
    %v3402 = vpack.c.b16 %v3372, %v3370
    %v3403 = vpack.c.b16 %v3375, %v3373
    %v3404 = vpack.c.b16 %v3376, %v3374
    %v3405 = vpack.c.b16 %v3379, %v3377
    %v3406 = vpack.c.b16 %v3380, %v3378
    %v3407 = vpack.c.b16 %v3383, %v3381
    %v3408 = vpack.c.b16 %v3384, %v3382
    %v3409 = vpack.c.b16 %v3387, %v3385
    %v3410 = vpack.c.b16 %v3388, %v3386
    %v3411 = vpack.c.b16 %v3391, %v3389
    %v3412 = vpack.c.b16 %v3392, %v3390
    %v3413 = vpack.c.b16 %v3395, %v3393
    %v3414 = vpack.c.b16 %v3396, %v3394
    %v3415 = vpack.c.b16 %v3399, %v3397
    %v3416 = vpack.c.b16 %v3400, %v3398
    %3433 = vmatprep.subr.bf16.mxu0 %v3402
    %3434 = vmatpush1.bf16.msra.mxu0 %v3401
    %3435 = vmatprep.subr.bf16.mxu0 %v3404
    %3436 = vmatpush1.bf16.msra.mxu0 %v3403
    %3437 = vmatprep.subr.bf16.mxu0 %v3406
    %3438 = vmatpush1.bf16.msra.mxu0 %v3405
    %3439 = vmatprep.subr.bf16.mxu0 %v3408
    %3440 = vmatpush1.bf16.msra.mxu0 %v3407
    %3441 = vmatprep.subr.bf16.mxu0 %v3410
    %3442 = vmatpush1.bf16.msra.mxu0 %v3409
    %3443 = vmatprep.subr.bf16.mxu0 %v3412
    %3444 = vmatpush1.bf16.msra.mxu0 %v3411
    %3445 = vmatprep.subr.bf16.mxu0 %v3414
    %3446 = vmatpush1.bf16.msra.mxu0 %v3413
    %3447 = vmatprep.subr.bf16.mxu0 %v3416
    %3448 = vmatpush1.bf16.msra.mxu0 %v3415
    %3449 = vmatprep.subr.bf16.mxu0 0
    %3450 = vmatpush1.bf16.msra.mxu0 0
    %3451 = vmatprep.subr.bf16.mxu0 0
    %3452 = vmatpush1.bf16.msra.mxu0 0
    %3453 = vmatprep.subr.bf16.mxu0 0
    %3454 = vmatpush1.bf16.msra.mxu0 0
    %3455 = vmatprep.subr.bf16.mxu0 0
    %3456 = vmatpush1.bf16.msra.mxu0 0
    %3457 = vmatprep.subr.bf16.mxu0 0
    %3458 = vmatpush1.bf16.msra.mxu0 0
    %3459 = vmatprep.subr.bf16.mxu0 0
    %3460 = vmatpush1.bf16.msra.mxu0 0
    %3461 = vmatprep.subr.bf16.mxu0 0
    %3462 = vmatpush1.bf16.msra.mxu0 0
    %3463 = vmatprep.subr.bf16.mxu0 0
    %3464 = vmatpush1.bf16.msra.mxu0 0
    %3465 = vmatprep.mubr.bf16.mxu0 0
    %3466 = vmatmul.mubr.bf16.gmra.mrb[0].mxu0 %v3198
    %v3467 = vpop.f32.mrb[0].mxu0
    %v3468 = vadd.f32 %v3347, %v3467
    %v3469 = vpop.f32.mrb[0].mxu0
    %v3470 = vadd.f32 %v3349, %v3469
    %v3471 = vpop.f32.mrb[0].mxu0
    %v3472 = vpop.f32.mrb[0].mxu0
    %3473 = vdwg.mxu0
    %v3474 = vld [vmem:[#allocation33] sm:$0x3]
    %v3476 = vlaneseq
    %v3477 = vshrl.u32 %v3476, 7
    %v3478 = vsub.s32 0, %v3477
    %v3479 = vrot.slane %v3474, %v3478
    %v3480 = vlaneseq
    %v3481 = vshrl.u32 %v3480, 7
    %v3482 = vsub.s32 1, %v3481
    %v3483 = vrot.slane %v3474, %v3482
    %v3486 = vadd.f32 %v3468, %v3479
    %v3487 = vadd.f32 %v3470, %v3483
    %v3488 = vpack.c.bf16 %v3193, %v3193
    %v3489 = vld [vmem:[#allocation32] sm:$0xff]
    %v3490 = vld [vmem:[#allocation32 + $0x8] sm:$0xff]
    %v3491 = vld [vmem:[#allocation32 + $0x10] sm:$0xff]
    %v3492 = vld [vmem:[#allocation32 + $0x18] sm:$0xff]
    %v3493 = vld [vmem:[#allocation32 + $0x20] sm:$0x11]
    %v3499 = vunpack.c.l.b16 %v3489
    %v3500 = vunpack.c.h.b16 %v3489
    %v3501 = vunpack.c.l.b16 %v3490
    %v3502 = vunpack.c.h.b16 %v3490
    %v3503 = vunpack.c.l.b16 %v3491
    %v3504 = vunpack.c.h.b16 %v3491
    %v3505 = vunpack.c.l.b16 %v3492
    %v3506 = vunpack.c.h.b16 %v3492
    %v3507 = vunpack.c.l.b16 %v3493
    %v3508 = vunpack.c.h.b16 %v3493
    %v3509 = vpack.c.b16 %v3501, %v3499
    %v3510 = vpack.c.b16 %v3502, %v3500
    %v3511 = vpack.c.b16 %v3505, %v3503
    %v3512 = vpack.c.b16 %v3506, %v3504
    %v3513 = vpack.c.b16 %v3507, %v3507
    %v3514 = vpack.c.b16 %v3508, %v3508
    %v3520 = vsel %vm3111, %v3488, 0
    %vm3522 = vcmask 1040384
    %v3524 = vsel %vm3522, %v3513, 0
    %v3527 = vsel %vm3522, %v3514, 0
    %3529 = vmatprep.subr.bf16.mxu0 %v3510
    %3530 = vmatpush1.bf16.msra.mxu0 %v3509
    %3531 = vmatprep.subr.bf16.mxu0 %v3512
    %3532 = vmatpush1.bf16.msra.mxu0 %v3511
    %3533 = vmatprep.subr.bf16.mxu0 %v3527
    %3534 = vmatpush1.bf16.msra.mxu0 %v3524
    %3535 = vmatprep.subr.bf16.mxu0 0
    %3536 = vmatpush1.bf16.msra.mxu0 0
    %3537 = vmatprep.subr.bf16.mxu0 0
    %3538 = vmatpush1.bf16.msra.mxu0 0
    %3539 = vmatprep.subr.bf16.mxu0 0
    %3540 = vmatpush1.bf16.msra.mxu0 0
    %3541 = vmatprep.subr.bf16.mxu0 0
    %3542 = vmatpush1.bf16.msra.mxu0 0
    %3543 = vmatprep.subr.bf16.mxu0 0
    %3544 = vmatpush1.bf16.msra.mxu0 0
    %3545 = vmatprep.subr.bf16.mxu0 0
    %3546 = vmatpush1.bf16.msra.mxu0 0
    %3547 = vmatprep.subr.bf16.mxu0 0
    %3548 = vmatpush1.bf16.msra.mxu0 0
    %3549 = vmatprep.subr.bf16.mxu0 0
    %3550 = vmatpush1.bf16.msra.mxu0 0
    %3551 = vmatprep.subr.bf16.mxu0 0
    %3552 = vmatpush1.bf16.msra.mxu0 0
    %3553 = vmatprep.subr.bf16.mxu0 0
    %3554 = vmatpush1.bf16.msra.mxu0 0
    %3555 = vmatprep.subr.bf16.mxu0 0
    %3556 = vmatpush1.bf16.msra.mxu0 0
    %3557 = vmatprep.subr.bf16.mxu0 0
    %3558 = vmatpush1.bf16.msra.mxu0 0
    %3559 = vmatprep.subr.bf16.mxu0 0
    %3560 = vmatpush1.bf16.msra.mxu0 0
    %3561 = vmatprep.mubr.bf16.mxu0 0
    %3562 = vmatmul.mubr.bf16.gmra.mrb[0].mxu0 %v3520
    %v3563 = vpop.f32.mrb[0].mxu0
    %v3564 = vadd.f32 0.0, %v3563
    %v3565 = vpop.f32.mrb[0].mxu0
    %v3566 = vadd.f32 0.0, %v3565
    %v3567 = vpop.f32.mrb[0].mxu0
    %v3568 = vpop.f32.mrb[0].mxu0
    %3569 = vdwg.mxu0
    %v3570 = vadd.f32 %v3486, %v3564
    %v3571 = vadd.f32 %v3487, %v3566
    %s3572 = scalar_lea.vmem [#allocation32], 40
    %v3573 = vld [vmem:[%s3572] sm:$0xff]
    %v3574 = vld [vmem:[%s3572 + $0x8] sm:$0xff]
    %v3575 = vld [vmem:[%s3572 + $0x10] sm:$0xff]
    %v3576 = vld [vmem:[%s3572 + $0x18] sm:$0xff]
    %v3577 = vld [vmem:[%s3572 + $0x20] sm:$0x11]
    %v3578 = vshrl.u32 %v3488, 16
    %v3585 = vunpack.c.l.b16 %v3573
    %v3586 = vunpack.c.h.b16 %v3573
    %v3587 = vunpack.c.l.b16 %v3574
    %v3588 = vunpack.c.h.b16 %v3574
    %v3589 = vunpack.c.l.b16 %v3575
    %v3590 = vunpack.c.h.b16 %v3575
    %v3591 = vunpack.c.l.b16 %v3576
    %v3592 = vunpack.c.h.b16 %v3576
    %v3593 = vunpack.c.l.b16 %v3577
    %v3594 = vunpack.c.h.b16 %v3577
    %v3595 = vpack.c.b16 %v3587, %v3585
    %v3596 = vpack.c.b16 %v3588, %v3586
    %v3597 = vpack.c.b16 %v3591, %v3589
    %v3598 = vpack.c.b16 %v3592, %v3590
    %v3599 = vpack.c.b16 %v3593, %v3593
    %v3600 = vpack.c.b16 %v3594, %v3594
    %v3606 = vsel %vm3111, %v3578, 0
    %v3609 = vsel %vm3522, %v3599, 0
    %v3612 = vsel %vm3522, %v3600, 0
    %3614 = vmatprep.subr.bf16.mxu0 %v3596
    %3615 = vmatpush1.bf16.msra.mxu0 %v3595
    %3616 = vmatprep.subr.bf16.mxu0 %v3598
    %3617 = vmatpush1.bf16.msra.mxu0 %v3597
    %3618 = vmatprep.subr.bf16.mxu0 %v3612
    %3619 = vmatpush1.bf16.msra.mxu0 %v3609
    %3620 = vmatprep.subr.bf16.mxu0 0
    %3621 = vmatpush1.bf16.msra.mxu0 0
    %3622 = vmatprep.subr.bf16.mxu0 0
    %3623 = vmatpush1.bf16.msra.mxu0 0
    %3624 = vmatprep.subr.bf16.mxu0 0
    %3625 = vmatpush1.bf16.msra.mxu0 0
    %3626 = vmatprep.subr.bf16.mxu0 0
    %3627 = vmatpush1.bf16.msra.mxu0 0
    %3628 = vmatprep.subr.bf16.mxu0 0
    %3629 = vmatpush1.bf16.msra.mxu0 0
    %3630 = vmatprep.subr.bf16.mxu0 0
    %3631 = vmatpush1.bf16.msra.mxu0 0
    %3632 = vmatprep.subr.bf16.mxu0 0
    %3633 = vmatpush1.bf16.msra.mxu0 0
    %3634 = vmatprep.subr.bf16.mxu0 0
    %3635 = vmatpush1.bf16.msra.mxu0 0
    %3636 = vmatprep.subr.bf16.mxu0 0
    %3637 = vmatpush1.bf16.msra.mxu0 0
    %3638 = vmatprep.subr.bf16.mxu0 0
    %3639 = vmatpush1.bf16.msra.mxu0 0
    %3640 = vmatprep.subr.bf16.mxu0 0
    %3641 = vmatpush1.bf16.msra.mxu0 0
    %3642 = vmatprep.subr.bf16.mxu0 0
    %3643 = vmatpush1.bf16.msra.mxu0 0
    %3644 = vmatprep.subr.bf16.mxu0 0
    %3645 = vmatpush1.bf16.msra.mxu0 0
    %3646 = vmatprep.mubr.bf16.mxu0 0
    %3647 = vmatmul.mubr.bf16.gmra.mrb[0].mxu0 %v3606
    %v3648 = vpop.f32.mrb[0].mxu0
    %v3649 = vadd.f32 0.0, %v3648
    %v3650 = vpop.f32.mrb[0].mxu0
    %v3651 = vadd.f32 0.0, %v3650
    %v3652 = vpop.f32.mrb[0].mxu0
    %v3653 = vpop.f32.mrb[0].mxu0
    %3654 = vdwg.mxu0
    %v3655 = vadd.f32 %v3570, %v3649
    %v3656 = vadd.f32 %v3571, %v3651
    %s3657 = scalar_lea.vmem [#allocation32], 80
    %v3658 = vld [vmem:[%s3657] sm:$0xff]
    %v3659 = vld [vmem:[%s3657 + $0x8] sm:$0xff]
    %v3660 = vld [vmem:[%s3657 + $0x10] sm:$0xff]
    %v3661 = vld [vmem:[%s3657 + $0x18] sm:$0xff]
    %v3662 = vld [vmem:[%s3657 + $0x20] sm:$0x11]
    %v3664 = vrot.slane %v3488, 1
    %v3670 = vunpack.c.l.b16 %v3658
    %v3671 = vunpack.c.h.b16 %v3658
    %v3672 = vunpack.c.l.b16 %v3659
    %v3673 = vunpack.c.h.b16 %v3659
    %v3674 = vunpack.c.l.b16 %v3660
    %v3675 = vunpack.c.h.b16 %v3660
    %v3676 = vunpack.c.l.b16 %v3661
    %v3677 = vunpack.c.h.b16 %v3661
    %v3678 = vunpack.c.l.b16 %v3662
    %v3679 = vunpack.c.h.b16 %v3662
    %v3680 = vpack.c.b16 %v3672, %v3670
    %v3681 = vpack.c.b16 %v3673, %v3671
    %v3682 = vpack.c.b16 %v3676, %v3674
    %v3683 = vpack.c.b16 %v3677, %v3675
    %v3684 = vpack.c.b16 %v3678, %v3678
    %v3685 = vpack.c.b16 %v3679, %v3679
    %v3691 = vsel %vm3111, %v3664, 0
    %v3694 = vsel %vm3522, %v3684, 0
    %v3697 = vsel %vm3522, %v3685, 0
    %3699 = vmatprep.subr.bf16.mxu0 %v3681
    %3700 = vmatpush1.bf16.msra.mxu0 %v3680
    %3701 = vmatprep.subr.bf16.mxu0 %v3683
    %3702 = vmatpush1.bf16.msra.mxu0 %v3682
    %3703 = vmatprep.subr.bf16.mxu0 %v3697
    %3704 = vmatpush1.bf16.msra.mxu0 %v3694
    %3705 = vmatprep.subr.bf16.mxu0 0
    %3706 = vmatpush1.bf16.msra.mxu0 0
    %3707 = vmatprep.subr.bf16.mxu0 0
    %3708 = vmatpush1.bf16.msra.mxu0 0
    %3709 = vmatprep.subr.bf16.mxu0 0
    %3710 = vmatpush1.bf16.msra.mxu0 0
    %3711 = vmatprep.subr.bf16.mxu0 0
    %3712 = vmatpush1.bf16.msra.mxu0 0
    %3713 = vmatprep.subr.bf16.mxu0 0
    %3714 = vmatpush1.bf16.msra.mxu0 0
    %3715 = vmatprep.subr.bf16.mxu0 0
    %3716 = vmatpush1.bf16.msra.mxu0 0
    %3717 = vmatprep.subr.bf16.mxu0 0
    %3718 = vmatpush1.bf16.msra.mxu0 0
    %3719 = vmatprep.subr.bf16.mxu0 0
    %3720 = vmatpush1.bf16.msra.mxu0 0
    %3721 = vmatprep.subr.bf16.mxu0 0
    %3722 = vmatpush1.bf16.msra.mxu0 0
    %3723 = vmatprep.subr.bf16.mxu0 0
    %3724 = vmatpush1.bf16.msra.mxu0 0
    %3725 = vmatprep.subr.bf16.mxu0 0
    %3726 = vmatpush1.bf16.msra.mxu0 0
    %3727 = vmatprep.subr.bf16.mxu0 0
    %3728 = vmatpush1.bf16.msra.mxu0 0
    %3729 = vmatprep.subr.bf16.mxu0 0
    %3730 = vmatpush1.bf16.msra.mxu0 0
    %3731 = vmatprep.mubr.bf16.mxu0 0
    %3732 = vmatmul.mubr.bf16.gmra.mrb[0].mxu0 %v3691
    %v3733 = vpop.f32.mrb[0].mxu0
    %v3734 = vadd.f32 0.0, %v3733
    %v3735 = vpop.f32.mrb[0].mxu0
    %v3736 = vadd.f32 0.0, %v3735
    %v3737 = vpop.f32.mrb[0].mxu0
    %v3738 = vpop.f32.mrb[0].mxu0
    %3739 = vdwg.mxu0
    %v3740 = vadd.f32 %v3655, %v3734
    %v3741 = vadd.f32 %v3656, %v3736
    %s3742 = scalar_lea.vmem [#allocation32], 120
    %v3743 = vld [vmem:[%s3742] sm:$0xff]
    %v3744 = vld [vmem:[%s3742 + $0x8] sm:$0xff]
    %v3745 = vld [vmem:[%s3742 + $0x10] sm:$0xff]
    %v3746 = vld [vmem:[%s3742 + $0x18] sm:$0xff]
    %v3747 = vld [vmem:[%s3742 + $0x20] sm:$0x11]
    %v3748 = vrot.slane %v3578, 1
    %v3754 = vunpack.c.l.b16 %v3743
    %v3755 = vunpack.c.h.b16 %v3743
    %v3756 = vunpack.c.l.b16 %v3744
    %v3757 = vunpack.c.h.b16 %v3744
    %v3758 = vunpack.c.l.b16 %v3745
    %v3759 = vunpack.c.h.b16 %v3745
    %v3760 = vunpack.c.l.b16 %v3746
    %v3761 = vunpack.c.h.b16 %v3746
    %v3762 = vunpack.c.l.b16 %v3747
    %v3763 = vunpack.c.h.b16 %v3747
    %v3764 = vpack.c.b16 %v3756, %v3754
    %v3765 = vpack.c.b16 %v3757, %v3755
    %v3766 = vpack.c.b16 %v3760, %v3758
    %v3767 = vpack.c.b16 %v3761, %v3759
    %v3768 = vpack.c.b16 %v3762, %v3762
    %v3769 = vpack.c.b16 %v3763, %v3763
    %v3775 = vsel %vm3111, %v3748, 0
    %v3778 = vsel %vm3522, %v3768, 0
    %v3781 = vsel %vm3522, %v3769, 0
    %3783 = vmatprep.subr.bf16.mxu0 %v3765
    %3784 = vmatpush1.bf16.msra.mxu0 %v3764
    %3785 = vmatprep.subr.bf16.mxu0 %v3767
    %3786 = vmatpush1.bf16.msra.mxu0 %v3766
    %3787 = vmatprep.subr.bf16.mxu0 %v3781
    %3788 = vmatpush1.bf16.msra.mxu0 %v3778
    %3789 = vmatprep.subr.bf16.mxu0 0
    %3790 = vmatpush1.bf16.msra.mxu0 0
    %3791 = vmatprep.subr.bf16.mxu0 0
    %3792 = vmatpush1.bf16.msra.mxu0 0
    %3793 = vmatprep.subr.bf16.mxu0 0
    %3794 = vmatpush1.bf16.msra.mxu0 0
    %3795 = vmatprep.subr.bf16.mxu0 0
    %3796 = vmatpush1.bf16.msra.mxu0 0
    %3797 = vmatprep.subr.bf16.mxu0 0
    %3798 = vmatpush1.bf16.msra.mxu0 0
    %3799 = vmatprep.subr.bf16.mxu0 0
    %3800 = vmatpush1.bf16.msra.mxu0 0
    %3801 = vmatprep.subr.bf16.mxu0 0
    %3802 = vmatpush1.bf16.msra.mxu0 0
    %3803 = vmatprep.subr.bf16.mxu0 0
    %3804 = vmatpush1.bf16.msra.mxu0 0
    %3805 = vmatprep.subr.bf16.mxu0 0
    %3806 = vmatpush1.bf16.msra.mxu0 0
    %3807 = vmatprep.subr.bf16.mxu0 0
    %3808 = vmatpush1.bf16.msra.mxu0 0
    %3809 = vmatprep.subr.bf16.mxu0 0
    %3810 = vmatpush1.bf16.msra.mxu0 0
    %3811 = vmatprep.subr.bf16.mxu0 0
    %3812 = vmatpush1.bf16.msra.mxu0 0
    %3813 = vmatprep.subr.bf16.mxu0 0
    %3814 = vmatpush1.bf16.msra.mxu0 0
    %3815 = vmatprep.mubr.bf16.mxu0 0
    %3816 = vmatmul.mubr.bf16.gmra.mrb[0].mxu0 %v3775
    %v3817 = vpop.f32.mrb[0].mxu0
    %v3818 = vadd.f32 0.0, %v3817
    %v3819 = vpop.f32.mrb[0].mxu0
    %v3820 = vadd.f32 0.0, %v3819
    %v3821 = vpop.f32.mrb[0].mxu0
    %v3822 = vpop.f32.mrb[0].mxu0
    %3823 = vdwg.mxu0
    %v3824 = vadd.f32 %v3740, %v3818
    %v3825 = vadd.f32 %v3741, %v3820
    %s3826 = scalar_lea.vmem [#allocation32], 160
    %v3827 = vld [vmem:[%s3826] sm:$0xff]
    %v3828 = vld [vmem:[%s3826 + $0x8] sm:$0xff]
    %v3829 = vld [vmem:[%s3826 + $0x10] sm:$0xff]
    %v3830 = vld [vmem:[%s3826 + $0x18] sm:$0xff]
    %v3831 = vld [vmem:[%s3826 + $0x20] sm:$0x11]
    %v3832 = vrot.slane %v3488, 2
    %v3838 = vunpack.c.l.b16 %v3827
    %v3839 = vunpack.c.h.b16 %v3827
    %v3840 = vunpack.c.l.b16 %v3828
    %v3841 = vunpack.c.h.b16 %v3828
    %v3842 = vunpack.c.l.b16 %v3829
    %v3843 = vunpack.c.h.b16 %v3829
    %v3844 = vunpack.c.l.b16 %v3830
    %v3845 = vunpack.c.h.b16 %v3830
    %v3846 = vunpack.c.l.b16 %v3831
    %v3847 = vunpack.c.h.b16 %v3831
    %v3848 = vpack.c.b16 %v3840, %v3838
    %v3849 = vpack.c.b16 %v3841, %v3839
    %v3850 = vpack.c.b16 %v3844, %v3842
    %v3851 = vpack.c.b16 %v3845, %v3843
    %v3852 = vpack.c.b16 %v3846, %v3846
    %v3853 = vpack.c.b16 %v3847, %v3847
    %v3859 = vsel %vm3111, %v3832, 0
    %v3862 = vsel %vm3522, %v3852, 0
    %v3865 = vsel %vm3522, %v3853, 0
    %3867 = vmatprep.subr.bf16.mxu0 %v3849
    %3868 = vmatpush1.bf16.msra.mxu0 %v3848
    %3869 = vmatprep.subr.bf16.mxu0 %v3851
    %3870 = vmatpush1.bf16.msra.mxu0 %v3850
    %3871 = vmatprep.subr.bf16.mxu0 %v3865
    %3872 = vmatpush1.bf16.msra.mxu0 %v3862
    %3873 = vmatprep.subr.bf16.mxu0 0
    %3874 = vmatpush1.bf16.msra.mxu0 0
    %3875 = vmatprep.subr.bf16.mxu0 0
    %3876 = vmatpush1.bf16.msra.mxu0 0
    %3877 = vmatprep.subr.bf16.mxu0 0
    %3878 = vmatpush1.bf16.msra.mxu0 0
    %3879 = vmatprep.subr.bf16.mxu0 0
    %3880 = vmatpush1.bf16.msra.mxu0 0
    %3881 = vmatprep.subr.bf16.mxu0 0
    %3882 = vmatpush1.bf16.msra.mxu0 0
    %3883 = vmatprep.subr.bf16.mxu0 0
    %3884 = vmatpush1.bf16.msra.mxu0 0
    %3885 = vmatprep.subr.bf16.mxu0 0
    %3886 = vmatpush1.bf16.msra.mxu0 0
    %3887 = vmatprep.subr.bf16.mxu0 0
    %3888 = vmatpush1.bf16.msra.mxu0 0
    %3889 = vmatprep.subr.bf16.mxu0 0
    %3890 = vmatpush1.bf16.msra.mxu0 0
    %3891 = vmatprep.subr.bf16.mxu0 0
    %3892 = vmatpush1.bf16.msra.mxu0 0
    %3893 = vmatprep.subr.bf16.mxu0 0
    %3894 = vmatpush1.bf16.msra.mxu0 0
    %3895 = vmatprep.subr.bf16.mxu0 0
    %3896 = vmatpush1.bf16.msra.mxu0 0
    %3897 = vmatprep.subr.bf16.mxu0 0
    %3898 = vmatpush1.bf16.msra.mxu0 0
    %3899 = vmatprep.mubr.bf16.mxu0 0
    %3900 = vmatmul.mubr.bf16.gmra.mrb[0].mxu0 %v3859
    %v3901 = vpop.f32.mrb[0].mxu0
    %v3902 = vadd.f32 0.0, %v3901
    %v3903 = vpop.f32.mrb[0].mxu0
    %v3904 = vadd.f32 0.0, %v3903
    %v3905 = vpop.f32.mrb[0].mxu0
    %v3906 = vpop.f32.mrb[0].mxu0
    %3907 = vdwg.mxu0
    %v3908 = vadd.f32 %v3824, %v3902
    %v3909 = vadd.f32 %v3825, %v3904
    %s3910 = scalar_lea.vmem [#allocation32], 200
    %v3911 = vld [vmem:[%s3910] sm:$0xff]
    %v3912 = vld [vmem:[%s3910 + $0x8] sm:$0xff]
    %v3913 = vld [vmem:[%s3910 + $0x10] sm:$0xff]
    %v3914 = vld [vmem:[%s3910 + $0x18] sm:$0xff]
    %v3915 = vld [vmem:[%s3910 + $0x20] sm:$0x11]
    %v3916 = vrot.slane %v3578, 2
    %v3922 = vunpack.c.l.b16 %v3911
    %v3923 = vunpack.c.h.b16 %v3911
    %v3924 = vunpack.c.l.b16 %v3912
    %v3925 = vunpack.c.h.b16 %v3912
    %v3926 = vunpack.c.l.b16 %v3913
    %v3927 = vunpack.c.h.b16 %v3913
    %v3928 = vunpack.c.l.b16 %v3914
    %v3929 = vunpack.c.h.b16 %v3914
    %v3930 = vunpack.c.l.b16 %v3915
    %v3931 = vunpack.c.h.b16 %v3915
    %v3932 = vpack.c.b16 %v3924, %v3922
    %v3933 = vpack.c.b16 %v3925, %v3923
    %v3934 = vpack.c.b16 %v3928, %v3926
    %v3935 = vpack.c.b16 %v3929, %v3927
    %v3936 = vpack.c.b16 %v3930, %v3930
    %v3937 = vpack.c.b16 %v3931, %v3931
    %v3943 = vsel %vm3111, %v3916, 0
    %v3946 = vsel %vm3522, %v3936, 0
    %v3949 = vsel %vm3522, %v3937, 0
    %3951 = vmatprep.subr.bf16.mxu0 %v3933
    %3952 = vmatpush1.bf16.msra.mxu0 %v3932
    %3953 = vmatprep.subr.bf16.mxu0 %v3935
    %3954 = vmatpush1.bf16.msra.mxu0 %v3934
    %3955 = vmatprep.subr.bf16.mxu0 %v3949
    %3956 = vmatpush1.bf16.msra.mxu0 %v3946
    %3957 = vmatprep.subr.bf16.mxu0 0
    %3958 = vmatpush1.bf16.msra.mxu0 0
    %3959 = vmatprep.subr.bf16.mxu0 0
    %3960 = vmatpush1.bf16.msra.mxu0 0
    %3961 = vmatprep.subr.bf16.mxu0 0
    %3962 = vmatpush1.bf16.msra.mxu0 0
    %3963 = vmatprep.subr.bf16.mxu0 0
    %3964 = vmatpush1.bf16.msra.mxu0 0
    %3965 = vmatprep.subr.bf16.mxu0 0
    %3966 = vmatpush1.bf16.msra.mxu0 0
    %3967 = vmatprep.subr.bf16.mxu0 0
    %3968 = vmatpush1.bf16.msra.mxu0 0
    %3969 = vmatprep.subr.bf16.mxu0 0
    %3970 = vmatpush1.bf16.msra.mxu0 0
    %3971 = vmatprep.subr.bf16.mxu0 0
    %3972 = vmatpush1.bf16.msra.mxu0 0
    %3973 = vmatprep.subr.bf16.mxu0 0
    %3974 = vmatpush1.bf16.msra.mxu0 0
    %3975 = vmatprep.subr.bf16.mxu0 0
    %3976 = vmatpush1.bf16.msra.mxu0 0
    %3977 = vmatprep.subr.bf16.mxu0 0
    %3978 = vmatpush1.bf16.msra.mxu0 0
    %3979 = vmatprep.subr.bf16.mxu0 0
    %3980 = vmatpush1.bf16.msra.mxu0 0
    %3981 = vmatprep.subr.bf16.mxu0 0
    %3982 = vmatpush1.bf16.msra.mxu0 0
    %3983 = vmatprep.mubr.bf16.mxu0 0
    %3984 = vmatmul.mubr.bf16.gmra.mrb[0].mxu0 %v3943
    %v3985 = vpop.f32.mrb[0].mxu0
    %v3986 = vadd.f32 0.0, %v3985
    %v3987 = vpop.f32.mrb[0].mxu0
    %v3988 = vadd.f32 0.0, %v3987
    %v3989 = vpop.f32.mrb[0].mxu0
    %v3990 = vpop.f32.mrb[0].mxu0
    %3991 = vdwg.mxu0
    %v3992 = vadd.f32 %v3908, %v3986
    %v3993 = vadd.f32 %v3909, %v3988
    %s3994 = scalar_lea.vmem [#allocation32], 240
    %v3995 = vld [vmem:[%s3994] sm:$0xff]
    %v3996 = vld [vmem:[%s3994 + $0x8] sm:$0xff]
    %v3997 = vld [vmem:[%s3994 + $0x10] sm:$0xff]
    %v3998 = vld [vmem:[%s3994 + $0x18] sm:$0xff]
    %v3999 = vld [vmem:[%s3994 + $0x20] sm:$0x11]
    %v4000 = vrot.slane %v3488, 3
    %v4006 = vunpack.c.l.b16 %v3995
    %v4007 = vunpack.c.h.b16 %v3995
    %v4008 = vunpack.c.l.b16 %v3996
    %v4009 = vunpack.c.h.b16 %v3996
    %v4010 = vunpack.c.l.b16 %v3997
    %v4011 = vunpack.c.h.b16 %v3997
    %v4012 = vunpack.c.l.b16 %v3998
    %v4013 = vunpack.c.h.b16 %v3998
    %v4014 = vunpack.c.l.b16 %v3999
    %v4015 = vunpack.c.h.b16 %v3999
    %v4016 = vpack.c.b16 %v4008, %v4006
    %v4017 = vpack.c.b16 %v4009, %v4007
    %v4018 = vpack.c.b16 %v4012, %v4010
    %v4019 = vpack.c.b16 %v4013, %v4011
    %v4020 = vpack.c.b16 %v4014, %v4014
    %v4021 = vpack.c.b16 %v4015, %v4015
    %v4027 = vsel %vm3111, %v4000, 0
    %v4030 = vsel %vm3522, %v4020, 0
    %v4033 = vsel %vm3522, %v4021, 0
    %4035 = vmatprep.subr.bf16.mxu0 %v4017
    %4036 = vmatpush1.bf16.msra.mxu0 %v4016
    %4037 = vmatprep.subr.bf16.mxu0 %v4019
    %4038 = vmatpush1.bf16.msra.mxu0 %v4018
    %4039 = vmatprep.subr.bf16.mxu0 %v4033
    %4040 = vmatpush1.bf16.msra.mxu0 %v4030
    %4041 = vmatprep.subr.bf16.mxu0 0
    %4042 = vmatpush1.bf16.msra.mxu0 0
    %4043 = vmatprep.subr.bf16.mxu0 0
    %4044 = vmatpush1.bf16.msra.mxu0 0
    %4045 = vmatprep.subr.bf16.mxu0 0
    %4046 = vmatpush1.bf16.msra.mxu0 0
    %4047 = vmatprep.subr.bf16.mxu0 0
    %4048 = vmatpush1.bf16.msra.mxu0 0
    %4049 = vmatprep.subr.bf16.mxu0 0
    %4050 = vmatpush1.bf16.msra.mxu0 0
    %4051 = vmatprep.subr.bf16.mxu0 0
    %4052 = vmatpush1.bf16.msra.mxu0 0
    %4053 = vmatprep.subr.bf16.mxu0 0
    %4054 = vmatpush1.bf16.msra.mxu0 0
    %4055 = vmatprep.subr.bf16.mxu0 0
    %4056 = vmatpush1.bf16.msra.mxu0 0
    %4057 = vmatprep.subr.bf16.mxu0 0
    %4058 = vmatpush1.bf16.msra.mxu0 0
    %4059 = vmatprep.subr.bf16.mxu0 0
    %4060 = vmatpush1.bf16.msra.mxu0 0
    %4061 = vmatprep.subr.bf16.mxu0 0
    %4062 = vmatpush1.bf16.msra.mxu0 0
    %4063 = vmatprep.subr.bf16.mxu0 0
    %4064 = vmatpush1.bf16.msra.mxu0 0
    %4065 = vmatprep.subr.bf16.mxu0 0
    %4066 = vmatpush1.bf16.msra.mxu0 0
    %4067 = vmatprep.mubr.bf16.mxu0 0
    %4068 = vmatmul.mubr.bf16.gmra.mrb[0].mxu0 %v4027
    %v4069 = vpop.f32.mrb[0].mxu0
    %v4070 = vadd.f32 0.0, %v4069
    %v4071 = vpop.f32.mrb[0].mxu0
    %v4072 = vadd.f32 0.0, %v4071
    %v4073 = vpop.f32.mrb[0].mxu0
    %v4074 = vpop.f32.mrb[0].mxu0
    %4075 = vdwg.mxu0
    %v4076 = vadd.f32 %v3992, %v4070
    %v4077 = vadd.f32 %v3993, %v4072
    %s4078 = scalar_lea.vmem [#allocation32], 280
    %v4079 = vld [vmem:[%s4078] sm:$0xff]
    %v4080 = vld [vmem:[%s4078 + $0x8] sm:$0xff]
    %v4081 = vld [vmem:[%s4078 + $0x10] sm:$0xff]
    %v4082 = vld [vmem:[%s4078 + $0x18] sm:$0xff]
    %v4083 = vld [vmem:[%s4078 + $0x20] sm:$0x11]
    %v4084 = vrot.slane %v3578, 3
    %v4090 = vunpack.c.l.b16 %v4079
    %v4091 = vunpack.c.h.b16 %v4079
    %v4092 = vunpack.c.l.b16 %v4080
    %v4093 = vunpack.c.h.b16 %v4080
    %v4094 = vunpack.c.l.b16 %v4081
    %v4095 = vunpack.c.h.b16 %v4081
    %v4096 = vunpack.c.l.b16 %v4082
    %v4097 = vunpack.c.h.b16 %v4082
    %v4098 = vunpack.c.l.b16 %v4083
    %v4099 = vunpack.c.h.b16 %v4083
    %v4100 = vpack.c.b16 %v4092, %v4090
    %v4101 = vpack.c.b16 %v4093, %v4091
    %v4102 = vpack.c.b16 %v4096, %v4094
    %v4103 = vpack.c.b16 %v4097, %v4095
    %v4104 = vpack.c.b16 %v4098, %v4098
    %v4105 = vpack.c.b16 %v4099, %v4099
    %v4111 = vsel %vm3111, %v4084, 0
    %v4114 = vsel %vm3522, %v4104, 0
    %v4117 = vsel %vm3522, %v4105, 0
    %4119 = vmatprep.subr.bf16.mxu0 %v4101
    %4120 = vmatpush1.bf16.msra.mxu0 %v4100
    %4121 = vmatprep.subr.bf16.mxu0 %v4103
    %4122 = vmatpush1.bf16.msra.mxu0 %v4102
    %4123 = vmatprep.subr.bf16.mxu0 %v4117
    %4124 = vmatpush1.bf16.msra.mxu0 %v4114
    %4125 = vmatprep.subr.bf16.mxu0 0
    %4126 = vmatpush1.bf16.msra.mxu0 0
    %4127 = vmatprep.subr.bf16.mxu0 0
    %4128 = vmatpush1.bf16.msra.mxu0 0
    %4129 = vmatprep.subr.bf16.mxu0 0
    %4130 = vmatpush1.bf16.msra.mxu0 0
    %4131 = vmatprep.subr.bf16.mxu0 0
    %4132 = vmatpush1.bf16.msra.mxu0 0
    %4133 = vmatprep.subr.bf16.mxu0 0
    %4134 = vmatpush1.bf16.msra.mxu0 0
    %4135 = vmatprep.subr.bf16.mxu0 0
    %4136 = vmatpush1.bf16.msra.mxu0 0
    %4137 = vmatprep.subr.bf16.mxu0 0
    %4138 = vmatpush1.bf16.msra.mxu0 0
    %4139 = vmatprep.subr.bf16.mxu0 0
    %4140 = vmatpush1.bf16.msra.mxu0 0
    %4141 = vmatprep.subr.bf16.mxu0 0
    %4142 = vmatpush1.bf16.msra.mxu0 0
    %4143 = vmatprep.subr.bf16.mxu0 0
    %4144 = vmatpush1.bf16.msra.mxu0 0
    %4145 = vmatprep.subr.bf16.mxu0 0
    %4146 = vmatpush1.bf16.msra.mxu0 0
    %4147 = vmatprep.subr.bf16.mxu0 0
    %4148 = vmatpush1.bf16.msra.mxu0 0
    %4149 = vmatprep.subr.bf16.mxu0 0
    %4150 = vmatpush1.bf16.msra.mxu0 0
    %4151 = vmatprep.mubr.bf16.mxu0 0
    %4152 = vmatmul.mubr.bf16.gmra.mrb[0].mxu0 %v4111
    %v4153 = vpop.f32.mrb[0].mxu0
    %v4154 = vadd.f32 0.0, %v4153
    %v4155 = vpop.f32.mrb[0].mxu0
    %v4156 = vadd.f32 0.0, %v4155
    %v4157 = vpop.f32.mrb[0].mxu0
    %v4158 = vpop.f32.mrb[0].mxu0
    %4159 = vdwg.mxu0
    %v4160 = vadd.f32 %v4076, %v4154
    %v4161 = vadd.f32 %v4077, %v4156
    %v4162 = vpack.c.bf16 %v3194, %v3194
    %s4163 = scalar_lea.vmem [#allocation32], 320
    %v4164 = vld [vmem:[%s4163] sm:$0xff]
    %v4165 = vld [vmem:[%s4163 + $0x8] sm:$0xff]
    %v4166 = vld [vmem:[%s4163 + $0x10] sm:$0xff]
    %v4167 = vld [vmem:[%s4163 + $0x18] sm:$0xff]
    %v4168 = vld [vmem:[%s4163 + $0x20] sm:$0x11]
    %v4174 = vunpack.c.l.b16 %v4164
    %v4175 = vunpack.c.h.b16 %v4164
    %v4176 = vunpack.c.l.b16 %v4165
    %v4177 = vunpack.c.h.b16 %v4165
    %v4178 = vunpack.c.l.b16 %v4166
    %v4179 = vunpack.c.h.b16 %v4166
    %v4180 = vunpack.c.l.b16 %v4167
    %v4181 = vunpack.c.h.b16 %v4167
    %v4182 = vunpack.c.l.b16 %v4168
    %v4183 = vunpack.c.h.b16 %v4168
    %v4184 = vpack.c.b16 %v4176, %v4174
    %v4185 = vpack.c.b16 %v4177, %v4175
    %v4186 = vpack.c.b16 %v4180, %v4178
    %v4187 = vpack.c.b16 %v4181, %v4179
    %v4188 = vpack.c.b16 %v4182, %v4182
    %v4189 = vpack.c.b16 %v4183, %v4183
    %v4195 = vsel %vm3111, %v4162, 0
    %v4198 = vsel %vm3522, %v4188, 0
    %v4201 = vsel %vm3522, %v4189, 0
    %4203 = vmatprep.subr.bf16.mxu0 %v4185
    %4204 = vmatpush1.bf16.msra.mxu0 %v4184
    %4205 = vmatprep.subr.bf16.mxu0 %v4187
    %4206 = vmatpush1.bf16.msra.mxu0 %v4186
    %4207 = vmatprep.subr.bf16.mxu0 %v4201
    %4208 = vmatpush1.bf16.msra.mxu0 %v4198
    %4209 = vmatprep.subr.bf16.mxu0 0
    %4210 = vmatpush1.bf16.msra.mxu0 0
    %4211 = vmatprep.subr.bf16.mxu0 0
    %4212 = vmatpush1.bf16.msra.mxu0 0
    %4213 = vmatprep.subr.bf16.mxu0 0
    %4214 = vmatpush1.bf16.msra.mxu0 0
    %4215 = vmatprep.subr.bf16.mxu0 0
    %4216 = vmatpush1.bf16.msra.mxu0 0
    %4217 = vmatprep.subr.bf16.mxu0 0
    %4218 = vmatpush1.bf16.msra.mxu0 0
    %4219 = vmatprep.subr.bf16.mxu0 0
    %4220 = vmatpush1.bf16.msra.mxu0 0
    %4221 = vmatprep.subr.bf16.mxu0 0
    %4222 = vmatpush1.bf16.msra.mxu0 0
    %4223 = vmatprep.subr.bf16.mxu0 0
    %4224 = vmatpush1.bf16.msra.mxu0 0
    %4225 = vmatprep.subr.bf16.mxu0 0
    %4226 = vmatpush1.bf16.msra.mxu0 0
    %4227 = vmatprep.subr.bf16.mxu0 0
    %4228 = vmatpush1.bf16.msra.mxu0 0
    %4229 = vmatprep.subr.bf16.mxu0 0
    %4230 = vmatpush1.bf16.msra.mxu0 0
    %4231 = vmatprep.subr.bf16.mxu0 0
    %4232 = vmatpush1.bf16.msra.mxu0 0
    %4233 = vmatprep.subr.bf16.mxu0 0
    %4234 = vmatpush1.bf16.msra.mxu0 0
    %4235 = vmatprep.mubr.bf16.mxu0 0
    %4236 = vmatmul.mubr.bf16.gmra.mrb[0].mxu0 %v4195
    %v4237 = vpop.f32.mrb[0].mxu0
    %v4238 = vadd.f32 0.0, %v4237
    %v4239 = vpop.f32.mrb[0].mxu0
    %v4240 = vadd.f32 0.0, %v4239
    %v4241 = vpop.f32.mrb[0].mxu0
    %v4242 = vpop.f32.mrb[0].mxu0
    %4243 = vdwg.mxu0
    %v4244 = vadd.f32 %v4160, %v4238
    %v4245 = vadd.f32 %v4161, %v4240
    %s4246 = scalar_lea.vmem [#allocation32], 360
    %v4247 = vld [vmem:[%s4246] sm:$0xff]
    %v4248 = vld [vmem:[%s4246 + $0x8] sm:$0xff]
    %v4249 = vld [vmem:[%s4246 + $0x10] sm:$0xff]
    %v4250 = vld [vmem:[%s4246 + $0x18] sm:$0xff]
    %v4251 = vld [vmem:[%s4246 + $0x20] sm:$0x11]
    %v4252 = vshrl.u32 %v4162, 16
    %v4259 = vunpack.c.l.b16 %v4247
    %v4260 = vunpack.c.h.b16 %v4247
    %v4261 = vunpack.c.l.b16 %v4248
    %v4262 = vunpack.c.h.b16 %v4248
    %v4263 = vunpack.c.l.b16 %v4249
    %v4264 = vunpack.c.h.b16 %v4249
    %v4265 = vunpack.c.l.b16 %v4250
    %v4266 = vunpack.c.h.b16 %v4250
    %v4267 = vunpack.c.l.b16 %v4251
    %v4268 = vunpack.c.h.b16 %v4251
    %v4269 = vpack.c.b16 %v4261, %v4259
    %v4270 = vpack.c.b16 %v4262, %v4260
    %v4271 = vpack.c.b16 %v4265, %v4263
    %v4272 = vpack.c.b16 %v4266, %v4264
    %v4273 = vpack.c.b16 %v4267, %v4267
    %v4274 = vpack.c.b16 %v4268, %v4268
    %v4280 = vsel %vm3111, %v4252, 0
    %v4283 = vsel %vm3522, %v4273, 0
    %v4286 = vsel %vm3522, %v4274, 0
    %4288 = vmatprep.subr.bf16.mxu0 %v4270
    %4289 = vmatpush1.bf16.msra.mxu0 %v4269
    %4290 = vmatprep.subr.bf16.mxu0 %v4272
    %4291 = vmatpush1.bf16.msra.mxu0 %v4271
    %4292 = vmatprep.subr.bf16.mxu0 %v4286
    %4293 = vmatpush1.bf16.msra.mxu0 %v4283
    %4294 = vmatprep.subr.bf16.mxu0 0
    %4295 = vmatpush1.bf16.msra.mxu0 0
    %4296 = vmatprep.subr.bf16.mxu0 0
    %4297 = vmatpush1.bf16.msra.mxu0 0
    %4298 = vmatprep.subr.bf16.mxu0 0
    %4299 = vmatpush1.bf16.msra.mxu0 0
    %4300 = vmatprep.subr.bf16.mxu0 0
    %4301 = vmatpush1.bf16.msra.mxu0 0
    %4302 = vmatprep.subr.bf16.mxu0 0
    %4303 = vmatpush1.bf16.msra.mxu0 0
    %4304 = vmatprep.subr.bf16.mxu0 0
    %4305 = vmatpush1.bf16.msra.mxu0 0
    %4306 = vmatprep.subr.bf16.mxu0 0
    %4307 = vmatpush1.bf16.msra.mxu0 0
    %4308 = vmatprep.subr.bf16.mxu0 0
    %4309 = vmatpush1.bf16.msra.mxu0 0
    %4310 = vmatprep.subr.bf16.mxu0 0
    %4311 = vmatpush1.bf16.msra.mxu0 0
    %4312 = vmatprep.subr.bf16.mxu0 0
    %4313 = vmatpush1.bf16.msra.mxu0 0
    %4314 = vmatprep.subr.bf16.mxu0 0
    %4315 = vmatpush1.bf16.msra.mxu0 0
    %4316 = vmatprep.subr.bf16.mxu0 0
    %4317 = vmatpush1.bf16.msra.mxu0 0
    %4318 = vmatprep.subr.bf16.mxu0 0
    %4319 = vmatpush1.bf16.msra.mxu0 0
    %4320 = vmatprep.mubr.bf16.mxu0 0
    %4321 = vmatmul.mubr.bf16.gmra.mrb[0].mxu0 %v4280
    %v4322 = vpop.f32.mrb[0].mxu0
    %v4323 = vadd.f32 0.0, %v4322
    %v4324 = vpop.f32.mrb[0].mxu0
    %v4325 = vadd.f32 0.0, %v4324
    %v4326 = vpop.f32.mrb[0].mxu0
    %v4327 = vpop.f32.mrb[0].mxu0
    %4328 = vdwg.mxu0
    %v4329 = vadd.f32 %v4244, %v4323
    %v4330 = vadd.f32 %v4245, %v4325
    %s4331 = scalar_lea.vmem [#allocation32], 400
    %v4332 = vld [vmem:[%s4331] sm:$0xff]
    %v4333 = vld [vmem:[%s4331 + $0x8] sm:$0xff]
    %v4334 = vld [vmem:[%s4331 + $0x10] sm:$0xff]
    %v4335 = vld [vmem:[%s4331 + $0x18] sm:$0xff]
    %v4336 = vld [vmem:[%s4331 + $0x20] sm:$0x11]
    %v4338 = vrot.slane %v4162, 1
    %v4344 = vunpack.c.l.b16 %v4332
    %v4345 = vunpack.c.h.b16 %v4332
    %v4346 = vunpack.c.l.b16 %v4333
    %v4347 = vunpack.c.h.b16 %v4333
    %v4348 = vunpack.c.l.b16 %v4334
    %v4349 = vunpack.c.h.b16 %v4334
    %v4350 = vunpack.c.l.b16 %v4335
    %v4351 = vunpack.c.h.b16 %v4335
    %v4352 = vunpack.c.l.b16 %v4336
    %v4353 = vunpack.c.h.b16 %v4336
    %v4354 = vpack.c.b16 %v4346, %v4344
    %v4355 = vpack.c.b16 %v4347, %v4345
    %v4356 = vpack.c.b16 %v4350, %v4348
    %v4357 = vpack.c.b16 %v4351, %v4349
    %v4358 = vpack.c.b16 %v4352, %v4352
    %v4359 = vpack.c.b16 %v4353, %v4353
    %v4365 = vsel %vm3111, %v4338, 0
    %v4368 = vsel %vm3522, %v4358, 0
    %v4371 = vsel %vm3522, %v4359, 0
    %4373 = vmatprep.subr.bf16.mxu0 %v4355
    %4374 = vmatpush1.bf16.msra.mxu0 %v4354
    %4375 = vmatprep.subr.bf16.mxu0 %v4357
    %4376 = vmatpush1.bf16.msra.mxu0 %v4356
    %4377 = vmatprep.subr.bf16.mxu0 %v4371
    %4378 = vmatpush1.bf16.msra.mxu0 %v4368
    %4379 = vmatprep.subr.bf16.mxu0 0
    %4380 = vmatpush1.bf16.msra.mxu0 0
    %4381 = vmatprep.subr.bf16.mxu0 0
    %4382 = vmatpush1.bf16.msra.mxu0 0
    %4383 = vmatprep.subr.bf16.mxu0 0
    %4384 = vmatpush1.bf16.msra.mxu0 0
    %4385 = vmatprep.subr.bf16.mxu0 0
    %4386 = vmatpush1.bf16.msra.mxu0 0
    %4387 = vmatprep.subr.bf16.mxu0 0
    %4388 = vmatpush1.bf16.msra.mxu0 0
    %4389 = vmatprep.subr.bf16.mxu0 0
    %4390 = vmatpush1.bf16.msra.mxu0 0
    %4391 = vmatprep.subr.bf16.mxu0 0
    %4392 = vmatpush1.bf16.msra.mxu0 0
    %4393 = vmatprep.subr.bf16.mxu0 0
    %4394 = vmatpush1.bf16.msra.mxu0 0
    %4395 = vmatprep.subr.bf16.mxu0 0
    %4396 = vmatpush1.bf16.msra.mxu0 0
    %4397 = vmatprep.subr.bf16.mxu0 0
    %4398 = vmatpush1.bf16.msra.mxu0 0
    %4399 = vmatprep.subr.bf16.mxu0 0
    %4400 = vmatpush1.bf16.msra.mxu0 0
    %4401 = vmatprep.subr.bf16.mxu0 0
    %4402 = vmatpush1.bf16.msra.mxu0 0
    %4403 = vmatprep.subr.bf16.mxu0 0
    %4404 = vmatpush1.bf16.msra.mxu0 0
    %4405 = vmatprep.mubr.bf16.mxu0 0
    %4406 = vmatmul.mubr.bf16.gmra.mrb[0].mxu0 %v4365
    %v4407 = vpop.f32.mrb[0].mxu0
    %v4408 = vadd.f32 0.0, %v4407
    %v4409 = vpop.f32.mrb[0].mxu0
    %v4410 = vadd.f32 0.0, %v4409
    %v4411 = vpop.f32.mrb[0].mxu0
    %v4412 = vpop.f32.mrb[0].mxu0
    %4413 = vdwg.mxu0
    %v4414 = vadd.f32 %v4329, %v4408
    %v4415 = vadd.f32 %v4330, %v4410
    %s4416 = scalar_lea.vmem [#allocation32], 440
    %v4417 = vld [vmem:[%s4416] sm:$0xff]
    %v4418 = vld [vmem:[%s4416 + $0x8] sm:$0xff]
    %v4419 = vld [vmem:[%s4416 + $0x10] sm:$0xff]
    %v4420 = vld [vmem:[%s4416 + $0x18] sm:$0xff]
    %v4421 = vld [vmem:[%s4416 + $0x20] sm:$0x11]
    %v4422 = vrot.slane %v4252, 1
    %v4428 = vunpack.c.l.b16 %v4417
    %v4429 = vunpack.c.h.b16 %v4417
    %v4430 = vunpack.c.l.b16 %v4418
    %v4431 = vunpack.c.h.b16 %v4418
    %v4432 = vunpack.c.l.b16 %v4419
    %v4433 = vunpack.c.h.b16 %v4419
    %v4434 = vunpack.c.l.b16 %v4420
    %v4435 = vunpack.c.h.b16 %v4420
    %v4436 = vunpack.c.l.b16 %v4421
    %v4437 = vunpack.c.h.b16 %v4421
    %v4438 = vpack.c.b16 %v4430, %v4428
    %v4439 = vpack.c.b16 %v4431, %v4429
    %v4440 = vpack.c.b16 %v4434, %v4432
    %v4441 = vpack.c.b16 %v4435, %v4433
    %v4442 = vpack.c.b16 %v4436, %v4436
    %v4443 = vpack.c.b16 %v4437, %v4437
    %v4449 = vsel %vm3111, %v4422, 0
    %v4452 = vsel %vm3522, %v4442, 0
    %v4455 = vsel %vm3522, %v4443, 0
    %4457 = vmatprep.subr.bf16.mxu0 %v4439
    %4458 = vmatpush1.bf16.msra.mxu0 %v4438
    %4459 = vmatprep.subr.bf16.mxu0 %v4441
    %4460 = vmatpush1.bf16.msra.mxu0 %v4440
    %4461 = vmatprep.subr.bf16.mxu0 %v4455
    %4462 = vmatpush1.bf16.msra.mxu0 %v4452
    %4463 = vmatprep.subr.bf16.mxu0 0
    %4464 = vmatpush1.bf16.msra.mxu0 0
    %4465 = vmatprep.subr.bf16.mxu0 0
    %4466 = vmatpush1.bf16.msra.mxu0 0
    %4467 = vmatprep.subr.bf16.mxu0 0
    %4468 = vmatpush1.bf16.msra.mxu0 0
    %4469 = vmatprep.subr.bf16.mxu0 0
    %4470 = vmatpush1.bf16.msra.mxu0 0
    %4471 = vmatprep.subr.bf16.mxu0 0
    %4472 = vmatpush1.bf16.msra.mxu0 0
    %4473 = vmatprep.subr.bf16.mxu0 0
    %4474 = vmatpush1.bf16.msra.mxu0 0
    %4475 = vmatprep.subr.bf16.mxu0 0
    %4476 = vmatpush1.bf16.msra.mxu0 0
    %4477 = vmatprep.subr.bf16.mxu0 0
    %4478 = vmatpush1.bf16.msra.mxu0 0
    %4479 = vmatprep.subr.bf16.mxu0 0
    %4480 = vmatpush1.bf16.msra.mxu0 0
    %4481 = vmatprep.subr.bf16.mxu0 0
    %4482 = vmatpush1.bf16.msra.mxu0 0
    %4483 = vmatprep.subr.bf16.mxu0 0
    %4484 = vmatpush1.bf16.msra.mxu0 0
    %4485 = vmatprep.subr.bf16.mxu0 0
    %4486 = vmatpush1.bf16.msra.mxu0 0
    %4487 = vmatprep.subr.bf16.mxu0 0
    %4488 = vmatpush1.bf16.msra.mxu0 0
    %4489 = vmatprep.mubr.bf16.mxu0 0
    %4490 = vmatmul.mubr.bf16.gmra.mrb[0].mxu0 %v4449
    %v4491 = vpop.f32.mrb[0].mxu0
    %v4492 = vadd.f32 0.0, %v4491
    %v4493 = vpop.f32.mrb[0].mxu0
    %v4494 = vadd.f32 0.0, %v4493
    %v4495 = vpop.f32.mrb[0].mxu0
    %v4496 = vpop.f32.mrb[0].mxu0
    %4497 = vdwg.mxu0
    %v4498 = vadd.f32 %v4414, %v4492
    %v4499 = vadd.f32 %v4415, %v4494
    %s4500 = scalar_lea.vmem [#allocation32], 480
    %v4501 = vld [vmem:[%s4500] sm:$0xff]
    %v4502 = vld [vmem:[%s4500 + $0x8] sm:$0xff]
    %v4503 = vld [vmem:[%s4500 + $0x10] sm:$0xff]
    %v4504 = vld [vmem:[%s4500 + $0x18] sm:$0xff]
    %v4505 = vld [vmem:[%s4500 + $0x20] sm:$0x11]
    %v4506 = vrot.slane %v4162, 2
    %v4512 = vunpack.c.l.b16 %v4501
    %v4513 = vunpack.c.h.b16 %v4501
    %v4514 = vunpack.c.l.b16 %v4502
    %v4515 = vunpack.c.h.b16 %v4502
    %v4516 = vunpack.c.l.b16 %v4503
    %v4517 = vunpack.c.h.b16 %v4503
    %v4518 = vunpack.c.l.b16 %v4504
    %v4519 = vunpack.c.h.b16 %v4504
    %v4520 = vunpack.c.l.b16 %v4505
    %v4521 = vunpack.c.h.b16 %v4505
    %v4522 = vpack.c.b16 %v4514, %v4512
    %v4523 = vpack.c.b16 %v4515, %v4513
    %v4524 = vpack.c.b16 %v4518, %v4516
    %v4525 = vpack.c.b16 %v4519, %v4517
    %v4526 = vpack.c.b16 %v4520, %v4520
    %v4527 = vpack.c.b16 %v4521, %v4521
    %v4533 = vsel %vm3111, %v4506, 0
    %v4536 = vsel %vm3522, %v4526, 0
    %v4539 = vsel %vm3522, %v4527, 0
    %4541 = vmatprep.subr.bf16.mxu0 %v4523
    %4542 = vmatpush1.bf16.msra.mxu0 %v4522
    %4543 = vmatprep.subr.bf16.mxu0 %v4525
    %4544 = vmatpush1.bf16.msra.mxu0 %v4524
    %4545 = vmatprep.subr.bf16.mxu0 %v4539
    %4546 = vmatpush1.bf16.msra.mxu0 %v4536
    %4547 = vmatprep.subr.bf16.mxu0 0
    %4548 = vmatpush1.bf16.msra.mxu0 0
    %4549 = vmatprep.subr.bf16.mxu0 0
    %4550 = vmatpush1.bf16.msra.mxu0 0
    %4551 = vmatprep.subr.bf16.mxu0 0
    %4552 = vmatpush1.bf16.msra.mxu0 0
    %4553 = vmatprep.subr.bf16.mxu0 0
    %4554 = vmatpush1.bf16.msra.mxu0 0
    %4555 = vmatprep.subr.bf16.mxu0 0
    %4556 = vmatpush1.bf16.msra.mxu0 0
    %4557 = vmatprep.subr.bf16.mxu0 0
    %4558 = vmatpush1.bf16.msra.mxu0 0
    %4559 = vmatprep.subr.bf16.mxu0 0
    %4560 = vmatpush1.bf16.msra.mxu0 0
    %4561 = vmatprep.subr.bf16.mxu0 0
    %4562 = vmatpush1.bf16.msra.mxu0 0
    %4563 = vmatprep.subr.bf16.mxu0 0
    %4564 = vmatpush1.bf16.msra.mxu0 0
    %4565 = vmatprep.subr.bf16.mxu0 0
    %4566 = vmatpush1.bf16.msra.mxu0 0
    %4567 = vmatprep.subr.bf16.mxu0 0
    %4568 = vmatpush1.bf16.msra.mxu0 0
    %4569 = vmatprep.subr.bf16.mxu0 0
    %4570 = vmatpush1.bf16.msra.mxu0 0
    %4571 = vmatprep.subr.bf16.mxu0 0
    %4572 = vmatpush1.bf16.msra.mxu0 0
    %4573 = vmatprep.mubr.bf16.mxu0 0
    %4574 = vmatmul.mubr.bf16.gmra.mrb[0].mxu0 %v4533
    %v4575 = vpop.f32.mrb[0].mxu0
    %v4576 = vadd.f32 0.0, %v4575
    %v4577 = vpop.f32.mrb[0].mxu0
    %v4578 = vadd.f32 0.0, %v4577
    %v4579 = vpop.f32.mrb[0].mxu0
    %v4580 = vpop.f32.mrb[0].mxu0
    %4581 = vdwg.mxu0
    %v4582 = vadd.f32 %v4498, %v4576
    %v4583 = vadd.f32 %v4499, %v4578
    %s4584 = scalar_lea.vmem [#allocation32], 520
    %v4585 = vld [vmem:[%s4584] sm:$0xff]
    %v4586 = vld [vmem:[%s4584 + $0x8] sm:$0xff]
    %v4587 = vld [vmem:[%s4584 + $0x10] sm:$0xff]
    %v4588 = vld [vmem:[%s4584 + $0x18] sm:$0xff]
    %v4589 = vld [vmem:[%s4584 + $0x20] sm:$0x11]
    %v4590 = vrot.slane %v4252, 2
    %v4596 = vunpack.c.l.b16 %v4585
    %v4597 = vunpack.c.h.b16 %v4585
    %v4598 = vunpack.c.l.b16 %v4586
    %v4599 = vunpack.c.h.b16 %v4586
    %v4600 = vunpack.c.l.b16 %v4587
    %v4601 = vunpack.c.h.b16 %v4587
    %v4602 = vunpack.c.l.b16 %v4588
    %v4603 = vunpack.c.h.b16 %v4588
    %v4604 = vunpack.c.l.b16 %v4589
    %v4605 = vunpack.c.h.b16 %v4589
    %v4606 = vpack.c.b16 %v4598, %v4596
    %v4607 = vpack.c.b16 %v4599, %v4597
    %v4608 = vpack.c.b16 %v4602, %v4600
    %v4609 = vpack.c.b16 %v4603, %v4601
    %v4610 = vpack.c.b16 %v4604, %v4604
    %v4611 = vpack.c.b16 %v4605, %v4605
    %v4617 = vsel %vm3111, %v4590, 0
    %v4620 = vsel %vm3522, %v4610, 0
    %v4623 = vsel %vm3522, %v4611, 0
    %4625 = vmatprep.subr.bf16.mxu0 %v4607
    %4626 = vmatpush1.bf16.msra.mxu0 %v4606
    %4627 = vmatprep.subr.bf16.mxu0 %v4609
    %4628 = vmatpush1.bf16.msra.mxu0 %v4608
    %4629 = vmatprep.subr.bf16.mxu0 %v4623
    %4630 = vmatpush1.bf16.msra.mxu0 %v4620
    %4631 = vmatprep.subr.bf16.mxu0 0
    %4632 = vmatpush1.bf16.msra.mxu0 0
    %4633 = vmatprep.subr.bf16.mxu0 0
    %4634 = vmatpush1.bf16.msra.mxu0 0
    %4635 = vmatprep.subr.bf16.mxu0 0
    %4636 = vmatpush1.bf16.msra.mxu0 0
    %4637 = vmatprep.subr.bf16.mxu0 0
    %4638 = vmatpush1.bf16.msra.mxu0 0
    %4639 = vmatprep.subr.bf16.mxu0 0
    %4640 = vmatpush1.bf16.msra.mxu0 0
    %4641 = vmatprep.subr.bf16.mxu0 0
    %4642 = vmatpush1.bf16.msra.mxu0 0
    %4643 = vmatprep.subr.bf16.mxu0 0
    %4644 = vmatpush1.bf16.msra.mxu0 0
    %4645 = vmatprep.subr.bf16.mxu0 0
    %4646 = vmatpush1.bf16.msra.mxu0 0
    %4647 = vmatprep.subr.bf16.mxu0 0
    %4648 = vmatpush1.bf16.msra.mxu0 0
    %4649 = vmatprep.subr.bf16.mxu0 0
    %4650 = vmatpush1.bf16.msra.mxu0 0
    %4651 = vmatprep.subr.bf16.mxu0 0
    %4652 = vmatpush1.bf16.msra.mxu0 0
    %4653 = vmatprep.subr.bf16.mxu0 0
    %4654 = vmatpush1.bf16.msra.mxu0 0
    %4655 = vmatprep.subr.bf16.mxu0 0
    %4656 = vmatpush1.bf16.msra.mxu0 0
    %4657 = vmatprep.mubr.bf16.mxu0 0
    %4658 = vmatmul.mubr.bf16.gmra.mrb[0].mxu0 %v4617
    %v4659 = vpop.f32.mrb[0].mxu0
    %v4660 = vadd.f32 0.0, %v4659
    %v4661 = vpop.f32.mrb[0].mxu0
    %v4662 = vadd.f32 0.0, %v4661
    %v4663 = vpop.f32.mrb[0].mxu0
    %v4664 = vpop.f32.mrb[0].mxu0
    %4665 = vdwg.mxu0
    %v4666 = vadd.f32 %v4582, %v4660
    %v4667 = vadd.f32 %v4583, %v4662
    %s4668 = scalar_lea.vmem [#allocation32], 560
    %v4669 = vld [vmem:[%s4668] sm:$0xff]
    %v4670 = vld [vmem:[%s4668 + $0x8] sm:$0xff]
    %v4671 = vld [vmem:[%s4668 + $0x10] sm:$0xff]
    %v4672 = vld [vmem:[%s4668 + $0x18] sm:$0xff]
    %v4673 = vld [vmem:[%s4668 + $0x20] sm:$0x11]
    %v4674 = vrot.slane %v4162, 3
    %v4680 = vunpack.c.l.b16 %v4669
    %v4681 = vunpack.c.h.b16 %v4669
    %v4682 = vunpack.c.l.b16 %v4670
    %v4683 = vunpack.c.h.b16 %v4670
    %v4684 = vunpack.c.l.b16 %v4671
    %v4685 = vunpack.c.h.b16 %v4671
    %v4686 = vunpack.c.l.b16 %v4672
    %v4687 = vunpack.c.h.b16 %v4672
    %v4688 = vunpack.c.l.b16 %v4673
    %v4689 = vunpack.c.h.b16 %v4673
    %v4690 = vpack.c.b16 %v4682, %v4680
    %v4691 = vpack.c.b16 %v4683, %v4681
    %v4692 = vpack.c.b16 %v4686, %v4684
    %v4693 = vpack.c.b16 %v4687, %v4685
    %v4694 = vpack.c.b16 %v4688, %v4688
    %v4695 = vpack.c.b16 %v4689, %v4689
    %v4701 = vsel %vm3111, %v4674, 0
    %v4704 = vsel %vm3522, %v4694, 0
    %v4707 = vsel %vm3522, %v4695, 0
    %4709 = vmatprep.subr.bf16.mxu0 %v4691
    %4710 = vmatpush1.bf16.msra.mxu0 %v4690
    %4711 = vmatprep.subr.bf16.mxu0 %v4693
    %4712 = vmatpush1.bf16.msra.mxu0 %v4692
    %4713 = vmatprep.subr.bf16.mxu0 %v4707
    %4714 = vmatpush1.bf16.msra.mxu0 %v4704
    %4715 = vmatprep.subr.bf16.mxu0 0
    %4716 = vmatpush1.bf16.msra.mxu0 0
    %4717 = vmatprep.subr.bf16.mxu0 0
    %4718 = vmatpush1.bf16.msra.mxu0 0
    %4719 = vmatprep.subr.bf16.mxu0 0
    %4720 = vmatpush1.bf16.msra.mxu0 0
    %4721 = vmatprep.subr.bf16.mxu0 0
    %4722 = vmatpush1.bf16.msra.mxu0 0
    %4723 = vmatprep.subr.bf16.mxu0 0
    %4724 = vmatpush1.bf16.msra.mxu0 0
    %4725 = vmatprep.subr.bf16.mxu0 0
    %4726 = vmatpush1.bf16.msra.mxu0 0
    %4727 = vmatprep.subr.bf16.mxu0 0
    %4728 = vmatpush1.bf16.msra.mxu0 0
    %4729 = vmatprep.subr.bf16.mxu0 0
    %4730 = vmatpush1.bf16.msra.mxu0 0
    %4731 = vmatprep.subr.bf16.mxu0 0
    %4732 = vmatpush1.bf16.msra.mxu0 0
    %4733 = vmatprep.subr.bf16.mxu0 0
    %4734 = vmatpush1.bf16.msra.mxu0 0
    %4735 = vmatprep.subr.bf16.mxu0 0
    %4736 = vmatpush1.bf16.msra.mxu0 0
    %4737 = vmatprep.subr.bf16.mxu0 0
    %4738 = vmatpush1.bf16.msra.mxu0 0
    %4739 = vmatprep.subr.bf16.mxu0 0
    %4740 = vmatpush1.bf16.msra.mxu0 0
    %4741 = vmatprep.mubr.bf16.mxu0 0
    %4742 = vmatmul.mubr.bf16.gmra.mrb[0].mxu0 %v4701
    %v4743 = vpop.f32.mrb[0].mxu0
    %v4744 = vadd.f32 0.0, %v4743
    %v4745 = vpop.f32.mrb[0].mxu0
    %v4746 = vadd.f32 0.0, %v4745
    %v4747 = vpop.f32.mrb[0].mxu0
    %v4748 = vpop.f32.mrb[0].mxu0
    %4749 = vdwg.mxu0
    %v4750 = vadd.f32 %v4666, %v4744
    %v4751 = vadd.f32 %v4667, %v4746
    %s4752 = scalar_lea.vmem [#allocation32], 600
    %v4753 = vld [vmem:[%s4752] sm:$0xff]
    %v4754 = vld [vmem:[%s4752 + $0x8] sm:$0xff]
    %v4755 = vld [vmem:[%s4752 + $0x10] sm:$0xff]
    %v4756 = vld [vmem:[%s4752 + $0x18] sm:$0xff]
    %v4757 = vld [vmem:[%s4752 + $0x20] sm:$0x11]
    %v4758 = vrot.slane %v4252, 3
    %v4764 = vunpack.c.l.b16 %v4753
    %v4765 = vunpack.c.h.b16 %v4753
    %v4766 = vunpack.c.l.b16 %v4754
    %v4767 = vunpack.c.h.b16 %v4754
    %v4768 = vunpack.c.l.b16 %v4755
    %v4769 = vunpack.c.h.b16 %v4755
    %v4770 = vunpack.c.l.b16 %v4756
    %v4771 = vunpack.c.h.b16 %v4756
    %v4772 = vunpack.c.l.b16 %v4757
    %v4773 = vunpack.c.h.b16 %v4757
    %v4774 = vpack.c.b16 %v4766, %v4764
    %v4775 = vpack.c.b16 %v4767, %v4765
    %v4776 = vpack.c.b16 %v4770, %v4768
    %v4777 = vpack.c.b16 %v4771, %v4769
    %v4778 = vpack.c.b16 %v4772, %v4772
    %v4779 = vpack.c.b16 %v4773, %v4773
    %v4785 = vsel %vm3111, %v4758, 0
    %v4788 = vsel %vm3522, %v4778, 0
    %v4791 = vsel %vm3522, %v4779, 0
    %4793 = vmatprep.subr.bf16.mxu0 %v4775
    %4794 = vmatpush1.bf16.msra.mxu0 %v4774
    %4795 = vmatprep.subr.bf16.mxu0 %v4777
    %4796 = vmatpush1.bf16.msra.mxu0 %v4776
    %4797 = vmatprep.subr.bf16.mxu0 %v4791
    %4798 = vmatpush1.bf16.msra.mxu0 %v4788
    %4799 = vmatprep.subr.bf16.mxu0 0
    %4800 = vmatpush1.bf16.msra.mxu0 0
    %4801 = vmatprep.subr.bf16.mxu0 0
    %4802 = vmatpush1.bf16.msra.mxu0 0
    %4803 = vmatprep.subr.bf16.mxu0 0
    %4804 = vmatpush1.bf16.msra.mxu0 0
    %4805 = vmatprep.subr.bf16.mxu0 0
    %4806 = vmatpush1.bf16.msra.mxu0 0
    %4807 = vmatprep.subr.bf16.mxu0 0
    %4808 = vmatpush1.bf16.msra.mxu0 0
    %4809 = vmatprep.subr.bf16.mxu0 0
    %4810 = vmatpush1.bf16.msra.mxu0 0
    %4811 = vmatprep.subr.bf16.mxu0 0
    %4812 = vmatpush1.bf16.msra.mxu0 0
    %4813 = vmatprep.subr.bf16.mxu0 0
    %4814 = vmatpush1.bf16.msra.mxu0 0
    %4815 = vmatprep.subr.bf16.mxu0 0
    %4816 = vmatpush1.bf16.msra.mxu0 0
    %4817 = vmatprep.subr.bf16.mxu0 0
    %4818 = vmatpush1.bf16.msra.mxu0 0
    %4819 = vmatprep.subr.bf16.mxu0 0
    %4820 = vmatpush1.bf16.msra.mxu0 0
    %4821 = vmatprep.subr.bf16.mxu0 0
    %4822 = vmatpush1.bf16.msra.mxu0 0
    %4823 = vmatprep.subr.bf16.mxu0 0
    %4824 = vmatpush1.bf16.msra.mxu0 0
    %4825 = vmatprep.mubr.bf16.mxu0 0
    %4826 = vmatmul.mubr.bf16.gmra.mrb[0].mxu0 %v4785
    %v4827 = vpop.f32.mrb[0].mxu0
    %v4828 = vadd.f32 0.0, %v4827
    %v4829 = vpop.f32.mrb[0].mxu0
    %v4830 = vadd.f32 0.0, %v4829
    %v4831 = vpop.f32.mrb[0].mxu0
    %v4832 = vpop.f32.mrb[0].mxu0
    %4833 = vdwg.mxu0
    %v4834 = vadd.f32 %v4750, %v4828
    %v4835 = vadd.f32 %v4751, %v4830
    %v4836 = vpack.c.bf16 %v3195, %v3195
    %s4837 = scalar_lea.vmem [#allocation32], 640
    %v4838 = vld [vmem:[%s4837] sm:$0xff]
    %v4839 = vld [vmem:[%s4837 + $0x8] sm:$0xff]
    %v4840 = vld [vmem:[%s4837 + $0x10] sm:$0xff]
    %v4841 = vld [vmem:[%s4837 + $0x18] sm:$0xff]
    %v4842 = vld [vmem:[%s4837 + $0x20] sm:$0x11]
    %v4848 = vunpack.c.l.b16 %v4838
    %v4849 = vunpack.c.h.b16 %v4838
    %v4850 = vunpack.c.l.b16 %v4839
    %v4851 = vunpack.c.h.b16 %v4839
    %v4852 = vunpack.c.l.b16 %v4840
    %v4853 = vunpack.c.h.b16 %v4840
    %v4854 = vunpack.c.l.b16 %v4841
    %v4855 = vunpack.c.h.b16 %v4841
    %v4856 = vunpack.c.l.b16 %v4842
    %v4857 = vunpack.c.h.b16 %v4842
    %v4858 = vpack.c.b16 %v4850, %v4848
    %v4859 = vpack.c.b16 %v4851, %v4849
    %v4860 = vpack.c.b16 %v4854, %v4852
    %v4861 = vpack.c.b16 %v4855, %v4853
    %v4862 = vpack.c.b16 %v4856, %v4856
    %v4863 = vpack.c.b16 %v4857, %v4857
    %v4869 = vsel %vm3111, %v4836, 0
    %v4872 = vsel %vm3522, %v4862, 0
    %v4875 = vsel %vm3522, %v4863, 0
    %4877 = vmatprep.subr.bf16.mxu0 %v4859
    %4878 = vmatpush1.bf16.msra.mxu0 %v4858
    %4879 = vmatprep.subr.bf16.mxu0 %v4861
    %4880 = vmatpush1.bf16.msra.mxu0 %v4860
    %4881 = vmatprep.subr.bf16.mxu0 %v4875
    %4882 = vmatpush1.bf16.msra.mxu0 %v4872
    %4883 = vmatprep.subr.bf16.mxu0 0
    %4884 = vmatpush1.bf16.msra.mxu0 0
    %4885 = vmatprep.subr.bf16.mxu0 0
    %4886 = vmatpush1.bf16.msra.mxu0 0
    %4887 = vmatprep.subr.bf16.mxu0 0
    %4888 = vmatpush1.bf16.msra.mxu0 0
    %4889 = vmatprep.subr.bf16.mxu0 0
    %4890 = vmatpush1.bf16.msra.mxu0 0
    %4891 = vmatprep.subr.bf16.mxu0 0
    %4892 = vmatpush1.bf16.msra.mxu0 0
    %4893 = vmatprep.subr.bf16.mxu0 0
    %4894 = vmatpush1.bf16.msra.mxu0 0
    %4895 = vmatprep.subr.bf16.mxu0 0
    %4896 = vmatpush1.bf16.msra.mxu0 0
    %4897 = vmatprep.subr.bf16.mxu0 0
    %4898 = vmatpush1.bf16.msra.mxu0 0
    %4899 = vmatprep.subr.bf16.mxu0 0
    %4900 = vmatpush1.bf16.msra.mxu0 0
    %4901 = vmatprep.subr.bf16.mxu0 0
    %4902 = vmatpush1.bf16.msra.mxu0 0
    %4903 = vmatprep.subr.bf16.mxu0 0
    %4904 = vmatpush1.bf16.msra.mxu0 0
    %4905 = vmatprep.subr.bf16.mxu0 0
    %4906 = vmatpush1.bf16.msra.mxu0 0
    %4907 = vmatprep.subr.bf16.mxu0 0
    %4908 = vmatpush1.bf16.msra.mxu0 0
    %4909 = vmatprep.mubr.bf16.mxu0 0
    %4910 = vmatmul.mubr.bf16.gmra.mrb[0].mxu0 %v4869
    %v4911 = vpop.f32.mrb[0].mxu0
    %v4912 = vadd.f32 0.0, %v4911
    %v4913 = vpop.f32.mrb[0].mxu0
    %v4914 = vadd.f32 0.0, %v4913
    %v4915 = vpop.f32.mrb[0].mxu0
    %v4916 = vpop.f32.mrb[0].mxu0
    %4917 = vdwg.mxu0
    %v4918 = vadd.f32 %v4834, %v4912
    %v4919 = vadd.f32 %v4835, %v4914
    %s4920 = scalar_lea.vmem [#allocation32], 680
    %v4921 = vld [vmem:[%s4920] sm:$0xff]
    %v4922 = vld [vmem:[%s4920 + $0x8] sm:$0xff]
    %v4923 = vld [vmem:[%s4920 + $0x10] sm:$0xff]
    %v4924 = vld [vmem:[%s4920 + $0x18] sm:$0xff]
    %v4925 = vld [vmem:[%s4920 + $0x20] sm:$0x11]
    %v4926 = vshrl.u32 %v4836, 16
    %v4933 = vunpack.c.l.b16 %v4921
    %v4934 = vunpack.c.h.b16 %v4921
    %v4935 = vunpack.c.l.b16 %v4922
    %v4936 = vunpack.c.h.b16 %v4922
    %v4937 = vunpack.c.l.b16 %v4923
    %v4938 = vunpack.c.h.b16 %v4923
    %v4939 = vunpack.c.l.b16 %v4924
    %v4940 = vunpack.c.h.b16 %v4924
    %v4941 = vunpack.c.l.b16 %v4925
    %v4942 = vunpack.c.h.b16 %v4925
    %v4943 = vpack.c.b16 %v4935, %v4933
    %v4944 = vpack.c.b16 %v4936, %v4934
    %v4945 = vpack.c.b16 %v4939, %v4937
    %v4946 = vpack.c.b16 %v4940, %v4938
    %v4947 = vpack.c.b16 %v4941, %v4941
    %v4948 = vpack.c.b16 %v4942, %v4942
    %v4954 = vsel %vm3111, %v4926, 0
    %v4957 = vsel %vm3522, %v4947, 0
    %v4960 = vsel %vm3522, %v4948, 0
    %4962 = vmatprep.subr.bf16.mxu0 %v4944
    %4963 = vmatpush1.bf16.msra.mxu0 %v4943
    %4964 = vmatprep.subr.bf16.mxu0 %v4946
    %4965 = vmatpush1.bf16.msra.mxu0 %v4945
    %4966 = vmatprep.subr.bf16.mxu0 %v4960
    %4967 = vmatpush1.bf16.msra.mxu0 %v4957
    %4968 = vmatprep.subr.bf16.mxu0 0
    %4969 = vmatpush1.bf16.msra.mxu0 0
    %4970 = vmatprep.subr.bf16.mxu0 0
    %4971 = vmatpush1.bf16.msra.mxu0 0
    %4972 = vmatprep.subr.bf16.mxu0 0
    %4973 = vmatpush1.bf16.msra.mxu0 0
    %4974 = vmatprep.subr.bf16.mxu0 0
    %4975 = vmatpush1.bf16.msra.mxu0 0
    %4976 = vmatprep.subr.bf16.mxu0 0
    %4977 = vmatpush1.bf16.msra.mxu0 0
    %4978 = vmatprep.subr.bf16.mxu0 0
    %4979 = vmatpush1.bf16.msra.mxu0 0
    %4980 = vmatprep.subr.bf16.mxu0 0
    %4981 = vmatpush1.bf16.msra.mxu0 0
    %4982 = vmatprep.subr.bf16.mxu0 0
    %4983 = vmatpush1.bf16.msra.mxu0 0
    %4984 = vmatprep.subr.bf16.mxu0 0
    %4985 = vmatpush1.bf16.msra.mxu0 0
    %4986 = vmatprep.subr.bf16.mxu0 0
    %4987 = vmatpush1.bf16.msra.mxu0 0
    %4988 = vmatprep.subr.bf16.mxu0 0
    %4989 = vmatpush1.bf16.msra.mxu0 0
    %4990 = vmatprep.subr.bf16.mxu0 0
    %4991 = vmatpush1.bf16.msra.mxu0 0
    %4992 = vmatprep.subr.bf16.mxu0 0
    %4993 = vmatpush1.bf16.msra.mxu0 0
    %4994 = vmatprep.mubr.bf16.mxu0 0
    %4995 = vmatmul.mubr.bf16.gmra.mrb[0].mxu0 %v4954
    %v4996 = vpop.f32.mrb[0].mxu0
    %v4997 = vadd.f32 0.0, %v4996
    %v4998 = vpop.f32.mrb[0].mxu0
    %v4999 = vadd.f32 0.0, %v4998
    %v5000 = vpop.f32.mrb[0].mxu0
    %v5001 = vpop.f32.mrb[0].mxu0
    %5002 = vdwg.mxu0
    %v5003 = vadd.f32 %v4918, %v4997
    %v5004 = vadd.f32 %v4919, %v4999
    %s5005 = scalar_lea.vmem [#allocation32], 720
    %v5006 = vld [vmem:[%s5005] sm:$0xff]
    %v5007 = vld [vmem:[%s5005 + $0x8] sm:$0xff]
    %v5008 = vld [vmem:[%s5005 + $0x10] sm:$0xff]
    %v5009 = vld [vmem:[%s5005 + $0x18] sm:$0xff]
    %v5010 = vld [vmem:[%s5005 + $0x20] sm:$0x11]
    %v5012 = vrot.slane %v4836, 1
    %v5018 = vunpack.c.l.b16 %v5006
    %v5019 = vunpack.c.h.b16 %v5006
    %v5020 = vunpack.c.l.b16 %v5007
    %v5021 = vunpack.c.h.b16 %v5007
    %v5022 = vunpack.c.l.b16 %v5008
    %v5023 = vunpack.c.h.b16 %v5008
    %v5024 = vunpack.c.l.b16 %v5009
    %v5025 = vunpack.c.h.b16 %v5009
    %v5026 = vunpack.c.l.b16 %v5010
    %v5027 = vunpack.c.h.b16 %v5010
    %v5028 = vpack.c.b16 %v5020, %v5018
    %v5029 = vpack.c.b16 %v5021, %v5019
    %v5030 = vpack.c.b16 %v5024, %v5022
    %v5031 = vpack.c.b16 %v5025, %v5023
    %v5032 = vpack.c.b16 %v5026, %v5026
    %v5033 = vpack.c.b16 %v5027, %v5027
    %v5039 = vsel %vm3111, %v5012, 0
    %v5042 = vsel %vm3522, %v5032, 0
    %v5045 = vsel %vm3522, %v5033, 0
    %5047 = vmatprep.subr.bf16.mxu0 %v5029
    %5048 = vmatpush1.bf16.msra.mxu0 %v5028
    %5049 = vmatprep.subr.bf16.mxu0 %v5031
    %5050 = vmatpush1.bf16.msra.mxu0 %v5030
    %5051 = vmatprep.subr.bf16.mxu0 %v5045
    %5052 = vmatpush1.bf16.msra.mxu0 %v5042
    %5053 = vmatprep.subr.bf16.mxu0 0
    %5054 = vmatpush1.bf16.msra.mxu0 0
    %5055 = vmatprep.subr.bf16.mxu0 0
    %5056 = vmatpush1.bf16.msra.mxu0 0
    %5057 = vmatprep.subr.bf16.mxu0 0
    %5058 = vmatpush1.bf16.msra.mxu0 0
    %5059 = vmatprep.subr.bf16.mxu0 0
    %5060 = vmatpush1.bf16.msra.mxu0 0
    %5061 = vmatprep.subr.bf16.mxu0 0
    %5062 = vmatpush1.bf16.msra.mxu0 0
    %5063 = vmatprep.subr.bf16.mxu0 0
    %5064 = vmatpush1.bf16.msra.mxu0 0
    %5065 = vmatprep.subr.bf16.mxu0 0
    %5066 = vmatpush1.bf16.msra.mxu0 0
    %5067 = vmatprep.subr.bf16.mxu0 0
    %5068 = vmatpush1.bf16.msra.mxu0 0
    %5069 = vmatprep.subr.bf16.mxu0 0
    %5070 = vmatpush1.bf16.msra.mxu0 0
    %5071 = vmatprep.subr.bf16.mxu0 0
    %5072 = vmatpush1.bf16.msra.mxu0 0
    %5073 = vmatprep.subr.bf16.mxu0 0
    %5074 = vmatpush1.bf16.msra.mxu0 0
    %5075 = vmatprep.subr.bf16.mxu0 0
    %5076 = vmatpush1.bf16.msra.mxu0 0
    %5077 = vmatprep.subr.bf16.mxu0 0
    %5078 = vmatpush1.bf16.msra.mxu0 0
    %5079 = vmatprep.mubr.bf16.mxu0 0
    %5080 = vmatmul.mubr.bf16.gmra.mrb[0].mxu0 %v5039
    %v5081 = vpop.f32.mrb[0].mxu0
    %v5082 = vadd.f32 0.0, %v5081
    %v5083 = vpop.f32.mrb[0].mxu0
    %v5084 = vadd.f32 0.0, %v5083
    %v5085 = vpop.f32.mrb[0].mxu0
    %v5086 = vpop.f32.mrb[0].mxu0
    %5087 = vdwg.mxu0
    %v5088 = vadd.f32 %v5003, %v5082
    %v5089 = vadd.f32 %v5004, %v5084
    %s5090 = scalar_lea.vmem [#allocation32], 760
    %v5091 = vld [vmem:[%s5090] sm:$0xff]
    %v5092 = vld [vmem:[%s5090 + $0x8] sm:$0xff]
    %v5093 = vld [vmem:[%s5090 + $0x10] sm:$0xff]
    %v5094 = vld [vmem:[%s5090 + $0x18] sm:$0xff]
    %v5095 = vld [vmem:[%s5090 + $0x20] sm:$0x11]
    %v5096 = vrot.slane %v4926, 1
    %v5102 = vunpack.c.l.b16 %v5091
    %v5103 = vunpack.c.h.b16 %v5091
    %v5104 = vunpack.c.l.b16 %v5092
    %v5105 = vunpack.c.h.b16 %v5092
    %v5106 = vunpack.c.l.b16 %v5093
    %v5107 = vunpack.c.h.b16 %v5093
    %v5108 = vunpack.c.l.b16 %v5094
    %v5109 = vunpack.c.h.b16 %v5094
    %v5110 = vunpack.c.l.b16 %v5095
    %v5111 = vunpack.c.h.b16 %v5095
    %v5112 = vpack.c.b16 %v5104, %v5102
    %v5113 = vpack.c.b16 %v5105, %v5103
    %v5114 = vpack.c.b16 %v5108, %v5106
    %v5115 = vpack.c.b16 %v5109, %v5107
    %v5116 = vpack.c.b16 %v5110, %v5110
    %v5117 = vpack.c.b16 %v5111, %v5111
    %v5123 = vsel %vm3111, %v5096, 0
    %v5126 = vsel %vm3522, %v5116, 0
    %v5129 = vsel %vm3522, %v5117, 0
    %5131 = vmatprep.subr.bf16.mxu0 %v5113
    %5132 = vmatpush1.bf16.msra.mxu0 %v5112
    %5133 = vmatprep.subr.bf16.mxu0 %v5115
    %5134 = vmatpush1.bf16.msra.mxu0 %v5114
    %5135 = vmatprep.subr.bf16.mxu0 %v5129
    %5136 = vmatpush1.bf16.msra.mxu0 %v5126
    %5137 = vmatprep.subr.bf16.mxu0 0
    %5138 = vmatpush1.bf16.msra.mxu0 0
    %5139 = vmatprep.subr.bf16.mxu0 0
    %5140 = vmatpush1.bf16.msra.mxu0 0
    %5141 = vmatprep.subr.bf16.mxu0 0
    %5142 = vmatpush1.bf16.msra.mxu0 0
    %5143 = vmatprep.subr.bf16.mxu0 0
    %5144 = vmatpush1.bf16.msra.mxu0 0
    %5145 = vmatprep.subr.bf16.mxu0 0
    %5146 = vmatpush1.bf16.msra.mxu0 0
    %5147 = vmatprep.subr.bf16.mxu0 0
    %5148 = vmatpush1.bf16.msra.mxu0 0
    %5149 = vmatprep.subr.bf16.mxu0 0
    %5150 = vmatpush1.bf16.msra.mxu0 0
    %5151 = vmatprep.subr.bf16.mxu0 0
    %5152 = vmatpush1.bf16.msra.mxu0 0
    %5153 = vmatprep.subr.bf16.mxu0 0
    %5154 = vmatpush1.bf16.msra.mxu0 0
    %5155 = vmatprep.subr.bf16.mxu0 0
    %5156 = vmatpush1.bf16.msra.mxu0 0
    %5157 = vmatprep.subr.bf16.mxu0 0
    %5158 = vmatpush1.bf16.msra.mxu0 0
    %5159 = vmatprep.subr.bf16.mxu0 0
    %5160 = vmatpush1.bf16.msra.mxu0 0
    %5161 = vmatprep.subr.bf16.mxu0 0
    %5162 = vmatpush1.bf16.msra.mxu0 0
    %5163 = vmatprep.mubr.bf16.mxu0 0
    %5164 = vmatmul.mubr.bf16.gmra.mrb[0].mxu0 %v5123
    %v5165 = vpop.f32.mrb[0].mxu0
    %v5166 = vadd.f32 0.0, %v5165
    %v5167 = vpop.f32.mrb[0].mxu0
    %v5168 = vadd.f32 0.0, %v5167
    %v5169 = vpop.f32.mrb[0].mxu0
    %v5170 = vpop.f32.mrb[0].mxu0
    %5171 = vdwg.mxu0
    %v5172 = vadd.f32 %v5088, %v5166
    %v5173 = vadd.f32 %v5089, %v5168
    %s5174 = scalar_lea.vmem [#allocation32], 800
    %v5175 = vld [vmem:[%s5174] sm:$0xff]
    %v5176 = vld [vmem:[%s5174 + $0x8] sm:$0xff]
    %v5177 = vld [vmem:[%s5174 + $0x10] sm:$0xff]
    %v5178 = vld [vmem:[%s5174 + $0x18] sm:$0xff]
    %v5179 = vld [vmem:[%s5174 + $0x20] sm:$0x11]
    %v5180 = vrot.slane %v4836, 2
    %v5186 = vunpack.c.l.b16 %v5175
    %v5187 = vunpack.c.h.b16 %v5175
    %v5188 = vunpack.c.l.b16 %v5176
    %v5189 = vunpack.c.h.b16 %v5176
    %v5190 = vunpack.c.l.b16 %v5177
    %v5191 = vunpack.c.h.b16 %v5177
    %v5192 = vunpack.c.l.b16 %v5178
    %v5193 = vunpack.c.h.b16 %v5178
    %v5194 = vunpack.c.l.b16 %v5179
    %v5195 = vunpack.c.h.b16 %v5179
    %v5196 = vpack.c.b16 %v5188, %v5186
    %v5197 = vpack.c.b16 %v5189, %v5187
    %v5198 = vpack.c.b16 %v5192, %v5190
    %v5199 = vpack.c.b16 %v5193, %v5191
    %v5200 = vpack.c.b16 %v5194, %v5194
    %v5201 = vpack.c.b16 %v5195, %v5195
    %v5207 = vsel %vm3111, %v5180, 0
    %v5210 = vsel %vm3522, %v5200, 0
    %v5213 = vsel %vm3522, %v5201, 0
    %5215 = vmatprep.subr.bf16.mxu0 %v5197
    %5216 = vmatpush1.bf16.msra.mxu0 %v5196
    %5217 = vmatprep.subr.bf16.mxu0 %v5199
    %5218 = vmatpush1.bf16.msra.mxu0 %v5198
    %5219 = vmatprep.subr.bf16.mxu0 %v5213
    %5220 = vmatpush1.bf16.msra.mxu0 %v5210
    %5221 = vmatprep.subr.bf16.mxu0 0
    %5222 = vmatpush1.bf16.msra.mxu0 0
    %5223 = vmatprep.subr.bf16.mxu0 0
    %5224 = vmatpush1.bf16.msra.mxu0 0
    %5225 = vmatprep.subr.bf16.mxu0 0
    %5226 = vmatpush1.bf16.msra.mxu0 0
    %5227 = vmatprep.subr.bf16.mxu0 0
    %5228 = vmatpush1.bf16.msra.mxu0 0
    %5229 = vmatprep.subr.bf16.mxu0 0
    %5230 = vmatpush1.bf16.msra.mxu0 0
    %5231 = vmatprep.subr.bf16.mxu0 0
    %5232 = vmatpush1.bf16.msra.mxu0 0
    %5233 = vmatprep.subr.bf16.mxu0 0
    %5234 = vmatpush1.bf16.msra.mxu0 0
    %5235 = vmatprep.subr.bf16.mxu0 0
    %5236 = vmatpush1.bf16.msra.mxu0 0
    %5237 = vmatprep.subr.bf16.mxu0 0
    %5238 = vmatpush1.bf16.msra.mxu0 0
    %5239 = vmatprep.subr.bf16.mxu0 0
    %5240 = vmatpush1.bf16.msra.mxu0 0
    %5241 = vmatprep.subr.bf16.mxu0 0
    %5242 = vmatpush1.bf16.msra.mxu0 0
    %5243 = vmatprep.subr.bf16.mxu0 0
    %5244 = vmatpush1.bf16.msra.mxu0 0
    %5245 = vmatprep.subr.bf16.mxu0 0
    %5246 = vmatpush1.bf16.msra.mxu0 0
    %5247 = vmatprep.mubr.bf16.mxu0 0
    %5248 = vmatmul.mubr.bf16.gmra.mrb[0].mxu0 %v5207
    %v5249 = vpop.f32.mrb[0].mxu0
    %v5250 = vadd.f32 0.0, %v5249
    %v5251 = vpop.f32.mrb[0].mxu0
    %v5252 = vadd.f32 0.0, %v5251
    %v5253 = vpop.f32.mrb[0].mxu0
    %v5254 = vpop.f32.mrb[0].mxu0
    %5255 = vdwg.mxu0
    %v5256 = vadd.f32 %v5172, %v5250
    %v5257 = vadd.f32 %v5173, %v5252
    %s5258 = scalar_lea.vmem [#allocation32], 840
    %v5259 = vld [vmem:[%s5258] sm:$0xff]
    %v5260 = vld [vmem:[%s5258 + $0x8] sm:$0xff]
    %v5261 = vld [vmem:[%s5258 + $0x10] sm:$0xff]
    %v5262 = vld [vmem:[%s5258 + $0x18] sm:$0xff]
    %v5263 = vld [vmem:[%s5258 + $0x20] sm:$0x11]
    %v5264 = vrot.slane %v4926, 2
    %v5270 = vunpack.c.l.b16 %v5259
    %v5271 = vunpack.c.h.b16 %v5259
    %v5272 = vunpack.c.l.b16 %v5260
    %v5273 = vunpack.c.h.b16 %v5260
    %v5274 = vunpack.c.l.b16 %v5261
    %v5275 = vunpack.c.h.b16 %v5261
    %v5276 = vunpack.c.l.b16 %v5262
    %v5277 = vunpack.c.h.b16 %v5262
    %v5278 = vunpack.c.l.b16 %v5263
    %v5279 = vunpack.c.h.b16 %v5263
    %v5280 = vpack.c.b16 %v5272, %v5270
    %v5281 = vpack.c.b16 %v5273, %v5271
    %v5282 = vpack.c.b16 %v5276, %v5274
    %v5283 = vpack.c.b16 %v5277, %v5275
    %v5284 = vpack.c.b16 %v5278, %v5278
    %v5285 = vpack.c.b16 %v5279, %v5279
    %v5291 = vsel %vm3111, %v5264, 0
    %v5294 = vsel %vm3522, %v5284, 0
    %v5297 = vsel %vm3522, %v5285, 0
    %5299 = vmatprep.subr.bf16.mxu0 %v5281
    %5300 = vmatpush1.bf16.msra.mxu0 %v5280
    %5301 = vmatprep.subr.bf16.mxu0 %v5283
    %5302 = vmatpush1.bf16.msra.mxu0 %v5282
    %5303 = vmatprep.subr.bf16.mxu0 %v5297
    %5304 = vmatpush1.bf16.msra.mxu0 %v5294
    %5305 = vmatprep.subr.bf16.mxu0 0
    %5306 = vmatpush1.bf16.msra.mxu0 0
    %5307 = vmatprep.subr.bf16.mxu0 0
    %5308 = vmatpush1.bf16.msra.mxu0 0
    %5309 = vmatprep.subr.bf16.mxu0 0
    %5310 = vmatpush1.bf16.msra.mxu0 0
    %5311 = vmatprep.subr.bf16.mxu0 0
    %5312 = vmatpush1.bf16.msra.mxu0 0
    %5313 = vmatprep.subr.bf16.mxu0 0
    %5314 = vmatpush1.bf16.msra.mxu0 0
    %5315 = vmatprep.subr.bf16.mxu0 0
    %5316 = vmatpush1.bf16.msra.mxu0 0
    %5317 = vmatprep.subr.bf16.mxu0 0
    %5318 = vmatpush1.bf16.msra.mxu0 0
    %5319 = vmatprep.subr.bf16.mxu0 0
    %5320 = vmatpush1.bf16.msra.mxu0 0
    %5321 = vmatprep.subr.bf16.mxu0 0
    %5322 = vmatpush1.bf16.msra.mxu0 0
    %5323 = vmatprep.subr.bf16.mxu0 0
    %5324 = vmatpush1.bf16.msra.mxu0 0
    %5325 = vmatprep.subr.bf16.mxu0 0
    %5326 = vmatpush1.bf16.msra.mxu0 0
    %5327 = vmatprep.subr.bf16.mxu0 0
    %5328 = vmatpush1.bf16.msra.mxu0 0
    %5329 = vmatprep.subr.bf16.mxu0 0
    %5330 = vmatpush1.bf16.msra.mxu0 0
    %5331 = vmatprep.mubr.bf16.mxu0 0
    %5332 = vmatmul.mubr.bf16.gmra.mrb[0].mxu0 %v5291
    %v5333 = vpop.f32.mrb[0].mxu0
    %v5334 = vadd.f32 0.0, %v5333
    %v5335 = vpop.f32.mrb[0].mxu0
    %v5336 = vadd.f32 0.0, %v5335
    %v5337 = vpop.f32.mrb[0].mxu0
    %v5338 = vpop.f32.mrb[0].mxu0
    %5339 = vdwg.mxu0
    %v5340 = vadd.f32 %v5256, %v5334
    %v5341 = vadd.f32 %v5257, %v5336
    %s5342 = scalar_lea.vmem [#allocation32], 880
    %v5343 = vld [vmem:[%s5342] sm:$0xff]
    %v5344 = vld [vmem:[%s5342 + $0x8] sm:$0xff]
    %v5345 = vld [vmem:[%s5342 + $0x10] sm:$0xff]
    %v5346 = vld [vmem:[%s5342 + $0x18] sm:$0xff]
    %v5347 = vld [vmem:[%s5342 + $0x20] sm:$0x11]
    %v5348 = vrot.slane %v4836, 3
    %v5354 = vunpack.c.l.b16 %v5343
    %v5355 = vunpack.c.h.b16 %v5343
    %v5356 = vunpack.c.l.b16 %v5344
    %v5357 = vunpack.c.h.b16 %v5344
    %v5358 = vunpack.c.l.b16 %v5345
    %v5359 = vunpack.c.h.b16 %v5345
    %v5360 = vunpack.c.l.b16 %v5346
    %v5361 = vunpack.c.h.b16 %v5346
    %v5362 = vunpack.c.l.b16 %v5347
    %v5363 = vunpack.c.h.b16 %v5347
    %v5364 = vpack.c.b16 %v5356, %v5354
    %v5365 = vpack.c.b16 %v5357, %v5355
    %v5366 = vpack.c.b16 %v5360, %v5358
    %v5367 = vpack.c.b16 %v5361, %v5359
    %v5368 = vpack.c.b16 %v5362, %v5362
    %v5369 = vpack.c.b16 %v5363, %v5363
    %v5375 = vsel %vm3111, %v5348, 0
    %v5378 = vsel %vm3522, %v5368, 0
    %v5381 = vsel %vm3522, %v5369, 0
    %5383 = vmatprep.subr.bf16.mxu0 %v5365
    %5384 = vmatpush1.bf16.msra.mxu0 %v5364
    %5385 = vmatprep.subr.bf16.mxu0 %v5367
    %5386 = vmatpush1.bf16.msra.mxu0 %v5366
    %5387 = vmatprep.subr.bf16.mxu0 %v5381
    %5388 = vmatpush1.bf16.msra.mxu0 %v5378
    %5389 = vmatprep.subr.bf16.mxu0 0
    %5390 = vmatpush1.bf16.msra.mxu0 0
    %5391 = vmatprep.subr.bf16.mxu0 0
    %5392 = vmatpush1.bf16.msra.mxu0 0
    %5393 = vmatprep.subr.bf16.mxu0 0
    %5394 = vmatpush1.bf16.msra.mxu0 0
    %5395 = vmatprep.subr.bf16.mxu0 0
    %5396 = vmatpush1.bf16.msra.mxu0 0
    %5397 = vmatprep.subr.bf16.mxu0 0
    %5398 = vmatpush1.bf16.msra.mxu0 0
    %5399 = vmatprep.subr.bf16.mxu0 0
    %5400 = vmatpush1.bf16.msra.mxu0 0
    %5401 = vmatprep.subr.bf16.mxu0 0
    %5402 = vmatpush1.bf16.msra.mxu0 0
    %5403 = vmatprep.subr.bf16.mxu0 0
    %5404 = vmatpush1.bf16.msra.mxu0 0
    %5405 = vmatprep.subr.bf16.mxu0 0
    %5406 = vmatpush1.bf16.msra.mxu0 0
    %5407 = vmatprep.subr.bf16.mxu0 0
    %5408 = vmatpush1.bf16.msra.mxu0 0
    %5409 = vmatprep.subr.bf16.mxu0 0
    %5410 = vmatpush1.bf16.msra.mxu0 0
    %5411 = vmatprep.subr.bf16.mxu0 0
    %5412 = vmatpush1.bf16.msra.mxu0 0
    %5413 = vmatprep.subr.bf16.mxu0 0
    %5414 = vmatpush1.bf16.msra.mxu0 0
    %5415 = vmatprep.mubr.bf16.mxu0 0
    %5416 = vmatmul.mubr.bf16.gmra.mrb[0].mxu0 %v5375
    %v5417 = vpop.f32.mrb[0].mxu0
    %v5418 = vadd.f32 0.0, %v5417
    %v5419 = vpop.f32.mrb[0].mxu0
    %v5420 = vadd.f32 0.0, %v5419
    %v5421 = vpop.f32.mrb[0].mxu0
    %v5422 = vpop.f32.mrb[0].mxu0
    %5423 = vdwg.mxu0
    %v5424 = vadd.f32 %v5340, %v5418
    %v5425 = vadd.f32 %v5341, %v5420
    %s5426 = scalar_lea.vmem [#allocation32], 920
    %v5427 = vld [vmem:[%s5426] sm:$0xff]
    %v5428 = vld [vmem:[%s5426 + $0x8] sm:$0xff]
    %v5429 = vld [vmem:[%s5426 + $0x10] sm:$0xff]
    %v5430 = vld [vmem:[%s5426 + $0x18] sm:$0xff]
    %v5431 = vld [vmem:[%s5426 + $0x20] sm:$0x11]
    %v5432 = vrot.slane %v4926, 3
    %v5438 = vunpack.c.l.b16 %v5427
    %v5439 = vunpack.c.h.b16 %v5427
    %v5440 = vunpack.c.l.b16 %v5428
    %v5441 = vunpack.c.h.b16 %v5428
    %v5442 = vunpack.c.l.b16 %v5429
    %v5443 = vunpack.c.h.b16 %v5429
    %v5444 = vunpack.c.l.b16 %v5430
    %v5445 = vunpack.c.h.b16 %v5430
    %v5446 = vunpack.c.l.b16 %v5431
    %v5447 = vunpack.c.h.b16 %v5431
    %v5448 = vpack.c.b16 %v5440, %v5438
    %v5449 = vpack.c.b16 %v5441, %v5439
    %v5450 = vpack.c.b16 %v5444, %v5442
    %v5451 = vpack.c.b16 %v5445, %v5443
    %v5452 = vpack.c.b16 %v5446, %v5446
    %v5453 = vpack.c.b16 %v5447, %v5447
    %v5459 = vsel %vm3111, %v5432, 0
    %v5462 = vsel %vm3522, %v5452, 0
    %v5465 = vsel %vm3522, %v5453, 0
    %5467 = vmatprep.subr.bf16.mxu0 %v5449
    %5468 = vmatpush1.bf16.msra.mxu0 %v5448
    %5469 = vmatprep.subr.bf16.mxu0 %v5451
    %5470 = vmatpush1.bf16.msra.mxu0 %v5450
    %5471 = vmatprep.subr.bf16.mxu0 %v5465
    %5472 = vmatpush1.bf16.msra.mxu0 %v5462
    %5473 = vmatprep.subr.bf16.mxu0 0
    %5474 = vmatpush1.bf16.msra.mxu0 0
    %5475 = vmatprep.subr.bf16.mxu0 0
    %5476 = vmatpush1.bf16.msra.mxu0 0
    %5477 = vmatprep.subr.bf16.mxu0 0
    %5478 = vmatpush1.bf16.msra.mxu0 0
    %5479 = vmatprep.subr.bf16.mxu0 0
    %5480 = vmatpush1.bf16.msra.mxu0 0
    %5481 = vmatprep.subr.bf16.mxu0 0
    %5482 = vmatpush1.bf16.msra.mxu0 0
    %5483 = vmatprep.subr.bf16.mxu0 0
    %5484 = vmatpush1.bf16.msra.mxu0 0
    %5485 = vmatprep.subr.bf16.mxu0 0
    %5486 = vmatpush1.bf16.msra.mxu0 0
    %5487 = vmatprep.subr.bf16.mxu0 0
    %5488 = vmatpush1.bf16.msra.mxu0 0
    %5489 = vmatprep.subr.bf16.mxu0 0
    %5490 = vmatpush1.bf16.msra.mxu0 0
    %5491 = vmatprep.subr.bf16.mxu0 0
    %5492 = vmatpush1.bf16.msra.mxu0 0
    %5493 = vmatprep.subr.bf16.mxu0 0
    %5494 = vmatpush1.bf16.msra.mxu0 0
    %5495 = vmatprep.subr.bf16.mxu0 0
    %5496 = vmatpush1.bf16.msra.mxu0 0
    %5497 = vmatprep.subr.bf16.mxu0 0
    %5498 = vmatpush1.bf16.msra.mxu0 0
    %5499 = vmatprep.mubr.bf16.mxu0 0
    %5500 = vmatmul.mubr.bf16.gmra.mrb[0].mxu0 %v5459
    %v5501 = vpop.f32.mrb[0].mxu0
    %v5502 = vadd.f32 0.0, %v5501
    %v5503 = vpop.f32.mrb[0].mxu0
    %v5504 = vadd.f32 0.0, %v5503
    %v5505 = vpop.f32.mrb[0].mxu0
    %v5506 = vpop.f32.mrb[0].mxu0
    %5507 = vdwg.mxu0
    %v5508 = vadd.f32 %v5424, %v5502
    %v5509 = vadd.f32 %v5425, %v5504
    %v5510 = vpack.c.bf16 %v3196, %v3196
    %s5511 = scalar_lea.vmem [#allocation32], 960
    %v5512 = vld [vmem:[%s5511] sm:$0xff]
    %v5513 = vld [vmem:[%s5511 + $0x8] sm:$0xff]
    %v5514 = vld [vmem:[%s5511 + $0x10] sm:$0xff]
    %v5515 = vld [vmem:[%s5511 + $0x18] sm:$0xff]
    %v5516 = vld [vmem:[%s5511 + $0x20] sm:$0x11]
    %v5522 = vunpack.c.l.b16 %v5512
    %v5523 = vunpack.c.h.b16 %v5512
    %v5524 = vunpack.c.l.b16 %v5513
    %v5525 = vunpack.c.h.b16 %v5513
    %v5526 = vunpack.c.l.b16 %v5514
    %v5527 = vunpack.c.h.b16 %v5514
    %v5528 = vunpack.c.l.b16 %v5515
    %v5529 = vunpack.c.h.b16 %v5515
    %v5530 = vunpack.c.l.b16 %v5516
    %v5531 = vunpack.c.h.b16 %v5516
    %v5532 = vpack.c.b16 %v5524, %v5522
    %v5533 = vpack.c.b16 %v5525, %v5523
    %v5534 = vpack.c.b16 %v5528, %v5526
    %v5535 = vpack.c.b16 %v5529, %v5527
    %v5536 = vpack.c.b16 %v5530, %v5530
    %v5537 = vpack.c.b16 %v5531, %v5531
    %v5543 = vsel %vm3111, %v5510, 0
    %v5546 = vsel %vm3522, %v5536, 0
    %v5549 = vsel %vm3522, %v5537, 0
    %5551 = vmatprep.subr.bf16.mxu0 %v5533
    %5552 = vmatpush1.bf16.msra.mxu0 %v5532
    %5553 = vmatprep.subr.bf16.mxu0 %v5535
    %5554 = vmatpush1.bf16.msra.mxu0 %v5534
    %5555 = vmatprep.subr.bf16.mxu0 %v5549
    %5556 = vmatpush1.bf16.msra.mxu0 %v5546
    %5557 = vmatprep.subr.bf16.mxu0 0
    %5558 = vmatpush1.bf16.msra.mxu0 0
    %5559 = vmatprep.subr.bf16.mxu0 0
    %5560 = vmatpush1.bf16.msra.mxu0 0
    %5561 = vmatprep.subr.bf16.mxu0 0
    %5562 = vmatpush1.bf16.msra.mxu0 0
    %5563 = vmatprep.subr.bf16.mxu0 0
    %5564 = vmatpush1.bf16.msra.mxu0 0
    %5565 = vmatprep.subr.bf16.mxu0 0
    %5566 = vmatpush1.bf16.msra.mxu0 0
    %5567 = vmatprep.subr.bf16.mxu0 0
    %5568 = vmatpush1.bf16.msra.mxu0 0
    %5569 = vmatprep.subr.bf16.mxu0 0
    %5570 = vmatpush1.bf16.msra.mxu0 0
    %5571 = vmatprep.subr.bf16.mxu0 0
    %5572 = vmatpush1.bf16.msra.mxu0 0
    %5573 = vmatprep.subr.bf16.mxu0 0
    %5574 = vmatpush1.bf16.msra.mxu0 0
    %5575 = vmatprep.subr.bf16.mxu0 0
    %5576 = vmatpush1.bf16.msra.mxu0 0
    %5577 = vmatprep.subr.bf16.mxu0 0
    %5578 = vmatpush1.bf16.msra.mxu0 0
    %5579 = vmatprep.subr.bf16.mxu0 0
    %5580 = vmatpush1.bf16.msra.mxu0 0
    %5581 = vmatprep.subr.bf16.mxu0 0
    %5582 = vmatpush1.bf16.msra.mxu0 0
    %5583 = vmatprep.mubr.bf16.mxu0 0
    %5584 = vmatmul.mubr.bf16.gmra.mrb[0].mxu0 %v5543
    %v5585 = vpop.f32.mrb[0].mxu0
    %v5586 = vadd.f32 0.0, %v5585
    %v5587 = vpop.f32.mrb[0].mxu0
    %v5588 = vadd.f32 0.0, %v5587
    %v5589 = vpop.f32.mrb[0].mxu0
    %v5590 = vpop.f32.mrb[0].mxu0
    %5591 = vdwg.mxu0
    %v5592 = vadd.f32 %v5508, %v5586
    %v5593 = vadd.f32 %v5509, %v5588
    %s5594 = scalar_lea.vmem [#allocation32], 1000
    %v5595 = vld [vmem:[%s5594] sm:$0xff]
    %v5596 = vld [vmem:[%s5594 + $0x8] sm:$0xff]
    %v5597 = vld [vmem:[%s5594 + $0x10] sm:$0xff]
    %v5598 = vld [vmem:[%s5594 + $0x18] sm:$0xff]
    %v5599 = vld [vmem:[%s5594 + $0x20] sm:$0x11]
    %v5600 = vshrl.u32 %v5510, 16
    %v5607 = vunpack.c.l.b16 %v5595
    %v5608 = vunpack.c.h.b16 %v5595
    %v5609 = vunpack.c.l.b16 %v5596
    %v5610 = vunpack.c.h.b16 %v5596
    %v5611 = vunpack.c.l.b16 %v5597
    %v5612 = vunpack.c.h.b16 %v5597
    %v5613 = vunpack.c.l.b16 %v5598
    %v5614 = vunpack.c.h.b16 %v5598
    %v5615 = vunpack.c.l.b16 %v5599
    %v5616 = vunpack.c.h.b16 %v5599
    %v5617 = vpack.c.b16 %v5609, %v5607
    %v5618 = vpack.c.b16 %v5610, %v5608
    %v5619 = vpack.c.b16 %v5613, %v5611
    %v5620 = vpack.c.b16 %v5614, %v5612
    %v5621 = vpack.c.b16 %v5615, %v5615
    %v5622 = vpack.c.b16 %v5616, %v5616
    %v5628 = vsel %vm3111, %v5600, 0
    %v5631 = vsel %vm3522, %v5621, 0
    %v5634 = vsel %vm3522, %v5622, 0
    %5636 = vmatprep.subr.bf16.mxu0 %v5618
    %5637 = vmatpush1.bf16.msra.mxu0 %v5617
    %5638 = vmatprep.subr.bf16.mxu0 %v5620
    %5639 = vmatpush1.bf16.msra.mxu0 %v5619
    %5640 = vmatprep.subr.bf16.mxu0 %v5634
    %5641 = vmatpush1.bf16.msra.mxu0 %v5631
    %5642 = vmatprep.subr.bf16.mxu0 0
    %5643 = vmatpush1.bf16.msra.mxu0 0
    %5644 = vmatprep.subr.bf16.mxu0 0
    %5645 = vmatpush1.bf16.msra.mxu0 0
    %5646 = vmatprep.subr.bf16.mxu0 0
    %5647 = vmatpush1.bf16.msra.mxu0 0
    %5648 = vmatprep.subr.bf16.mxu0 0
    %5649 = vmatpush1.bf16.msra.mxu0 0
    %5650 = vmatprep.subr.bf16.mxu0 0
    %5651 = vmatpush1.bf16.msra.mxu0 0
    %5652 = vmatprep.subr.bf16.mxu0 0
    %5653 = vmatpush1.bf16.msra.mxu0 0
    %5654 = vmatprep.subr.bf16.mxu0 0
    %5655 = vmatpush1.bf16.msra.mxu0 0
    %5656 = vmatprep.subr.bf16.mxu0 0
    %5657 = vmatpush1.bf16.msra.mxu0 0
    %5658 = vmatprep.subr.bf16.mxu0 0
    %5659 = vmatpush1.bf16.msra.mxu0 0
    %5660 = vmatprep.subr.bf16.mxu0 0
    %5661 = vmatpush1.bf16.msra.mxu0 0
    %5662 = vmatprep.subr.bf16.mxu0 0
    %5663 = vmatpush1.bf16.msra.mxu0 0
    %5664 = vmatprep.subr.bf16.mxu0 0
    %5665 = vmatpush1.bf16.msra.mxu0 0
    %5666 = vmatprep.subr.bf16.mxu0 0
    %5667 = vmatpush1.bf16.msra.mxu0 0
    %5668 = vmatprep.mubr.bf16.mxu0 0
    %5669 = vmatmul.mubr.bf16.gmra.mrb[0].mxu0 %v5628
    %v5670 = vpop.f32.mrb[0].mxu0
    %v5671 = vadd.f32 0.0, %v5670
    %v5672 = vpop.f32.mrb[0].mxu0
    %v5673 = vadd.f32 0.0, %v5672
    %v5674 = vpop.f32.mrb[0].mxu0
    %v5675 = vpop.f32.mrb[0].mxu0
    %5676 = vdwg.mxu0
    %v5677 = vadd.f32 %v5592, %v5671
    %v5678 = vadd.f32 %v5593, %v5673
    %s5679 = scalar_lea.vmem [#allocation32], 1040
    %v5680 = vld [vmem:[%s5679] sm:$0xff]
    %v5681 = vld [vmem:[%s5679 + $0x8] sm:$0xff]
    %v5682 = vld [vmem:[%s5679 + $0x10] sm:$0xff]
    %v5683 = vld [vmem:[%s5679 + $0x18] sm:$0xff]
    %v5684 = vld [vmem:[%s5679 + $0x20] sm:$0x11]
    %v5686 = vrot.slane %v5510, 1
    %v5692 = vunpack.c.l.b16 %v5680
    %v5693 = vunpack.c.h.b16 %v5680
    %v5694 = vunpack.c.l.b16 %v5681
    %v5695 = vunpack.c.h.b16 %v5681
    %v5696 = vunpack.c.l.b16 %v5682
    %v5697 = vunpack.c.h.b16 %v5682
    %v5698 = vunpack.c.l.b16 %v5683
    %v5699 = vunpack.c.h.b16 %v5683
    %v5700 = vunpack.c.l.b16 %v5684
    %v5701 = vunpack.c.h.b16 %v5684
    %v5702 = vpack.c.b16 %v5694, %v5692
    %v5703 = vpack.c.b16 %v5695, %v5693
    %v5704 = vpack.c.b16 %v5698, %v5696
    %v5705 = vpack.c.b16 %v5699, %v5697
    %v5706 = vpack.c.b16 %v5700, %v5700
    %v5707 = vpack.c.b16 %v5701, %v5701
    %v5713 = vsel %vm3111, %v5686, 0
    %v5716 = vsel %vm3522, %v5706, 0
    %v5719 = vsel %vm3522, %v5707, 0
    %5721 = vmatprep.subr.bf16.mxu0 %v5703
    %5722 = vmatpush1.bf16.msra.mxu0 %v5702
    %5723 = vmatprep.subr.bf16.mxu0 %v5705
    %5724 = vmatpush1.bf16.msra.mxu0 %v5704
    %5725 = vmatprep.subr.bf16.mxu0 %v5719
    %5726 = vmatpush1.bf16.msra.mxu0 %v5716
    %5727 = vmatprep.subr.bf16.mxu0 0
    %5728 = vmatpush1.bf16.msra.mxu0 0
    %5729 = vmatprep.subr.bf16.mxu0 0
    %5730 = vmatpush1.bf16.msra.mxu0 0
    %5731 = vmatprep.subr.bf16.mxu0 0
    %5732 = vmatpush1.bf16.msra.mxu0 0
    %5733 = vmatprep.subr.bf16.mxu0 0
    %5734 = vmatpush1.bf16.msra.mxu0 0
    %5735 = vmatprep.subr.bf16.mxu0 0
    %5736 = vmatpush1.bf16.msra.mxu0 0
    %5737 = vmatprep.subr.bf16.mxu0 0
    %5738 = vmatpush1.bf16.msra.mxu0 0
    %5739 = vmatprep.subr.bf16.mxu0 0
    %5740 = vmatpush1.bf16.msra.mxu0 0
    %5741 = vmatprep.subr.bf16.mxu0 0
    %5742 = vmatpush1.bf16.msra.mxu0 0
    %5743 = vmatprep.subr.bf16.mxu0 0
    %5744 = vmatpush1.bf16.msra.mxu0 0
    %5745 = vmatprep.subr.bf16.mxu0 0
    %5746 = vmatpush1.bf16.msra.mxu0 0
    %5747 = vmatprep.subr.bf16.mxu0 0
    %5748 = vmatpush1.bf16.msra.mxu0 0
    %5749 = vmatprep.subr.bf16.mxu0 0
    %5750 = vmatpush1.bf16.msra.mxu0 0
    %5751 = vmatprep.subr.bf16.mxu0 0
    %5752 = vmatpush1.bf16.msra.mxu0 0
    %5753 = vmatprep.mubr.bf16.mxu0 0
    %5754 = vmatmul.mubr.bf16.gmra.mrb[0].mxu0 %v5713
    %v5755 = vpop.f32.mrb[0].mxu0
    %v5756 = vadd.f32 0.0, %v5755
    %v5757 = vpop.f32.mrb[0].mxu0
    %v5758 = vadd.f32 0.0, %v5757
    %v5759 = vpop.f32.mrb[0].mxu0
    %v5760 = vpop.f32.mrb[0].mxu0
    %5761 = vdwg.mxu0
    %v5762 = vadd.f32 %v5677, %v5756
    %v5763 = vadd.f32 %v5678, %v5758
    %s5764 = scalar_lea.vmem [#allocation32], 1080
    %v5765 = vld [vmem:[%s5764] sm:$0xff]
    %v5766 = vld [vmem:[%s5764 + $0x8] sm:$0xff]
    %v5767 = vld [vmem:[%s5764 + $0x10] sm:$0xff]
    %v5768 = vld [vmem:[%s5764 + $0x18] sm:$0xff]
    %v5769 = vld [vmem:[%s5764 + $0x20] sm:$0x11]
    %v5770 = vrot.slane %v5600, 1
    %v5776 = vunpack.c.l.b16 %v5765
    %v5777 = vunpack.c.h.b16 %v5765
    %v5778 = vunpack.c.l.b16 %v5766
    %v5779 = vunpack.c.h.b16 %v5766
    %v5780 = vunpack.c.l.b16 %v5767
    %v5781 = vunpack.c.h.b16 %v5767
    %v5782 = vunpack.c.l.b16 %v5768
    %v5783 = vunpack.c.h.b16 %v5768
    %v5784 = vunpack.c.l.b16 %v5769
    %v5785 = vunpack.c.h.b16 %v5769
    %v5786 = vpack.c.b16 %v5778, %v5776
    %v5787 = vpack.c.b16 %v5779, %v5777
    %v5788 = vpack.c.b16 %v5782, %v5780
    %v5789 = vpack.c.b16 %v5783, %v5781
    %v5790 = vpack.c.b16 %v5784, %v5784
    %v5791 = vpack.c.b16 %v5785, %v5785
    %v5797 = vsel %vm3111, %v5770, 0
    %v5800 = vsel %vm3522, %v5790, 0
    %v5803 = vsel %vm3522, %v5791, 0
    %5805 = vmatprep.subr.bf16.mxu0 %v5787
    %5806 = vmatpush1.bf16.msra.mxu0 %v5786
    %5807 = vmatprep.subr.bf16.mxu0 %v5789
    %5808 = vmatpush1.bf16.msra.mxu0 %v5788
    %5809 = vmatprep.subr.bf16.mxu0 %v5803
    %5810 = vmatpush1.bf16.msra.mxu0 %v5800
    %5811 = vmatprep.subr.bf16.mxu0 0
    %5812 = vmatpush1.bf16.msra.mxu0 0
    %5813 = vmatprep.subr.bf16.mxu0 0
    %5814 = vmatpush1.bf16.msra.mxu0 0
    %5815 = vmatprep.subr.bf16.mxu0 0
    %5816 = vmatpush1.bf16.msra.mxu0 0
    %5817 = vmatprep.subr.bf16.mxu0 0
    %5818 = vmatpush1.bf16.msra.mxu0 0
    %5819 = vmatprep.subr.bf16.mxu0 0
    %5820 = vmatpush1.bf16.msra.mxu0 0
    %5821 = vmatprep.subr.bf16.mxu0 0
    %5822 = vmatpush1.bf16.msra.mxu0 0
    %5823 = vmatprep.subr.bf16.mxu0 0
    %5824 = vmatpush1.bf16.msra.mxu0 0
    %5825 = vmatprep.subr.bf16.mxu0 0
    %5826 = vmatpush1.bf16.msra.mxu0 0
    %5827 = vmatprep.subr.bf16.mxu0 0
    %5828 = vmatpush1.bf16.msra.mxu0 0
    %5829 = vmatprep.subr.bf16.mxu0 0
    %5830 = vmatpush1.bf16.msra.mxu0 0
    %5831 = vmatprep.subr.bf16.mxu0 0
    %5832 = vmatpush1.bf16.msra.mxu0 0
    %5833 = vmatprep.subr.bf16.mxu0 0
    %5834 = vmatpush1.bf16.msra.mxu0 0
    %5835 = vmatprep.subr.bf16.mxu0 0
    %5836 = vmatpush1.bf16.msra.mxu0 0
    %5837 = vmatprep.mubr.bf16.mxu0 0
    %5838 = vmatmul.mubr.bf16.gmra.mrb[0].mxu0 %v5797
    %v5839 = vpop.f32.mrb[0].mxu0
    %v5840 = vadd.f32 0.0, %v5839
    %v5841 = vpop.f32.mrb[0].mxu0
    %v5842 = vadd.f32 0.0, %v5841
    %v5843 = vpop.f32.mrb[0].mxu0
    %v5844 = vpop.f32.mrb[0].mxu0
    %5845 = vdwg.mxu0
    %v5846 = vadd.f32 %v5762, %v5840
    %v5847 = vadd.f32 %v5763, %v5842
    %s5848 = scalar_lea.vmem [#allocation32], 1120
    %v5849 = vld [vmem:[%s5848] sm:$0xff]
    %v5850 = vld [vmem:[%s5848 + $0x8] sm:$0xff]
    %v5851 = vld [vmem:[%s5848 + $0x10] sm:$0xff]
    %v5852 = vld [vmem:[%s5848 + $0x18] sm:$0xff]
    %v5853 = vld [vmem:[%s5848 + $0x20] sm:$0x11]
    %v5854 = vrot.slane %v5510, 2
    %v5860 = vunpack.c.l.b16 %v5849
    %v5861 = vunpack.c.h.b16 %v5849
    %v5862 = vunpack.c.l.b16 %v5850
    %v5863 = vunpack.c.h.b16 %v5850
    %v5864 = vunpack.c.l.b16 %v5851
    %v5865 = vunpack.c.h.b16 %v5851
    %v5866 = vunpack.c.l.b16 %v5852
    %v5867 = vunpack.c.h.b16 %v5852
    %v5868 = vunpack.c.l.b16 %v5853
    %v5869 = vunpack.c.h.b16 %v5853
    %v5870 = vpack.c.b16 %v5862, %v5860
    %v5871 = vpack.c.b16 %v5863, %v5861
    %v5872 = vpack.c.b16 %v5866, %v5864
    %v5873 = vpack.c.b16 %v5867, %v5865
    %v5874 = vpack.c.b16 %v5868, %v5868
    %v5875 = vpack.c.b16 %v5869, %v5869
    %v5881 = vsel %vm3111, %v5854, 0
    %v5884 = vsel %vm3522, %v5874, 0
    %v5887 = vsel %vm3522, %v5875, 0
    %5889 = vmatprep.subr.bf16.mxu0 %v5871
    %5890 = vmatpush1.bf16.msra.mxu0 %v5870
    %5891 = vmatprep.subr.bf16.mxu0 %v5873
    %5892 = vmatpush1.bf16.msra.mxu0 %v5872
    %5893 = vmatprep.subr.bf16.mxu0 %v5887
    %5894 = vmatpush1.bf16.msra.mxu0 %v5884
    %5895 = vmatprep.subr.bf16.mxu0 0
    %5896 = vmatpush1.bf16.msra.mxu0 0
    %5897 = vmatprep.subr.bf16.mxu0 0
    %5898 = vmatpush1.bf16.msra.mxu0 0
    %5899 = vmatprep.subr.bf16.mxu0 0
    %5900 = vmatpush1.bf16.msra.mxu0 0
    %5901 = vmatprep.subr.bf16.mxu0 0
    %5902 = vmatpush1.bf16.msra.mxu0 0
    %5903 = vmatprep.subr.bf16.mxu0 0
    %5904 = vmatpush1.bf16.msra.mxu0 0
    %5905 = vmatprep.subr.bf16.mxu0 0
    %5906 = vmatpush1.bf16.msra.mxu0 0
    %5907 = vmatprep.subr.bf16.mxu0 0
    %5908 = vmatpush1.bf16.msra.mxu0 0
    %5909 = vmatprep.subr.bf16.mxu0 0
    %5910 = vmatpush1.bf16.msra.mxu0 0
    %5911 = vmatprep.subr.bf16.mxu0 0
    %5912 = vmatpush1.bf16.msra.mxu0 0
    %5913 = vmatprep.subr.bf16.mxu0 0
    %5914 = vmatpush1.bf16.msra.mxu0 0
    %5915 = vmatprep.subr.bf16.mxu0 0
    %5916 = vmatpush1.bf16.msra.mxu0 0
    %5917 = vmatprep.subr.bf16.mxu0 0
    %5918 = vmatpush1.bf16.msra.mxu0 0
    %5919 = vmatprep.subr.bf16.mxu0 0
    %5920 = vmatpush1.bf16.msra.mxu0 0
    %5921 = vmatprep.mubr.bf16.mxu0 0
    %5922 = vmatmul.mubr.bf16.gmra.mrb[0].mxu0 %v5881
    %v5923 = vpop.f32.mrb[0].mxu0
    %v5924 = vadd.f32 0.0, %v5923
    %v5925 = vpop.f32.mrb[0].mxu0
    %v5926 = vadd.f32 0.0, %v5925
    %v5927 = vpop.f32.mrb[0].mxu0
    %v5928 = vpop.f32.mrb[0].mxu0
    %5929 = vdwg.mxu0
    %v5930 = vadd.f32 %v5846, %v5924
    %v5931 = vadd.f32 %v5847, %v5926
    %s5932 = scalar_lea.vmem [#allocation32], 1160
    %v5933 = vld [vmem:[%s5932] sm:$0xff]
    %v5934 = vld [vmem:[%s5932 + $0x8] sm:$0xff]
    %v5935 = vld [vmem:[%s5932 + $0x10] sm:$0xff]
    %v5936 = vld [vmem:[%s5932 + $0x18] sm:$0xff]
    %v5937 = vld [vmem:[%s5932 + $0x20] sm:$0x11]
    %v5938 = vrot.slane %v5600, 2
    %v5944 = vunpack.c.l.b16 %v5933
    %v5945 = vunpack.c.h.b16 %v5933
    %v5946 = vunpack.c.l.b16 %v5934
    %v5947 = vunpack.c.h.b16 %v5934
    %v5948 = vunpack.c.l.b16 %v5935
    %v5949 = vunpack.c.h.b16 %v5935
    %v5950 = vunpack.c.l.b16 %v5936
    %v5951 = vunpack.c.h.b16 %v5936
    %v5952 = vunpack.c.l.b16 %v5937
    %v5953 = vunpack.c.h.b16 %v5937
    %v5954 = vpack.c.b16 %v5946, %v5944
    %v5955 = vpack.c.b16 %v5947, %v5945
    %v5956 = vpack.c.b16 %v5950, %v5948
    %v5957 = vpack.c.b16 %v5951, %v5949
    %v5958 = vpack.c.b16 %v5952, %v5952
    %v5959 = vpack.c.b16 %v5953, %v5953
    %v5965 = vsel %vm3111, %v5938, 0
    %v5968 = vsel %vm3522, %v5958, 0
    %v5971 = vsel %vm3522, %v5959, 0
    %5973 = vmatprep.subr.bf16.mxu0 %v5955
    %5974 = vmatpush1.bf16.msra.mxu0 %v5954
    %5975 = vmatprep.subr.bf16.mxu0 %v5957
    %5976 = vmatpush1.bf16.msra.mxu0 %v5956
    %5977 = vmatprep.subr.bf16.mxu0 %v5971
    %5978 = vmatpush1.bf16.msra.mxu0 %v5968
    %5979 = vmatprep.subr.bf16.mxu0 0
    %5980 = vmatpush1.bf16.msra.mxu0 0
    %5981 = vmatprep.subr.bf16.mxu0 0
    %5982 = vmatpush1.bf16.msra.mxu0 0
    %5983 = vmatprep.subr.bf16.mxu0 0
    %5984 = vmatpush1.bf16.msra.mxu0 0
    %5985 = vmatprep.subr.bf16.mxu0 0
    %5986 = vmatpush1.bf16.msra.mxu0 0
    %5987 = vmatprep.subr.bf16.mxu0 0
    %5988 = vmatpush1.bf16.msra.mxu0 0
    %5989 = vmatprep.subr.bf16.mxu0 0
    %5990 = vmatpush1.bf16.msra.mxu0 0
    %5991 = vmatprep.subr.bf16.mxu0 0
    %5992 = vmatpush1.bf16.msra.mxu0 0
    %5993 = vmatprep.subr.bf16.mxu0 0
    %5994 = vmatpush1.bf16.msra.mxu0 0
    %5995 = vmatprep.subr.bf16.mxu0 0
    %5996 = vmatpush1.bf16.msra.mxu0 0
    %5997 = vmatprep.subr.bf16.mxu0 0
    %5998 = vmatpush1.bf16.msra.mxu0 0
    %5999 = vmatprep.subr.bf16.mxu0 0
    %6000 = vmatpush1.bf16.msra.mxu0 0
    %6001 = vmatprep.subr.bf16.mxu0 0
    %6002 = vmatpush1.bf16.msra.mxu0 0
    %6003 = vmatprep.subr.bf16.mxu0 0
    %6004 = vmatpush1.bf16.msra.mxu0 0
    %6005 = vmatprep.mubr.bf16.mxu0 0
    %6006 = vmatmul.mubr.bf16.gmra.mrb[0].mxu0 %v5965
    %v6007 = vpop.f32.mrb[0].mxu0
    %v6008 = vadd.f32 0.0, %v6007
    %v6009 = vpop.f32.mrb[0].mxu0
    %v6010 = vadd.f32 0.0, %v6009
    %v6011 = vpop.f32.mrb[0].mxu0
    %v6012 = vpop.f32.mrb[0].mxu0
    %6013 = vdwg.mxu0
    %v6014 = vadd.f32 %v5930, %v6008
    %v6015 = vadd.f32 %v5931, %v6010
    %s6016 = scalar_lea.vmem [#allocation32], 1200
    %v6017 = vld [vmem:[%s6016] sm:$0xff]
    %v6018 = vld [vmem:[%s6016 + $0x8] sm:$0xff]
    %v6019 = vld [vmem:[%s6016 + $0x10] sm:$0xff]
    %v6020 = vld [vmem:[%s6016 + $0x18] sm:$0xff]
    %v6021 = vld [vmem:[%s6016 + $0x20] sm:$0x11]
    %v6022 = vrot.slane %v5510, 3
    %v6028 = vunpack.c.l.b16 %v6017
    %v6029 = vunpack.c.h.b16 %v6017
    %v6030 = vunpack.c.l.b16 %v6018
    %v6031 = vunpack.c.h.b16 %v6018
    %v6032 = vunpack.c.l.b16 %v6019
    %v6033 = vunpack.c.h.b16 %v6019
    %v6034 = vunpack.c.l.b16 %v6020
    %v6035 = vunpack.c.h.b16 %v6020
    %v6036 = vunpack.c.l.b16 %v6021
    %v6037 = vunpack.c.h.b16 %v6021
    %v6038 = vpack.c.b16 %v6030, %v6028
    %v6039 = vpack.c.b16 %v6031, %v6029
    %v6040 = vpack.c.b16 %v6034, %v6032
    %v6041 = vpack.c.b16 %v6035, %v6033
    %v6042 = vpack.c.b16 %v6036, %v6036
    %v6043 = vpack.c.b16 %v6037, %v6037
    %v6049 = vsel %vm3111, %v6022, 0
    %v6052 = vsel %vm3522, %v6042, 0
    %v6055 = vsel %vm3522, %v6043, 0
    %6057 = vmatprep.subr.bf16.mxu0 %v6039
    %6058 = vmatpush1.bf16.msra.mxu0 %v6038
    %6059 = vmatprep.subr.bf16.mxu0 %v6041
    %6060 = vmatpush1.bf16.msra.mxu0 %v6040
    %6061 = vmatprep.subr.bf16.mxu0 %v6055
    %6062 = vmatpush1.bf16.msra.mxu0 %v6052
    %6063 = vmatprep.subr.bf16.mxu0 0
    %6064 = vmatpush1.bf16.msra.mxu0 0
    %6065 = vmatprep.subr.bf16.mxu0 0
    %6066 = vmatpush1.bf16.msra.mxu0 0
    %6067 = vmatprep.subr.bf16.mxu0 0
    %6068 = vmatpush1.bf16.msra.mxu0 0
    %6069 = vmatprep.subr.bf16.mxu0 0
    %6070 = vmatpush1.bf16.msra.mxu0 0
    %6071 = vmatprep.subr.bf16.mxu0 0
    %6072 = vmatpush1.bf16.msra.mxu0 0
    %6073 = vmatprep.subr.bf16.mxu0 0
    %6074 = vmatpush1.bf16.msra.mxu0 0
    %6075 = vmatprep.subr.bf16.mxu0 0
    %6076 = vmatpush1.bf16.msra.mxu0 0
    %6077 = vmatprep.subr.bf16.mxu0 0
    %6078 = vmatpush1.bf16.msra.mxu0 0
    %6079 = vmatprep.subr.bf16.mxu0 0
    %6080 = vmatpush1.bf16.msra.mxu0 0
    %6081 = vmatprep.subr.bf16.mxu0 0
    %6082 = vmatpush1.bf16.msra.mxu0 0
    %6083 = vmatprep.subr.bf16.mxu0 0
    %6084 = vmatpush1.bf16.msra.mxu0 0
    %6085 = vmatprep.subr.bf16.mxu0 0
    %6086 = vmatpush1.bf16.msra.mxu0 0
    %6087 = vmatprep.subr.bf16.mxu0 0
    %6088 = vmatpush1.bf16.msra.mxu0 0
    %6089 = vmatprep.mubr.bf16.mxu0 0
    %6090 = vmatmul.mubr.bf16.gmra.mrb[0].mxu0 %v6049
    %v6091 = vpop.f32.mrb[0].mxu0
    %v6092 = vadd.f32 0.0, %v6091
    %v6093 = vpop.f32.mrb[0].mxu0
    %v6094 = vadd.f32 0.0, %v6093
    %v6095 = vpop.f32.mrb[0].mxu0
    %v6096 = vpop.f32.mrb[0].mxu0
    %6097 = vdwg.mxu0
    %v6098 = vadd.f32 %v6014, %v6092
    %v6099 = vadd.f32 %v6015, %v6094
    %s6100 = scalar_lea.vmem [#allocation32], 1240
    %v6101 = vld [vmem:[%s6100] sm:$0xff]
    %v6102 = vld [vmem:[%s6100 + $0x8] sm:$0xff]
    %v6103 = vld [vmem:[%s6100 + $0x10] sm:$0xff]
    %v6104 = vld [vmem:[%s6100 + $0x18] sm:$0xff]
    %v6105 = vld [vmem:[%s6100 + $0x20] sm:$0x11]
    %v6106 = vrot.slane %v5600, 3
    %v6112 = vunpack.c.l.b16 %v6101
    %v6113 = vunpack.c.h.b16 %v6101
    %v6114 = vunpack.c.l.b16 %v6102
    %v6115 = vunpack.c.h.b16 %v6102
    %v6116 = vunpack.c.l.b16 %v6103
    %v6117 = vunpack.c.h.b16 %v6103
    %v6118 = vunpack.c.l.b16 %v6104
    %v6119 = vunpack.c.h.b16 %v6104
    %v6120 = vunpack.c.l.b16 %v6105
    %v6121 = vunpack.c.h.b16 %v6105
    %v6122 = vpack.c.b16 %v6114, %v6112
    %v6123 = vpack.c.b16 %v6115, %v6113
    %v6124 = vpack.c.b16 %v6118, %v6116
    %v6125 = vpack.c.b16 %v6119, %v6117
    %v6126 = vpack.c.b16 %v6120, %v6120
    %v6127 = vpack.c.b16 %v6121, %v6121
    %v6133 = vsel %vm3111, %v6106, 0
    %v6136 = vsel %vm3522, %v6126, 0
    %v6139 = vsel %vm3522, %v6127, 0
    %6141 = vmatprep.subr.bf16.mxu0 %v6123
    %6142 = vmatpush1.bf16.msra.mxu0 %v6122
    %6143 = vmatprep.subr.bf16.mxu0 %v6125
    %6144 = vmatpush1.bf16.msra.mxu0 %v6124
    %6145 = vmatprep.subr.bf16.mxu0 %v6139
    %6146 = vmatpush1.bf16.msra.mxu0 %v6136
    %6147 = vmatprep.subr.bf16.mxu0 0
    %6148 = vmatpush1.bf16.msra.mxu0 0
    %6149 = vmatprep.subr.bf16.mxu0 0
    %6150 = vmatpush1.bf16.msra.mxu0 0
    %6151 = vmatprep.subr.bf16.mxu0 0
    %6152 = vmatpush1.bf16.msra.mxu0 0
    %6153 = vmatprep.subr.bf16.mxu0 0
    %6154 = vmatpush1.bf16.msra.mxu0 0
    %6155 = vmatprep.subr.bf16.mxu0 0
    %6156 = vmatpush1.bf16.msra.mxu0 0
    %6157 = vmatprep.subr.bf16.mxu0 0
    %6158 = vmatpush1.bf16.msra.mxu0 0
    %6159 = vmatprep.subr.bf16.mxu0 0
    %6160 = vmatpush1.bf16.msra.mxu0 0
    %6161 = vmatprep.subr.bf16.mxu0 0
    %6162 = vmatpush1.bf16.msra.mxu0 0
    %6163 = vmatprep.subr.bf16.mxu0 0
    %6164 = vmatpush1.bf16.msra.mxu0 0
    %6165 = vmatprep.subr.bf16.mxu0 0
    %6166 = vmatpush1.bf16.msra.mxu0 0
    %6167 = vmatprep.subr.bf16.mxu0 0
    %6168 = vmatpush1.bf16.msra.mxu0 0
    %6169 = vmatprep.subr.bf16.mxu0 0
    %6170 = vmatpush1.bf16.msra.mxu0 0
    %6171 = vmatprep.subr.bf16.mxu0 0
    %6172 = vmatpush1.bf16.msra.mxu0 0
    %6173 = vmatprep.mubr.bf16.mxu0 0
    %6174 = vmatmul.mubr.bf16.gmra.mrb[0].mxu0 %v6133
    %v6175 = vpop.f32.mrb[0].mxu0
    %v6176 = vadd.f32 0.0, %v6175
    %v6177 = vpop.f32.mrb[0].mxu0
    %v6178 = vadd.f32 0.0, %v6177
    %v6179 = vpop.f32.mrb[0].mxu0
    %v6180 = vpop.f32.mrb[0].mxu0
    %6181 = vdwg.mxu0
    %v6182 = vadd.f32 %v6098, %v6176
    %v6183 = vadd.f32 %v6099, %v6178
    %v6184 = vpack.c.bf16 %v3197, %v3197
    %s6185 = scalar_lea.vmem [#allocation32], 1280
    %v6186 = vld [vmem:[%s6185] sm:$0xff]
    %v6187 = vld [vmem:[%s6185 + $0x8] sm:$0xff]
    %v6188 = vld [vmem:[%s6185 + $0x10] sm:$0xff]
    %v6189 = vld [vmem:[%s6185 + $0x18] sm:$0xff]
    %v6190 = vld [vmem:[%s6185 + $0x20] sm:$0x11]
    %v6196 = vunpack.c.l.b16 %v6186
    %v6197 = vunpack.c.h.b16 %v6186
    %v6198 = vunpack.c.l.b16 %v6187
    %v6199 = vunpack.c.h.b16 %v6187
    %v6200 = vunpack.c.l.b16 %v6188
    %v6201 = vunpack.c.h.b16 %v6188
    %v6202 = vunpack.c.l.b16 %v6189
    %v6203 = vunpack.c.h.b16 %v6189
    %v6204 = vunpack.c.l.b16 %v6190
    %v6205 = vunpack.c.h.b16 %v6190
    %v6206 = vpack.c.b16 %v6198, %v6196
    %v6207 = vpack.c.b16 %v6199, %v6197
    %v6208 = vpack.c.b16 %v6202, %v6200
    %v6209 = vpack.c.b16 %v6203, %v6201
    %v6210 = vpack.c.b16 %v6204, %v6204
    %v6211 = vpack.c.b16 %v6205, %v6205
    %v6217 = vsel %vm3111, %v6184, 0
    %v6220 = vsel %vm3522, %v6210, 0
    %v6223 = vsel %vm3522, %v6211, 0
    %6225 = vmatprep.subr.bf16.mxu0 %v6207
    %6226 = vmatpush1.bf16.msra.mxu0 %v6206
    %6227 = vmatprep.subr.bf16.mxu0 %v6209
    %6228 = vmatpush1.bf16.msra.mxu0 %v6208
    %6229 = vmatprep.subr.bf16.mxu0 %v6223
    %6230 = vmatpush1.bf16.msra.mxu0 %v6220
    %6231 = vmatprep.subr.bf16.mxu0 0
    %6232 = vmatpush1.bf16.msra.mxu0 0
    %6233 = vmatprep.subr.bf16.mxu0 0
    %6234 = vmatpush1.bf16.msra.mxu0 0
    %6235 = vmatprep.subr.bf16.mxu0 0
    %6236 = vmatpush1.bf16.msra.mxu0 0
    %6237 = vmatprep.subr.bf16.mxu0 0
    %6238 = vmatpush1.bf16.msra.mxu0 0
    %6239 = vmatprep.subr.bf16.mxu0 0
    %6240 = vmatpush1.bf16.msra.mxu0 0
    %6241 = vmatprep.subr.bf16.mxu0 0
    %6242 = vmatpush1.bf16.msra.mxu0 0
    %6243 = vmatprep.subr.bf16.mxu0 0
    %6244 = vmatpush1.bf16.msra.mxu0 0
    %6245 = vmatprep.subr.bf16.mxu0 0
    %6246 = vmatpush1.bf16.msra.mxu0 0
    %6247 = vmatprep.subr.bf16.mxu0 0
    %6248 = vmatpush1.bf16.msra.mxu0 0
    %6249 = vmatprep.subr.bf16.mxu0 0
    %6250 = vmatpush1.bf16.msra.mxu0 0
    %6251 = vmatprep.subr.bf16.mxu0 0
    %6252 = vmatpush1.bf16.msra.mxu0 0
    %6253 = vmatprep.subr.bf16.mxu0 0
    %6254 = vmatpush1.bf16.msra.mxu0 0
    %6255 = vmatprep.subr.bf16.mxu0 0
    %6256 = vmatpush1.bf16.msra.mxu0 0
    %6257 = vmatprep.mubr.bf16.mxu0 0
    %6258 = vmatmul.mubr.bf16.gmra.mrb[0].mxu0 %v6217
    %v6259 = vpop.f32.mrb[0].mxu0
    %v6260 = vadd.f32 0.0, %v6259
    %v6261 = vpop.f32.mrb[0].mxu0
    %v6262 = vadd.f32 0.0, %v6261
    %v6263 = vpop.f32.mrb[0].mxu0
    %v6264 = vpop.f32.mrb[0].mxu0
    %6265 = vdwg.mxu0
    %v6266 = vadd.f32 %v6182, %v6260
    %v6267 = vadd.f32 %v6183, %v6262
    %v6268 = vmax.f32 %v6266, 0.0
    %v6269 = vmax.f32 %v6267, 0.0
    %v6270 = vpack.c.bf16 %v6268, %v6268
    %v6271 = vpack.c.bf16 %v6269, %v6269
    %v6272 = vld [vmem:[#allocation35] sm:$0xff]
    %v6273 = vld [vmem:[#allocation35 + $0x8] sm:$0xff]
    %v6274 = vld [vmem:[#allocation35 + $0x10] sm:$0xff]
    %v6275 = vld [vmem:[#allocation35 + $0x18] sm:$0xff]
    %v6276 = vld [vmem:[#allocation35 + $0x20] sm:$0xff]
    %v6277 = vld [vmem:[#allocation35 + $0x28] sm:$0xff]
    %v6278 = vld [vmem:[#allocation35 + $0x30] sm:$0xff]
    %v6279 = vld [vmem:[#allocation35 + $0x38] sm:$0xff]
    %v6280 = vld [vmem:[#allocation35 + $0x40] sm:$0xff]
    %v6281 = vld [vmem:[#allocation35 + $0x48] sm:$0xff]
    %v6282 = vld [vmem:[#allocation35 + $0x50] sm:$0xff]
    %v6283 = vld [vmem:[#allocation35 + $0x58] sm:$0xff]
    %v6284 = vld [vmem:[#allocation35 + $0x60] sm:$0xff]
    %v6285 = vld [vmem:[#allocation35 + $0x68] sm:$0xff]
    %v6286 = vld [vmem:[#allocation35 + $0x70] sm:$0xff]
    %v6287 = vld [vmem:[#allocation35 + $0x78] sm:$0xff]
    %v6288 = vld [vmem:[#allocation35 + $0x80] sm:$0xff]
    %v6289 = vld [vmem:[#allocation35 + $0x88] sm:$0xff]
    %v6290 = vld [vmem:[#allocation35 + $0x90] sm:$0xff]
    %v6291 = vld [vmem:[#allocation35 + $0x98] sm:$0xff]
    %v6292 = vld [vmem:[#allocation35 + $0xa0] sm:$0xff]
    %v6293 = vld [vmem:[#allocation35 + $0xa8] sm:$0xff]
    %v6294 = vld [vmem:[#allocation35 + $0xb0] sm:$0xff]
    %v6295 = vld [vmem:[#allocation35 + $0xb8] sm:$0xff]
    %v6296 = vld [vmem:[#allocation35 + $0xc0] sm:$0xff]
    %v6297 = vld [vmem:[#allocation35 + $0xc8] sm:$0xff]
    %v6298 = vld [vmem:[#allocation35 + $0xd0] sm:$0xff]
    %v6299 = vld [vmem:[#allocation35 + $0xd8] sm:$0xff]
    %v6300 = vld [vmem:[#allocation35 + $0xe0] sm:$0xff]
    %v6301 = vld [vmem:[#allocation35 + $0xe8] sm:$0xff]
    %v6302 = vld [vmem:[#allocation35 + $0xf0] sm:$0xff]
    %v6303 = vld [vmem:[#allocation35 + $0xf8] sm:$0xff]
    %v6304 = vld [vmem:[#allocation36] sm:$0x3]
    %v6337 = vunpack.c.l.b16 %v6272
    %v6338 = vunpack.c.h.b16 %v6272
    %v6339 = vunpack.c.l.b16 %v6273
    %v6340 = vunpack.c.h.b16 %v6273
    %v6341 = vunpack.c.l.b16 %v6274
    %v6342 = vunpack.c.h.b16 %v6274
    %v6343 = vunpack.c.l.b16 %v6275
    %v6344 = vunpack.c.h.b16 %v6275
    %v6345 = vunpack.c.l.b16 %v6276
    %v6346 = vunpack.c.h.b16 %v6276
    %v6347 = vunpack.c.l.b16 %v6277
    %v6348 = vunpack.c.h.b16 %v6277
    %v6349 = vunpack.c.l.b16 %v6278
    %v6350 = vunpack.c.h.b16 %v6278
    %v6351 = vunpack.c.l.b16 %v6279
    %v6352 = vunpack.c.h.b16 %v6279
    %v6353 = vunpack.c.l.b16 %v6280
    %v6354 = vunpack.c.h.b16 %v6280
    %v6355 = vunpack.c.l.b16 %v6281
    %v6356 = vunpack.c.h.b16 %v6281
    %v6357 = vunpack.c.l.b16 %v6282
    %v6358 = vunpack.c.h.b16 %v6282
    %v6359 = vunpack.c.l.b16 %v6283
    %v6360 = vunpack.c.h.b16 %v6283
    %v6361 = vunpack.c.l.b16 %v6284
    %v6362 = vunpack.c.h.b16 %v6284
    %v6363 = vunpack.c.l.b16 %v6285
    %v6364 = vunpack.c.h.b16 %v6285
    %v6365 = vunpack.c.l.b16 %v6286
    %v6366 = vunpack.c.h.b16 %v6286
    %v6367 = vunpack.c.l.b16 %v6287
    %v6368 = vunpack.c.h.b16 %v6287
    %v6369 = vunpack.c.l.b16 %v6288
    %v6370 = vunpack.c.h.b16 %v6288
    %v6371 = vunpack.c.l.b16 %v6289
    %v6372 = vunpack.c.h.b16 %v6289
    %v6373 = vunpack.c.l.b16 %v6290
    %v6374 = vunpack.c.h.b16 %v6290
    %v6375 = vunpack.c.l.b16 %v6291
    %v6376 = vunpack.c.h.b16 %v6291
    %v6377 = vunpack.c.l.b16 %v6292
    %v6378 = vunpack.c.h.b16 %v6292
    %v6379 = vunpack.c.l.b16 %v6293
    %v6380 = vunpack.c.h.b16 %v6293
    %v6381 = vunpack.c.l.b16 %v6294
    %v6382 = vunpack.c.h.b16 %v6294
    %v6383 = vunpack.c.l.b16 %v6295
    %v6384 = vunpack.c.h.b16 %v6295
    %v6385 = vunpack.c.l.b16 %v6296
    %v6386 = vunpack.c.h.b16 %v6296
    %v6387 = vunpack.c.l.b16 %v6297
    %v6388 = vunpack.c.h.b16 %v6297
    %v6389 = vunpack.c.l.b16 %v6298
    %v6390 = vunpack.c.h.b16 %v6298
    %v6391 = vunpack.c.l.b16 %v6299
    %v6392 = vunpack.c.h.b16 %v6299
    %v6393 = vunpack.c.l.b16 %v6300
    %v6394 = vunpack.c.h.b16 %v6300
    %v6395 = vunpack.c.l.b16 %v6301
    %v6396 = vunpack.c.h.b16 %v6301
    %v6397 = vunpack.c.l.b16 %v6302
    %v6398 = vunpack.c.h.b16 %v6302
    %v6399 = vunpack.c.l.b16 %v6303
    %v6400 = vunpack.c.h.b16 %v6303
    %v6401 = vpack.c.b16 %v6339, %v6337
    %v6402 = vpack.c.b16 %v6340, %v6338
    %v6403 = vpack.c.b16 %v6343, %v6341
    %v6404 = vpack.c.b16 %v6344, %v6342
    %v6405 = vpack.c.b16 %v6347, %v6345
    %v6406 = vpack.c.b16 %v6348, %v6346
    %v6407 = vpack.c.b16 %v6351, %v6349
    %v6408 = vpack.c.b16 %v6352, %v6350
    %v6409 = vpack.c.b16 %v6355, %v6353
    %v6410 = vpack.c.b16 %v6356, %v6354
    %v6411 = vpack.c.b16 %v6359, %v6357
    %v6412 = vpack.c.b16 %v6360, %v6358
    %v6413 = vpack.c.b16 %v6363, %v6361
    %v6414 = vpack.c.b16 %v6364, %v6362
    %v6415 = vpack.c.b16 %v6367, %v6365
    %v6416 = vpack.c.b16 %v6368, %v6366
    %v6417 = vpack.c.b16 %v6371, %v6369
    %v6418 = vpack.c.b16 %v6372, %v6370
    %v6419 = vpack.c.b16 %v6375, %v6373
    %v6420 = vpack.c.b16 %v6376, %v6374
    %v6421 = vpack.c.b16 %v6379, %v6377
    %v6422 = vpack.c.b16 %v6380, %v6378
    %v6423 = vpack.c.b16 %v6383, %v6381
    %v6424 = vpack.c.b16 %v6384, %v6382
    %v6425 = vpack.c.b16 %v6387, %v6385
    %v6426 = vpack.c.b16 %v6388, %v6386
    %v6427 = vpack.c.b16 %v6391, %v6389
    %v6428 = vpack.c.b16 %v6392, %v6390
    %v6429 = vpack.c.b16 %v6395, %v6393
    %v6430 = vpack.c.b16 %v6396, %v6394
    %v6431 = vpack.c.b16 %v6399, %v6397
    %v6432 = vpack.c.b16 %v6400, %v6398
    %v6466 = vlaneseq
    %v6467 = vshrl.u32 %v6466, 7
    %v6468 = vsub.s32 0, %v6467
    %v6469 = vrot.slane %v6304, %v6468
    %v6470 = vlaneseq
    %v6471 = vshrl.u32 %v6470, 7
    %v6472 = vsub.s32 1, %v6471
    %v6473 = vrot.slane %v6304, %v6472
    %6476 = vmatprep.subr.bf16.mxu0 %v6402
    %6477 = vmatpush1.bf16.msra.mxu0 %v6401
    %6478 = vmatprep.subr.bf16.mxu0 %v6404
    %6479 = vmatpush1.bf16.msra.mxu0 %v6403
    %6480 = vmatprep.subr.bf16.mxu0 %v6406
    %6481 = vmatpush1.bf16.msra.mxu0 %v6405
    %6482 = vmatprep.subr.bf16.mxu0 %v6408
    %6483 = vmatpush1.bf16.msra.mxu0 %v6407
    %6484 = vmatprep.subr.bf16.mxu0 %v6410
    %6485 = vmatpush1.bf16.msra.mxu0 %v6409
    %6486 = vmatprep.subr.bf16.mxu0 %v6412
    %6487 = vmatpush1.bf16.msra.mxu0 %v6411
    %6488 = vmatprep.subr.bf16.mxu0 %v6414
    %6489 = vmatpush1.bf16.msra.mxu0 %v6413
    %6490 = vmatprep.subr.bf16.mxu0 %v6416
    %6491 = vmatpush1.bf16.msra.mxu0 %v6415
    %6492 = vmatprep.subr.bf16.mxu0 %v6418
    %6493 = vmatpush1.bf16.msra.mxu0 %v6417
    %6494 = vmatprep.subr.bf16.mxu0 %v6420
    %6495 = vmatpush1.bf16.msra.mxu0 %v6419
    %6496 = vmatprep.subr.bf16.mxu0 %v6422
    %6497 = vmatpush1.bf16.msra.mxu0 %v6421
    %6498 = vmatprep.subr.bf16.mxu0 %v6424
    %6499 = vmatpush1.bf16.msra.mxu0 %v6423
    %6500 = vmatprep.subr.bf16.mxu0 %v6426
    %6501 = vmatpush1.bf16.msra.mxu0 %v6425
    %6502 = vmatprep.subr.bf16.mxu0 %v6428
    %6503 = vmatpush1.bf16.msra.mxu0 %v6427
    %6504 = vmatprep.subr.bf16.mxu0 %v6430
    %6505 = vmatpush1.bf16.msra.mxu0 %v6429
    %6506 = vmatprep.subr.bf16.mxu0 %v6432
    %6507 = vmatpush1.bf16.msra.mxu0 %v6431
    %6508 = vmatprep.mubr.bf16.mxu0 %v6271
    %6509 = vmatmul.mubr.bf16.gmra.mrb[0].mxu0 %v6270
    %v6510 = vpop.f32.mrb[0].mxu0
    %v6511 = vadd.f32 %v6469, %v6510
    %v6512 = vpop.f32.mrb[0].mxu0
    %v6513 = vadd.f32 %v6473, %v6512
    %v6514 = vpop.f32.mrb[0].mxu0
    %v6515 = vpop.f32.mrb[0].mxu0
    %6516 = vdwg.mxu0
    %v6517 = vmax.f32 %v6511, 0.0
    %v6518 = vmax.f32 %v6513, 0.0
    %v6519 = vpack.c.bf16 %v6517, %v6517
    %v6520 = vpack.c.bf16 %v6518, %v6518
    %v6521 = vld [vmem:[#allocation38] sm:$0xff]
    %v6522 = vld [vmem:[#allocation38 + $0x8] sm:$0xff]
    %v6523 = vld [vmem:[#allocation38 + $0x10] sm:$0xff]
    %v6524 = vld [vmem:[#allocation38 + $0x18] sm:$0xff]
    %v6525 = vld [vmem:[#allocation38 + $0x20] sm:$0xff]
    %v6526 = vld [vmem:[#allocation38 + $0x28] sm:$0xff]
    %v6527 = vld [vmem:[#allocation38 + $0x30] sm:$0xff]
    %v6528 = vld [vmem:[#allocation38 + $0x38] sm:$0xff]
    %v6529 = vld [vmem:[#allocation38 + $0x40] sm:$0xff]
    %v6530 = vld [vmem:[#allocation38 + $0x48] sm:$0xff]
    %v6531 = vld [vmem:[#allocation38 + $0x50] sm:$0xff]
    %v6532 = vld [vmem:[#allocation38 + $0x58] sm:$0xff]
    %v6533 = vld [vmem:[#allocation38 + $0x60] sm:$0xff]
    %v6534 = vld [vmem:[#allocation38 + $0x68] sm:$0xff]
    %v6535 = vld [vmem:[#allocation38 + $0x70] sm:$0xff]
    %v6536 = vld [vmem:[#allocation38 + $0x78] sm:$0xff]
    %v6537 = vld [vmem:[#allocation38 + $0x80] sm:$0xff]
    %v6538 = vld [vmem:[#allocation38 + $0x88] sm:$0xff]
    %v6539 = vld [vmem:[#allocation38 + $0x90] sm:$0xff]
    %v6540 = vld [vmem:[#allocation38 + $0x98] sm:$0xff]
    %v6541 = vld [vmem:[#allocation38 + $0xa0] sm:$0xff]
    %v6542 = vld [vmem:[#allocation38 + $0xa8] sm:$0xff]
    %v6543 = vld [vmem:[#allocation38 + $0xb0] sm:$0xff]
    %v6544 = vld [vmem:[#allocation38 + $0xb8] sm:$0xff]
    %v6545 = vld [vmem:[#allocation38 + $0xc0] sm:$0xff]
    %v6546 = vld [vmem:[#allocation38 + $0xc8] sm:$0xff]
    %v6547 = vld [vmem:[#allocation38 + $0xd0] sm:$0xff]
    %v6548 = vld [vmem:[#allocation38 + $0xd8] sm:$0xff]
    %v6549 = vld [vmem:[#allocation38 + $0xe0] sm:$0xff]
    %v6550 = vld [vmem:[#allocation38 + $0xe8] sm:$0xff]
    %v6551 = vld [vmem:[#allocation38 + $0xf0] sm:$0xff]
    %v6552 = vld [vmem:[#allocation38 + $0xf8] sm:$0xff]
    %v6553 = vld [vmem:[#allocation39] sm:$0x3]
    %v6586 = vunpack.c.l.b16 %v6521
    %v6587 = vunpack.c.h.b16 %v6521
    %v6588 = vunpack.c.l.b16 %v6522
    %v6589 = vunpack.c.h.b16 %v6522
    %v6590 = vunpack.c.l.b16 %v6523
    %v6591 = vunpack.c.h.b16 %v6523
    %v6592 = vunpack.c.l.b16 %v6524
    %v6593 = vunpack.c.h.b16 %v6524
    %v6594 = vunpack.c.l.b16 %v6525
    %v6595 = vunpack.c.h.b16 %v6525
    %v6596 = vunpack.c.l.b16 %v6526
    %v6597 = vunpack.c.h.b16 %v6526
    %v6598 = vunpack.c.l.b16 %v6527
    %v6599 = vunpack.c.h.b16 %v6527
    %v6600 = vunpack.c.l.b16 %v6528
    %v6601 = vunpack.c.h.b16 %v6528
    %v6602 = vunpack.c.l.b16 %v6529
    %v6603 = vunpack.c.h.b16 %v6529
    %v6604 = vunpack.c.l.b16 %v6530
    %v6605 = vunpack.c.h.b16 %v6530
    %v6606 = vunpack.c.l.b16 %v6531
    %v6607 = vunpack.c.h.b16 %v6531
    %v6608 = vunpack.c.l.b16 %v6532
    %v6609 = vunpack.c.h.b16 %v6532
    %v6610 = vunpack.c.l.b16 %v6533
    %v6611 = vunpack.c.h.b16 %v6533
    %v6612 = vunpack.c.l.b16 %v6534
    %v6613 = vunpack.c.h.b16 %v6534
    %v6614 = vunpack.c.l.b16 %v6535
    %v6615 = vunpack.c.h.b16 %v6535
    %v6616 = vunpack.c.l.b16 %v6536
    %v6617 = vunpack.c.h.b16 %v6536
    %v6618 = vunpack.c.l.b16 %v6537
    %v6619 = vunpack.c.h.b16 %v6537
    %v6620 = vunpack.c.l.b16 %v6538
    %v6621 = vunpack.c.h.b16 %v6538
    %v6622 = vunpack.c.l.b16 %v6539
    %v6623 = vunpack.c.h.b16 %v6539
    %v6624 = vunpack.c.l.b16 %v6540
    %v6625 = vunpack.c.h.b16 %v6540
    %v6626 = vunpack.c.l.b16 %v6541
    %v6627 = vunpack.c.h.b16 %v6541
    %v6628 = vunpack.c.l.b16 %v6542
    %v6629 = vunpack.c.h.b16 %v6542
    %v6630 = vunpack.c.l.b16 %v6543
    %v6631 = vunpack.c.h.b16 %v6543
    %v6632 = vunpack.c.l.b16 %v6544
    %v6633 = vunpack.c.h.b16 %v6544
    %v6634 = vunpack.c.l.b16 %v6545
    %v6635 = vunpack.c.h.b16 %v6545
    %v6636 = vunpack.c.l.b16 %v6546
    %v6637 = vunpack.c.h.b16 %v6546
    %v6638 = vunpack.c.l.b16 %v6547
    %v6639 = vunpack.c.h.b16 %v6547
    %v6640 = vunpack.c.l.b16 %v6548
    %v6641 = vunpack.c.h.b16 %v6548
    %v6642 = vunpack.c.l.b16 %v6549
    %v6643 = vunpack.c.h.b16 %v6549
    %v6644 = vunpack.c.l.b16 %v6550
    %v6645 = vunpack.c.h.b16 %v6550
    %v6646 = vunpack.c.l.b16 %v6551
    %v6647 = vunpack.c.h.b16 %v6551
    %v6648 = vunpack.c.l.b16 %v6552
    %v6649 = vunpack.c.h.b16 %v6552
    %v6650 = vpack.c.b16 %v6588, %v6586
    %v6651 = vpack.c.b16 %v6589, %v6587
    %v6652 = vpack.c.b16 %v6592, %v6590
    %v6653 = vpack.c.b16 %v6593, %v6591
    %v6654 = vpack.c.b16 %v6596, %v6594
    %v6655 = vpack.c.b16 %v6597, %v6595
    %v6656 = vpack.c.b16 %v6600, %v6598
    %v6657 = vpack.c.b16 %v6601, %v6599
    %v6658 = vpack.c.b16 %v6604, %v6602
    %v6659 = vpack.c.b16 %v6605, %v6603
    %v6660 = vpack.c.b16 %v6608, %v6606
    %v6661 = vpack.c.b16 %v6609, %v6607
    %v6662 = vpack.c.b16 %v6612, %v6610
    %v6663 = vpack.c.b16 %v6613, %v6611
    %v6664 = vpack.c.b16 %v6616, %v6614
    %v6665 = vpack.c.b16 %v6617, %v6615
    %v6666 = vpack.c.b16 %v6620, %v6618
    %v6667 = vpack.c.b16 %v6621, %v6619
    %v6668 = vpack.c.b16 %v6624, %v6622
    %v6669 = vpack.c.b16 %v6625, %v6623
    %v6670 = vpack.c.b16 %v6628, %v6626
    %v6671 = vpack.c.b16 %v6629, %v6627
    %v6672 = vpack.c.b16 %v6632, %v6630
    %v6673 = vpack.c.b16 %v6633, %v6631
    %v6674 = vpack.c.b16 %v6636, %v6634
    %v6675 = vpack.c.b16 %v6637, %v6635
    %v6676 = vpack.c.b16 %v6640, %v6638
    %v6677 = vpack.c.b16 %v6641, %v6639
    %v6678 = vpack.c.b16 %v6644, %v6642
    %v6679 = vpack.c.b16 %v6645, %v6643
    %v6680 = vpack.c.b16 %v6648, %v6646
    %v6681 = vpack.c.b16 %v6649, %v6647
    %v6715 = vlaneseq
    %v6716 = vshrl.u32 %v6715, 7
    %v6717 = vsub.s32 0, %v6716
    %v6718 = vrot.slane %v6553, %v6717
    %v6719 = vlaneseq
    %v6720 = vshrl.u32 %v6719, 7
    %v6721 = vsub.s32 1, %v6720
    %v6722 = vrot.slane %v6553, %v6721
    %6725 = vmatprep.subr.bf16.mxu0 %v6651
    %6726 = vmatpush1.bf16.msra.mxu0 %v6650
    %6727 = vmatprep.subr.bf16.mxu0 %v6653
    %6728 = vmatpush1.bf16.msra.mxu0 %v6652
    %6729 = vmatprep.subr.bf16.mxu0 %v6655
    %6730 = vmatpush1.bf16.msra.mxu0 %v6654
    %6731 = vmatprep.subr.bf16.mxu0 %v6657
    %6732 = vmatpush1.bf16.msra.mxu0 %v6656
    %6733 = vmatprep.subr.bf16.mxu0 %v6659
    %6734 = vmatpush1.bf16.msra.mxu0 %v6658
    %6735 = vmatprep.subr.bf16.mxu0 %v6661
    %6736 = vmatpush1.bf16.msra.mxu0 %v6660
    %6737 = vmatprep.subr.bf16.mxu0 %v6663
    %6738 = vmatpush1.bf16.msra.mxu0 %v6662
    %6739 = vmatprep.subr.bf16.mxu0 %v6665
    %6740 = vmatpush1.bf16.msra.mxu0 %v6664
    %6741 = vmatprep.subr.bf16.mxu0 %v6667
    %6742 = vmatpush1.bf16.msra.mxu0 %v6666
    %6743 = vmatprep.subr.bf16.mxu0 %v6669
    %6744 = vmatpush1.bf16.msra.mxu0 %v6668
    %6745 = vmatprep.subr.bf16.mxu0 %v6671
    %6746 = vmatpush1.bf16.msra.mxu0 %v6670
    %6747 = vmatprep.subr.bf16.mxu0 %v6673
    %6748 = vmatpush1.bf16.msra.mxu0 %v6672
    %6749 = vmatprep.subr.bf16.mxu0 %v6675
    %6750 = vmatpush1.bf16.msra.mxu0 %v6674
    %6751 = vmatprep.subr.bf16.mxu0 %v6677
    %6752 = vmatpush1.bf16.msra.mxu0 %v6676
    %6753 = vmatprep.subr.bf16.mxu0 %v6679
    %6754 = vmatpush1.bf16.msra.mxu0 %v6678
    %6755 = vmatprep.subr.bf16.mxu0 %v6681
    %6756 = vmatpush1.bf16.msra.mxu0 %v6680
    %6757 = vmatprep.mubr.bf16.mxu0 %v6520
    %6758 = vmatmul.mubr.bf16.gmra.mrb[0].mxu0 %v6519
    %v6759 = vpop.f32.mrb[0].mxu0
    %v6760 = vadd.f32 %v6718, %v6759
    %v6761 = vpop.f32.mrb[0].mxu0
    %v6762 = vadd.f32 %v6722, %v6761
    %v6763 = vpop.f32.mrb[0].mxu0
    %v6764 = vpop.f32.mrb[0].mxu0
    %6765 = vdwg.mxu0
    %v6766 = vmax.f32 %v6760, 0.0
    %v6767 = vmax.f32 %v6762, 0.0
    %v6768 = vpack.c.bf16 %v6766, %v6766
    %v6769 = vpack.c.bf16 %v6767, %v6767
    %v6770 = vld [vmem:[#allocation41] sm:$0xf]
    %v6771 = vld [vmem:[#allocation41 + $0x4] sm:$0xf]
    %v6772 = vld [vmem:[#allocation41 + $0x8] sm:$0xf]
    %v6773 = vld [vmem:[#allocation41 + $0xc] sm:$0xf]
    %v6774 = vld [vmem:[#allocation41 + $0x10] sm:$0xf]
    %v6775 = vld [vmem:[#allocation41 + $0x14] sm:$0xf]
    %v6776 = vld [vmem:[#allocation41 + $0x18] sm:$0xf]
    %v6777 = vld [vmem:[#allocation41 + $0x1c] sm:$0xf]
    %v6778 = vld [vmem:[#allocation41 + $0x20] sm:$0xf]
    %v6779 = vld [vmem:[#allocation41 + $0x24] sm:$0xf]
    %v6780 = vld [vmem:[#allocation41 + $0x28] sm:$0xf]
    %v6781 = vld [vmem:[#allocation41 + $0x2c] sm:$0xf]
    %v6782 = vld [vmem:[#allocation41 + $0x30] sm:$0xf]
    %v6783 = vld [vmem:[#allocation41 + $0x34] sm:$0xf]
    %v6784 = vld [vmem:[#allocation41 + $0x38] sm:$0xf]
    %v6785 = vld [vmem:[#allocation41 + $0x3c] sm:$0xf]
    %v6786 = vld [vmem:[#allocation41 + $0x40] sm:$0xf]
    %v6787 = vld [vmem:[#allocation41 + $0x44] sm:$0xf]
    %v6788 = vld [vmem:[#allocation41 + $0x48] sm:$0xf]
    %v6789 = vld [vmem:[#allocation41 + $0x4c] sm:$0xf]
    %v6790 = vld [vmem:[#allocation41 + $0x50] sm:$0xf]
    %v6791 = vld [vmem:[#allocation41 + $0x54] sm:$0xf]
    %v6792 = vld [vmem:[#allocation41 + $0x58] sm:$0xf]
    %v6793 = vld [vmem:[#allocation41 + $0x5c] sm:$0xf]
    %v6794 = vld [vmem:[#allocation41 + $0x60] sm:$0xf]
    %v6795 = vld [vmem:[#allocation41 + $0x64] sm:$0xf]
    %v6796 = vld [vmem:[#allocation41 + $0x68] sm:$0xf]
    %v6797 = vld [vmem:[#allocation41 + $0x6c] sm:$0xf]
    %v6798 = vld [vmem:[#allocation41 + $0x70] sm:$0xf]
    %v6799 = vld [vmem:[#allocation41 + $0x74] sm:$0xf]
    %v6800 = vld [vmem:[#allocation41 + $0x78] sm:$0xf]
    %v6801 = vld [vmem:[#allocation41 + $0x7c] sm:$0xf]
    %v6802 = vld [vmem:[#allocation42] sm:$0x1]
    %v6835 = vunpack.c.l.b16 %v6770
    %v6836 = vunpack.c.l.b16 %v6771
    %v6837 = vunpack.c.l.b16 %v6772
    %v6838 = vunpack.c.l.b16 %v6773
    %v6839 = vunpack.c.l.b16 %v6774
    %v6840 = vunpack.c.l.b16 %v6775
    %v6841 = vunpack.c.l.b16 %v6776
    %v6842 = vunpack.c.l.b16 %v6777
    %v6843 = vunpack.c.l.b16 %v6778
    %v6844 = vunpack.c.l.b16 %v6779
    %v6845 = vunpack.c.l.b16 %v6780
    %v6846 = vunpack.c.l.b16 %v6781
    %v6847 = vunpack.c.l.b16 %v6782
    %v6848 = vunpack.c.l.b16 %v6783
    %v6849 = vunpack.c.l.b16 %v6784
    %v6850 = vunpack.c.l.b16 %v6785
    %v6851 = vunpack.c.l.b16 %v6786
    %v6852 = vunpack.c.l.b16 %v6787
    %v6853 = vunpack.c.l.b16 %v6788
    %v6854 = vunpack.c.l.b16 %v6789
    %v6855 = vunpack.c.l.b16 %v6790
    %v6856 = vunpack.c.l.b16 %v6791
    %v6857 = vunpack.c.l.b16 %v6792
    %v6858 = vunpack.c.l.b16 %v6793
    %v6859 = vunpack.c.l.b16 %v6794
    %v6860 = vunpack.c.l.b16 %v6795
    %v6861 = vunpack.c.l.b16 %v6796
    %v6862 = vunpack.c.l.b16 %v6797
    %v6863 = vunpack.c.l.b16 %v6798
    %v6864 = vunpack.c.l.b16 %v6799
    %v6865 = vunpack.c.l.b16 %v6800
    %v6866 = vunpack.c.l.b16 %v6801
    %v6867 = vpack.c.b16 %v6836, %v6835
    %v6868 = vpack.c.b16 %v6838, %v6837
    %v6869 = vpack.c.b16 %v6840, %v6839
    %v6870 = vpack.c.b16 %v6842, %v6841
    %v6871 = vpack.c.b16 %v6844, %v6843
    %v6872 = vpack.c.b16 %v6846, %v6845
    %v6873 = vpack.c.b16 %v6848, %v6847
    %v6874 = vpack.c.b16 %v6850, %v6849
    %v6875 = vpack.c.b16 %v6852, %v6851
    %v6876 = vpack.c.b16 %v6854, %v6853
    %v6877 = vpack.c.b16 %v6856, %v6855
    %v6878 = vpack.c.b16 %v6858, %v6857
    %v6879 = vpack.c.b16 %v6860, %v6859
    %v6880 = vpack.c.b16 %v6862, %v6861
    %v6881 = vpack.c.b16 %v6864, %v6863
    %v6882 = vpack.c.b16 %v6866, %v6865
    %6899 = vmatprep.subr.bf16.mxu0 0
    %6900 = vmatpush1.bf16.msra.mxu0 %v6867
    %6901 = vmatprep.subr.bf16.mxu0 0
    %6902 = vmatpush1.bf16.msra.mxu0 %v6868
    %6903 = vmatprep.subr.bf16.mxu0 0
    %6904 = vmatpush1.bf16.msra.mxu0 %v6869
    %6905 = vmatprep.subr.bf16.mxu0 0
    %6906 = vmatpush1.bf16.msra.mxu0 %v6870
    %6907 = vmatprep.subr.bf16.mxu0 0
    %6908 = vmatpush1.bf16.msra.mxu0 %v6871
    %6909 = vmatprep.subr.bf16.mxu0 0
    %6910 = vmatpush1.bf16.msra.mxu0 %v6872
    %6911 = vmatprep.subr.bf16.mxu0 0
    %6912 = vmatpush1.bf16.msra.mxu0 %v6873
    %6913 = vmatprep.subr.bf16.mxu0 0
    %6914 = vmatpush1.bf16.msra.mxu0 %v6874
    %6915 = vmatprep.subr.bf16.mxu0 0
    %6916 = vmatpush1.bf16.msra.mxu0 %v6875
    %6917 = vmatprep.subr.bf16.mxu0 0
    %6918 = vmatpush1.bf16.msra.mxu0 %v6876
    %6919 = vmatprep.subr.bf16.mxu0 0
    %6920 = vmatpush1.bf16.msra.mxu0 %v6877
    %6921 = vmatprep.subr.bf16.mxu0 0
    %6922 = vmatpush1.bf16.msra.mxu0 %v6878
    %6923 = vmatprep.subr.bf16.mxu0 0
    %6924 = vmatpush1.bf16.msra.mxu0 %v6879
    %6925 = vmatprep.subr.bf16.mxu0 0
    %6926 = vmatpush1.bf16.msra.mxu0 %v6880
    %6927 = vmatprep.subr.bf16.mxu0 0
    %6928 = vmatpush1.bf16.msra.mxu0 %v6881
    %6929 = vmatprep.subr.bf16.mxu0 0
    %6930 = vmatpush1.bf16.msra.mxu0 %v6882
    %6931 = vmatprep.mubr.bf16.mxu0 %v6769
    %6932 = vmatmul.mubr.bf16.gmra.mrb[0].mxu0 %v6768
    %v6933 = vpop.f32.mrb[0].mxu0
    %v6934 = vadd.f32 %v6802, %v6933
    %v6935 = vpop.f32.mrb[0].mxu0
    %v6936 = vpop.f32.mrb[0].mxu0
    %v6937 = vpop.f32.mrb[0].mxu0
    %6938 = vdwg.mxu0
    %v6939 = vmax.f32 %v6934, 0.0
    %v6940 = vpack.c.bf16 %v6939, %v6939
    %v6941 = vld [vmem:[#allocation44] sm:$0xf]
    %v6942 = vld [vmem:[#allocation44 + $0x4] sm:$0xf]
    %v6943 = vld [vmem:[#allocation44 + $0x8] sm:$0xf]
    %v6944 = vld [vmem:[#allocation44 + $0xc] sm:$0xf]
    %v6945 = vld [vmem:[#allocation44 + $0x10] sm:$0xf]
    %v6946 = vld [vmem:[#allocation44 + $0x14] sm:$0xf]
    %v6947 = vld [vmem:[#allocation44 + $0x18] sm:$0xf]
    %v6948 = vld [vmem:[#allocation44 + $0x1c] sm:$0xf]
    %v6949 = vld [vmem:[#allocation44 + $0x20] sm:$0xf]
    %v6950 = vld [vmem:[#allocation44 + $0x24] sm:$0xf]
    %v6951 = vld [vmem:[#allocation44 + $0x28] sm:$0xf]
    %v6952 = vld [vmem:[#allocation44 + $0x2c] sm:$0xf]
    %v6953 = vld [vmem:[#allocation44 + $0x30] sm:$0xf]
    %v6954 = vld [vmem:[#allocation44 + $0x34] sm:$0xf]
    %v6955 = vld [vmem:[#allocation44 + $0x38] sm:$0xf]
    %v6956 = vld [vmem:[#allocation44 + $0x3c] sm:$0xf]
    %v6957 = vld [vmem:[#allocation45] sm:$0x1]
    %v6974 = vunpack.c.l.b16 %v6941
    %v6975 = vunpack.c.l.b16 %v6942
    %v6976 = vunpack.c.l.b16 %v6943
    %v6977 = vunpack.c.l.b16 %v6944
    %v6978 = vunpack.c.l.b16 %v6945
    %v6979 = vunpack.c.l.b16 %v6946
    %v6980 = vunpack.c.l.b16 %v6947
    %v6981 = vunpack.c.l.b16 %v6948
    %v6982 = vunpack.c.l.b16 %v6949
    %v6983 = vunpack.c.l.b16 %v6950
    %v6984 = vunpack.c.l.b16 %v6951
    %v6985 = vunpack.c.l.b16 %v6952
    %v6986 = vunpack.c.l.b16 %v6953
    %v6987 = vunpack.c.l.b16 %v6954
    %v6988 = vunpack.c.l.b16 %v6955
    %v6989 = vunpack.c.l.b16 %v6956
    %v6990 = vpack.c.b16 %v6975, %v6974
    %v6991 = vpack.c.b16 %v6977, %v6976
    %v6992 = vpack.c.b16 %v6979, %v6978
    %v6993 = vpack.c.b16 %v6981, %v6980
    %v6994 = vpack.c.b16 %v6983, %v6982
    %v6995 = vpack.c.b16 %v6985, %v6984
    %v6996 = vpack.c.b16 %v6987, %v6986
    %v6997 = vpack.c.b16 %v6989, %v6988
    %7006 = vmatprep.subr.bf16.mxu0 0
    %7007 = vmatpush1.bf16.msra.mxu0 %v6990
    %7008 = vmatprep.subr.bf16.mxu0 0
    %7009 = vmatpush1.bf16.msra.mxu0 %v6991
    %7010 = vmatprep.subr.bf16.mxu0 0
    %7011 = vmatpush1.bf16.msra.mxu0 %v6992
    %7012 = vmatprep.subr.bf16.mxu0 0
    %7013 = vmatpush1.bf16.msra.mxu0 %v6993
    %7014 = vmatprep.subr.bf16.mxu0 0
    %7015 = vmatpush1.bf16.msra.mxu0 %v6994
    %7016 = vmatprep.subr.bf16.mxu0 0
    %7017 = vmatpush1.bf16.msra.mxu0 %v6995
    %7018 = vmatprep.subr.bf16.mxu0 0
    %7019 = vmatpush1.bf16.msra.mxu0 %v6996
    %7020 = vmatprep.subr.bf16.mxu0 0
    %7021 = vmatpush1.bf16.msra.mxu0 %v6997
    %7022 = vmatprep.subr.bf16.mxu0 0
    %7023 = vmatpush1.bf16.msra.mxu0 0
    %7024 = vmatprep.subr.bf16.mxu0 0
    %7025 = vmatpush1.bf16.msra.mxu0 0
    %7026 = vmatprep.subr.bf16.mxu0 0
    %7027 = vmatpush1.bf16.msra.mxu0 0
    %7028 = vmatprep.subr.bf16.mxu0 0
    %7029 = vmatpush1.bf16.msra.mxu0 0
    %7030 = vmatprep.subr.bf16.mxu0 0
    %7031 = vmatpush1.bf16.msra.mxu0 0
    %7032 = vmatprep.subr.bf16.mxu0 0
    %7033 = vmatpush1.bf16.msra.mxu0 0
    %7034 = vmatprep.subr.bf16.mxu0 0
    %7035 = vmatpush1.bf16.msra.mxu0 0
    %7036 = vmatprep.subr.bf16.mxu0 0
    %7037 = vmatpush1.bf16.msra.mxu0 0
    %7038 = vmatprep.mubr.bf16.mxu0 0
    %7039 = vmatmul.mubr.bf16.gmra.mrb[0].mxu0 %v6940
    %v7040 = vpop.f32.mrb[0].mxu0
    %v7041 = vadd.f32 %v6957, %v7040
    %v7042 = vpop.f32.mrb[0].mxu0
    %v7043 = vpop.f32.mrb[0].mxu0
    %v7044 = vpop.f32.mrb[0].mxu0
    %7045 = vdwg.mxu0
    %v7046 = vmax.f32 %v7041, 0.0
    %7047 = vst [vmem:[#allocation47] sm:$0x1] %v7046
    // Predicated region
    $region246: #{critic_forward.1} parent=1 // pred_check
      _
    $region247: #{critic_forward.1} parent=1 // pred_check_branch
      %7049 = sbr.rel (0) target = $region249
    $region248: #{critic_forward.1} parent=1 // pred_region
      %s7051 = ssub.s32 16, 16
      %7052 = vsyncadd [#allocation4], %s7051
      %s7054 = sshll.u32 [#allocation47], 4
      %s7055 = int_to_ptr.vmem [resolvable:$true] %s7054
      %7057 = dma.vmem_to_hbm [thread:$0]  %s7055, 16, %s67, [#allocation4]
    $region249: #{critic_forward.1} parent=1 // pred_fallthru
      _
    // Predicated region
    $region250: #{critic_forward.1} parent=1 // pred_check
      _
    $region251: #{critic_forward.1} parent=1 // pred_check_branch
      %7059 = sbr.rel (0) target = $region253
    $region252: #{critic_forward.1} parent=1 // pred_region
      %7060 = dma.done [#allocation4], 16
    $region253: #{critic_forward.1} parent=1 // pred_fallthru
      _
    %7061 = vsyncpa [#allocation3], 1
    %7062 = vsyncpa [#allocation10], 1
    %7063 = vsyncpa [#allocation13], 1
    %7064 = vsyncpa [#allocation16], 1
    %7065 = vsyncpa [#allocation19], 1
    %7066 = vsyncpa [#allocation22], 1
    %7067 = vsyncpa [#allocation25], 1
    %7068 = vsyncpa [#allocation28], 1
    %7069 = vsyncpa [#allocation31], 1
    %7070 = vsyncpa [#allocation34], 1
    %7071 = vsyncpa [#allocation37], 1
    %7072 = vsyncpa [#allocation40], 1
    %7073 = vsyncpa [#allocation43], 1
    %7074 = vsyncpa [#allocation46], 1
    %7075 = vsyncpa [#allocation4], 1
    %7076 = vsyncpa [#allocation5], 1
    %7077 = vsyncpa [#allocation6], 1

</llo_original>
